<compile_context>
chip_gen: v5e
topology: v5e:2x2
jax: 0.10.0
libtpu: 0.0.40
codegen_flags: <defaults>
</compile_context>

<pallas_src>
import jax
import jax.numpy as jnp
from jax.experimental import pallas as pl
from jax.experimental.pallas import tpu as pltpu

_LP = 16  # aligned left spatial pad (multiple of the bf16 16-row sublane tile)


def _round_up(x, m):
    return (x + m - 1) // m * m


def _padded_w(w):
    # aligned left pad + image width + 1 right pad, rounded to the bf16 tile.
    return _round_up(_LP + w + 1, 16)


# ----------------------------------------------------------------------------
# Fused kernel
# ----------------------------------------------------------------------------
def _make_fused_cnn_kernel(Nb, H, W, C1P, C1, C2, C3):
    """Whole CNN forward for one batch block, resident in VMEM."""
    H1, W1 = H, W
    H2, W2 = H // 2, W // 2
    H3, W3 = H // 4, W // 4

    def zero_border(pad_ref, Hh, Ww, Cin):
        # Only the 1-wide border that the taps actually read; interiors are
        # fully overwritten each step.  Safe regardless of how the parallel
        # grid is split across cores (no reliance on program_id==0 zeroing).
        z_row = jnp.zeros((Nb, 1, Ww + 2, Cin), pad_ref.dtype)
        z_col = jnp.zeros((Nb, Hh, 1, Cin), pad_ref.dtype)
        pad_ref[:, 0:1, _LP - 1:_LP + Ww + 1, :] = z_row
        pad_ref[:, Hh + 1:Hh + 2, _LP - 1:_LP + Ww + 1, :] = z_row
        pad_ref[:, 1:Hh + 1, _LP - 1:_LP, :] = z_col
        pad_ref[:, 1:Hh + 1, _LP + Ww:_LP + Ww + 1, :] = z_col

    def conv3x3_relu(pad_ref, patch_ref, x, w_ref, b_ref, Hh, Ww, Cin):
        M = Nb * Hh * Ww
        zero_border(pad_ref, Hh, Ww, Cin)
        # Sublane-aligned bulk store of the layer input (W-offset _LP=16).
        pad_ref[:, 1:Hh + 1, _LP:_LP + Ww, :] = x.astype(pad_ref.dtype)
        # im2col: build the 9 taps and store the patch ONCE (lane-dense).
        taps = []
        for dh in range(3):
            for dw in range(3):
                c0 = _LP - 1 + dw
                tap = pad_ref[:, dh:dh + Hh, c0:c0 + Ww, :]
                taps.append(tap.reshape(M, Cin))
        patch_ref[...] = jnp.concatenate(taps, axis=-1)
        # One bf16 MXU matmul (K = 9*Cin) with f32 accumulation, bias + ReLU.
        y = jnp.dot(patch_ref[...], w_ref[...],
                    preferred_element_type=jnp.float32)
        return jnp.maximum(y + b_ref[...], 0.0)             # (M, Cout) f32

    def maxpool2x2(y, Hh, Ww, C):
        # y: (Nb*Hh*Ww, C) f32, rows ordered (nb, h, w).
        # TODO(synk): roll-based pooling (XLU) would avoid these sublane
        # relayouts once shapes grow.
        y = y.reshape(Nb * Hh // 2, 2, Ww // 2, 2, C)
        y = jnp.max(y, axis=3)                               # pool width pairs
        y = jnp.max(y, axis=1)                               # pool height pairs
        return y.reshape(Nb, Hh // 2, Ww // 2, C)

    def kernel(x_ref, w1_ref, b1_ref, w2_ref, b2_ref, w3_ref, b3_ref,
               w4_ref, b4_ref, o_ref,
               pad1, patch1, pad2, patch2, pad3, patch3):
        x0 = x_ref[...]                                                # (Nb,H,W,C1P) bf16
        y1 = conv3x3_relu(pad1, patch1, x0, w1_ref, b1_ref, H1, W1, C1P)
        x1 = maxpool2x2(y1, H1, W1, C1)                                # (Nb,H2,W2,C1) f32
        y2 = conv3x3_relu(pad2, patch2, x1, w2_ref, b2_ref, H2, W2, C1)
        x2 = maxpool2x2(y2, H2, W2, C2)                                # (Nb,H3,W3,C2) f32
        y3 = conv3x3_relu(pad3, patch3, x2, w3_ref, b3_ref, H3, W3, C2)
        # Final 1x1 conv (Cout=1): VPU multiply + lane reduction (no N=1 MXU
        # matmul); broadcast against b4 (1,1) yields a lane-dense output row.
        y4 = jnp.sum(y3 * w4_ref[...], axis=-1) + b4_ref[...]          # (1, Nb*H3*W3)
        o_ref[...] = y4.reshape(1, 1, Nb * H3 * W3)

    return kernel


# ----------------------------------------------------------------------------
# Block-size / VMEM heuristics
# ----------------------------------------------------------------------------
def _per_image_vmem_bytes(H, W, C1P=32, C1=32, C2=64, C3=128):
    H2, W2, H3, W3 = H // 2, W // 2, H // 4, W // 4
    bf, f4 = 2, 4

    def lanes(c):                     # VMEM lane padding to the 128-wide tile
        return _round_up(c, 128)

    b = 2 * H * W * lanes(C1P) * bf                                     # 2x input block
    b += (H + 2) * _padded_w(W) * lanes(C1P) * bf + H * W * lanes(9 * C1P) * bf
    b += (H2 + 2) * _padded_w(W2) * lanes(C1) * bf + H2 * W2 * lanes(9 * C1) * bf
    b += (H3 + 2) * _padded_w(W3) * lanes(C2) * bf + H3 * W3 * lanes(9 * C2) * bf
    b += H * W * lanes(C1) * f4 + H2 * W2 * lanes(C2) * f4 + H3 * W3 * lanes(C3) * f4
    b += 2 * H3 * W3 * f4                                               # 2x output block
    return b


def _pick_block_n(N, H, W):
    """Images per grid block: fill the MXU rows (M3 >= 256) while staying
    inside a v7x-safe VMEM budget and keeping an even number of grid blocks
    so both v7x TensorCores get work."""
    h3w3 = (H // 4) * (W // 4)
    target_m = 256                                   # v6e/v7x MXU rows; 2x128 on v5e
    budget = 28 << 20                                # ~half of v7x's 64 MiB VMEM
    bn_vmem = max(1, budget // _per_image_vmem_bytes(H, W))
    if N * h3w3 <= target_m:
        bn = max(1, -(-N // 2))                      # tiny problem: one block per TC
    else:
        bn = max(1, -(-target_m // h3w3))
    bn = max(1, min(bn, bn_vmem, N))
    n_blocks = -(-N // bn)
    if n_blocks > 1 and n_blocks % 2:                # even block count for megacore
        bn = max(1, -(-N // (n_blocks + 1)))
        n_blocks = -(-N // bn)
    return bn, n_blocks


# ----------------------------------------------------------------------------
# Wrapper
# ----------------------------------------------------------------------------
def cnn_forward(params, x_nchw, block_n=None):
    N, Cin, H, W = x_nchw.shape
    assert Cin == 18 and H % 4 == 0 and W % 4 == 0

    C1P = 32                        # input channels zero-padded 18 -> 32
    C1, C2, C3 = 32, 64, 128
    H3, W3 = H // 4, W // 4

    if block_n is None:
        block_n, n_blocks = _pick_block_n(N, H, W)
    else:
        n_blocks = -(-N // block_n)
    Np = n_blocks * block_n
    m_out = block_n * H3 * W3

    # NCHW -> NHWC, pad channels (lane / MXU-K density) and batch, cast bf16.
    x = jnp.transpose(x_nchw, (0, 2, 3, 1)).astype(jnp.float32)
    x = jnp.pad(x, ((0, Np - N), (0, 0), (0, 0), (0, C1P - Cin)))
    x = x.astype(jnp.bfloat16)

    # im2col weight layout: (3,3,Cin,Cout) -> (9*Cin, Cout); bf16 MXU operands.
    w1f = jnp.pad(params["w1"], ((0, 0), (0, 0), (0, C1P - Cin), (0, 0))
                  ).reshape(9 * C1P, C1).astype(jnp.bfloat16)
    w2f = params["w2"].reshape(9 * C1, C2).astype(jnp.bfloat16)
    w3f = params["w3"].reshape(9 * C2, C3).astype(jnp.bfloat16)
    w4r = params["w4"].reshape(1, C3).astype(jnp.float32)
    b1 = params["b1"].reshape(1, C1).astype(jnp.float32)
    b2 = params["b2"].reshape(1, C2).astype(jnp.float32)
    b3 = params["b3"].reshape(1, C3).astype(jnp.float32)
    b4 = params["b4"].reshape(1, 1).astype(jnp.float32)

    kernel = _make_fused_cnn_kernel(block_n, H, W, C1P, C1, C2, C3)

    # Explicit scoped-VMEM limit from the actual footprint (+ headroom).
    vmem_need = _per_image_vmem_bytes(H, W) * block_n + (2 << 20)
    vmem_limit = int(min(max(int(1.3 * vmem_need), 32 << 20), 112 << 20))

    def wspec(shape):
        return pl.BlockSpec(shape, lambda n: (0,) * len(shape))

    out = pl.pallas_call(
        kernel,
        out_shape=jax.ShapeDtypeStruct((n_blocks, 1, m_out), jnp.float32),
        grid=(n_blocks,),
        in_specs=[
            pl.BlockSpec((block_n, H, W, C1P), lambda n: (n, 0, 0, 0)),
            wspec((9 * C1P, C1)), wspec((1, C1)),
            wspec((9 * C1, C2)), wspec((1, C2)),
            wspec((9 * C2, C3)), wspec((1, C3)),
            wspec((1, C3)), wspec((1, 1)),
        ],
        out_specs=pl.BlockSpec((1, 1, m_out), lambda n: (n, 0, 0)),
        scratch_shapes=[
            # SAME-pad scratches (16-wide aligned left pad) + im2col patches.
            pltpu.VMEM((block_n, H + 2, _padded_w(W), C1P), jnp.bfloat16),
            pltpu.VMEM((block_n * H * W, 9 * C1P), jnp.bfloat16),
            pltpu.VMEM((block_n, H // 2 + 2, _padded_w(W // 2), C1), jnp.bfloat16),
            pltpu.VMEM((block_n * (H // 2) * (W // 2), 9 * C1), jnp.bfloat16),
            pltpu.VMEM((block_n, H // 4 + 2, _padded_w(W // 4), C2), jnp.bfloat16),
            pltpu.VMEM((block_n * (H // 4) * (W // 4), 9 * C2), jnp.bfloat16),
        ],
        compiler_params=pltpu.CompilerParams(
            dimension_semantics=("parallel",),
            vmem_limit_bytes=vmem_limit),
    )(x, w1f, b1, w2f, b2, w3f, b3, w4r, b4)

    out = out.reshape(Np, H3, W3)[:N]             # drop batch padding
    return out[:, None, :, :]                     # (N, 1, H3, W3)  NCHW


# ----------------------------------------------------------------------------
# Parameters (PyTorch-default-style init) + pure-JAX reference
# ----------------------------------------------------------------------------
def init_params(key):
    def conv_init(k, kh, kw, cin, cout):
        kw_key, kb_key = jax.random.split(k)
        bound = 1.0 / jnp.sqrt(jnp.float32(cin * kh * kw))
        w = jax.random.uniform(kw_key, (kh, kw, cin, cout), jnp.float32, -bound, bound)
        b = jax.random.uniform(kb_key, (cout,), jnp.float32, -bound, bound)
        return w, b

    k1, k2, k3, k4 = jax.random.split(key, 4)
    w1, b1 = conv_init(k1, 3, 3, 18, 32)
    w2, b2 = conv_init(k2, 3, 3, 32, 64)
    w3, b3 = conv_init(k3, 3, 3, 64, 128)
    w4, b4 = conv_init(k4, 1, 1, 128, 1)
    return dict(w1=w1, b1=b1, w2=w2, b2=b2, w3=w3, b3=b3, w4=w4, b4=b4)


def cnn_reference(params, x_nchw):
    x = jnp.transpose(x_nchw, (0, 2, 3, 1))

    def conv(x, w, b):
        y = jax.lax.conv_general_dilated(
            x, w, (1, 1), "SAME", dimension_numbers=("NHWC", "HWIO", "NHWC"))
        return y + b

    def pool(x):
        return jax.lax.reduce_window(x, -jnp.inf, jax.lax.max,
                                     (1, 2, 2, 1), (1, 2, 2, 1), "VALID")

    x = pool(jax.nn.relu(conv(x, params["w1"], params["b1"])))
    x = pool(jax.nn.relu(conv(x, params["w2"], params["b2"])))
    x = jax.nn.relu(conv(x, params["w3"], params["b3"]))
    x = conv(x, params["w4"], params["b4"])
    return jnp.transpose(x, (0, 3, 1, 2))


if __name__ == "__main__":
    key = jax.random.PRNGKey(0)
    pkey, xkey = jax.random.split(key)
    params = init_params(pkey)

    # Small NCHW input consistent with the module (in_channels=18).
    x = jax.random.normal(xkey, (2, 18, 16, 16), jnp.float32)

    out = jax.block_until_ready(cnn_forward(params, x))
    ref = jax.block_until_ready(cnn_reference(params, x))

    assert out.shape == (2, 1, 4, 4), out.shape
    # bf16 MXU operands (f32 accumulation) -> slightly looser tolerance vs f32 ref.
    assert jnp.allclose(out, ref, atol=2e-2, rtol=2e-2), \
        float(jnp.max(jnp.abs(out - ref)))
    print("KERNEL_OK")
</pallas_src>

<mosaic_0001>
module attributes {stable_mosaic.version = 11 : i64} {
  func.func @kernel(%arg0: i32, %arg1: memref<1x16x16x32xbf16, #tpu.memory_space<vmem>>, %arg2: memref<288x32xbf16, #tpu.memory_space<vmem>>, %arg3: memref<1x32xf32, #tpu.memory_space<vmem>>, %arg4: memref<288x64xbf16, #tpu.memory_space<vmem>>, %arg5: memref<1x64xf32, #tpu.memory_space<vmem>>, %arg6: memref<576x128xbf16, #tpu.memory_space<vmem>>, %arg7: memref<1x128xf32, #tpu.memory_space<vmem>>, %arg8: memref<1x128xf32, #tpu.memory_space<vmem>>, %arg9: memref<1x1xf32, #tpu.memory_space<vmem>>, %arg10: memref<1x1x16xf32, #tpu.memory_space<vmem>>, %arg11: memref<1x18x48x32xbf16, #tpu.memory_space<vmem>>, %arg12: memref<256x288xbf16, #tpu.memory_space<vmem>>, %arg13: memref<1x10x32x32xbf16, #tpu.memory_space<vmem>>, %arg14: memref<64x288xbf16, #tpu.memory_space<vmem>>, %arg15: memref<1x6x32x64xbf16, #tpu.memory_space<vmem>>, %arg16: memref<16x576xbf16, #tpu.memory_space<vmem>>) attributes {dimension_semantics = [#tpu.dimension_semantics<parallel>], iteration_bounds = array<i64: 2>, scalar_prefetch = 0 : i64, scratch_operands = 6 : i64, tpu.core_type = #tpu.core_type<tc>, window_params = [{transform_indices = @transform_0, window_bounds = array<i64: 1, 16, 16, 32>}, {pipeline_mode = #tpu.pipeline_mode<synchronous>, transform_indices = @transform_1, window_bounds = array<i64: 288, 32>}, {pipeline_mode = #tpu.pipeline_mode<synchronous>, transform_indices = @transform_2, window_bounds = array<i64: 1, 32>}, {pipeline_mode = #tpu.pipeline_mode<synchronous>, transform_indices = @transform_3, window_bounds = array<i64: 288, 64>}, {pipeline_mode = #tpu.pipeline_mode<synchronous>, transform_indices = @transform_4, window_bounds = array<i64: 1, 64>}, {pipeline_mode = #tpu.pipeline_mode<synchronous>, transform_indices = @transform_5, window_bounds = array<i64: 576, 128>}, {pipeline_mode = #tpu.pipeline_mode<synchronous>, transform_indices = @transform_6, window_bounds = array<i64: 1, 128>}, {pipeline_mode = #tpu.pipeline_mode<synchronous>, transform_indices = @transform_7, window_bounds = array<i64: 1, 128>}, {pipeline_mode = #tpu.pipeline_mode<synchronous>, transform_indices = @transform_8, window_bounds = array<i64: 1, 1>}, {transform_indices = @transform_9, window_bounds = array<i64: 1, 1, 16>}]} {
    %c0 = arith.constant 0 : index
    %c0_0 = arith.constant 0 : index
    %c0_1 = arith.constant 0 : index
    %c0_2 = arith.constant 0 : index
    %0 = vector.load %arg1[%c0, %c0_0, %c0_1, %c0_2] : memref<1x16x16x32xbf16, #tpu.memory_space<vmem>>, vector<1x16x16x32xbf16>
    %cst = arith.constant 0.000000e+00 : bf16
    %1 = vector.broadcast %cst : bf16 to vector<1x1x18x32xbf16>
    %cst_3 = arith.constant 0.000000e+00 : bf16
    %2 = vector.broadcast %cst_3 : bf16 to vector<1x16x1x32xbf16>
    %c0_4 = arith.constant 0 : index
    %c0_5 = arith.constant 0 : index
    %c15 = arith.constant 15 : index
    %c0_6 = arith.constant 0 : index
    %3 = vector.load %arg11[%c0_4, %c0_5, %c15, %c0_6] : memref<1x18x48x32xbf16, #tpu.memory_space<vmem>>, vector<1x1x18x32xbf16>
    tpu.vector_store %arg11[%c0_4, %c0_5, %c15, %c0_6], %1 {strides = array<i32>} : memref<1x18x48x32xbf16, #tpu.memory_space<vmem>>, vector<1x1x18x32xbf16>,
    %c0_7 = arith.constant 0 : index
    %c17 = arith.constant 17 : index
    %c15_8 = arith.constant 15 : index
    %c0_9 = arith.constant 0 : index
    %4 = vector.load %arg11[%c0_7, %c17, %c15_8, %c0_9] : memref<1x18x48x32xbf16, #tpu.memory_space<vmem>>, vector<1x1x18x32xbf16>
    tpu.vector_store %arg11[%c0_7, %c17, %c15_8, %c0_9], %1 {strides = array<i32>} : memref<1x18x48x32xbf16, #tpu.memory_space<vmem>>, vector<1x1x18x32xbf16>,
    %c0_10 = arith.constant 0 : index
    %c1 = arith.constant 1 : index
    %c15_11 = arith.constant 15 : index
    %c0_12 = arith.constant 0 : index
    %5 = vector.load %arg11[%c0_10, %c1, %c15_11, %c0_12] : memref<1x18x48x32xbf16, #tpu.memory_space<vmem>>, vector<1x16x1x32xbf16>
    tpu.vector_store %arg11[%c0_10, %c1, %c15_11, %c0_12], %2 {strides = array<i32>} : memref<1x18x48x32xbf16, #tpu.memory_space<vmem>>, vector<1x16x1x32xbf16>,
    %c0_13 = arith.constant 0 : index
    %c1_14 = arith.constant 1 : index
    %c32 = arith.constant 32 : index
    %c0_15 = arith.constant 0 : index
    %6 = vector.load %arg11[%c0_13, %c1_14, %c32, %c0_15] : memref<1x18x48x32xbf16, #tpu.memory_space<vmem>>, vector<1x16x1x32xbf16>
    tpu.vector_store %arg11[%c0_13, %c1_14, %c32, %c0_15], %2 {strides = array<i32>} : memref<1x18x48x32xbf16, #tpu.memory_space<vmem>>, vector<1x16x1x32xbf16>,
    %c0_16 = arith.constant 0 : index
    %c1_17 = arith.constant 1 : index
    %c16 = arith.constant 16 : index
    %c0_18 = arith.constant 0 : index
    %7 = vector.load %arg11[%c0_16, %c1_17, %c16, %c0_18] : memref<1x18x48x32xbf16, #tpu.memory_space<vmem>>, vector<1x16x16x32xbf16>
    tpu.vector_store %arg11[%c0_16, %c1_17, %c16, %c0_18], %0 {strides = array<i32>} : memref<1x18x48x32xbf16, #tpu.memory_space<vmem>>, vector<1x16x16x32xbf16>,
    %c0_19 = arith.constant 0 : index
    %c0_20 = arith.constant 0 : index
    %c15_21 = arith.constant 15 : index
    %c0_22 = arith.constant 0 : index
    %8 = vector.load %arg11[%c0_19, %c0_20, %c15_21, %c0_22] : memref<1x18x48x32xbf16, #tpu.memory_space<vmem>>, vector<1x16x16x32xbf16>
    %9 = vector.shape_cast %8 : vector<1x16x16x32xbf16> to vector<256x32xbf16>
    %c0_23 = arith.constant 0 : index
    %c0_24 = arith.constant 0 : index
    %c16_25 = arith.constant 16 : index
    %c0_26 = arith.constant 0 : index
    %10 = vector.load %arg11[%c0_23, %c0_24, %c16_25, %c0_26] : memref<1x18x48x32xbf16, #tpu.memory_space<vmem>>, vector<1x16x16x32xbf16>
    %11 = vector.shape_cast %10 : vector<1x16x16x32xbf16> to vector<256x32xbf16>
    %c0_27 = arith.constant 0 : index
    %c0_28 = arith.constant 0 : index
    %c17_29 = arith.constant 17 : index
    %c0_30 = arith.constant 0 : index
    %12 = vector.load %arg11[%c0_27, %c0_28, %c17_29, %c0_30] : memref<1x18x48x32xbf16, #tpu.memory_space<vmem>>, vector<1x16x16x32xbf16>
    %13 = vector.shape_cast %12 : vector<1x16x16x32xbf16> to vector<256x32xbf16>
    %c0_31 = arith.constant 0 : index
    %c1_32 = arith.constant 1 : index
    %c15_33 = arith.constant 15 : index
    %c0_34 = arith.constant 0 : index
    %14 = vector.load %arg11[%c0_31, %c1_32, %c15_33, %c0_34] : memref<1x18x48x32xbf16, #tpu.memory_space<vmem>>, vector<1x16x16x32xbf16>
    %15 = vector.shape_cast %14 : vector<1x16x16x32xbf16> to vector<256x32xbf16>
    %c0_35 = arith.constant 0 : index
    %c1_36 = arith.constant 1 : index
    %c16_37 = arith.constant 16 : index
    %c0_38 = arith.constant 0 : index
    %16 = vector.load %arg11[%c0_35, %c1_36, %c16_37, %c0_38] : memref<1x18x48x32xbf16, #tpu.memory_space<vmem>>, vector<1x16x16x32xbf16>
    %17 = vector.shape_cast %16 : vector<1x16x16x32xbf16> to vector<256x32xbf16>
    %c0_39 = arith.constant 0 : index
    %c1_40 = arith.constant 1 : index
    %c17_41 = arith.constant 17 : index
    %c0_42 = arith.constant 0 : index
    %18 = vector.load %arg11[%c0_39, %c1_40, %c17_41, %c0_42] : memref<1x18x48x32xbf16, #tpu.memory_space<vmem>>, vector<1x16x16x32xbf16>
    %19 = vector.shape_cast %18 : vector<1x16x16x32xbf16> to vector<256x32xbf16>
    %c0_43 = arith.constant 0 : index
    %c2 = arith.constant 2 : index
    %c15_44 = arith.constant 15 : index
    %c0_45 = arith.constant 0 : index
    %20 = vector.load %arg11[%c0_43, %c2, %c15_44, %c0_45] : memref<1x18x48x32xbf16, #tpu.memory_space<vmem>>, vector<1x16x16x32xbf16>
    %21 = vector.shape_cast %20 : vector<1x16x16x32xbf16> to vector<256x32xbf16>
    %c0_46 = arith.constant 0 : index
    %c2_47 = arith.constant 2 : index
    %c16_48 = arith.constant 16 : index
    %c0_49 = arith.constant 0 : index
    %22 = vector.load %arg11[%c0_46, %c2_47, %c16_48, %c0_49] : memref<1x18x48x32xbf16, #tpu.memory_space<vmem>>, vector<1x16x16x32xbf16>
    %23 = vector.shape_cast %22 : vector<1x16x16x32xbf16> to vector<256x32xbf16>
    %c0_50 = arith.constant 0 : index
    %c2_51 = arith.constant 2 : index
    %c17_52 = arith.constant 17 : index
    %c0_53 = arith.constant 0 : index
    %24 = vector.load %arg11[%c0_50, %c2_51, %c17_52, %c0_53] : memref<1x18x48x32xbf16, #tpu.memory_space<vmem>>, vector<1x16x16x32xbf16>
    %25 = vector.shape_cast %24 : vector<1x16x16x32xbf16> to vector<256x32xbf16>
    %26 = tpu.concatenate %9, %11, %13, %15, %17, %19, %21, %23, %25 in 1 : vector<256x32xbf16>, vector<256x32xbf16>, vector<256x32xbf16>, vector<256x32xbf16>, vector<256x32xbf16>, vector<256x32xbf16>, vector<256x32xbf16>, vector<256x32xbf16>, vector<256x32xbf16> -> vector<256x288xbf16>
    %c0_54 = arith.constant 0 : index
    %c0_55 = arith.constant 0 : index
    %27 = vector.load %arg12[%c0_54, %c0_55] : memref<256x288xbf16, #tpu.memory_space<vmem>>, vector<256x288xbf16>
    tpu.vector_store %arg12[%c0_54, %c0_55], %26 {strides = array<i32>} : memref<256x288xbf16, #tpu.memory_space<vmem>>, vector<256x288xbf16>,
    %c0_56 = arith.constant 0 : index
    %c0_57 = arith.constant 0 : index
    %28 = vector.load %arg12[%c0_56, %c0_57] : memref<256x288xbf16, #tpu.memory_space<vmem>>, vector<256x288xbf16>
    %c0_58 = arith.constant 0 : index
    %c0_59 = arith.constant 0 : index
    %29 = vector.load %arg2[%c0_58, %c0_59] : memref<288x32xbf16, #tpu.memory_space<vmem>>, vector<288x32xbf16>
    %cst_60 = arith.constant dense<0.000000e+00> : vector<256x32xf32>
    %30 = tpu.matmul %28, %29, %cst_60 {dimension_numbers = #tpu.dot_dimension_numbers<[1], [0], [0], [1], [0, 0, 1, 1], [], []>} : vector<256x288xbf16>, vector<288x32xbf16>, vector<256x32xf32> -> vector<256x32xf32>
    %c0_61 = arith.constant 0 : index
    %c0_62 = arith.constant 0 : index
    %31 = vector.load %arg3[%c0_61, %c0_62] : memref<1x32xf32, #tpu.memory_space<vmem>>, vector<1x32xf32>
    %32 = vector.broadcast %31 : vector<1x32xf32> to vector<256x32xf32>
    %33 = arith.addf %30, %32 : vector<256x32xf32>
    %cst_63 = arith.constant 0.000000e+00 : f32
    %34 = vector.broadcast %cst_63 : f32 to vector<256x32xf32>
    %35 = arith.maximumf %33, %34 : vector<256x32xf32>
    %36 = vector.shape_cast %35 : vector<256x32xf32> to vector<8x2x8x2x32xf32>
    %cst_64 = arith.constant dense<0xFF800000> : vector<8x2x8x32xf32>
    %37 = vector.multi_reduction <maximumf>, %36, %cst_64 [3] : vector<8x2x8x2x32xf32> to vector<8x2x8x32xf32>
    %cst_65 = arith.constant dense<0xFF800000> : vector<8x8x32xf32>
    %38 = vector.multi_reduction <maximumf>, %37, %cst_65 [1] : vector<8x2x8x32xf32> to vector<8x8x32xf32>
    %39 = vector.shape_cast %38 : vector<8x8x32xf32> to vector<1x8x8x32xf32>
    %cst_66 = arith.constant 0.000000e+00 : bf16
    %40 = vector.broadcast %cst_66 : bf16 to vector<1x1x10x32xbf16>
    %cst_67 = arith.constant 0.000000e+00 : bf16
    %41 = vector.broadcast %cst_67 : bf16 to vector<1x8x1x32xbf16>
    %c0_68 = arith.constant 0 : index
    %c0_69 = arith.constant 0 : index
    %c15_70 = arith.constant 15 : index
    %c0_71 = arith.constant 0 : index
    %42 = vector.load %arg13[%c0_68, %c0_69, %c15_70, %c0_71] : memref<1x10x32x32xbf16, #tpu.memory_space<vmem>>, vector<1x1x10x32xbf16>
    tpu.vector_store %arg13[%c0_68, %c0_69, %c15_70, %c0_71], %40 {strides = array<i32>} : memref<1x10x32x32xbf16, #tpu.memory_space<vmem>>, vector<1x1x10x32xbf16>,
    %c0_72 = arith.constant 0 : index
    %c9 = arith.constant 9 : index
    %c15_73 = arith.constant 15 : index
    %c0_74 = arith.constant 0 : index
    %43 = vector.load %arg13[%c0_72, %c9, %c15_73, %c0_74] : memref<1x10x32x32xbf16, #tpu.memory_space<vmem>>, vector<1x1x10x32xbf16>
    tpu.vector_store %arg13[%c0_72, %c9, %c15_73, %c0_74], %40 {strides = array<i32>} : memref<1x10x32x32xbf16, #tpu.memory_space<vmem>>, vector<1x1x10x32xbf16>,
    %c0_75 = arith.constant 0 : index
    %c1_76 = arith.constant 1 : index
    %c15_77 = arith.constant 15 : index
    %c0_78 = arith.constant 0 : index
    %44 = vector.load %arg13[%c0_75, %c1_76, %c15_77, %c0_78] : memref<1x10x32x32xbf16, #tpu.memory_space<vmem>>, vector<1x8x1x32xbf16>
    tpu.vector_store %arg13[%c0_75, %c1_76, %c15_77, %c0_78], %41 {strides = array<i32>} : memref<1x10x32x32xbf16, #tpu.memory_space<vmem>>, vector<1x8x1x32xbf16>,
    %c0_79 = arith.constant 0 : index
    %c1_80 = arith.constant 1 : index
    %c24 = arith.constant 24 : index
    %c0_81 = arith.constant 0 : index
    %45 = vector.load %arg13[%c0_79, %c1_80, %c24, %c0_81] : memref<1x10x32x32xbf16, #tpu.memory_space<vmem>>, vector<1x8x1x32xbf16>
    tpu.vector_store %arg13[%c0_79, %c1_80, %c24, %c0_81], %41 {strides = array<i32>} : memref<1x10x32x32xbf16, #tpu.memory_space<vmem>>, vector<1x8x1x32xbf16>,
    %46 = arith.truncf %39 : vector<1x8x8x32xf32> to vector<1x8x8x32xbf16>
    %c0_82 = arith.constant 0 : index
    %c1_83 = arith.constant 1 : index
    %c16_84 = arith.constant 16 : index
    %c0_85 = arith.constant 0 : index
    %47 = vector.load %arg13[%c0_82, %c1_83, %c16_84, %c0_85] : memref<1x10x32x32xbf16, #tpu.memory_space<vmem>>, vector<1x8x8x32xbf16>
    tpu.vector_store %arg13[%c0_82, %c1_83, %c16_84, %c0_85], %46 {strides = array<i32>} : memref<1x10x32x32xbf16, #tpu.memory_space<vmem>>, vector<1x8x8x32xbf16>,
    %c0_86 = arith.constant 0 : index
    %c0_87 = arith.constant 0 : index
    %c15_88 = arith.constant 15 : index
    %c0_89 = arith.constant 0 : index
    %48 = vector.load %arg13[%c0_86, %c0_87, %c15_88, %c0_89] : memref<1x10x32x32xbf16, #tpu.memory_space<vmem>>, vector<1x8x8x32xbf16>
    %49 = vector.shape_cast %48 : vector<1x8x8x32xbf16> to vector<64x32xbf16>
    %c0_90 = arith.constant 0 : index
    %c0_91 = arith.constant 0 : index
    %c16_92 = arith.constant 16 : index
    %c0_93 = arith.constant 0 : index
    %50 = vector.load %arg13[%c0_90, %c0_91, %c16_92, %c0_93] : memref<1x10x32x32xbf16, #tpu.memory_space<vmem>>, vector<1x8x8x32xbf16>
    %51 = vector.shape_cast %50 : vector<1x8x8x32xbf16> to vector<64x32xbf16>
    %c0_94 = arith.constant 0 : index
    %c0_95 = arith.constant 0 : index
    %c17_96 = arith.constant 17 : index
    %c0_97 = arith.constant 0 : index
    %52 = vector.load %arg13[%c0_94, %c0_95, %c17_96, %c0_97] : memref<1x10x32x32xbf16, #tpu.memory_space<vmem>>, vector<1x8x8x32xbf16>
    %53 = vector.shape_cast %52 : vector<1x8x8x32xbf16> to vector<64x32xbf16>
    %c0_98 = arith.constant 0 : index
    %c1_99 = arith.constant 1 : index
    %c15_100 = arith.constant 15 : index
    %c0_101 = arith.constant 0 : index
    %54 = vector.load %arg13[%c0_98, %c1_99, %c15_100, %c0_101] : memref<1x10x32x32xbf16, #tpu.memory_space<vmem>>, vector<1x8x8x32xbf16>
    %55 = vector.shape_cast %54 : vector<1x8x8x32xbf16> to vector<64x32xbf16>
    %c0_102 = arith.constant 0 : index
    %c1_103 = arith.constant 1 : index
    %c16_104 = arith.constant 16 : index
    %c0_105 = arith.constant 0 : index
    %56 = vector.load %arg13[%c0_102, %c1_103, %c16_104, %c0_105] : memref<1x10x32x32xbf16, #tpu.memory_space<vmem>>, vector<1x8x8x32xbf16>
    %57 = vector.shape_cast %56 : vector<1x8x8x32xbf16> to vector<64x32xbf16>
    %c0_106 = arith.constant 0 : index
    %c1_107 = arith.constant 1 : index
    %c17_108 = arith.constant 17 : index
    %c0_109 = arith.constant 0 : index
    %58 = vector.load %arg13[%c0_106, %c1_107, %c17_108, %c0_109] : memref<1x10x32x32xbf16, #tpu.memory_space<vmem>>, vector<1x8x8x32xbf16>
    %59 = vector.shape_cast %58 : vector<1x8x8x32xbf16> to vector<64x32xbf16>
    %c0_110 = arith.constant 0 : index
    %c2_111 = arith.constant 2 : index
    %c15_112 = arith.constant 15 : index
    %c0_113 = arith.constant 0 : index
    %60 = vector.load %arg13[%c0_110, %c2_111, %c15_112, %c0_113] : memref<1x10x32x32xbf16, #tpu.memory_space<vmem>>, vector<1x8x8x32xbf16>
    %61 = vector.shape_cast %60 : vector<1x8x8x32xbf16> to vector<64x32xbf16>
    %c0_114 = arith.constant 0 : index
    %c2_115 = arith.constant 2 : index
    %c16_116 = arith.constant 16 : index
    %c0_117 = arith.constant 0 : index
    %62 = vector.load %arg13[%c0_114, %c2_115, %c16_116, %c0_117] : memref<1x10x32x32xbf16, #tpu.memory_space<vmem>>, vector<1x8x8x32xbf16>
    %63 = vector.shape_cast %62 : vector<1x8x8x32xbf16> to vector<64x32xbf16>
    %c0_118 = arith.constant 0 : index
    %c2_119 = arith.constant 2 : index
    %c17_120 = arith.constant 17 : index
    %c0_121 = arith.constant 0 : index
    %64 = vector.load %arg13[%c0_118, %c2_119, %c17_120, %c0_121] : memref<1x10x32x32xbf16, #tpu.memory_space<vmem>>, vector<1x8x8x32xbf16>
    %65 = vector.shape_cast %64 : vector<1x8x8x32xbf16> to vector<64x32xbf16>
    %66 = tpu.concatenate %49, %51, %53, %55, %57, %59, %61, %63, %65 in 1 : vector<64x32xbf16>, vector<64x32xbf16>, vector<64x32xbf16>, vector<64x32xbf16>, vector<64x32xbf16>, vector<64x32xbf16>, vector<64x32xbf16>, vector<64x32xbf16>, vector<64x32xbf16> -> vector<64x288xbf16>
    %c0_122 = arith.constant 0 : index
    %c0_123 = arith.constant 0 : index
    %67 = vector.load %arg14[%c0_122, %c0_123] : memref<64x288xbf16, #tpu.memory_space<vmem>>, vector<64x288xbf16>
    tpu.vector_store %arg14[%c0_122, %c0_123], %66 {strides = array<i32>} : memref<64x288xbf16, #tpu.memory_space<vmem>>, vector<64x288xbf16>,
    %c0_124 = arith.constant 0 : index
    %c0_125 = arith.constant 0 : index
    %68 = vector.load %arg14[%c0_124, %c0_125] : memref<64x288xbf16, #tpu.memory_space<vmem>>, vector<64x288xbf16>
    %c0_126 = arith.constant 0 : index
    %c0_127 = arith.constant 0 : index
    %69 = vector.load %arg4[%c0_126, %c0_127] : memref<288x64xbf16, #tpu.memory_space<vmem>>, vector<288x64xbf16>
    %cst_128 = arith.constant dense<0.000000e+00> : vector<64x64xf32>
    %70 = tpu.matmul %68, %69, %cst_128 {dimension_numbers = #tpu.dot_dimension_numbers<[1], [0], [0], [1], [0, 0, 1, 1], [], []>} : vector<64x288xbf16>, vector<288x64xbf16>, vector<64x64xf32> -> vector<64x64xf32>
    %c0_129 = arith.constant 0 : index
    %c0_130 = arith.constant 0 : index
    %71 = vector.load %arg5[%c0_129, %c0_130] : memref<1x64xf32, #tpu.memory_space<vmem>>, vector<1x64xf32>
    %72 = vector.broadcast %71 : vector<1x64xf32> to vector<64x64xf32>
    %73 = arith.addf %70, %72 : vector<64x64xf32>
    %cst_131 = arith.constant 0.000000e+00 : f32
    %74 = vector.broadcast %cst_131 : f32 to vector<64x64xf32>
    %75 = arith.maximumf %73, %74 : vector<64x64xf32>
    %76 = vector.shape_cast %75 : vector<64x64xf32> to vector<4x2x4x2x64xf32>
    %cst_132 = arith.constant dense<0xFF800000> : vector<4x2x4x64xf32>
    %77 = vector.multi_reduction <maximumf>, %76, %cst_132 [3] : vector<4x2x4x2x64xf32> to vector<4x2x4x64xf32>
    %cst_133 = arith.constant dense<0xFF800000> : vector<4x4x64xf32>
    %78 = vector.multi_reduction <maximumf>, %77, %cst_133 [1] : vector<4x2x4x64xf32> to vector<4x4x64xf32>
    %79 = vector.shape_cast %78 : vector<4x4x64xf32> to vector<1x4x4x64xf32>
    %cst_134 = arith.constant 0.000000e+00 : bf16
    %80 = vector.broadcast %cst_134 : bf16 to vector<1x1x6x64xbf16>
    %cst_135 = arith.constant 0.000000e+00 : bf16
    %81 = vector.broadcast %cst_135 : bf16 to vector<1x4x1x64xbf16>
    %c0_136 = arith.constant 0 : index
    %c0_137 = arith.constant 0 : index
    %c15_138 = arith.constant 15 : index
    %c0_139 = arith.constant 0 : index
    %82 = vector.load %arg15[%c0_136, %c0_137, %c15_138, %c0_139] : memref<1x6x32x64xbf16, #tpu.memory_space<vmem>>, vector<1x1x6x64xbf16>
    tpu.vector_store %arg15[%c0_136, %c0_137, %c15_138, %c0_139], %80 {strides = array<i32>} : memref<1x6x32x64xbf16, #tpu.memory_space<vmem>>, vector<1x1x6x64xbf16>,
    %c0_140 = arith.constant 0 : index
    %c5 = arith.constant 5 : index
    %c15_141 = arith.constant 15 : index
    %c0_142 = arith.constant 0 : index
    %83 = vector.load %arg15[%c0_140, %c5, %c15_141, %c0_142] : memref<1x6x32x64xbf16, #tpu.memory_space<vmem>>, vector<1x1x6x64xbf16>
    tpu.vector_store %arg15[%c0_140, %c5, %c15_141, %c0_142], %80 {strides = array<i32>} : memref<1x6x32x64xbf16, #tpu.memory_space<vmem>>, vector<1x1x6x64xbf16>,
    %c0_143 = arith.constant 0 : index
    %c1_144 = arith.constant 1 : index
    %c15_145 = arith.constant 15 : index
    %c0_146 = arith.constant 0 : index
    %84 = vector.load %arg15[%c0_143, %c1_144, %c15_145, %c0_146] : memref<1x6x32x64xbf16, #tpu.memory_space<vmem>>, vector<1x4x1x64xbf16>
    tpu.vector_store %arg15[%c0_143, %c1_144, %c15_145, %c0_146], %81 {strides = array<i32>} : memref<1x6x32x64xbf16, #tpu.memory_space<vmem>>, vector<1x4x1x64xbf16>,
    %c0_147 = arith.constant 0 : index
    %c1_148 = arith.constant 1 : index
    %c20 = arith.constant 20 : index
    %c0_149 = arith.constant 0 : index
    %85 = vector.load %arg15[%c0_147, %c1_148, %c20, %c0_149] : memref<1x6x32x64xbf16, #tpu.memory_space<vmem>>, vector<1x4x1x64xbf16>
    tpu.vector_store %arg15[%c0_147, %c1_148, %c20, %c0_149], %81 {strides = array<i32>} : memref<1x6x32x64xbf16, #tpu.memory_space<vmem>>, vector<1x4x1x64xbf16>,
    %86 = arith.truncf %79 : vector<1x4x4x64xf32> to vector<1x4x4x64xbf16>
    %c0_150 = arith.constant 0 : index
    %c1_151 = arith.constant 1 : index
    %c16_152 = arith.constant 16 : index
    %c0_153 = arith.constant 0 : index
    %87 = vector.load %arg15[%c0_150, %c1_151, %c16_152, %c0_153] : memref<1x6x32x64xbf16, #tpu.memory_space<vmem>>, vector<1x4x4x64xbf16>
    tpu.vector_store %arg15[%c0_150, %c1_151, %c16_152, %c0_153], %86 {strides = array<i32>} : memref<1x6x32x64xbf16, #tpu.memory_space<vmem>>, vector<1x4x4x64xbf16>,
    %c0_154 = arith.constant 0 : index
    %c0_155 = arith.constant 0 : index
    %c15_156 = arith.constant 15 : index
    %c0_157 = arith.constant 0 : index
    %88 = vector.load %arg15[%c0_154, %c0_155, %c15_156, %c0_157] : memref<1x6x32x64xbf16, #tpu.memory_space<vmem>>, vector<1x4x4x64xbf16>
    %89 = vector.shape_cast %88 : vector<1x4x4x64xbf16> to vector<16x64xbf16>
    %c0_158 = arith.constant 0 : index
    %c0_159 = arith.constant 0 : index
    %c16_160 = arith.constant 16 : index
    %c0_161 = arith.constant 0 : index
    %90 = vector.load %arg15[%c0_158, %c0_159, %c16_160, %c0_161] : memref<1x6x32x64xbf16, #tpu.memory_space<vmem>>, vector<1x4x4x64xbf16>
    %91 = vector.shape_cast %90 : vector<1x4x4x64xbf16> to vector<16x64xbf16>
    %c0_162 = arith.constant 0 : index
    %c0_163 = arith.constant 0 : index
    %c17_164 = arith.constant 17 : index
    %c0_165 = arith.constant 0 : index
    %92 = vector.load %arg15[%c0_162, %c0_163, %c17_164, %c0_165] : memref<1x6x32x64xbf16, #tpu.memory_space<vmem>>, vector<1x4x4x64xbf16>
    %93 = vector.shape_cast %92 : vector<1x4x4x64xbf16> to vector<16x64xbf16>
    %c0_166 = arith.constant 0 : index
    %c1_167 = arith.constant 1 : index
    %c15_168 = arith.constant 15 : index
    %c0_169 = arith.constant 0 : index
    %94 = vector.load %arg15[%c0_166, %c1_167, %c15_168, %c0_169] : memref<1x6x32x64xbf16, #tpu.memory_space<vmem>>, vector<1x4x4x64xbf16>
    %95 = vector.shape_cast %94 : vector<1x4x4x64xbf16> to vector<16x64xbf16>
    %c0_170 = arith.constant 0 : index
    %c1_171 = arith.constant 1 : index
    %c16_172 = arith.constant 16 : index
    %c0_173 = arith.constant 0 : index
    %96 = vector.load %arg15[%c0_170, %c1_171, %c16_172, %c0_173] : memref<1x6x32x64xbf16, #tpu.memory_space<vmem>>, vector<1x4x4x64xbf16>
    %97 = vector.shape_cast %96 : vector<1x4x4x64xbf16> to vector<16x64xbf16>
    %c0_174 = arith.constant 0 : index
    %c1_175 = arith.constant 1 : index
    %c17_176 = arith.constant 17 : index
    %c0_177 = arith.constant 0 : index
    %98 = vector.load %arg15[%c0_174, %c1_175, %c17_176, %c0_177] : memref<1x6x32x64xbf16, #tpu.memory_space<vmem>>, vector<1x4x4x64xbf16>
    %99 = vector.shape_cast %98 : vector<1x4x4x64xbf16> to vector<16x64xbf16>
    %c0_178 = arith.constant 0 : index
    %c2_179 = arith.constant 2 : index
    %c15_180 = arith.constant 15 : index
    %c0_181 = arith.constant 0 : index
    %100 = vector.load %arg15[%c0_178, %c2_179, %c15_180, %c0_181] : memref<1x6x32x64xbf16, #tpu.memory_space<vmem>>, vector<1x4x4x64xbf16>
    %101 = vector.shape_cast %100 : vector<1x4x4x64xbf16> to vector<16x64xbf16>
    %c0_182 = arith.constant 0 : index
    %c2_183 = arith.constant 2 : index
    %c16_184 = arith.constant 16 : index
    %c0_185 = arith.constant 0 : index
    %102 = vector.load %arg15[%c0_182, %c2_183, %c16_184, %c0_185] : memref<1x6x32x64xbf16, #tpu.memory_space<vmem>>, vector<1x4x4x64xbf16>
    %103 = vector.shape_cast %102 : vector<1x4x4x64xbf16> to vector<16x64xbf16>
    %c0_186 = arith.constant 0 : index
    %c2_187 = arith.constant 2 : index
    %c17_188 = arith.constant 17 : index
    %c0_189 = arith.constant 0 : index
    %104 = vector.load %arg15[%c0_186, %c2_187, %c17_188, %c0_189] : memref<1x6x32x64xbf16, #tpu.memory_space<vmem>>, vector<1x4x4x64xbf16>
    %105 = vector.shape_cast %104 : vector<1x4x4x64xbf16> to vector<16x64xbf16>
    %106 = tpu.concatenate %89, %91, %93, %95, %97, %99, %101, %103, %105 in 1 : vector<16x64xbf16>, vector<16x64xbf16>, vector<16x64xbf16>, vector<16x64xbf16>, vector<16x64xbf16>, vector<16x64xbf16>, vector<16x64xbf16>, vector<16x64xbf16>, vector<16x64xbf16> -> vector<16x576xbf16>
    %c0_190 = arith.constant 0 : index
    %c0_191 = arith.constant 0 : index
    %107 = vector.load %arg16[%c0_190, %c0_191] : memref<16x576xbf16, #tpu.memory_space<vmem>>, vector<16x576xbf16>
    tpu.vector_store %arg16[%c0_190, %c0_191], %106 {strides = array<i32>} : memref<16x576xbf16, #tpu.memory_space<vmem>>, vector<16x576xbf16>,
    %c0_192 = arith.constant 0 : index
    %c0_193 = arith.constant 0 : index
    %108 = vector.load %arg16[%c0_192, %c0_193] : memref<16x576xbf16, #tpu.memory_space<vmem>>, vector<16x576xbf16>
    %c0_194 = arith.constant 0 : index
    %c0_195 = arith.constant 0 : index
    %109 = vector.load %arg6[%c0_194, %c0_195] : memref<576x128xbf16, #tpu.memory_space<vmem>>, vector<576x128xbf16>
    %cst_196 = arith.constant dense<0.000000e+00> : vector<16x128xf32>
    %110 = tpu.matmul %108, %109, %cst_196 {dimension_numbers = #tpu.dot_dimension_numbers<[1], [0], [0], [1], [0, 0, 1, 1], [], []>} : vector<16x576xbf16>, vector<576x128xbf16>, vector<16x128xf32> -> vector<16x128xf32>
    %c0_197 = arith.constant 0 : index
    %c0_198 = arith.constant 0 : index
    %111 = vector.load %arg7[%c0_197, %c0_198] : memref<1x128xf32, #tpu.memory_space<vmem>>, vector<1x128xf32>
    %112 = vector.broadcast %111 : vector<1x128xf32> to vector<16x128xf32>
    %113 = arith.addf %110, %112 : vector<16x128xf32>
    %cst_199 = arith.constant 0.000000e+00 : f32
    %114 = vector.broadcast %cst_199 : f32 to vector<16x128xf32>
    %115 = arith.maximumf %113, %114 : vector<16x128xf32>
    %c0_200 = arith.constant 0 : index
    %c0_201 = arith.constant 0 : index
    %116 = vector.load %arg8[%c0_200, %c0_201] : memref<1x128xf32, #tpu.memory_space<vmem>>, vector<1x128xf32>
    %117 = vector.broadcast %116 : vector<1x128xf32> to vector<16x128xf32>
    %118 = arith.mulf %115, %117 : vector<16x128xf32>
    %cst_202 = arith.constant dense<0.000000e+00> : vector<16xf32>
    %119 = vector.multi_reduction <add>, %118, %cst_202 [1] : vector<16x128xf32> to vector<16xf32>
    %c0_203 = arith.constant 0 : index
    %c0_204 = arith.constant 0 : index
    %120 = vector.load %arg9[%c0_203, %c0_204] : memref<1x1xf32, #tpu.memory_space<vmem>>, vector<1x1xf32>
    %121 = vector.shape_cast %119 : vector<16xf32> to vector<1x16xf32>
    %122 = vector.broadcast %120 : vector<1x1xf32> to vector<1x16xf32>
    %123 = arith.addf %121, %122 : vector<1x16xf32>
    %124 = vector.shape_cast %123 : vector<1x16xf32> to vector<1x1x16xf32>
    %c0_205 = arith.constant 0 : index
    %c0_206 = arith.constant 0 : index
    %c0_207 = arith.constant 0 : index
    %125 = vector.load %arg10[%c0_205, %c0_206, %c0_207] : memref<1x1x16xf32, #tpu.memory_space<vmem>>, vector<1x1x16xf32>
    tpu.vector_store %arg10[%c0_205, %c0_206, %c0_207], %124 {strides = array<i32>} : memref<1x1x16xf32, #tpu.memory_space<vmem>>, vector<1x1x16xf32>,
    return
  }
  func.func @transform_0(%arg0: i32) -> (i32, i32, i32, i32) {
    %c0_i32 = arith.constant 0 : i32
    %c0_i32_0 = arith.constant 0 : i32
    %c0_i32_1 = arith.constant 0 : i32
    %c0_i32_2 = arith.constant 0 : i32
    return %arg0, %c0_i32, %c0_i32_0, %c0_i32_1 : i32, i32, i32, i32
  }
  func.func @transform_1(%arg0: i32) -> (i32, i32) {
    %c0_i32 = arith.constant 0 : i32
    %c0_i32_0 = arith.constant 0 : i32
    %c0_i32_1 = arith.constant 0 : i32
    return %c0_i32, %c0_i32_0 : i32, i32
  }
  func.func @transform_2(%arg0: i32) -> (i32, i32) {
    %c0_i32 = arith.constant 0 : i32
    %c0_i32_0 = arith.constant 0 : i32
    %c0_i32_1 = arith.constant 0 : i32
    return %c0_i32, %c0_i32_0 : i32, i32
  }
  func.func @transform_3(%arg0: i32) -> (i32, i32) {
    %c0_i32 = arith.constant 0 : i32
    %c0_i32_0 = arith.constant 0 : i32
    %c0_i32_1 = arith.constant 0 : i32
    return %c0_i32, %c0_i32_0 : i32, i32
  }
  func.func @transform_4(%arg0: i32) -> (i32, i32) {
    %c0_i32 = arith.constant 0 : i32
    %c0_i32_0 = arith.constant 0 : i32
    %c0_i32_1 = arith.constant 0 : i32
    return %c0_i32, %c0_i32_0 : i32, i32
  }
  func.func @transform_5(%arg0: i32) -> (i32, i32) {
    %c0_i32 = arith.constant 0 : i32
    %c0_i32_0 = arith.constant 0 : i32
    %c0_i32_1 = arith.constant 0 : i32
    return %c0_i32, %c0_i32_0 : i32, i32
  }
  func.func @transform_6(%arg0: i32) -> (i32, i32) {
    %c0_i32 = arith.constant 0 : i32
    %c0_i32_0 = arith.constant 0 : i32
    %c0_i32_1 = arith.constant 0 : i32
    return %c0_i32, %c0_i32_0 : i32, i32
  }
  func.func @transform_7(%arg0: i32) -> (i32, i32) {
    %c0_i32 = arith.constant 0 : i32
    %c0_i32_0 = arith.constant 0 : i32
    %c0_i32_1 = arith.constant 0 : i32
    return %c0_i32, %c0_i32_0 : i32, i32
  }
  func.func @transform_8(%arg0: i32) -> (i32, i32) {
    %c0_i32 = arith.constant 0 : i32
    %c0_i32_0 = arith.constant 0 : i32
    %c0_i32_1 = arith.constant 0 : i32
    return %c0_i32, %c0_i32_0 : i32, i32
  }
  func.func @transform_9(%arg0: i32) -> (i32, i32, i32) {
    %c0_i32 = arith.constant 0 : i32
    %c0_i32_0 = arith.constant 0 : i32
    %c0_i32_1 = arith.constant 0 : i32
    return %arg0, %c0_i32, %c0_i32_0 : i32, i32, i32
  }
}

</mosaic_0001>

<llo_original>
// kernel: tpu_custom_call.1
$region0: #{tpu_custom_call.1}
  #allocation0 [shape = 'u32[]', space=smem, size = 0x4, offset = 0x4, fixed_abs, tag = 'smem constant byte address 0x4 - core index']
  #allocation1 [shape = 'u32[72,128]{1,0:T(1,128)}', space=vmem, size = 0x9000, scoped, tag = 'internal scratch']
  #allocation2 [shape = 'bf16[1,18,48,32]{3,2,1,0:T(8,128)(2,1)}', space=vmem, size = 0x36000, scoped, tag = 'scratch operand']
  #allocation3 [shape = 'bf16[256,288]{1,0:T(8,128)(2,1)}', space=vmem, size = 0x30000, scoped, tag = 'scratch operand']
  #allocation4 [shape = 'bf16[1,10,32,32]{3,2,1,0:T(8,128)(2,1)}', space=vmem, size = 0x14000, scoped, tag = 'scratch operand']
  #allocation5 [shape = 'bf16[64,288]{1,0:T(8,128)(2,1)}', space=vmem, size = 0xc000, scoped, tag = 'scratch operand']
  #allocation6 [shape = 'bf16[1,6,32,64]{3,2,1,0:T(8,128)(2,1)}', space=vmem, size = 0xc000, scoped, tag = 'scratch operand']
  #allocation7 [shape = 'bf16[16,576]{1,0:T(8,128)(2,1)}', space=vmem, size = 0x5000, scoped, tag = 'scratch operand']
  #allocation8 [shape = 'f32[1,1]{1,0:T(1,128)S(1)}', space=vmem, size = 0x200, scoped, tag = 'scoped memory for tpu_custom_call.1']
  %s0 = inlined_call_operand.hbm [shape: bf16[2,16,16,32], index: 0, kind: input, shape index: {}]
  %s1 = inlined_call_operand.vmem [shape: bf16[288,32], index: 1, kind: input, shape index: {}]
  %s2 = inlined_call_operand.vmem [shape: f32[1,32], index: 2, kind: input, shape index: {}]
  %s3 = inlined_call_operand.vmem [shape: bf16[288,64], index: 3, kind: input, shape index: {}]
  %s4 = inlined_call_operand.vmem [shape: f32[1,64], index: 4, kind: input, shape index: {}]
  %s5 = inlined_call_operand.vmem [shape: bf16[576,128], index: 5, kind: input, shape index: {}]
  %s6 = inlined_call_operand.vmem [shape: f32[1,128], index: 6, kind: input, shape index: {}]
  %s7 = inlined_call_operand.vmem [shape: f32[1,128], index: 7, kind: input, shape index: {}]
  %s8 = inlined_call_operand.<no memory space> [shape: f32[1,1], index: 8, kind: input, shape index: {}]
  %s9 = inlined_call_operand.hbm [shape: f32[2,1,16], index: 9, kind: output, shape index: {}]
  %s10 = sld [smem:[#allocation0]]
  $region73: #{tpu_custom_call.1} parent=0
    _
  %s12 = ssub.s32 1, %s10
  %s13 = scalar_select 0, %s12, %s10
  %v14 = vstv %s8
  %15 = vst [vmem:[#allocation8] sm:$0x1] %v14
  $region1: #{tpu_custom_call.1} parent=0
    #allocation9 [shape = 'u8[131072]{0}', space=vmem, size = 0x20000, scoped, tag = 'input window, operand 0']
    #allocation10 [shape = 's32[2]{0}', space=sflag, size = 0x8, scoped, tag = 'scoped memory for tpu_custom_call.1']
    #allocation11 [shape = 's32[2]{0}', space=sflag, size = 0x8, scoped, tag = 'scoped memory for tpu_custom_call.1']
    #allocation12 [shape = 'u8[1024]{0}', space=vmem, size = 0x400, scoped, tag = 'output window, operand 0']
    %16 = vsyncpa [#allocation10], 0
    %s17 = scalar_lea.sflag [#allocation10], 1
    %18 = vsyncpa %s17, 0
    %19 = vsyncpa [#allocation11], 0
    %s20 = scalar_lea.sflag [#allocation11], 1
    %21 = vsyncpa %s20, 0
    loop: start=0, step=1, limit=4
    $region2: #{tpu_custom_call.1} parent=1 // loop_pre_header
      _
    $region3: #{tpu_custom_call.1} parent=1 // loop_header
      %s23 = sphi 0, %s27
      %p24 = scmp.ge.s32.totalorder %s23, 4
      %s33 = sphi 0, %s35
      %s36 = sphi 0, %s33
      %s37 = sphi 0, %s36
      %s53 = sphi 0, %s37
      %s57 = sphi 0, %s57
      %s59 = sphi 0, %s57
      %s60 = sphi 0, %s59
      %s74 = sphi 0, %s60
      %s78 = sphi 0, %s78
      %s80 = sphi 0, %s78
      %s81 = sphi 0, %s80
      %s95 = sphi 0, %s81
      %s99 = sphi 0, %s99
      %s101 = sphi 0, %s99
      %s102 = sphi 0, %s101
      %s116 = sphi 0, %s102
      %s120 = sphi 0, %s120
      %s122 = sphi 0, %s120
      %s123 = sphi 0, %s122
      %s137 = sphi 0, %s123
      %s141 = sphi 0, %s141
      %s143 = sphi 0, %s141
      %s144 = sphi 0, %s143
      %s158 = sphi 0, %s144
      %s162 = sphi 0, %s162
      %s164 = sphi 0, %s162
      %s165 = sphi 0, %s164
      %s179 = sphi 0, %s165
      %s183 = sphi 0, %s183
      %s185 = sphi 0, %s183
      %s186 = sphi 0, %s185
      %s200 = sphi 0, %s186
      %s204 = sphi 0, %s204
      %s206 = sphi 0, %s204
      %s207 = sphi 0, %s206
      %s221 = sphi 0, %s207
      %s227 = sphi 0, %s229
      %s230 = sphi 0, %s227
      %s231 = sphi 0, %s230
      %s247 = sphi 0, %s231
    $region4: #{tpu_custom_call.1} parent=1 // loop_header_branch
      %26 = sbr.rel (%p24) target = $region8
    $region5: #{tpu_custom_call.1} parent=1 // loop_body
      %s28 = ssub.s32 %s23, 1
      %s29 = ssub.s32 %s23, 2
      %s30 = sadd.s32 %s23, 1
      %s31 = ssub.s32 %s23, %s30
      %p32 = scmp.eq.s32.totalorder %s31, 0
      %s34 = sadd.s32 %s33, 1
      %s35 = scalar_select %p32, %s33, %s34
      %p38 = pneg %p32
      %p39 = scmp.eq.s32.totalorder %s23, 1
      %p40 = por %p38, %p39
      %p41 = scmp.ne.s32.totalorder %s33, %s36
      %p42 = scmp.eq.s32.totalorder %s23, 0
      %p43 = por %p41, %p42
      %p44 = scmp.ne.s32.totalorder %s33, %s36
      %p45 = scmp.eq.s32.totalorder %s28, 1
      %p46 = por %p44, %p45
      %p47 = scmp.ne.s32.totalorder %s36, %s37
      %p48 = scmp.eq.s32.totalorder %s28, 0
      %p49 = por %p47, %p48
      %p50 = scmp.ne.s32.totalorder %s36, %s37
      %p51 = scmp.eq.s32.totalorder %s29, 1
      %p52 = por %p50, %p51
      %p54 = scmp.ne.s32.totalorder %s37, %s53
      %p55 = scmp.eq.s32.totalorder %s29, 0
      %p56 = por %p54, %p55
      %s58 = sadd.s32 %s57, 1
      %p61 = scmp.eq.s32.totalorder %s23, 1
      %p62 = scmp.ne.s32.totalorder %s57, %s59
      %p63 = scmp.eq.s32.totalorder %s23, 0
      %p64 = por %p62, %p63
      %p65 = scmp.ne.s32.totalorder %s57, %s59
      %p66 = scmp.eq.s32.totalorder %s28, 1
      %p67 = por %p65, %p66
      %p68 = scmp.ne.s32.totalorder %s59, %s60
      %p69 = scmp.eq.s32.totalorder %s28, 0
      %p70 = por %p68, %p69
      %p71 = scmp.ne.s32.totalorder %s59, %s60
      %p72 = scmp.eq.s32.totalorder %s29, 1
      %p73 = por %p71, %p72
      %p75 = scmp.ne.s32.totalorder %s60, %s74
      %p76 = scmp.eq.s32.totalorder %s29, 0
      %p77 = por %p75, %p76
      %s79 = sadd.s32 %s78, 1
      %p82 = scmp.eq.s32.totalorder %s23, 1
      %p83 = scmp.ne.s32.totalorder %s78, %s80
      %p84 = scmp.eq.s32.totalorder %s23, 0
      %p85 = por %p83, %p84
      %p86 = scmp.ne.s32.totalorder %s78, %s80
      %p87 = scmp.eq.s32.totalorder %s28, 1
      %p88 = por %p86, %p87
      %p89 = scmp.ne.s32.totalorder %s80, %s81
      %p90 = scmp.eq.s32.totalorder %s28, 0
      %p91 = por %p89, %p90
      %p92 = scmp.ne.s32.totalorder %s80, %s81
      %p93 = scmp.eq.s32.totalorder %s29, 1
      %p94 = por %p92, %p93
      %p96 = scmp.ne.s32.totalorder %s81, %s95
      %p97 = scmp.eq.s32.totalorder %s29, 0
      %p98 = por %p96, %p97
      %s100 = sadd.s32 %s99, 1
      %p103 = scmp.eq.s32.totalorder %s23, 1
      %p104 = scmp.ne.s32.totalorder %s99, %s101
      %p105 = scmp.eq.s32.totalorder %s23, 0
      %p106 = por %p104, %p105
      %p107 = scmp.ne.s32.totalorder %s99, %s101
      %p108 = scmp.eq.s32.totalorder %s28, 1
      %p109 = por %p107, %p108
      %p110 = scmp.ne.s32.totalorder %s101, %s102
      %p111 = scmp.eq.s32.totalorder %s28, 0
      %p112 = por %p110, %p111
      %p113 = scmp.ne.s32.totalorder %s101, %s102
      %p114 = scmp.eq.s32.totalorder %s29, 1
      %p115 = por %p113, %p114
      %p117 = scmp.ne.s32.totalorder %s102, %s116
      %p118 = scmp.eq.s32.totalorder %s29, 0
      %p119 = por %p117, %p118
      %s121 = sadd.s32 %s120, 1
      %p124 = scmp.eq.s32.totalorder %s23, 1
      %p125 = scmp.ne.s32.totalorder %s120, %s122
      %p126 = scmp.eq.s32.totalorder %s23, 0
      %p127 = por %p125, %p126
      %p128 = scmp.ne.s32.totalorder %s120, %s122
      %p129 = scmp.eq.s32.totalorder %s28, 1
      %p130 = por %p128, %p129
      %p131 = scmp.ne.s32.totalorder %s122, %s123
      %p132 = scmp.eq.s32.totalorder %s28, 0
      %p133 = por %p131, %p132
      %p134 = scmp.ne.s32.totalorder %s122, %s123
      %p135 = scmp.eq.s32.totalorder %s29, 1
      %p136 = por %p134, %p135
      %p138 = scmp.ne.s32.totalorder %s123, %s137
      %p139 = scmp.eq.s32.totalorder %s29, 0
      %p140 = por %p138, %p139
      %s142 = sadd.s32 %s141, 1
      %p145 = scmp.eq.s32.totalorder %s23, 1
      %p146 = scmp.ne.s32.totalorder %s141, %s143
      %p147 = scmp.eq.s32.totalorder %s23, 0
      %p148 = por %p146, %p147
      %p149 = scmp.ne.s32.totalorder %s141, %s143
      %p150 = scmp.eq.s32.totalorder %s28, 1
      %p151 = por %p149, %p150
      %p152 = scmp.ne.s32.totalorder %s143, %s144
      %p153 = scmp.eq.s32.totalorder %s28, 0
      %p154 = por %p152, %p153
      %p155 = scmp.ne.s32.totalorder %s143, %s144
      %p156 = scmp.eq.s32.totalorder %s29, 1
      %p157 = por %p155, %p156
      %p159 = scmp.ne.s32.totalorder %s144, %s158
      %p160 = scmp.eq.s32.totalorder %s29, 0
      %p161 = por %p159, %p160
      %s163 = sadd.s32 %s162, 1
      %p166 = scmp.eq.s32.totalorder %s23, 1
      %p167 = scmp.ne.s32.totalorder %s162, %s164
      %p168 = scmp.eq.s32.totalorder %s23, 0
      %p169 = por %p167, %p168
      %p170 = scmp.ne.s32.totalorder %s162, %s164
      %p171 = scmp.eq.s32.totalorder %s28, 1
      %p172 = por %p170, %p171
      %p173 = scmp.ne.s32.totalorder %s164, %s165
      %p174 = scmp.eq.s32.totalorder %s28, 0
      %p175 = por %p173, %p174
      %p176 = scmp.ne.s32.totalorder %s164, %s165
      %p177 = scmp.eq.s32.totalorder %s29, 1
      %p178 = por %p176, %p177
      %p180 = scmp.ne.s32.totalorder %s165, %s179
      %p181 = scmp.eq.s32.totalorder %s29, 0
      %p182 = por %p180, %p181
      %s184 = sadd.s32 %s183, 1
      %p187 = scmp.eq.s32.totalorder %s23, 1
      %p188 = scmp.ne.s32.totalorder %s183, %s185
      %p189 = scmp.eq.s32.totalorder %s23, 0
      %p190 = por %p188, %p189
      %p191 = scmp.ne.s32.totalorder %s183, %s185
      %p192 = scmp.eq.s32.totalorder %s28, 1
      %p193 = por %p191, %p192
      %p194 = scmp.ne.s32.totalorder %s185, %s186
      %p195 = scmp.eq.s32.totalorder %s28, 0
      %p196 = por %p194, %p195
      %p197 = scmp.ne.s32.totalorder %s185, %s186
      %p198 = scmp.eq.s32.totalorder %s29, 1
      %p199 = por %p197, %p198
      %p201 = scmp.ne.s32.totalorder %s186, %s200
      %p202 = scmp.eq.s32.totalorder %s29, 0
      %p203 = por %p201, %p202
      %s205 = sadd.s32 %s204, 1
      %p208 = scmp.eq.s32.totalorder %s23, 1
      %p209 = scmp.ne.s32.totalorder %s204, %s206
      %p210 = scmp.eq.s32.totalorder %s23, 0
      %p211 = por %p209, %p210
      %p212 = scmp.ne.s32.totalorder %s204, %s206
      %p213 = scmp.eq.s32.totalorder %s28, 1
      %p214 = por %p212, %p213
      %p215 = scmp.ne.s32.totalorder %s206, %s207
      %p216 = scmp.eq.s32.totalorder %s28, 0
      %p217 = por %p215, %p216
      %p218 = scmp.ne.s32.totalorder %s206, %s207
      %p219 = scmp.eq.s32.totalorder %s29, 1
      %p220 = por %p218, %p219
      %p222 = scmp.ne.s32.totalorder %s207, %s221
      %p223 = scmp.eq.s32.totalorder %s29, 0
      %p224 = por %p222, %p223
      %s225 = ssub.s32 %s23, %s30
      %p226 = scmp.eq.s32.totalorder %s225, 0
      %s228 = sadd.s32 %s227, 1
      %s229 = scalar_select %p226, %s227, %s228
      %p232 = pneg %p226
      %p233 = scmp.eq.s32.totalorder %s23, 1
      %p234 = por %p232, %p233
      %p235 = scmp.ne.s32.totalorder %s227, %s230
      %p236 = scmp.eq.s32.totalorder %s23, 0
      %p237 = por %p235, %p236
      %p238 = scmp.ne.s32.totalorder %s227, %s230
      %p239 = scmp.eq.s32.totalorder %s28, 1
      %p240 = por %p238, %p239
      %p241 = scmp.ne.s32.totalorder %s230, %s231
      %p242 = scmp.eq.s32.totalorder %s28, 0
      %p243 = por %p241, %p242
      %p244 = scmp.ne.s32.totalorder %s230, %s231
      %p245 = scmp.eq.s32.totalorder %s29, 1
      %p246 = por %p244, %p245
      %p248 = scmp.ne.s32.totalorder %s231, %s247
      %p249 = scmp.eq.s32.totalorder %s29, 0
      %p250 = por %p248, %p249
      %p251 = scmp.le.s32.totalorder 1, %s23
      %p252 = scmp.lt.s32.totalorder %s23, 3
      %p253 = pnand %p251, %p252
      %p254 = pneg %p253
      // Predicated region
      $region9: #{tpu_custom_call.1} parent=5 // pred_check
        _
      $region10: #{tpu_custom_call.1} parent=5 // pred_check_branch
        %256 = sbr.rel (%p253) target = $region12
      $region11: #{tpu_custom_call.1} parent=5 // pred_region
        %s257 = ssub.s32 %s23, 1
        // Predicated region
        $region13: #{tpu_custom_call.1} parent=11 // pred_check
          %p258 = pneg %p70
        $region14: #{tpu_custom_call.1} parent=11 // pred_check_branch
          %260 = sbr.rel (%p258) target = $region16
        $region15: #{tpu_custom_call.1} parent=11 // pred_region
          _
        $region16: #{tpu_custom_call.1} parent=11 // pred_fallthru
          _
        // Predicated region
        $region17: #{tpu_custom_call.1} parent=11 // pred_check
          %p261 = pneg %p91
        $region18: #{tpu_custom_call.1} parent=11 // pred_check_branch
          %263 = sbr.rel (%p261) target = $region20
        $region19: #{tpu_custom_call.1} parent=11 // pred_region
          _
        $region20: #{tpu_custom_call.1} parent=11 // pred_fallthru
          _
        // Predicated region
        $region21: #{tpu_custom_call.1} parent=11 // pred_check
          %p264 = pneg %p112
        $region22: #{tpu_custom_call.1} parent=11 // pred_check_branch
          %266 = sbr.rel (%p264) target = $region24
        $region23: #{tpu_custom_call.1} parent=11 // pred_region
          _
        $region24: #{tpu_custom_call.1} parent=11 // pred_fallthru
          _
        // Predicated region
        $region25: #{tpu_custom_call.1} parent=11 // pred_check
          %p267 = pneg %p133
        $region26: #{tpu_custom_call.1} parent=11 // pred_check_branch
          %269 = sbr.rel (%p267) target = $region28
        $region27: #{tpu_custom_call.1} parent=11 // pred_region
          _
        $region28: #{tpu_custom_call.1} parent=11 // pred_fallthru
          _
        // Predicated region
        $region29: #{tpu_custom_call.1} parent=11 // pred_check
          %p270 = pneg %p154
        $region30: #{tpu_custom_call.1} parent=11 // pred_check_branch
          %272 = sbr.rel (%p270) target = $region32
        $region31: #{tpu_custom_call.1} parent=11 // pred_region
          _
        $region32: #{tpu_custom_call.1} parent=11 // pred_fallthru
          _
        // Predicated region
        $region33: #{tpu_custom_call.1} parent=11 // pred_check
          %p273 = pneg %p175
        $region34: #{tpu_custom_call.1} parent=11 // pred_check_branch
          %275 = sbr.rel (%p273) target = $region36
        $region35: #{tpu_custom_call.1} parent=11 // pred_region
          _
        $region36: #{tpu_custom_call.1} parent=11 // pred_fallthru
          _
        // Predicated region
        $region37: #{tpu_custom_call.1} parent=11 // pred_check
          %p276 = pneg %p196
        $region38: #{tpu_custom_call.1} parent=11 // pred_check_branch
          %278 = sbr.rel (%p276) target = $region40
        $region39: #{tpu_custom_call.1} parent=11 // pred_region
          _
        $region40: #{tpu_custom_call.1} parent=11 // pred_fallthru
          _
        // Predicated region
        $region41: #{tpu_custom_call.1} parent=11 // pred_check
          %p279 = pneg %p217
        $region42: #{tpu_custom_call.1} parent=11 // pred_check_branch
          %281 = sbr.rel (%p279) target = $region44
        $region43: #{tpu_custom_call.1} parent=11 // pred_region
          _
        $region44: #{tpu_custom_call.1} parent=11 // pred_fallthru
          _
      $region12: #{tpu_custom_call.1} parent=5 // pred_fallthru
        _
      %p282 = scmp.lt.s32.totalorder %s23, 2
      // Predicated region
      $region45: #{tpu_custom_call.1} parent=5 // pred_check
        %p283 = pneg %p282
      $region46: #{tpu_custom_call.1} parent=5 // pred_check_branch
        %285 = sbr.rel (%p283) target = $region48
      $region47: #{tpu_custom_call.1} parent=5 // pred_region
        // Predicated region
        $region49: #{tpu_custom_call.1} parent=47 // pred_check
          %p286 = pneg %p43
        $region50: #{tpu_custom_call.1} parent=47 // pred_check_branch
          %288 = sbr.rel (%p286) target = $region52
        $region51: #{tpu_custom_call.1} parent=47 // pred_region
          %s289 = sand.u32 %s33, 1
          %s290 = scalar_lea.sflag [#allocation10], %s289
          %s291 = sand.u32 %s33, 1
          %s292 = smul.addr %s291, 128
          %s293 = scalar_lea.vmem [#allocation9], %s292
          %295 = vsyncadd %s290, 0
          %s296 = smul.addr %s23, 32
          %s297 = smul.addr %s296, 4
          %s298 = scalar_lea.hbm %s0, %s297
          %s299 = sshll.u32 %s298, 4
          %s300 = int_to_ptr.hbm [resolvable:$true] %s299
          %s301 = sshll.u32 %s293, 4
          %s302 = int_to_ptr.vmem [resolvable:$true] %s301
          %307 = dma.hbm_to_vmem [thread:$0]  %s300, 2048, %s302, %s290, 64, 64, 4
        $region52: #{tpu_custom_call.1} parent=47 // pred_fallthru
          _
      $region48: #{tpu_custom_call.1} parent=5 // pred_fallthru
        _
      %p308 = scmp.le.s32.totalorder 1, %s23
      %p309 = scmp.lt.s32.totalorder %s23, 3
      %p310 = pnand %p308, %p309
      %p311 = pneg %p310
      // Predicated region
      $region53: #{tpu_custom_call.1} parent=5 // pred_check
        _
      $region54: #{tpu_custom_call.1} parent=5 // pred_check_branch
        %313 = sbr.rel (%p310) target = $region56
      $region55: #{tpu_custom_call.1} parent=5 // pred_region
        %s314 = ssub.s32 %s23, 1
        %s315 = sand.u32 %s36, 1
        %s316 = scalar_lea.sflag [#allocation10], %s315
        %s317 = sand.u32 %s36, 1
        %s318 = smul.addr %s317, 128
        %s319 = scalar_lea.vmem [#allocation9], %s318
        // Predicated region
        $region57: #{tpu_custom_call.1} parent=55 // pred_check
          %p320 = pneg %p49
        $region58: #{tpu_custom_call.1} parent=55 // pred_check_branch
          %322 = sbr.rel (%p320) target = $region60
        $region59: #{tpu_custom_call.1} parent=55 // pred_region
          %324 = dma.done %s316, 2048
        $region60: #{tpu_custom_call.1} parent=55 // pred_fallthru
          _
        %s325 = sand.u32 %s36, 1
        %s326 = scalar_lea.sflag [#allocation10], %s325
        %s327 = sand.u32 %s36, 1
        %s328 = smul.addr %s327, 128
        %s329 = scalar_lea.vmem [#allocation9], %s328
        %p330 = pneg %p49
        %p331 = pneg %p46
        %p332 = pneg %p70
        %p333 = pneg %p67
        %p334 = pneg %p91
        %p335 = pneg %p88
        %p336 = pneg %p112
        %p337 = pneg %p109
        %p338 = pneg %p133
        %p339 = pneg %p130
        %p340 = pneg %p154
        %p341 = pneg %p151
        %p342 = pneg %p175
        %p343 = pneg %p172
        %p344 = pneg %p196
        %p345 = pneg %p193
        %p346 = pneg %p217
        %p347 = pneg %p214
        %p348 = pneg %p243
        %p349 = pneg %p240
        %s350 = sand.u32 %s230, 1
        %s351 = scalar_lea.sflag [#allocation11], %s350
        %s352 = sand.u32 %s230, 1
        %s353 = scalar_lea.vmem [#allocation12], %s352
        %v355 = vld [vmem:[%s319] sm:$0xf]
        %v356 = vld [vmem:[%s319 + $0x4] sm:$0xf]
        %v357 = vld [vmem:[%s319 + $0x8] sm:$0xf]
        %v358 = vld [vmem:[%s319 + $0xc] sm:$0xf]
        %v359 = vld [vmem:[%s319 + $0x10] sm:$0xf]
        %v360 = vld [vmem:[%s319 + $0x14] sm:$0xf]
        %v361 = vld [vmem:[%s319 + $0x18] sm:$0xf]
        %v362 = vld [vmem:[%s319 + $0x1c] sm:$0xf]
        %v363 = vld [vmem:[%s319 + $0x20] sm:$0xf]
        %v364 = vld [vmem:[%s319 + $0x24] sm:$0xf]
        %v365 = vld [vmem:[%s319 + $0x28] sm:$0xf]
        %v366 = vld [vmem:[%s319 + $0x2c] sm:$0xf]
        %v367 = vld [vmem:[%s319 + $0x30] sm:$0xf]
        %v368 = vld [vmem:[%s319 + $0x34] sm:$0xf]
        %v369 = vld [vmem:[%s319 + $0x38] sm:$0xf]
        %v370 = vld [vmem:[%s319 + $0x3c] sm:$0xf]
        %v371 = vld [vmem:[%s319 + $0x40] sm:$0xf]
        %v372 = vld [vmem:[%s319 + $0x44] sm:$0xf]
        %v373 = vld [vmem:[%s319 + $0x48] sm:$0xf]
        %v374 = vld [vmem:[%s319 + $0x4c] sm:$0xf]
        %v375 = vld [vmem:[%s319 + $0x50] sm:$0xf]
        %v376 = vld [vmem:[%s319 + $0x54] sm:$0xf]
        %v377 = vld [vmem:[%s319 + $0x58] sm:$0xf]
        %v378 = vld [vmem:[%s319 + $0x5c] sm:$0xf]
        %v379 = vld [vmem:[%s319 + $0x60] sm:$0xf]
        %v380 = vld [vmem:[%s319 + $0x64] sm:$0xf]
        %v381 = vld [vmem:[%s319 + $0x68] sm:$0xf]
        %v382 = vld [vmem:[%s319 + $0x6c] sm:$0xf]
        %v383 = vld [vmem:[%s319 + $0x70] sm:$0xf]
        %v384 = vld [vmem:[%s319 + $0x74] sm:$0xf]
        %v385 = vld [vmem:[%s319 + $0x78] sm:$0xf]
        %v386 = vld [vmem:[%s319 + $0x7c] sm:$0xf]
        %vm387 = vcmask 257027
        %vm388 = vsmask.f32 7950
        %vm389 = vmand %vm387, %vm388
        %v390 = vld [vmem:[#allocation2 + $0x4] sm:$0x8]
        %v391 = vsel %vm389, 0, %v390
        %392 = vst [vmem:[#allocation2 + $0x4] sm:$0x8] %v391
        %vm393 = vcmask 257024
        %394 = vst.msk [vmem:[#allocation2 + $0x8] sm:$0xf] %vm393, 0
        %395 = vst.msk [vmem:[#allocation2 + $0xc] sm:$0xf] %vm393, 0
        %vm396 = vcmask 253952
        %vm397 = vsmask.f32 256
        %vm398 = vmand %vm396, %vm397
        %v399 = vld [vmem:[#allocation2 + $0x10] sm:$0x1]
        %v400 = vsel %vm398, 0, %v399
        %401 = vst [vmem:[#allocation2 + $0x10] sm:$0x1] %v400
        %s402 = scalar_lea.vmem [#allocation2], 408
        %v403 = vld [vmem:[%s402 + $0x4] sm:$0x8]
        %v404 = vsel %vm389, 0, %v403
        %405 = vst [vmem:[%s402 + $0x4] sm:$0x8] %v404
        %406 = vst.msk [vmem:[%s402 + $0x8] sm:$0xf] %vm393, 0
        %407 = vst.msk [vmem:[%s402 + $0xc] sm:$0xf] %vm393, 0
        %v408 = vld [vmem:[%s402 + $0x10] sm:$0x1]
        %v409 = vsel %vm398, 0, %v408
        %410 = vst [vmem:[%s402 + $0x10] sm:$0x1] %v409
        %s411 = scalar_lea.vmem [#allocation2], 24
        %v412 = vld [vmem:[%s411 + $0x4] sm:$0x8]
        %v413 = vsel %vm389, 0, %v412
        %414 = vst [vmem:[%s411 + $0x4] sm:$0x8] %v413
        %v415 = vld [vmem:[%s411 + $0x1c] sm:$0x8]
        %v416 = vsel %vm389, 0, %v415
        %417 = vst [vmem:[%s411 + $0x1c] sm:$0x8] %v416
        %v418 = vld [vmem:[%s411 + $0x34] sm:$0x8]
        %v419 = vsel %vm389, 0, %v418
        %420 = vst [vmem:[%s411 + $0x34] sm:$0x8] %v419
        %v421 = vld [vmem:[%s411 + $0x4c] sm:$0x8]
        %v422 = vsel %vm389, 0, %v421
        %423 = vst [vmem:[%s411 + $0x4c] sm:$0x8] %v422
        %v424 = vld [vmem:[%s411 + $0x64] sm:$0x8]
        %v425 = vsel %vm389, 0, %v424
        %426 = vst [vmem:[%s411 + $0x64] sm:$0x8] %v425
        %v427 = vld [vmem:[%s411 + $0x7c] sm:$0x8]
        %v428 = vsel %vm389, 0, %v427
        %429 = vst [vmem:[%s411 + $0x7c] sm:$0x8] %v428
        %v430 = vld [vmem:[%s411 + $0x94] sm:$0x8]
        %v431 = vsel %vm389, 0, %v430
        %432 = vst [vmem:[%s411 + $0x94] sm:$0x8] %v431
        %v433 = vld [vmem:[%s411 + $0xac] sm:$0x8]
        %v434 = vsel %vm389, 0, %v433
        %435 = vst [vmem:[%s411 + $0xac] sm:$0x8] %v434
        %v436 = vld [vmem:[%s411 + $0xc4] sm:$0x8]
        %v437 = vsel %vm389, 0, %v436
        %438 = vst [vmem:[%s411 + $0xc4] sm:$0x8] %v437
        %v439 = vld [vmem:[%s411 + $0xdc] sm:$0x8]
        %v440 = vsel %vm389, 0, %v439
        %441 = vst [vmem:[%s411 + $0xdc] sm:$0x8] %v440
        %v442 = vld [vmem:[%s411 + $0xf4] sm:$0x8]
        %v443 = vsel %vm389, 0, %v442
        %444 = vst [vmem:[%s411 + $0xf4] sm:$0x8] %v443
        %v445 = vld [vmem:[%s411 + $0x10c] sm:$0x8]
        %v446 = vsel %vm389, 0, %v445
        %447 = vst [vmem:[%s411 + $0x10c] sm:$0x8] %v446
        %v448 = vld [vmem:[%s411 + $0x124] sm:$0x8]
        %v449 = vsel %vm389, 0, %v448
        %450 = vst [vmem:[%s411 + $0x124] sm:$0x8] %v449
        %v451 = vld [vmem:[%s411 + $0x13c] sm:$0x8]
        %v452 = vsel %vm389, 0, %v451
        %453 = vst [vmem:[%s411 + $0x13c] sm:$0x8] %v452
        %v454 = vld [vmem:[%s411 + $0x154] sm:$0x8]
        %v455 = vsel %vm389, 0, %v454
        %456 = vst [vmem:[%s411 + $0x154] sm:$0x8] %v455
        %v457 = vld [vmem:[%s411 + $0x16c] sm:$0x8]
        %v458 = vsel %vm389, 0, %v457
        %459 = vst [vmem:[%s411 + $0x16c] sm:$0x8] %v458
        %v460 = vld [vmem:[%s411 + $0x10] sm:$0x1]
        %v461 = vsel %vm398, 0, %v460
        %462 = vst [vmem:[%s411 + $0x10] sm:$0x1] %v461
        %v463 = vld [vmem:[%s411 + $0x28] sm:$0x1]
        %v464 = vsel %vm398, 0, %v463
        %465 = vst [vmem:[%s411 + $0x28] sm:$0x1] %v464
        %v466 = vld [vmem:[%s411 + $0x40] sm:$0x1]
        %v467 = vsel %vm398, 0, %v466
        %468 = vst [vmem:[%s411 + $0x40] sm:$0x1] %v467
        %v469 = vld [vmem:[%s411 + $0x58] sm:$0x1]
        %v470 = vsel %vm398, 0, %v469
        %471 = vst [vmem:[%s411 + $0x58] sm:$0x1] %v470
        %v472 = vld [vmem:[%s411 + $0x70] sm:$0x1]
        %v473 = vsel %vm398, 0, %v472
        %474 = vst [vmem:[%s411 + $0x70] sm:$0x1] %v473
        %v475 = vld [vmem:[%s411 + $0x88] sm:$0x1]
        %v476 = vsel %vm398, 0, %v475
        %477 = vst [vmem:[%s411 + $0x88] sm:$0x1] %v476
        %v478 = vld [vmem:[%s411 + $0xa0] sm:$0x1]
        %v479 = vsel %vm398, 0, %v478
        %480 = vst [vmem:[%s411 + $0xa0] sm:$0x1] %v479
        %v481 = vld [vmem:[%s411 + $0xb8] sm:$0x1]
        %v482 = vsel %vm398, 0, %v481
        %483 = vst [vmem:[%s411 + $0xb8] sm:$0x1] %v482
        %v484 = vld [vmem:[%s411 + $0xd0] sm:$0x1]
        %v485 = vsel %vm398, 0, %v484
        %486 = vst [vmem:[%s411 + $0xd0] sm:$0x1] %v485
        %v487 = vld [vmem:[%s411 + $0xe8] sm:$0x1]
        %v488 = vsel %vm398, 0, %v487
        %489 = vst [vmem:[%s411 + $0xe8] sm:$0x1] %v488
        %v490 = vld [vmem:[%s411 + $0x100] sm:$0x1]
        %v491 = vsel %vm398, 0, %v490
        %492 = vst [vmem:[%s411 + $0x100] sm:$0x1] %v491
        %v493 = vld [vmem:[%s411 + $0x118] sm:$0x1]
        %v494 = vsel %vm398, 0, %v493
        %495 = vst [vmem:[%s411 + $0x118] sm:$0x1] %v494
        %v496 = vld [vmem:[%s411 + $0x130] sm:$0x1]
        %v497 = vsel %vm398, 0, %v496
        %498 = vst [vmem:[%s411 + $0x130] sm:$0x1] %v497
        %v499 = vld [vmem:[%s411 + $0x148] sm:$0x1]
        %v500 = vsel %vm398, 0, %v499
        %501 = vst [vmem:[%s411 + $0x148] sm:$0x1] %v500
        %v502 = vld [vmem:[%s411 + $0x160] sm:$0x1]
        %v503 = vsel %vm398, 0, %v502
        %504 = vst [vmem:[%s411 + $0x160] sm:$0x1] %v503
        %v505 = vld [vmem:[%s411 + $0x178] sm:$0x1]
        %v506 = vsel %vm398, 0, %v505
        %507 = vst [vmem:[%s411 + $0x178] sm:$0x1] %v506
        %508 = vst.msk [vmem:[%s411 + $0x8] sm:$0xf] %vm393, %v355
        %509 = vst.msk [vmem:[%s411 + $0xc] sm:$0xf] %vm393, %v356
        %510 = vst.msk [vmem:[%s411 + $0x20] sm:$0xf] %vm393, %v357
        %511 = vst.msk [vmem:[%s411 + $0x24] sm:$0xf] %vm393, %v358
        %512 = vst.msk [vmem:[%s411 + $0x38] sm:$0xf] %vm393, %v359
        %513 = vst.msk [vmem:[%s411 + $0x3c] sm:$0xf] %vm393, %v360
        %514 = vst.msk [vmem:[%s411 + $0x50] sm:$0xf] %vm393, %v361
        %515 = vst.msk [vmem:[%s411 + $0x54] sm:$0xf] %vm393, %v362
        %516 = vst.msk [vmem:[%s411 + $0x68] sm:$0xf] %vm393, %v363
        %517 = vst.msk [vmem:[%s411 + $0x6c] sm:$0xf] %vm393, %v364
        %518 = vst.msk [vmem:[%s411 + $0x80] sm:$0xf] %vm393, %v365
        %519 = vst.msk [vmem:[%s411 + $0x84] sm:$0xf] %vm393, %v366
        %520 = vst.msk [vmem:[%s411 + $0x98] sm:$0xf] %vm393, %v367
        %521 = vst.msk [vmem:[%s411 + $0x9c] sm:$0xf] %vm393, %v368
        %522 = vst.msk [vmem:[%s411 + $0xb0] sm:$0xf] %vm393, %v369
        %523 = vst.msk [vmem:[%s411 + $0xb4] sm:$0xf] %vm393, %v370
        %524 = vst.msk [vmem:[%s411 + $0xc8] sm:$0xf] %vm393, %v371
        %525 = vst.msk [vmem:[%s411 + $0xcc] sm:$0xf] %vm393, %v372
        %526 = vst.msk [vmem:[%s411 + $0xe0] sm:$0xf] %vm393, %v373
        %527 = vst.msk [vmem:[%s411 + $0xe4] sm:$0xf] %vm393, %v374
        %528 = vst.msk [vmem:[%s411 + $0xf8] sm:$0xf] %vm393, %v375
        %529 = vst.msk [vmem:[%s411 + $0xfc] sm:$0xf] %vm393, %v376
        %530 = vst.msk [vmem:[%s411 + $0x110] sm:$0xf] %vm393, %v377
        %531 = vst.msk [vmem:[%s411 + $0x114] sm:$0xf] %vm393, %v378
        %532 = vst.msk [vmem:[%s411 + $0x128] sm:$0xf] %vm393, %v379
        %533 = vst.msk [vmem:[%s411 + $0x12c] sm:$0xf] %vm393, %v380
        %534 = vst.msk [vmem:[%s411 + $0x140] sm:$0xf] %vm393, %v381
        %535 = vst.msk [vmem:[%s411 + $0x144] sm:$0xf] %vm393, %v382
        %536 = vst.msk [vmem:[%s411 + $0x158] sm:$0xf] %vm393, %v383
        %537 = vst.msk [vmem:[%s411 + $0x15c] sm:$0xf] %vm393, %v384
        %538 = vst.msk [vmem:[%s411 + $0x170] sm:$0xf] %vm393, %v385
        %539 = vst.msk [vmem:[%s411 + $0x174] sm:$0xf] %vm393, %v386
        %v540 = vld [vmem:[#allocation2 + $0x4] sm:$0x8]
        %v541 = vld [vmem:[#allocation2 + $0x8] sm:$0xf]
        %v542 = vld [vmem:[#allocation2 + $0xc] sm:$0xf]
        %v543 = vld [vmem:[#allocation2 + $0x1c] sm:$0x8]
        %v544 = vld [vmem:[#allocation2 + $0x20] sm:$0xf]
        %v545 = vld [vmem:[#allocation2 + $0x24] sm:$0xf]
        %v546 = vld [vmem:[#allocation2 + $0x34] sm:$0x8]
        %v547 = vld [vmem:[#allocation2 + $0x38] sm:$0xf]
        %v548 = vld [vmem:[#allocation2 + $0x3c] sm:$0xf]
        %v549 = vld [vmem:[#allocation2 + $0x4c] sm:$0x8]
        %v550 = vld [vmem:[#allocation2 + $0x50] sm:$0xf]
        %v551 = vld [vmem:[#allocation2 + $0x54] sm:$0xf]
        %v552 = vld [vmem:[#allocation2 + $0x64] sm:$0x8]
        %v553 = vld [vmem:[#allocation2 + $0x68] sm:$0xf]
        %v554 = vld [vmem:[#allocation2 + $0x6c] sm:$0xf]
        %v555 = vld [vmem:[#allocation2 + $0x7c] sm:$0x8]
        %v556 = vld [vmem:[#allocation2 + $0x80] sm:$0xf]
        %v557 = vld [vmem:[#allocation2 + $0x84] sm:$0xf]
        %v558 = vld [vmem:[#allocation2 + $0x94] sm:$0x8]
        %v559 = vld [vmem:[#allocation2 + $0x98] sm:$0xf]
        %v560 = vld [vmem:[#allocation2 + $0x9c] sm:$0xf]
        %v561 = vld [vmem:[#allocation2 + $0xac] sm:$0x8]
        %v562 = vld [vmem:[#allocation2 + $0xb0] sm:$0xf]
        %v563 = vld [vmem:[#allocation2 + $0xb4] sm:$0xf]
        %v564 = vld [vmem:[#allocation2 + $0xc4] sm:$0x8]
        %v565 = vld [vmem:[#allocation2 + $0xc8] sm:$0xf]
        %v566 = vld [vmem:[#allocation2 + $0xcc] sm:$0xf]
        %v567 = vld [vmem:[#allocation2 + $0xdc] sm:$0x8]
        %v568 = vld [vmem:[#allocation2 + $0xe0] sm:$0xf]
        %v569 = vld [vmem:[#allocation2 + $0xe4] sm:$0xf]
        %v570 = vld [vmem:[#allocation2 + $0xf4] sm:$0x8]
        %v571 = vld [vmem:[#allocation2 + $0xf8] sm:$0xf]
        %v572 = vld [vmem:[#allocation2 + $0xfc] sm:$0xf]
        %v573 = vld [vmem:[#allocation2 + $0x10c] sm:$0x8]
        %v574 = vld [vmem:[#allocation2 + $0x110] sm:$0xf]
        %v575 = vld [vmem:[#allocation2 + $0x114] sm:$0xf]
        %v576 = vld [vmem:[#allocation2 + $0x124] sm:$0x8]
        %v577 = vld [vmem:[#allocation2 + $0x128] sm:$0xf]
        %v578 = vld [vmem:[#allocation2 + $0x12c] sm:$0xf]
        %v579 = vld [vmem:[#allocation2 + $0x13c] sm:$0x8]
        %v580 = vld [vmem:[#allocation2 + $0x140] sm:$0xf]
        %v581 = vld [vmem:[#allocation2 + $0x144] sm:$0xf]
        %v582 = vld [vmem:[#allocation2 + $0x154] sm:$0x8]
        %v583 = vld [vmem:[#allocation2 + $0x158] sm:$0xf]
        %v584 = vld [vmem:[#allocation2 + $0x15c] sm:$0xf]
        %v585 = vld [vmem:[#allocation2 + $0x16c] sm:$0x8]
        %v586 = vld [vmem:[#allocation2 + $0x170] sm:$0xf]
        %v587 = vld [vmem:[#allocation2 + $0x174] sm:$0xf]
        %vm588 = vsmask.f32 4368
        %vm589 = vmor %vm397, %vm588
        %v591 = vshrl.u32 %v540, 16
        %v593 = vrot.slane %v591, 7
        %v594 = vrot.slane %v593, 4
        %v596 = vshrl.u32 %v541, 16
        %v598 = vrot.slane %v596, 7
        %v599 = vshll.u32 %v541, 16
        %v601 = vor.u32 %v598, %v599
        %v602 = vsel %vm589, %v594, %v601
        %v603 = vrot.slane %v598, 4
        %v605 = vshrl.u32 %v542, 16
        %v607 = vrot.slane %v605, 7
        %v608 = vshll.u32 %v542, 16
        %v610 = vor.u32 %v607, %v608
        %v611 = vsel %vm589, %v603, %v610
        %v613 = vshrl.u32 %v543, 16
        %v615 = vrot.slane %v613, 7
        %v616 = vrot.slane %v615, 4
        %v618 = vshrl.u32 %v544, 16
        %v620 = vrot.slane %v618, 7
        %v621 = vshll.u32 %v544, 16
        %v623 = vor.u32 %v620, %v621
        %v624 = vsel %vm589, %v616, %v623
        %v625 = vrot.slane %v620, 4
        %v627 = vshrl.u32 %v545, 16
        %v629 = vrot.slane %v627, 7
        %v630 = vshll.u32 %v545, 16
        %v632 = vor.u32 %v629, %v630
        %v633 = vsel %vm589, %v625, %v632
        %v635 = vshrl.u32 %v546, 16
        %v637 = vrot.slane %v635, 7
        %v638 = vrot.slane %v637, 4
        %v640 = vshrl.u32 %v547, 16
        %v642 = vrot.slane %v640, 7
        %v643 = vshll.u32 %v547, 16
        %v645 = vor.u32 %v642, %v643
        %v646 = vsel %vm589, %v638, %v645
        %v647 = vrot.slane %v642, 4
        %v649 = vshrl.u32 %v548, 16
        %v651 = vrot.slane %v649, 7
        %v652 = vshll.u32 %v548, 16
        %v654 = vor.u32 %v651, %v652
        %v655 = vsel %vm589, %v647, %v654
        %v657 = vshrl.u32 %v549, 16
        %v659 = vrot.slane %v657, 7
        %v660 = vrot.slane %v659, 4
        %v662 = vshrl.u32 %v550, 16
        %v664 = vrot.slane %v662, 7
        %v665 = vshll.u32 %v550, 16
        %v667 = vor.u32 %v664, %v665
        %v668 = vsel %vm589, %v660, %v667
        %v669 = vrot.slane %v664, 4
        %v671 = vshrl.u32 %v551, 16
        %v673 = vrot.slane %v671, 7
        %v674 = vshll.u32 %v551, 16
        %v676 = vor.u32 %v673, %v674
        %v677 = vsel %vm589, %v669, %v676
        %v679 = vshrl.u32 %v552, 16
        %v681 = vrot.slane %v679, 7
        %v682 = vrot.slane %v681, 4
        %v684 = vshrl.u32 %v553, 16
        %v686 = vrot.slane %v684, 7
        %v687 = vshll.u32 %v553, 16
        %v689 = vor.u32 %v686, %v687
        %v690 = vsel %vm589, %v682, %v689
        %v691 = vrot.slane %v686, 4
        %v693 = vshrl.u32 %v554, 16
        %v695 = vrot.slane %v693, 7
        %v696 = vshll.u32 %v554, 16
        %v698 = vor.u32 %v695, %v696
        %v699 = vsel %vm589, %v691, %v698
        %v701 = vshrl.u32 %v555, 16
        %v703 = vrot.slane %v701, 7
        %v704 = vrot.slane %v703, 4
        %v706 = vshrl.u32 %v556, 16
        %v708 = vrot.slane %v706, 7
        %v709 = vshll.u32 %v556, 16
        %v711 = vor.u32 %v708, %v709
        %v712 = vsel %vm589, %v704, %v711
        %v713 = vrot.slane %v708, 4
        %v715 = vshrl.u32 %v557, 16
        %v717 = vrot.slane %v715, 7
        %v718 = vshll.u32 %v557, 16
        %v720 = vor.u32 %v717, %v718
        %v721 = vsel %vm589, %v713, %v720
        %v723 = vshrl.u32 %v558, 16
        %v725 = vrot.slane %v723, 7
        %v726 = vrot.slane %v725, 4
        %v728 = vshrl.u32 %v559, 16
        %v730 = vrot.slane %v728, 7
        %v731 = vshll.u32 %v559, 16
        %v733 = vor.u32 %v730, %v731
        %v734 = vsel %vm589, %v726, %v733
        %v735 = vrot.slane %v730, 4
        %v737 = vshrl.u32 %v560, 16
        %v739 = vrot.slane %v737, 7
        %v740 = vshll.u32 %v560, 16
        %v742 = vor.u32 %v739, %v740
        %v743 = vsel %vm589, %v735, %v742
        %v745 = vshrl.u32 %v561, 16
        %v747 = vrot.slane %v745, 7
        %v748 = vrot.slane %v747, 4
        %v750 = vshrl.u32 %v562, 16
        %v752 = vrot.slane %v750, 7
        %v753 = vshll.u32 %v562, 16
        %v755 = vor.u32 %v752, %v753
        %v756 = vsel %vm589, %v748, %v755
        %v757 = vrot.slane %v752, 4
        %v759 = vshrl.u32 %v563, 16
        %v761 = vrot.slane %v759, 7
        %v762 = vshll.u32 %v563, 16
        %v764 = vor.u32 %v761, %v762
        %v765 = vsel %vm589, %v757, %v764
        %v767 = vshrl.u32 %v564, 16
        %v769 = vrot.slane %v767, 7
        %v770 = vrot.slane %v769, 4
        %v772 = vshrl.u32 %v565, 16
        %v774 = vrot.slane %v772, 7
        %v775 = vshll.u32 %v565, 16
        %v777 = vor.u32 %v774, %v775
        %v778 = vsel %vm589, %v770, %v777
        %v779 = vrot.slane %v774, 4
        %v781 = vshrl.u32 %v566, 16
        %v783 = vrot.slane %v781, 7
        %v784 = vshll.u32 %v566, 16
        %v786 = vor.u32 %v783, %v784
        %v787 = vsel %vm589, %v779, %v786
        %v789 = vshrl.u32 %v567, 16
        %v791 = vrot.slane %v789, 7
        %v792 = vrot.slane %v791, 4
        %v794 = vshrl.u32 %v568, 16
        %v796 = vrot.slane %v794, 7
        %v797 = vshll.u32 %v568, 16
        %v799 = vor.u32 %v796, %v797
        %v800 = vsel %vm589, %v792, %v799
        %v801 = vrot.slane %v796, 4
        %v803 = vshrl.u32 %v569, 16
        %v805 = vrot.slane %v803, 7
        %v806 = vshll.u32 %v569, 16
        %v808 = vor.u32 %v805, %v806
        %v809 = vsel %vm589, %v801, %v808
        %v811 = vshrl.u32 %v570, 16
        %v813 = vrot.slane %v811, 7
        %v814 = vrot.slane %v813, 4
        %v816 = vshrl.u32 %v571, 16
        %v818 = vrot.slane %v816, 7
        %v819 = vshll.u32 %v571, 16
        %v821 = vor.u32 %v818, %v819
        %v822 = vsel %vm589, %v814, %v821
        %v823 = vrot.slane %v818, 4
        %v825 = vshrl.u32 %v572, 16
        %v827 = vrot.slane %v825, 7
        %v828 = vshll.u32 %v572, 16
        %v830 = vor.u32 %v827, %v828
        %v831 = vsel %vm589, %v823, %v830
        %v833 = vshrl.u32 %v573, 16
        %v835 = vrot.slane %v833, 7
        %v836 = vrot.slane %v835, 4
        %v838 = vshrl.u32 %v574, 16
        %v840 = vrot.slane %v838, 7
        %v841 = vshll.u32 %v574, 16
        %v843 = vor.u32 %v840, %v841
        %v844 = vsel %vm589, %v836, %v843
        %v845 = vrot.slane %v840, 4
        %v847 = vshrl.u32 %v575, 16
        %v849 = vrot.slane %v847, 7
        %v850 = vshll.u32 %v575, 16
        %v852 = vor.u32 %v849, %v850
        %v853 = vsel %vm589, %v845, %v852
        %v855 = vshrl.u32 %v576, 16
        %v857 = vrot.slane %v855, 7
        %v858 = vrot.slane %v857, 4
        %v860 = vshrl.u32 %v577, 16
        %v862 = vrot.slane %v860, 7
        %v863 = vshll.u32 %v577, 16
        %v865 = vor.u32 %v862, %v863
        %v866 = vsel %vm589, %v858, %v865
        %v867 = vrot.slane %v862, 4
        %v869 = vshrl.u32 %v578, 16
        %v871 = vrot.slane %v869, 7
        %v872 = vshll.u32 %v578, 16
        %v874 = vor.u32 %v871, %v872
        %v875 = vsel %vm589, %v867, %v874
        %v877 = vshrl.u32 %v579, 16
        %v879 = vrot.slane %v877, 7
        %v880 = vrot.slane %v879, 4
        %v882 = vshrl.u32 %v580, 16
        %v884 = vrot.slane %v882, 7
        %v885 = vshll.u32 %v580, 16
        %v887 = vor.u32 %v884, %v885
        %v888 = vsel %vm589, %v880, %v887
        %v889 = vrot.slane %v884, 4
        %v891 = vshrl.u32 %v581, 16
        %v893 = vrot.slane %v891, 7
        %v894 = vshll.u32 %v581, 16
        %v896 = vor.u32 %v893, %v894
        %v897 = vsel %vm589, %v889, %v896
        %v899 = vshrl.u32 %v582, 16
        %v901 = vrot.slane %v899, 7
        %v902 = vrot.slane %v901, 4
        %v904 = vshrl.u32 %v583, 16
        %v906 = vrot.slane %v904, 7
        %v907 = vshll.u32 %v583, 16
        %v909 = vor.u32 %v906, %v907
        %v910 = vsel %vm589, %v902, %v909
        %v911 = vrot.slane %v906, 4
        %v913 = vshrl.u32 %v584, 16
        %v915 = vrot.slane %v913, 7
        %v916 = vshll.u32 %v584, 16
        %v918 = vor.u32 %v915, %v916
        %v919 = vsel %vm589, %v911, %v918
        %v921 = vshrl.u32 %v585, 16
        %v923 = vrot.slane %v921, 7
        %v924 = vrot.slane %v923, 4
        %v926 = vshrl.u32 %v586, 16
        %v928 = vrot.slane %v926, 7
        %v929 = vshll.u32 %v586, 16
        %v931 = vor.u32 %v928, %v929
        %v932 = vsel %vm589, %v924, %v931
        %v933 = vrot.slane %v928, 4
        %v935 = vshrl.u32 %v587, 16
        %v937 = vrot.slane %v935, 7
        %v938 = vshll.u32 %v587, 16
        %v940 = vor.u32 %v937, %v938
        %v941 = vsel %vm589, %v933, %v940
        %v942 = vld [vmem:[#allocation2 + $0x10] sm:$0x1]
        %v943 = vld [vmem:[#allocation2 + $0x28] sm:$0x1]
        %v944 = vld [vmem:[#allocation2 + $0x40] sm:$0x1]
        %v945 = vld [vmem:[#allocation2 + $0x58] sm:$0x1]
        %v946 = vld [vmem:[#allocation2 + $0x70] sm:$0x1]
        %v947 = vld [vmem:[#allocation2 + $0x88] sm:$0x1]
        %v948 = vld [vmem:[#allocation2 + $0xa0] sm:$0x1]
        %v949 = vld [vmem:[#allocation2 + $0xb8] sm:$0x1]
        %v950 = vld [vmem:[#allocation2 + $0xd0] sm:$0x1]
        %v951 = vld [vmem:[#allocation2 + $0xe8] sm:$0x1]
        %v952 = vld [vmem:[#allocation2 + $0x100] sm:$0x1]
        %v953 = vld [vmem:[#allocation2 + $0x118] sm:$0x1]
        %v954 = vld [vmem:[#allocation2 + $0x130] sm:$0x1]
        %v955 = vld [vmem:[#allocation2 + $0x148] sm:$0x1]
        %v956 = vld [vmem:[#allocation2 + $0x160] sm:$0x1]
        %v957 = vld [vmem:[#allocation2 + $0x178] sm:$0x1]
        %vm958 = vsmask.f32 3328
        %vm959 = vsmask.f32 7440
        %vm960 = vmor %vm958, %vm959
        %v961 = vrot.slane %v596, 4
        %v962 = vrot.slane %v599, 5
        %v963 = vor.u32 %v961, %v962
        %v964 = vrot.slane %v963, 4
        %v965 = vrot.slane %v608, 5
        %v966 = vsel %vm960, %v964, %v965
        %v967 = vrot.slane %v605, 4
        %v968 = vor.u32 %v967, %v965
        %v969 = vrot.slane %v968, 4
        %v971 = vshll.u32 %v942, 16
        %v973 = vrot.slane %v971, 5
        %v974 = vsel %vm960, %v969, %v973
        %v975 = vrot.slane %v618, 4
        %v976 = vrot.slane %v621, 5
        %v977 = vor.u32 %v975, %v976
        %v978 = vrot.slane %v977, 4
        %v979 = vrot.slane %v630, 5
        %v980 = vsel %vm960, %v978, %v979
        %v981 = vrot.slane %v627, 4
        %v982 = vor.u32 %v981, %v979
        %v983 = vrot.slane %v982, 4
        %v985 = vshll.u32 %v943, 16
        %v987 = vrot.slane %v985, 5
        %v988 = vsel %vm960, %v983, %v987
        %v989 = vrot.slane %v640, 4
        %v990 = vrot.slane %v643, 5
        %v991 = vor.u32 %v989, %v990
        %v992 = vrot.slane %v991, 4
        %v993 = vrot.slane %v652, 5
        %v994 = vsel %vm960, %v992, %v993
        %v995 = vrot.slane %v649, 4
        %v996 = vor.u32 %v995, %v993
        %v997 = vrot.slane %v996, 4
        %v999 = vshll.u32 %v944, 16
        %v1001 = vrot.slane %v999, 5
        %v1002 = vsel %vm960, %v997, %v1001
        %v1003 = vrot.slane %v662, 4
        %v1004 = vrot.slane %v665, 5
        %v1005 = vor.u32 %v1003, %v1004
        %v1006 = vrot.slane %v1005, 4
        %v1007 = vrot.slane %v674, 5
        %v1008 = vsel %vm960, %v1006, %v1007
        %v1009 = vrot.slane %v671, 4
        %v1010 = vor.u32 %v1009, %v1007
        %v1011 = vrot.slane %v1010, 4
        %v1013 = vshll.u32 %v945, 16
        %v1015 = vrot.slane %v1013, 5
        %v1016 = vsel %vm960, %v1011, %v1015
        %v1017 = vrot.slane %v684, 4
        %v1018 = vrot.slane %v687, 5
        %v1019 = vor.u32 %v1017, %v1018
        %v1020 = vrot.slane %v1019, 4
        %v1021 = vrot.slane %v696, 5
        %v1022 = vsel %vm960, %v1020, %v1021
        %v1023 = vrot.slane %v693, 4
        %v1024 = vor.u32 %v1023, %v1021
        %v1025 = vrot.slane %v1024, 4
        %v1027 = vshll.u32 %v946, 16
        %v1029 = vrot.slane %v1027, 5
        %v1030 = vsel %vm960, %v1025, %v1029
        %v1031 = vrot.slane %v706, 4
        %v1032 = vrot.slane %v709, 5
        %v1033 = vor.u32 %v1031, %v1032
        %v1034 = vrot.slane %v1033, 4
        %v1035 = vrot.slane %v718, 5
        %v1036 = vsel %vm960, %v1034, %v1035
        %v1037 = vrot.slane %v715, 4
        %v1038 = vor.u32 %v1037, %v1035
        %v1039 = vrot.slane %v1038, 4
        %v1041 = vshll.u32 %v947, 16
        %v1043 = vrot.slane %v1041, 5
        %v1044 = vsel %vm960, %v1039, %v1043
        %v1045 = vrot.slane %v728, 4
        %v1046 = vrot.slane %v731, 5
        %v1047 = vor.u32 %v1045, %v1046
        %v1048 = vrot.slane %v1047, 4
        %v1049 = vrot.slane %v740, 5
        %v1050 = vsel %vm960, %v1048, %v1049
        %v1051 = vrot.slane %v737, 4
        %v1052 = vor.u32 %v1051, %v1049
        %v1053 = vrot.slane %v1052, 4
        %v1055 = vshll.u32 %v948, 16
        %v1057 = vrot.slane %v1055, 5
        %v1058 = vsel %vm960, %v1053, %v1057
        %v1059 = vrot.slane %v750, 4
        %v1060 = vrot.slane %v753, 5
        %v1061 = vor.u32 %v1059, %v1060
        %v1062 = vrot.slane %v1061, 4
        %v1063 = vrot.slane %v762, 5
        %v1064 = vsel %vm960, %v1062, %v1063
        %v1065 = vrot.slane %v759, 4
        %v1066 = vor.u32 %v1065, %v1063
        %v1067 = vrot.slane %v1066, 4
        %v1069 = vshll.u32 %v949, 16
        %v1071 = vrot.slane %v1069, 5
        %v1072 = vsel %vm960, %v1067, %v1071
        %v1073 = vrot.slane %v772, 4
        %v1074 = vrot.slane %v775, 5
        %v1075 = vor.u32 %v1073, %v1074
        %v1076 = vrot.slane %v1075, 4
        %v1077 = vrot.slane %v784, 5
        %v1078 = vsel %vm960, %v1076, %v1077
        %v1079 = vrot.slane %v781, 4
        %v1080 = vor.u32 %v1079, %v1077
        %v1081 = vrot.slane %v1080, 4
        %v1083 = vshll.u32 %v950, 16
        %v1085 = vrot.slane %v1083, 5
        %v1086 = vsel %vm960, %v1081, %v1085
        %v1087 = vrot.slane %v794, 4
        %v1088 = vrot.slane %v797, 5
        %v1089 = vor.u32 %v1087, %v1088
        %v1090 = vrot.slane %v1089, 4
        %v1091 = vrot.slane %v806, 5
        %v1092 = vsel %vm960, %v1090, %v1091
        %v1093 = vrot.slane %v803, 4
        %v1094 = vor.u32 %v1093, %v1091
        %v1095 = vrot.slane %v1094, 4
        %v1097 = vshll.u32 %v951, 16
        %v1099 = vrot.slane %v1097, 5
        %v1100 = vsel %vm960, %v1095, %v1099
        %v1101 = vrot.slane %v816, 4
        %v1102 = vrot.slane %v819, 5
        %v1103 = vor.u32 %v1101, %v1102
        %v1104 = vrot.slane %v1103, 4
        %v1105 = vrot.slane %v828, 5
        %v1106 = vsel %vm960, %v1104, %v1105
        %v1107 = vrot.slane %v825, 4
        %v1108 = vor.u32 %v1107, %v1105
        %v1109 = vrot.slane %v1108, 4
        %v1111 = vshll.u32 %v952, 16
        %v1113 = vrot.slane %v1111, 5
        %v1114 = vsel %vm960, %v1109, %v1113
        %v1115 = vrot.slane %v838, 4
        %v1116 = vrot.slane %v841, 5
        %v1117 = vor.u32 %v1115, %v1116
        %v1118 = vrot.slane %v1117, 4
        %v1119 = vrot.slane %v850, 5
        %v1120 = vsel %vm960, %v1118, %v1119
        %v1121 = vrot.slane %v847, 4
        %v1122 = vor.u32 %v1121, %v1119
        %v1123 = vrot.slane %v1122, 4
        %v1125 = vshll.u32 %v953, 16
        %v1127 = vrot.slane %v1125, 5
        %v1128 = vsel %vm960, %v1123, %v1127
        %v1129 = vrot.slane %v860, 4
        %v1130 = vrot.slane %v863, 5
        %v1131 = vor.u32 %v1129, %v1130
        %v1132 = vrot.slane %v1131, 4
        %v1133 = vrot.slane %v872, 5
        %v1134 = vsel %vm960, %v1132, %v1133
        %v1135 = vrot.slane %v869, 4
        %v1136 = vor.u32 %v1135, %v1133
        %v1137 = vrot.slane %v1136, 4
        %v1139 = vshll.u32 %v954, 16
        %v1141 = vrot.slane %v1139, 5
        %v1142 = vsel %vm960, %v1137, %v1141
        %v1143 = vrot.slane %v882, 4
        %v1144 = vrot.slane %v885, 5
        %v1145 = vor.u32 %v1143, %v1144
        %v1146 = vrot.slane %v1145, 4
        %v1147 = vrot.slane %v894, 5
        %v1148 = vsel %vm960, %v1146, %v1147
        %v1149 = vrot.slane %v891, 4
        %v1150 = vor.u32 %v1149, %v1147
        %v1151 = vrot.slane %v1150, 4
        %v1153 = vshll.u32 %v955, 16
        %v1155 = vrot.slane %v1153, 5
        %v1156 = vsel %vm960, %v1151, %v1155
        %v1157 = vrot.slane %v904, 4
        %v1158 = vrot.slane %v907, 5
        %v1159 = vor.u32 %v1157, %v1158
        %v1160 = vrot.slane %v1159, 4
        %v1161 = vrot.slane %v916, 5
        %v1162 = vsel %vm960, %v1160, %v1161
        %v1163 = vrot.slane %v913, 4
        %v1164 = vor.u32 %v1163, %v1161
        %v1165 = vrot.slane %v1164, 4
        %v1167 = vshll.u32 %v956, 16
        %v1169 = vrot.slane %v1167, 5
        %v1170 = vsel %vm960, %v1165, %v1169
        %v1171 = vrot.slane %v926, 4
        %v1172 = vrot.slane %v929, 5
        %v1173 = vor.u32 %v1171, %v1172
        %v1174 = vrot.slane %v1173, 4
        %v1175 = vrot.slane %v938, 5
        %v1176 = vsel %vm960, %v1174, %v1175
        %v1177 = vrot.slane %v935, 4
        %v1178 = vor.u32 %v1177, %v1175
        %v1179 = vrot.slane %v1178, 4
        %v1181 = vshll.u32 %v957, 16
        %v1183 = vrot.slane %v1181, 5
        %v1184 = vsel %vm960, %v1179, %v1183
        %v1185 = vld [vmem:[%s411 + $0x4] sm:$0x8]
        %v1186 = vld [vmem:[%s411 + $0x8] sm:$0xf]
        %v1187 = vld [vmem:[%s411 + $0xc] sm:$0xf]
        %v1188 = vld [vmem:[%s411 + $0x1c] sm:$0x8]
        %v1189 = vld [vmem:[%s411 + $0x20] sm:$0xf]
        %v1190 = vld [vmem:[%s411 + $0x24] sm:$0xf]
        %v1191 = vld [vmem:[%s411 + $0x34] sm:$0x8]
        %v1192 = vld [vmem:[%s411 + $0x38] sm:$0xf]
        %v1193 = vld [vmem:[%s411 + $0x3c] sm:$0xf]
        %v1194 = vld [vmem:[%s411 + $0x4c] sm:$0x8]
        %v1195 = vld [vmem:[%s411 + $0x50] sm:$0xf]
        %v1196 = vld [vmem:[%s411 + $0x54] sm:$0xf]
        %v1197 = vld [vmem:[%s411 + $0x64] sm:$0x8]
        %v1198 = vld [vmem:[%s411 + $0x68] sm:$0xf]
        %v1199 = vld [vmem:[%s411 + $0x6c] sm:$0xf]
        %v1200 = vld [vmem:[%s411 + $0x7c] sm:$0x8]
        %v1201 = vld [vmem:[%s411 + $0x80] sm:$0xf]
        %v1202 = vld [vmem:[%s411 + $0x84] sm:$0xf]
        %v1203 = vld [vmem:[%s411 + $0x94] sm:$0x8]
        %v1204 = vld [vmem:[%s411 + $0x98] sm:$0xf]
        %v1205 = vld [vmem:[%s411 + $0x9c] sm:$0xf]
        %v1206 = vld [vmem:[%s411 + $0xac] sm:$0x8]
        %v1207 = vld [vmem:[%s411 + $0xb0] sm:$0xf]
        %v1208 = vld [vmem:[%s411 + $0xb4] sm:$0xf]
        %v1209 = vld [vmem:[%s411 + $0xc4] sm:$0x8]
        %v1210 = vld [vmem:[%s411 + $0xc8] sm:$0xf]
        %v1211 = vld [vmem:[%s411 + $0xcc] sm:$0xf]
        %v1212 = vld [vmem:[%s411 + $0xdc] sm:$0x8]
        %v1213 = vld [vmem:[%s411 + $0xe0] sm:$0xf]
        %v1214 = vld [vmem:[%s411 + $0xe4] sm:$0xf]
        %v1215 = vld [vmem:[%s411 + $0xf4] sm:$0x8]
        %v1216 = vld [vmem:[%s411 + $0xf8] sm:$0xf]
        %v1217 = vld [vmem:[%s411 + $0xfc] sm:$0xf]
        %v1218 = vld [vmem:[%s411 + $0x10c] sm:$0x8]
        %v1219 = vld [vmem:[%s411 + $0x110] sm:$0xf]
        %v1220 = vld [vmem:[%s411 + $0x114] sm:$0xf]
        %v1221 = vld [vmem:[%s411 + $0x124] sm:$0x8]
        %v1222 = vld [vmem:[%s411 + $0x128] sm:$0xf]
        %v1223 = vld [vmem:[%s411 + $0x12c] sm:$0xf]
        %v1224 = vld [vmem:[%s411 + $0x13c] sm:$0x8]
        %v1225 = vld [vmem:[%s411 + $0x140] sm:$0xf]
        %v1226 = vld [vmem:[%s411 + $0x144] sm:$0xf]
        %v1227 = vld [vmem:[%s411 + $0x154] sm:$0x8]
        %v1228 = vld [vmem:[%s411 + $0x158] sm:$0xf]
        %v1229 = vld [vmem:[%s411 + $0x15c] sm:$0xf]
        %v1230 = vld [vmem:[%s411 + $0x16c] sm:$0x8]
        %v1231 = vld [vmem:[%s411 + $0x170] sm:$0xf]
        %v1232 = vld [vmem:[%s411 + $0x174] sm:$0xf]
        %v1234 = vshrl.u32 %v1185, 16
        %v1236 = vrot.slane %v1234, 7
        %v1237 = vrot.slane %v1236, 4
        %v1239 = vshrl.u32 %v1186, 16
        %v1241 = vrot.slane %v1239, 7
        %v1242 = vshll.u32 %v1186, 16
        %v1244 = vor.u32 %v1241, %v1242
        %v1245 = vsel %vm589, %v1237, %v1244
        %v1246 = vrot.slane %v1241, 4
        %v1248 = vshrl.u32 %v1187, 16
        %v1250 = vrot.slane %v1248, 7
        %v1251 = vshll.u32 %v1187, 16
        %v1253 = vor.u32 %v1250, %v1251
        %v1254 = vsel %vm589, %v1246, %v1253
        %v1256 = vshrl.u32 %v1188, 16
        %v1258 = vrot.slane %v1256, 7
        %v1259 = vrot.slane %v1258, 4
        %v1261 = vshrl.u32 %v1189, 16
        %v1263 = vrot.slane %v1261, 7
        %v1264 = vshll.u32 %v1189, 16
        %v1266 = vor.u32 %v1263, %v1264
        %v1267 = vsel %vm589, %v1259, %v1266
        %v1268 = vrot.slane %v1263, 4
        %v1270 = vshrl.u32 %v1190, 16
        %v1272 = vrot.slane %v1270, 7
        %v1273 = vshll.u32 %v1190, 16
        %v1275 = vor.u32 %v1272, %v1273
        %v1276 = vsel %vm589, %v1268, %v1275
        %v1278 = vshrl.u32 %v1191, 16
        %v1280 = vrot.slane %v1278, 7
        %v1281 = vrot.slane %v1280, 4
        %v1283 = vshrl.u32 %v1192, 16
        %v1285 = vrot.slane %v1283, 7
        %v1286 = vshll.u32 %v1192, 16
        %v1288 = vor.u32 %v1285, %v1286
        %v1289 = vsel %vm589, %v1281, %v1288
        %v1290 = vrot.slane %v1285, 4
        %v1292 = vshrl.u32 %v1193, 16
        %v1294 = vrot.slane %v1292, 7
        %v1295 = vshll.u32 %v1193, 16
        %v1297 = vor.u32 %v1294, %v1295
        %v1298 = vsel %vm589, %v1290, %v1297
        %v1300 = vshrl.u32 %v1194, 16
        %v1302 = vrot.slane %v1300, 7
        %v1303 = vrot.slane %v1302, 4
        %v1305 = vshrl.u32 %v1195, 16
        %v1307 = vrot.slane %v1305, 7
        %v1308 = vshll.u32 %v1195, 16
        %v1310 = vor.u32 %v1307, %v1308
        %v1311 = vsel %vm589, %v1303, %v1310
        %v1312 = vrot.slane %v1307, 4
        %v1314 = vshrl.u32 %v1196, 16
        %v1316 = vrot.slane %v1314, 7
        %v1317 = vshll.u32 %v1196, 16
        %v1319 = vor.u32 %v1316, %v1317
        %v1320 = vsel %vm589, %v1312, %v1319
        %v1322 = vshrl.u32 %v1197, 16
        %v1324 = vrot.slane %v1322, 7
        %v1325 = vrot.slane %v1324, 4
        %v1327 = vshrl.u32 %v1198, 16
        %v1329 = vrot.slane %v1327, 7
        %v1330 = vshll.u32 %v1198, 16
        %v1332 = vor.u32 %v1329, %v1330
        %v1333 = vsel %vm589, %v1325, %v1332
        %v1334 = vrot.slane %v1329, 4
        %v1336 = vshrl.u32 %v1199, 16
        %v1338 = vrot.slane %v1336, 7
        %v1339 = vshll.u32 %v1199, 16
        %v1341 = vor.u32 %v1338, %v1339
        %v1342 = vsel %vm589, %v1334, %v1341
        %v1344 = vshrl.u32 %v1200, 16
        %v1346 = vrot.slane %v1344, 7
        %v1347 = vrot.slane %v1346, 4
        %v1349 = vshrl.u32 %v1201, 16
        %v1351 = vrot.slane %v1349, 7
        %v1352 = vshll.u32 %v1201, 16
        %v1354 = vor.u32 %v1351, %v1352
        %v1355 = vsel %vm589, %v1347, %v1354
        %v1356 = vrot.slane %v1351, 4
        %v1358 = vshrl.u32 %v1202, 16
        %v1360 = vrot.slane %v1358, 7
        %v1361 = vshll.u32 %v1202, 16
        %v1363 = vor.u32 %v1360, %v1361
        %v1364 = vsel %vm589, %v1356, %v1363
        %v1366 = vshrl.u32 %v1203, 16
        %v1368 = vrot.slane %v1366, 7
        %v1369 = vrot.slane %v1368, 4
        %v1371 = vshrl.u32 %v1204, 16
        %v1373 = vrot.slane %v1371, 7
        %v1374 = vshll.u32 %v1204, 16
        %v1376 = vor.u32 %v1373, %v1374
        %v1377 = vsel %vm589, %v1369, %v1376
        %v1378 = vrot.slane %v1373, 4
        %v1380 = vshrl.u32 %v1205, 16
        %v1382 = vrot.slane %v1380, 7
        %v1383 = vshll.u32 %v1205, 16
        %v1385 = vor.u32 %v1382, %v1383
        %v1386 = vsel %vm589, %v1378, %v1385
        %v1388 = vshrl.u32 %v1206, 16
        %v1390 = vrot.slane %v1388, 7
        %v1391 = vrot.slane %v1390, 4
        %v1393 = vshrl.u32 %v1207, 16
        %v1395 = vrot.slane %v1393, 7
        %v1396 = vshll.u32 %v1207, 16
        %v1398 = vor.u32 %v1395, %v1396
        %v1399 = vsel %vm589, %v1391, %v1398
        %v1400 = vrot.slane %v1395, 4
        %v1402 = vshrl.u32 %v1208, 16
        %v1404 = vrot.slane %v1402, 7
        %v1405 = vshll.u32 %v1208, 16
        %v1407 = vor.u32 %v1404, %v1405
        %v1408 = vsel %vm589, %v1400, %v1407
        %v1410 = vshrl.u32 %v1209, 16
        %v1412 = vrot.slane %v1410, 7
        %v1413 = vrot.slane %v1412, 4
        %v1415 = vshrl.u32 %v1210, 16
        %v1417 = vrot.slane %v1415, 7
        %v1418 = vshll.u32 %v1210, 16
        %v1420 = vor.u32 %v1417, %v1418
        %v1421 = vsel %vm589, %v1413, %v1420
        %v1422 = vrot.slane %v1417, 4
        %v1424 = vshrl.u32 %v1211, 16
        %v1426 = vrot.slane %v1424, 7
        %v1427 = vshll.u32 %v1211, 16
        %v1429 = vor.u32 %v1426, %v1427
        %v1430 = vsel %vm589, %v1422, %v1429
        %v1432 = vshrl.u32 %v1212, 16
        %v1434 = vrot.slane %v1432, 7
        %v1435 = vrot.slane %v1434, 4
        %v1437 = vshrl.u32 %v1213, 16
        %v1439 = vrot.slane %v1437, 7
        %v1440 = vshll.u32 %v1213, 16
        %v1442 = vor.u32 %v1439, %v1440
        %v1443 = vsel %vm589, %v1435, %v1442
        %v1444 = vrot.slane %v1439, 4
        %v1446 = vshrl.u32 %v1214, 16
        %v1448 = vrot.slane %v1446, 7
        %v1449 = vshll.u32 %v1214, 16
        %v1451 = vor.u32 %v1448, %v1449
        %v1452 = vsel %vm589, %v1444, %v1451
        %v1454 = vshrl.u32 %v1215, 16
        %v1456 = vrot.slane %v1454, 7
        %v1457 = vrot.slane %v1456, 4
        %v1459 = vshrl.u32 %v1216, 16
        %v1461 = vrot.slane %v1459, 7
        %v1462 = vshll.u32 %v1216, 16
        %v1464 = vor.u32 %v1461, %v1462
        %v1465 = vsel %vm589, %v1457, %v1464
        %v1466 = vrot.slane %v1461, 4
        %v1468 = vshrl.u32 %v1217, 16
        %v1470 = vrot.slane %v1468, 7
        %v1471 = vshll.u32 %v1217, 16
        %v1473 = vor.u32 %v1470, %v1471
        %v1474 = vsel %vm589, %v1466, %v1473
        %v1476 = vshrl.u32 %v1218, 16
        %v1478 = vrot.slane %v1476, 7
        %v1479 = vrot.slane %v1478, 4
        %v1481 = vshrl.u32 %v1219, 16
        %v1483 = vrot.slane %v1481, 7
        %v1484 = vshll.u32 %v1219, 16
        %v1486 = vor.u32 %v1483, %v1484
        %v1487 = vsel %vm589, %v1479, %v1486
        %v1488 = vrot.slane %v1483, 4
        %v1490 = vshrl.u32 %v1220, 16
        %v1492 = vrot.slane %v1490, 7
        %v1493 = vshll.u32 %v1220, 16
        %v1495 = vor.u32 %v1492, %v1493
        %v1496 = vsel %vm589, %v1488, %v1495
        %v1498 = vshrl.u32 %v1221, 16
        %v1500 = vrot.slane %v1498, 7
        %v1501 = vrot.slane %v1500, 4
        %v1503 = vshrl.u32 %v1222, 16
        %v1505 = vrot.slane %v1503, 7
        %v1506 = vshll.u32 %v1222, 16
        %v1508 = vor.u32 %v1505, %v1506
        %v1509 = vsel %vm589, %v1501, %v1508
        %v1510 = vrot.slane %v1505, 4
        %v1512 = vshrl.u32 %v1223, 16
        %v1514 = vrot.slane %v1512, 7
        %v1515 = vshll.u32 %v1223, 16
        %v1517 = vor.u32 %v1514, %v1515
        %v1518 = vsel %vm589, %v1510, %v1517
        %v1520 = vshrl.u32 %v1224, 16
        %v1522 = vrot.slane %v1520, 7
        %v1523 = vrot.slane %v1522, 4
        %v1525 = vshrl.u32 %v1225, 16
        %v1527 = vrot.slane %v1525, 7
        %v1528 = vshll.u32 %v1225, 16
        %v1530 = vor.u32 %v1527, %v1528
        %v1531 = vsel %vm589, %v1523, %v1530
        %v1532 = vrot.slane %v1527, 4
        %v1534 = vshrl.u32 %v1226, 16
        %v1536 = vrot.slane %v1534, 7
        %v1537 = vshll.u32 %v1226, 16
        %v1539 = vor.u32 %v1536, %v1537
        %v1540 = vsel %vm589, %v1532, %v1539
        %v1542 = vshrl.u32 %v1227, 16
        %v1544 = vrot.slane %v1542, 7
        %v1545 = vrot.slane %v1544, 4
        %v1547 = vshrl.u32 %v1228, 16
        %v1549 = vrot.slane %v1547, 7
        %v1550 = vshll.u32 %v1228, 16
        %v1552 = vor.u32 %v1549, %v1550
        %v1553 = vsel %vm589, %v1545, %v1552
        %v1554 = vrot.slane %v1549, 4
        %v1556 = vshrl.u32 %v1229, 16
        %v1558 = vrot.slane %v1556, 7
        %v1559 = vshll.u32 %v1229, 16
        %v1561 = vor.u32 %v1558, %v1559
        %v1562 = vsel %vm589, %v1554, %v1561
        %v1564 = vshrl.u32 %v1230, 16
        %v1566 = vrot.slane %v1564, 7
        %v1567 = vrot.slane %v1566, 4
        %v1569 = vshrl.u32 %v1231, 16
        %v1571 = vrot.slane %v1569, 7
        %v1572 = vshll.u32 %v1231, 16
        %v1574 = vor.u32 %v1571, %v1572
        %v1575 = vsel %vm589, %v1567, %v1574
        %v1576 = vrot.slane %v1571, 4
        %v1578 = vshrl.u32 %v1232, 16
        %v1580 = vrot.slane %v1578, 7
        %v1581 = vshll.u32 %v1232, 16
        %v1583 = vor.u32 %v1580, %v1581
        %v1584 = vsel %vm589, %v1576, %v1583
        %v1585 = vld [vmem:[%s411 + $0x10] sm:$0x1]
        %v1586 = vld [vmem:[%s411 + $0x28] sm:$0x1]
        %v1587 = vld [vmem:[%s411 + $0x40] sm:$0x1]
        %v1588 = vld [vmem:[%s411 + $0x58] sm:$0x1]
        %v1589 = vld [vmem:[%s411 + $0x70] sm:$0x1]
        %v1590 = vld [vmem:[%s411 + $0x88] sm:$0x1]
        %v1591 = vld [vmem:[%s411 + $0xa0] sm:$0x1]
        %v1592 = vld [vmem:[%s411 + $0xb8] sm:$0x1]
        %v1593 = vld [vmem:[%s411 + $0xd0] sm:$0x1]
        %v1594 = vld [vmem:[%s411 + $0xe8] sm:$0x1]
        %v1595 = vld [vmem:[%s411 + $0x100] sm:$0x1]
        %v1596 = vld [vmem:[%s411 + $0x118] sm:$0x1]
        %v1597 = vld [vmem:[%s411 + $0x130] sm:$0x1]
        %v1598 = vld [vmem:[%s411 + $0x148] sm:$0x1]
        %v1599 = vld [vmem:[%s411 + $0x160] sm:$0x1]
        %v1600 = vld [vmem:[%s411 + $0x178] sm:$0x1]
        %v1601 = vrot.slane %v1239, 4
        %v1602 = vrot.slane %v1242, 5
        %v1603 = vor.u32 %v1601, %v1602
        %v1604 = vrot.slane %v1603, 4
        %v1605 = vrot.slane %v1251, 5
        %v1606 = vsel %vm960, %v1604, %v1605
        %v1607 = vrot.slane %v1248, 4
        %v1608 = vor.u32 %v1607, %v1605
        %v1609 = vrot.slane %v1608, 4
        %v1611 = vshll.u32 %v1585, 16
        %v1613 = vrot.slane %v1611, 5
        %v1614 = vsel %vm960, %v1609, %v1613
        %v1615 = vrot.slane %v1261, 4
        %v1616 = vrot.slane %v1264, 5
        %v1617 = vor.u32 %v1615, %v1616
        %v1618 = vrot.slane %v1617, 4
        %v1619 = vrot.slane %v1273, 5
        %v1620 = vsel %vm960, %v1618, %v1619
        %v1621 = vrot.slane %v1270, 4
        %v1622 = vor.u32 %v1621, %v1619
        %v1623 = vrot.slane %v1622, 4
        %v1625 = vshll.u32 %v1586, 16
        %v1627 = vrot.slane %v1625, 5
        %v1628 = vsel %vm960, %v1623, %v1627
        %v1629 = vrot.slane %v1283, 4
        %v1630 = vrot.slane %v1286, 5
        %v1631 = vor.u32 %v1629, %v1630
        %v1632 = vrot.slane %v1631, 4
        %v1633 = vrot.slane %v1295, 5
        %v1634 = vsel %vm960, %v1632, %v1633
        %v1635 = vrot.slane %v1292, 4
        %v1636 = vor.u32 %v1635, %v1633
        %v1637 = vrot.slane %v1636, 4
        %v1639 = vshll.u32 %v1587, 16
        %v1641 = vrot.slane %v1639, 5
        %v1642 = vsel %vm960, %v1637, %v1641
        %v1643 = vrot.slane %v1305, 4
        %v1644 = vrot.slane %v1308, 5
        %v1645 = vor.u32 %v1643, %v1644
        %v1646 = vrot.slane %v1645, 4
        %v1647 = vrot.slane %v1317, 5
        %v1648 = vsel %vm960, %v1646, %v1647
        %v1649 = vrot.slane %v1314, 4
        %v1650 = vor.u32 %v1649, %v1647
        %v1651 = vrot.slane %v1650, 4
        %v1653 = vshll.u32 %v1588, 16
        %v1655 = vrot.slane %v1653, 5
        %v1656 = vsel %vm960, %v1651, %v1655
        %v1657 = vrot.slane %v1327, 4
        %v1658 = vrot.slane %v1330, 5
        %v1659 = vor.u32 %v1657, %v1658
        %v1660 = vrot.slane %v1659, 4
        %v1661 = vrot.slane %v1339, 5
        %v1662 = vsel %vm960, %v1660, %v1661
        %v1663 = vrot.slane %v1336, 4
        %v1664 = vor.u32 %v1663, %v1661
        %v1665 = vrot.slane %v1664, 4
        %v1667 = vshll.u32 %v1589, 16
        %v1669 = vrot.slane %v1667, 5
        %v1670 = vsel %vm960, %v1665, %v1669
        %v1671 = vrot.slane %v1349, 4
        %v1672 = vrot.slane %v1352, 5
        %v1673 = vor.u32 %v1671, %v1672
        %v1674 = vrot.slane %v1673, 4
        %v1675 = vrot.slane %v1361, 5
        %v1676 = vsel %vm960, %v1674, %v1675
        %v1677 = vrot.slane %v1358, 4
        %v1678 = vor.u32 %v1677, %v1675
        %v1679 = vrot.slane %v1678, 4
        %v1681 = vshll.u32 %v1590, 16
        %v1683 = vrot.slane %v1681, 5
        %v1684 = vsel %vm960, %v1679, %v1683
        %v1685 = vrot.slane %v1371, 4
        %v1686 = vrot.slane %v1374, 5
        %v1687 = vor.u32 %v1685, %v1686
        %v1688 = vrot.slane %v1687, 4
        %v1689 = vrot.slane %v1383, 5
        %v1690 = vsel %vm960, %v1688, %v1689
        %v1691 = vrot.slane %v1380, 4
        %v1692 = vor.u32 %v1691, %v1689
        %v1693 = vrot.slane %v1692, 4
        %v1695 = vshll.u32 %v1591, 16
        %v1697 = vrot.slane %v1695, 5
        %v1698 = vsel %vm960, %v1693, %v1697
        %v1699 = vrot.slane %v1393, 4
        %v1700 = vrot.slane %v1396, 5
        %v1701 = vor.u32 %v1699, %v1700
        %v1702 = vrot.slane %v1701, 4
        %v1703 = vrot.slane %v1405, 5
        %v1704 = vsel %vm960, %v1702, %v1703
        %v1705 = vrot.slane %v1402, 4
        %v1706 = vor.u32 %v1705, %v1703
        %v1707 = vrot.slane %v1706, 4
        %v1709 = vshll.u32 %v1592, 16
        %v1711 = vrot.slane %v1709, 5
        %v1712 = vsel %vm960, %v1707, %v1711
        %v1713 = vrot.slane %v1415, 4
        %v1714 = vrot.slane %v1418, 5
        %v1715 = vor.u32 %v1713, %v1714
        %v1716 = vrot.slane %v1715, 4
        %v1717 = vrot.slane %v1427, 5
        %v1718 = vsel %vm960, %v1716, %v1717
        %v1719 = vrot.slane %v1424, 4
        %v1720 = vor.u32 %v1719, %v1717
        %v1721 = vrot.slane %v1720, 4
        %v1723 = vshll.u32 %v1593, 16
        %v1725 = vrot.slane %v1723, 5
        %v1726 = vsel %vm960, %v1721, %v1725
        %v1727 = vrot.slane %v1437, 4
        %v1728 = vrot.slane %v1440, 5
        %v1729 = vor.u32 %v1727, %v1728
        %v1730 = vrot.slane %v1729, 4
        %v1731 = vrot.slane %v1449, 5
        %v1732 = vsel %vm960, %v1730, %v1731
        %v1733 = vrot.slane %v1446, 4
        %v1734 = vor.u32 %v1733, %v1731
        %v1735 = vrot.slane %v1734, 4
        %v1737 = vshll.u32 %v1594, 16
        %v1739 = vrot.slane %v1737, 5
        %v1740 = vsel %vm960, %v1735, %v1739
        %v1741 = vrot.slane %v1459, 4
        %v1742 = vrot.slane %v1462, 5
        %v1743 = vor.u32 %v1741, %v1742
        %v1744 = vrot.slane %v1743, 4
        %v1745 = vrot.slane %v1471, 5
        %v1746 = vsel %vm960, %v1744, %v1745
        %v1747 = vrot.slane %v1468, 4
        %v1748 = vor.u32 %v1747, %v1745
        %v1749 = vrot.slane %v1748, 4
        %v1751 = vshll.u32 %v1595, 16
        %v1753 = vrot.slane %v1751, 5
        %v1754 = vsel %vm960, %v1749, %v1753
        %v1755 = vrot.slane %v1481, 4
        %v1756 = vrot.slane %v1484, 5
        %v1757 = vor.u32 %v1755, %v1756
        %v1758 = vrot.slane %v1757, 4
        %v1759 = vrot.slane %v1493, 5
        %v1760 = vsel %vm960, %v1758, %v1759
        %v1761 = vrot.slane %v1490, 4
        %v1762 = vor.u32 %v1761, %v1759
        %v1763 = vrot.slane %v1762, 4
        %v1765 = vshll.u32 %v1596, 16
        %v1767 = vrot.slane %v1765, 5
        %v1768 = vsel %vm960, %v1763, %v1767
        %v1769 = vrot.slane %v1503, 4
        %v1770 = vrot.slane %v1506, 5
        %v1771 = vor.u32 %v1769, %v1770
        %v1772 = vrot.slane %v1771, 4
        %v1773 = vrot.slane %v1515, 5
        %v1774 = vsel %vm960, %v1772, %v1773
        %v1775 = vrot.slane %v1512, 4
        %v1776 = vor.u32 %v1775, %v1773
        %v1777 = vrot.slane %v1776, 4
        %v1779 = vshll.u32 %v1597, 16
        %v1781 = vrot.slane %v1779, 5
        %v1782 = vsel %vm960, %v1777, %v1781
        %v1783 = vrot.slane %v1525, 4
        %v1784 = vrot.slane %v1528, 5
        %v1785 = vor.u32 %v1783, %v1784
        %v1786 = vrot.slane %v1785, 4
        %v1787 = vrot.slane %v1537, 5
        %v1788 = vsel %vm960, %v1786, %v1787
        %v1789 = vrot.slane %v1534, 4
        %v1790 = vor.u32 %v1789, %v1787
        %v1791 = vrot.slane %v1790, 4
        %v1793 = vshll.u32 %v1598, 16
        %v1795 = vrot.slane %v1793, 5
        %v1796 = vsel %vm960, %v1791, %v1795
        %v1797 = vrot.slane %v1547, 4
        %v1798 = vrot.slane %v1550, 5
        %v1799 = vor.u32 %v1797, %v1798
        %v1800 = vrot.slane %v1799, 4
        %v1801 = vrot.slane %v1559, 5
        %v1802 = vsel %vm960, %v1800, %v1801
        %v1803 = vrot.slane %v1556, 4
        %v1804 = vor.u32 %v1803, %v1801
        %v1805 = vrot.slane %v1804, 4
        %v1807 = vshll.u32 %v1599, 16
        %v1809 = vrot.slane %v1807, 5
        %v1810 = vsel %vm960, %v1805, %v1809
        %v1811 = vrot.slane %v1569, 4
        %v1812 = vrot.slane %v1572, 5
        %v1813 = vor.u32 %v1811, %v1812
        %v1814 = vrot.slane %v1813, 4
        %v1815 = vrot.slane %v1581, 5
        %v1816 = vsel %vm960, %v1814, %v1815
        %v1817 = vrot.slane %v1578, 4
        %v1818 = vor.u32 %v1817, %v1815
        %v1819 = vrot.slane %v1818, 4
        %v1821 = vshll.u32 %v1600, 16
        %v1823 = vrot.slane %v1821, 5
        %v1824 = vsel %vm960, %v1819, %v1823
        %s1825 = scalar_lea.vmem [#allocation2], 48
        %v1826 = vld [vmem:[%s1825 + $0x4] sm:$0x8]
        %v1827 = vld [vmem:[%s1825 + $0x8] sm:$0xf]
        %v1828 = vld [vmem:[%s1825 + $0xc] sm:$0xf]
        %v1829 = vld [vmem:[%s1825 + $0x1c] sm:$0x8]
        %v1830 = vld [vmem:[%s1825 + $0x20] sm:$0xf]
        %v1831 = vld [vmem:[%s1825 + $0x24] sm:$0xf]
        %v1832 = vld [vmem:[%s1825 + $0x34] sm:$0x8]
        %v1833 = vld [vmem:[%s1825 + $0x38] sm:$0xf]
        %v1834 = vld [vmem:[%s1825 + $0x3c] sm:$0xf]
        %v1835 = vld [vmem:[%s1825 + $0x4c] sm:$0x8]
        %v1836 = vld [vmem:[%s1825 + $0x50] sm:$0xf]
        %v1837 = vld [vmem:[%s1825 + $0x54] sm:$0xf]
        %v1838 = vld [vmem:[%s1825 + $0x64] sm:$0x8]
        %v1839 = vld [vmem:[%s1825 + $0x68] sm:$0xf]
        %v1840 = vld [vmem:[%s1825 + $0x6c] sm:$0xf]
        %v1841 = vld [vmem:[%s1825 + $0x7c] sm:$0x8]
        %v1842 = vld [vmem:[%s1825 + $0x80] sm:$0xf]
        %v1843 = vld [vmem:[%s1825 + $0x84] sm:$0xf]
        %v1844 = vld [vmem:[%s1825 + $0x94] sm:$0x8]
        %v1845 = vld [vmem:[%s1825 + $0x98] sm:$0xf]
        %v1846 = vld [vmem:[%s1825 + $0x9c] sm:$0xf]
        %v1847 = vld [vmem:[%s1825 + $0xac] sm:$0x8]
        %v1848 = vld [vmem:[%s1825 + $0xb0] sm:$0xf]
        %v1849 = vld [vmem:[%s1825 + $0xb4] sm:$0xf]
        %v1850 = vld [vmem:[%s1825 + $0xc4] sm:$0x8]
        %v1851 = vld [vmem:[%s1825 + $0xc8] sm:$0xf]
        %v1852 = vld [vmem:[%s1825 + $0xcc] sm:$0xf]
        %v1853 = vld [vmem:[%s1825 + $0xdc] sm:$0x8]
        %v1854 = vld [vmem:[%s1825 + $0xe0] sm:$0xf]
        %v1855 = vld [vmem:[%s1825 + $0xe4] sm:$0xf]
        %v1856 = vld [vmem:[%s1825 + $0xf4] sm:$0x8]
        %v1857 = vld [vmem:[%s1825 + $0xf8] sm:$0xf]
        %v1858 = vld [vmem:[%s1825 + $0xfc] sm:$0xf]
        %v1859 = vld [vmem:[%s1825 + $0x10c] sm:$0x8]
        %v1860 = vld [vmem:[%s1825 + $0x110] sm:$0xf]
        %v1861 = vld [vmem:[%s1825 + $0x114] sm:$0xf]
        %v1862 = vld [vmem:[%s1825 + $0x124] sm:$0x8]
        %v1863 = vld [vmem:[%s1825 + $0x128] sm:$0xf]
        %v1864 = vld [vmem:[%s1825 + $0x12c] sm:$0xf]
        %v1865 = vld [vmem:[%s1825 + $0x13c] sm:$0x8]
        %v1866 = vld [vmem:[%s1825 + $0x140] sm:$0xf]
        %v1867 = vld [vmem:[%s1825 + $0x144] sm:$0xf]
        %v1868 = vld [vmem:[%s1825 + $0x154] sm:$0x8]
        %v1869 = vld [vmem:[%s1825 + $0x158] sm:$0xf]
        %v1870 = vld [vmem:[%s1825 + $0x15c] sm:$0xf]
        %v1871 = vld [vmem:[%s1825 + $0x16c] sm:$0x8]
        %v1872 = vld [vmem:[%s1825 + $0x170] sm:$0xf]
        %v1873 = vld [vmem:[%s1825 + $0x174] sm:$0xf]
        %v1875 = vshrl.u32 %v1826, 16
        %v1877 = vrot.slane %v1875, 7
        %v1878 = vrot.slane %v1877, 4
        %v1880 = vshrl.u32 %v1827, 16
        %v1882 = vrot.slane %v1880, 7
        %v1883 = vshll.u32 %v1827, 16
        %v1885 = vor.u32 %v1882, %v1883
        %v1886 = vsel %vm589, %v1878, %v1885
        %v1887 = vrot.slane %v1882, 4
        %v1889 = vshrl.u32 %v1828, 16
        %v1891 = vrot.slane %v1889, 7
        %v1892 = vshll.u32 %v1828, 16
        %v1894 = vor.u32 %v1891, %v1892
        %v1895 = vsel %vm589, %v1887, %v1894
        %v1897 = vshrl.u32 %v1829, 16
        %v1899 = vrot.slane %v1897, 7
        %v1900 = vrot.slane %v1899, 4
        %v1902 = vshrl.u32 %v1830, 16
        %v1904 = vrot.slane %v1902, 7
        %v1905 = vshll.u32 %v1830, 16
        %v1907 = vor.u32 %v1904, %v1905
        %v1908 = vsel %vm589, %v1900, %v1907
        %v1909 = vrot.slane %v1904, 4
        %v1911 = vshrl.u32 %v1831, 16
        %v1913 = vrot.slane %v1911, 7
        %v1914 = vshll.u32 %v1831, 16
        %v1916 = vor.u32 %v1913, %v1914
        %v1917 = vsel %vm589, %v1909, %v1916
        %v1919 = vshrl.u32 %v1832, 16
        %v1921 = vrot.slane %v1919, 7
        %v1922 = vrot.slane %v1921, 4
        %v1924 = vshrl.u32 %v1833, 16
        %v1926 = vrot.slane %v1924, 7
        %v1927 = vshll.u32 %v1833, 16
        %v1929 = vor.u32 %v1926, %v1927
        %v1930 = vsel %vm589, %v1922, %v1929
        %v1931 = vrot.slane %v1926, 4
        %v1933 = vshrl.u32 %v1834, 16
        %v1935 = vrot.slane %v1933, 7
        %v1936 = vshll.u32 %v1834, 16
        %v1938 = vor.u32 %v1935, %v1936
        %v1939 = vsel %vm589, %v1931, %v1938
        %v1941 = vshrl.u32 %v1835, 16
        %v1943 = vrot.slane %v1941, 7
        %v1944 = vrot.slane %v1943, 4
        %v1946 = vshrl.u32 %v1836, 16
        %v1948 = vrot.slane %v1946, 7
        %v1949 = vshll.u32 %v1836, 16
        %v1951 = vor.u32 %v1948, %v1949
        %v1952 = vsel %vm589, %v1944, %v1951
        %v1953 = vrot.slane %v1948, 4
        %v1955 = vshrl.u32 %v1837, 16
        %v1957 = vrot.slane %v1955, 7
        %v1958 = vshll.u32 %v1837, 16
        %v1960 = vor.u32 %v1957, %v1958
        %v1961 = vsel %vm589, %v1953, %v1960
        %v1963 = vshrl.u32 %v1838, 16
        %v1965 = vrot.slane %v1963, 7
        %v1966 = vrot.slane %v1965, 4
        %v1968 = vshrl.u32 %v1839, 16
        %v1970 = vrot.slane %v1968, 7
        %v1971 = vshll.u32 %v1839, 16
        %v1973 = vor.u32 %v1970, %v1971
        %v1974 = vsel %vm589, %v1966, %v1973
        %v1975 = vrot.slane %v1970, 4
        %v1977 = vshrl.u32 %v1840, 16
        %v1979 = vrot.slane %v1977, 7
        %v1980 = vshll.u32 %v1840, 16
        %v1982 = vor.u32 %v1979, %v1980
        %v1983 = vsel %vm589, %v1975, %v1982
        %v1985 = vshrl.u32 %v1841, 16
        %v1987 = vrot.slane %v1985, 7
        %v1988 = vrot.slane %v1987, 4
        %v1990 = vshrl.u32 %v1842, 16
        %v1992 = vrot.slane %v1990, 7
        %v1993 = vshll.u32 %v1842, 16
        %v1995 = vor.u32 %v1992, %v1993
        %v1996 = vsel %vm589, %v1988, %v1995
        %v1997 = vrot.slane %v1992, 4
        %v1999 = vshrl.u32 %v1843, 16
        %v2001 = vrot.slane %v1999, 7
        %v2002 = vshll.u32 %v1843, 16
        %v2004 = vor.u32 %v2001, %v2002
        %v2005 = vsel %vm589, %v1997, %v2004
        %v2007 = vshrl.u32 %v1844, 16
        %v2009 = vrot.slane %v2007, 7
        %v2010 = vrot.slane %v2009, 4
        %v2012 = vshrl.u32 %v1845, 16
        %v2014 = vrot.slane %v2012, 7
        %v2015 = vshll.u32 %v1845, 16
        %v2017 = vor.u32 %v2014, %v2015
        %v2018 = vsel %vm589, %v2010, %v2017
        %v2019 = vrot.slane %v2014, 4
        %v2021 = vshrl.u32 %v1846, 16
        %v2023 = vrot.slane %v2021, 7
        %v2024 = vshll.u32 %v1846, 16
        %v2026 = vor.u32 %v2023, %v2024
        %v2027 = vsel %vm589, %v2019, %v2026
        %v2029 = vshrl.u32 %v1847, 16
        %v2031 = vrot.slane %v2029, 7
        %v2032 = vrot.slane %v2031, 4
        %v2034 = vshrl.u32 %v1848, 16
        %v2036 = vrot.slane %v2034, 7
        %v2037 = vshll.u32 %v1848, 16
        %v2039 = vor.u32 %v2036, %v2037
        %v2040 = vsel %vm589, %v2032, %v2039
        %v2041 = vrot.slane %v2036, 4
        %v2043 = vshrl.u32 %v1849, 16
        %v2045 = vrot.slane %v2043, 7
        %v2046 = vshll.u32 %v1849, 16
        %v2048 = vor.u32 %v2045, %v2046
        %v2049 = vsel %vm589, %v2041, %v2048
        %v2051 = vshrl.u32 %v1850, 16
        %v2053 = vrot.slane %v2051, 7
        %v2054 = vrot.slane %v2053, 4
        %v2056 = vshrl.u32 %v1851, 16
        %v2058 = vrot.slane %v2056, 7
        %v2059 = vshll.u32 %v1851, 16
        %v2061 = vor.u32 %v2058, %v2059
        %v2062 = vsel %vm589, %v2054, %v2061
        %v2063 = vrot.slane %v2058, 4
        %v2065 = vshrl.u32 %v1852, 16
        %v2067 = vrot.slane %v2065, 7
        %v2068 = vshll.u32 %v1852, 16
        %v2070 = vor.u32 %v2067, %v2068
        %v2071 = vsel %vm589, %v2063, %v2070
        %v2073 = vshrl.u32 %v1853, 16
        %v2075 = vrot.slane %v2073, 7
        %v2076 = vrot.slane %v2075, 4
        %v2078 = vshrl.u32 %v1854, 16
        %v2080 = vrot.slane %v2078, 7
        %v2081 = vshll.u32 %v1854, 16
        %v2083 = vor.u32 %v2080, %v2081
        %v2084 = vsel %vm589, %v2076, %v2083
        %v2085 = vrot.slane %v2080, 4
        %v2087 = vshrl.u32 %v1855, 16
        %v2089 = vrot.slane %v2087, 7
        %v2090 = vshll.u32 %v1855, 16
        %v2092 = vor.u32 %v2089, %v2090
        %v2093 = vsel %vm589, %v2085, %v2092
        %v2095 = vshrl.u32 %v1856, 16
        %v2097 = vrot.slane %v2095, 7
        %v2098 = vrot.slane %v2097, 4
        %v2100 = vshrl.u32 %v1857, 16
        %v2102 = vrot.slane %v2100, 7
        %v2103 = vshll.u32 %v1857, 16
        %v2105 = vor.u32 %v2102, %v2103
        %v2106 = vsel %vm589, %v2098, %v2105
        %v2107 = vrot.slane %v2102, 4
        %v2109 = vshrl.u32 %v1858, 16
        %v2111 = vrot.slane %v2109, 7
        %v2112 = vshll.u32 %v1858, 16
        %v2114 = vor.u32 %v2111, %v2112
        %v2115 = vsel %vm589, %v2107, %v2114
        %v2117 = vshrl.u32 %v1859, 16
        %v2119 = vrot.slane %v2117, 7
        %v2120 = vrot.slane %v2119, 4
        %v2122 = vshrl.u32 %v1860, 16
        %v2124 = vrot.slane %v2122, 7
        %v2125 = vshll.u32 %v1860, 16
        %v2127 = vor.u32 %v2124, %v2125
        %v2128 = vsel %vm589, %v2120, %v2127
        %v2129 = vrot.slane %v2124, 4
        %v2131 = vshrl.u32 %v1861, 16
        %v2133 = vrot.slane %v2131, 7
        %v2134 = vshll.u32 %v1861, 16
        %v2136 = vor.u32 %v2133, %v2134
        %v2137 = vsel %vm589, %v2129, %v2136
        %v2139 = vshrl.u32 %v1862, 16
        %v2141 = vrot.slane %v2139, 7
        %v2142 = vrot.slane %v2141, 4
        %v2144 = vshrl.u32 %v1863, 16
        %v2146 = vrot.slane %v2144, 7
        %v2147 = vshll.u32 %v1863, 16
        %v2149 = vor.u32 %v2146, %v2147
        %v2150 = vsel %vm589, %v2142, %v2149
        %v2151 = vrot.slane %v2146, 4
        %v2153 = vshrl.u32 %v1864, 16
        %v2155 = vrot.slane %v2153, 7
        %v2156 = vshll.u32 %v1864, 16
        %v2158 = vor.u32 %v2155, %v2156
        %v2159 = vsel %vm589, %v2151, %v2158
        %v2161 = vshrl.u32 %v1865, 16
        %v2163 = vrot.slane %v2161, 7
        %v2164 = vrot.slane %v2163, 4
        %v2166 = vshrl.u32 %v1866, 16
        %v2168 = vrot.slane %v2166, 7
        %v2169 = vshll.u32 %v1866, 16
        %v2171 = vor.u32 %v2168, %v2169
        %v2172 = vsel %vm589, %v2164, %v2171
        %v2173 = vrot.slane %v2168, 4
        %v2175 = vshrl.u32 %v1867, 16
        %v2177 = vrot.slane %v2175, 7
        %v2178 = vshll.u32 %v1867, 16
        %v2180 = vor.u32 %v2177, %v2178
        %v2181 = vsel %vm589, %v2173, %v2180
        %v2183 = vshrl.u32 %v1868, 16
        %v2185 = vrot.slane %v2183, 7
        %v2186 = vrot.slane %v2185, 4
        %v2188 = vshrl.u32 %v1869, 16
        %v2190 = vrot.slane %v2188, 7
        %v2191 = vshll.u32 %v1869, 16
        %v2193 = vor.u32 %v2190, %v2191
        %v2194 = vsel %vm589, %v2186, %v2193
        %v2195 = vrot.slane %v2190, 4
        %v2197 = vshrl.u32 %v1870, 16
        %v2199 = vrot.slane %v2197, 7
        %v2200 = vshll.u32 %v1870, 16
        %v2202 = vor.u32 %v2199, %v2200
        %v2203 = vsel %vm589, %v2195, %v2202
        %v2205 = vshrl.u32 %v1871, 16
        %v2207 = vrot.slane %v2205, 7
        %v2208 = vrot.slane %v2207, 4
        %v2210 = vshrl.u32 %v1872, 16
        %v2212 = vrot.slane %v2210, 7
        %v2213 = vshll.u32 %v1872, 16
        %v2215 = vor.u32 %v2212, %v2213
        %v2216 = vsel %vm589, %v2208, %v2215
        %v2217 = vrot.slane %v2212, 4
        %v2219 = vshrl.u32 %v1873, 16
        %v2221 = vrot.slane %v2219, 7
        %v2222 = vshll.u32 %v1873, 16
        %v2224 = vor.u32 %v2221, %v2222
        %v2225 = vsel %vm589, %v2217, %v2224
        %v2226 = vld [vmem:[%s1825 + $0x10] sm:$0x1]
        %v2227 = vld [vmem:[%s1825 + $0x28] sm:$0x1]
        %v2228 = vld [vmem:[%s1825 + $0x40] sm:$0x1]
        %v2229 = vld [vmem:[%s1825 + $0x58] sm:$0x1]
        %v2230 = vld [vmem:[%s1825 + $0x70] sm:$0x1]
        %v2231 = vld [vmem:[%s1825 + $0x88] sm:$0x1]
        %v2232 = vld [vmem:[%s1825 + $0xa0] sm:$0x1]
        %v2233 = vld [vmem:[%s1825 + $0xb8] sm:$0x1]
        %v2234 = vld [vmem:[%s1825 + $0xd0] sm:$0x1]
        %v2235 = vld [vmem:[%s1825 + $0xe8] sm:$0x1]
        %v2236 = vld [vmem:[%s1825 + $0x100] sm:$0x1]
        %v2237 = vld [vmem:[%s1825 + $0x118] sm:$0x1]
        %v2238 = vld [vmem:[%s1825 + $0x130] sm:$0x1]
        %v2239 = vld [vmem:[%s1825 + $0x148] sm:$0x1]
        %v2240 = vld [vmem:[%s1825 + $0x160] sm:$0x1]
        %v2241 = vld [vmem:[%s1825 + $0x178] sm:$0x1]
        %v2242 = vrot.slane %v1880, 4
        %v2243 = vrot.slane %v1883, 5
        %v2244 = vor.u32 %v2242, %v2243
        %v2245 = vrot.slane %v2244, 4
        %v2246 = vrot.slane %v1892, 5
        %v2247 = vsel %vm960, %v2245, %v2246
        %v2248 = vrot.slane %v1889, 4
        %v2249 = vor.u32 %v2248, %v2246
        %v2250 = vrot.slane %v2249, 4
        %v2252 = vshll.u32 %v2226, 16
        %v2254 = vrot.slane %v2252, 5
        %v2255 = vsel %vm960, %v2250, %v2254
        %v2256 = vrot.slane %v1902, 4
        %v2257 = vrot.slane %v1905, 5
        %v2258 = vor.u32 %v2256, %v2257
        %v2259 = vrot.slane %v2258, 4
        %v2260 = vrot.slane %v1914, 5
        %v2261 = vsel %vm960, %v2259, %v2260
        %v2262 = vrot.slane %v1911, 4
        %v2263 = vor.u32 %v2262, %v2260
        %v2264 = vrot.slane %v2263, 4
        %v2266 = vshll.u32 %v2227, 16
        %v2268 = vrot.slane %v2266, 5
        %v2269 = vsel %vm960, %v2264, %v2268
        %v2270 = vrot.slane %v1924, 4
        %v2271 = vrot.slane %v1927, 5
        %v2272 = vor.u32 %v2270, %v2271
        %v2273 = vrot.slane %v2272, 4
        %v2274 = vrot.slane %v1936, 5
        %v2275 = vsel %vm960, %v2273, %v2274
        %v2276 = vrot.slane %v1933, 4
        %v2277 = vor.u32 %v2276, %v2274
        %v2278 = vrot.slane %v2277, 4
        %v2280 = vshll.u32 %v2228, 16
        %v2282 = vrot.slane %v2280, 5
        %v2283 = vsel %vm960, %v2278, %v2282
        %v2284 = vrot.slane %v1946, 4
        %v2285 = vrot.slane %v1949, 5
        %v2286 = vor.u32 %v2284, %v2285
        %v2287 = vrot.slane %v2286, 4
        %v2288 = vrot.slane %v1958, 5
        %v2289 = vsel %vm960, %v2287, %v2288
        %v2290 = vrot.slane %v1955, 4
        %v2291 = vor.u32 %v2290, %v2288
        %v2292 = vrot.slane %v2291, 4
        %v2294 = vshll.u32 %v2229, 16
        %v2296 = vrot.slane %v2294, 5
        %v2297 = vsel %vm960, %v2292, %v2296
        %v2298 = vrot.slane %v1968, 4
        %v2299 = vrot.slane %v1971, 5
        %v2300 = vor.u32 %v2298, %v2299
        %v2301 = vrot.slane %v2300, 4
        %v2302 = vrot.slane %v1980, 5
        %v2303 = vsel %vm960, %v2301, %v2302
        %v2304 = vrot.slane %v1977, 4
        %v2305 = vor.u32 %v2304, %v2302
        %v2306 = vrot.slane %v2305, 4
        %v2308 = vshll.u32 %v2230, 16
        %v2310 = vrot.slane %v2308, 5
        %v2311 = vsel %vm960, %v2306, %v2310
        %v2312 = vrot.slane %v1990, 4
        %v2313 = vrot.slane %v1993, 5
        %v2314 = vor.u32 %v2312, %v2313
        %v2315 = vrot.slane %v2314, 4
        %v2316 = vrot.slane %v2002, 5
        %v2317 = vsel %vm960, %v2315, %v2316
        %v2318 = vrot.slane %v1999, 4
        %v2319 = vor.u32 %v2318, %v2316
        %v2320 = vrot.slane %v2319, 4
        %v2322 = vshll.u32 %v2231, 16
        %v2324 = vrot.slane %v2322, 5
        %v2325 = vsel %vm960, %v2320, %v2324
        %v2326 = vrot.slane %v2012, 4
        %v2327 = vrot.slane %v2015, 5
        %v2328 = vor.u32 %v2326, %v2327
        %v2329 = vrot.slane %v2328, 4
        %v2330 = vrot.slane %v2024, 5
        %v2331 = vsel %vm960, %v2329, %v2330
        %v2332 = vrot.slane %v2021, 4
        %v2333 = vor.u32 %v2332, %v2330
        %v2334 = vrot.slane %v2333, 4
        %v2336 = vshll.u32 %v2232, 16
        %v2338 = vrot.slane %v2336, 5
        %v2339 = vsel %vm960, %v2334, %v2338
        %v2340 = vrot.slane %v2034, 4
        %v2341 = vrot.slane %v2037, 5
        %v2342 = vor.u32 %v2340, %v2341
        %v2343 = vrot.slane %v2342, 4
        %v2344 = vrot.slane %v2046, 5
        %v2345 = vsel %vm960, %v2343, %v2344
        %v2346 = vrot.slane %v2043, 4
        %v2347 = vor.u32 %v2346, %v2344
        %v2348 = vrot.slane %v2347, 4
        %v2350 = vshll.u32 %v2233, 16
        %v2352 = vrot.slane %v2350, 5
        %v2353 = vsel %vm960, %v2348, %v2352
        %v2354 = vrot.slane %v2056, 4
        %v2355 = vrot.slane %v2059, 5
        %v2356 = vor.u32 %v2354, %v2355
        %v2357 = vrot.slane %v2356, 4
        %v2358 = vrot.slane %v2068, 5
        %v2359 = vsel %vm960, %v2357, %v2358
        %v2360 = vrot.slane %v2065, 4
        %v2361 = vor.u32 %v2360, %v2358
        %v2362 = vrot.slane %v2361, 4
        %v2364 = vshll.u32 %v2234, 16
        %v2366 = vrot.slane %v2364, 5
        %v2367 = vsel %vm960, %v2362, %v2366
        %v2368 = vrot.slane %v2078, 4
        %v2369 = vrot.slane %v2081, 5
        %v2370 = vor.u32 %v2368, %v2369
        %v2371 = vrot.slane %v2370, 4
        %v2372 = vrot.slane %v2090, 5
        %v2373 = vsel %vm960, %v2371, %v2372
        %v2374 = vrot.slane %v2087, 4
        %v2375 = vor.u32 %v2374, %v2372
        %v2376 = vrot.slane %v2375, 4
        %v2378 = vshll.u32 %v2235, 16
        %v2380 = vrot.slane %v2378, 5
        %v2381 = vsel %vm960, %v2376, %v2380
        %v2382 = vrot.slane %v2100, 4
        %v2383 = vrot.slane %v2103, 5
        %v2384 = vor.u32 %v2382, %v2383
        %v2385 = vrot.slane %v2384, 4
        %v2386 = vrot.slane %v2112, 5
        %v2387 = vsel %vm960, %v2385, %v2386
        %v2388 = vrot.slane %v2109, 4
        %v2389 = vor.u32 %v2388, %v2386
        %v2390 = vrot.slane %v2389, 4
        %v2392 = vshll.u32 %v2236, 16
        %v2394 = vrot.slane %v2392, 5
        %v2395 = vsel %vm960, %v2390, %v2394
        %v2396 = vrot.slane %v2122, 4
        %v2397 = vrot.slane %v2125, 5
        %v2398 = vor.u32 %v2396, %v2397
        %v2399 = vrot.slane %v2398, 4
        %v2400 = vrot.slane %v2134, 5
        %v2401 = vsel %vm960, %v2399, %v2400
        %v2402 = vrot.slane %v2131, 4
        %v2403 = vor.u32 %v2402, %v2400
        %v2404 = vrot.slane %v2403, 4
        %v2406 = vshll.u32 %v2237, 16
        %v2408 = vrot.slane %v2406, 5
        %v2409 = vsel %vm960, %v2404, %v2408
        %v2410 = vrot.slane %v2144, 4
        %v2411 = vrot.slane %v2147, 5
        %v2412 = vor.u32 %v2410, %v2411
        %v2413 = vrot.slane %v2412, 4
        %v2414 = vrot.slane %v2156, 5
        %v2415 = vsel %vm960, %v2413, %v2414
        %v2416 = vrot.slane %v2153, 4
        %v2417 = vor.u32 %v2416, %v2414
        %v2418 = vrot.slane %v2417, 4
        %v2420 = vshll.u32 %v2238, 16
        %v2422 = vrot.slane %v2420, 5
        %v2423 = vsel %vm960, %v2418, %v2422
        %v2424 = vrot.slane %v2166, 4
        %v2425 = vrot.slane %v2169, 5
        %v2426 = vor.u32 %v2424, %v2425
        %v2427 = vrot.slane %v2426, 4
        %v2428 = vrot.slane %v2178, 5
        %v2429 = vsel %vm960, %v2427, %v2428
        %v2430 = vrot.slane %v2175, 4
        %v2431 = vor.u32 %v2430, %v2428
        %v2432 = vrot.slane %v2431, 4
        %v2434 = vshll.u32 %v2239, 16
        %v2436 = vrot.slane %v2434, 5
        %v2437 = vsel %vm960, %v2432, %v2436
        %v2438 = vrot.slane %v2188, 4
        %v2439 = vrot.slane %v2191, 5
        %v2440 = vor.u32 %v2438, %v2439
        %v2441 = vrot.slane %v2440, 4
        %v2442 = vrot.slane %v2200, 5
        %v2443 = vsel %vm960, %v2441, %v2442
        %v2444 = vrot.slane %v2197, 4
        %v2445 = vor.u32 %v2444, %v2442
        %v2446 = vrot.slane %v2445, 4
        %v2448 = vshll.u32 %v2240, 16
        %v2450 = vrot.slane %v2448, 5
        %v2451 = vsel %vm960, %v2446, %v2450
        %v2452 = vrot.slane %v2210, 4
        %v2453 = vrot.slane %v2213, 5
        %v2454 = vor.u32 %v2452, %v2453
        %v2455 = vrot.slane %v2454, 4
        %v2456 = vrot.slane %v2222, 5
        %v2457 = vsel %vm960, %v2455, %v2456
        %v2458 = vrot.slane %v2219, 4
        %v2459 = vor.u32 %v2458, %v2456
        %v2460 = vrot.slane %v2459, 4
        %v2462 = vshll.u32 %v2241, 16
        %v2464 = vrot.slane %v2462, 5
        %v2465 = vsel %vm960, %v2460, %v2464
        %v2466 = vunpack.c.l.b16 %v602
        %v2467 = vunpack.c.l.b16 %v611
        %v2468 = vunpack.c.l.b16 %v624
        %v2469 = vunpack.c.l.b16 %v633
        %v2470 = vunpack.c.l.b16 %v646
        %v2471 = vunpack.c.l.b16 %v655
        %v2472 = vunpack.c.l.b16 %v668
        %v2473 = vunpack.c.l.b16 %v677
        %v2474 = vunpack.c.l.b16 %v690
        %v2475 = vunpack.c.l.b16 %v699
        %v2476 = vunpack.c.l.b16 %v712
        %v2477 = vunpack.c.l.b16 %v721
        %v2478 = vunpack.c.l.b16 %v734
        %v2479 = vunpack.c.l.b16 %v743
        %v2480 = vunpack.c.l.b16 %v756
        %v2481 = vunpack.c.l.b16 %v765
        %v2482 = vunpack.c.l.b16 %v778
        %v2483 = vunpack.c.l.b16 %v787
        %v2484 = vunpack.c.l.b16 %v800
        %v2485 = vunpack.c.l.b16 %v809
        %v2486 = vunpack.c.l.b16 %v822
        %v2487 = vunpack.c.l.b16 %v831
        %v2488 = vunpack.c.l.b16 %v844
        %v2489 = vunpack.c.l.b16 %v853
        %v2490 = vunpack.c.l.b16 %v866
        %v2491 = vunpack.c.l.b16 %v875
        %v2492 = vunpack.c.l.b16 %v888
        %v2493 = vunpack.c.l.b16 %v897
        %v2494 = vunpack.c.l.b16 %v910
        %v2495 = vunpack.c.l.b16 %v919
        %v2496 = vunpack.c.l.b16 %v932
        %v2497 = vunpack.c.l.b16 %v941
        %v2498 = vpack.c.b16 %v2467, %v2466
        %v2499 = vpack.c.b16 %v2469, %v2468
        %v2500 = vpack.c.b16 %v2471, %v2470
        %v2501 = vpack.c.b16 %v2473, %v2472
        %v2502 = vpack.c.b16 %v2475, %v2474
        %v2503 = vpack.c.b16 %v2477, %v2476
        %v2504 = vpack.c.b16 %v2479, %v2478
        %v2505 = vpack.c.b16 %v2481, %v2480
        %v2506 = vpack.c.b16 %v2483, %v2482
        %v2507 = vpack.c.b16 %v2485, %v2484
        %v2508 = vpack.c.b16 %v2487, %v2486
        %v2509 = vpack.c.b16 %v2489, %v2488
        %v2510 = vpack.c.b16 %v2491, %v2490
        %v2511 = vpack.c.b16 %v2493, %v2492
        %v2512 = vpack.c.b16 %v2495, %v2494
        %v2513 = vpack.c.b16 %v2497, %v2496
        %v2546 = vunpack.c.l.b16 %v541
        %v2547 = vunpack.c.l.b16 %v542
        %v2548 = vunpack.c.l.b16 %v544
        %v2549 = vunpack.c.l.b16 %v545
        %v2550 = vunpack.c.l.b16 %v547
        %v2551 = vunpack.c.l.b16 %v548
        %v2552 = vunpack.c.l.b16 %v550
        %v2553 = vunpack.c.l.b16 %v551
        %v2554 = vunpack.c.l.b16 %v553
        %v2555 = vunpack.c.l.b16 %v554
        %v2556 = vunpack.c.l.b16 %v556
        %v2557 = vunpack.c.l.b16 %v557
        %v2558 = vunpack.c.l.b16 %v559
        %v2559 = vunpack.c.l.b16 %v560
        %v2560 = vunpack.c.l.b16 %v562
        %v2561 = vunpack.c.l.b16 %v563
        %v2562 = vunpack.c.l.b16 %v565
        %v2563 = vunpack.c.l.b16 %v566
        %v2564 = vunpack.c.l.b16 %v568
        %v2565 = vunpack.c.l.b16 %v569
        %v2566 = vunpack.c.l.b16 %v571
        %v2567 = vunpack.c.l.b16 %v572
        %v2568 = vunpack.c.l.b16 %v574
        %v2569 = vunpack.c.l.b16 %v575
        %v2570 = vunpack.c.l.b16 %v577
        %v2571 = vunpack.c.l.b16 %v578
        %v2572 = vunpack.c.l.b16 %v580
        %v2573 = vunpack.c.l.b16 %v581
        %v2574 = vunpack.c.l.b16 %v583
        %v2575 = vunpack.c.l.b16 %v584
        %v2576 = vunpack.c.l.b16 %v586
        %v2577 = vunpack.c.l.b16 %v587
        %v2578 = vpack.c.b16 %v2547, %v2546
        %v2579 = vpack.c.b16 %v2549, %v2548
        %v2580 = vpack.c.b16 %v2551, %v2550
        %v2581 = vpack.c.b16 %v2553, %v2552
        %v2582 = vpack.c.b16 %v2555, %v2554
        %v2583 = vpack.c.b16 %v2557, %v2556
        %v2584 = vpack.c.b16 %v2559, %v2558
        %v2585 = vpack.c.b16 %v2561, %v2560
        %v2586 = vpack.c.b16 %v2563, %v2562
        %v2587 = vpack.c.b16 %v2565, %v2564
        %v2588 = vpack.c.b16 %v2567, %v2566
        %v2589 = vpack.c.b16 %v2569, %v2568
        %v2590 = vpack.c.b16 %v2571, %v2570
        %v2591 = vpack.c.b16 %v2573, %v2572
        %v2592 = vpack.c.b16 %v2575, %v2574
        %v2593 = vpack.c.b16 %v2577, %v2576
        %2594 = vrot.lane.b32.xlu0 %v2578, 32
        %v2595 = vpop.permute.xlu0 %2594
        %2596 = vrot.lane.b32.xlu0 %v2579, 32
        %v2597 = vpop.permute.xlu0 %2596
        %2598 = vrot.lane.b32.xlu0 %v2580, 32
        %v2599 = vpop.permute.xlu0 %2598
        %2600 = vrot.lane.b32.xlu0 %v2581, 32
        %v2601 = vpop.permute.xlu0 %2600
        %2602 = vrot.lane.b32.xlu0 %v2582, 32
        %v2603 = vpop.permute.xlu0 %2602
        %2604 = vrot.lane.b32.xlu0 %v2583, 32
        %v2605 = vpop.permute.xlu0 %2604
        %2606 = vrot.lane.b32.xlu0 %v2584, 32
        %v2607 = vpop.permute.xlu0 %2606
        %2608 = vrot.lane.b32.xlu0 %v2585, 32
        %v2609 = vpop.permute.xlu0 %2608
        %2610 = vrot.lane.b32.xlu0 %v2586, 32
        %v2611 = vpop.permute.xlu0 %2610
        %2612 = vrot.lane.b32.xlu0 %v2587, 32
        %v2613 = vpop.permute.xlu0 %2612
        %2614 = vrot.lane.b32.xlu0 %v2588, 32
        %v2615 = vpop.permute.xlu0 %2614
        %2616 = vrot.lane.b32.xlu0 %v2589, 32
        %v2617 = vpop.permute.xlu0 %2616
        %2618 = vrot.lane.b32.xlu0 %v2590, 32
        %v2619 = vpop.permute.xlu0 %2618
        %2620 = vrot.lane.b32.xlu0 %v2591, 32
        %v2621 = vpop.permute.xlu0 %2620
        %2622 = vrot.lane.b32.xlu0 %v2592, 32
        %v2623 = vpop.permute.xlu0 %2622
        %2624 = vrot.lane.b32.xlu0 %v2593, 32
        %v2625 = vpop.permute.xlu0 %2624
        %v2626 = vunpack.c.l.b16 %v966
        %v2627 = vunpack.c.l.b16 %v974
        %v2628 = vunpack.c.l.b16 %v980
        %v2629 = vunpack.c.l.b16 %v988
        %v2630 = vunpack.c.l.b16 %v994
        %v2631 = vunpack.c.l.b16 %v1002
        %v2632 = vunpack.c.l.b16 %v1008
        %v2633 = vunpack.c.l.b16 %v1016
        %v2634 = vunpack.c.l.b16 %v1022
        %v2635 = vunpack.c.l.b16 %v1030
        %v2636 = vunpack.c.l.b16 %v1036
        %v2637 = vunpack.c.l.b16 %v1044
        %v2638 = vunpack.c.l.b16 %v1050
        %v2639 = vunpack.c.l.b16 %v1058
        %v2640 = vunpack.c.l.b16 %v1064
        %v2641 = vunpack.c.l.b16 %v1072
        %v2642 = vunpack.c.l.b16 %v1078
        %v2643 = vunpack.c.l.b16 %v1086
        %v2644 = vunpack.c.l.b16 %v1092
        %v2645 = vunpack.c.l.b16 %v1100
        %v2646 = vunpack.c.l.b16 %v1106
        %v2647 = vunpack.c.l.b16 %v1114
        %v2648 = vunpack.c.l.b16 %v1120
        %v2649 = vunpack.c.l.b16 %v1128
        %v2650 = vunpack.c.l.b16 %v1134
        %v2651 = vunpack.c.l.b16 %v1142
        %v2652 = vunpack.c.l.b16 %v1148
        %v2653 = vunpack.c.l.b16 %v1156
        %v2654 = vunpack.c.l.b16 %v1162
        %v2655 = vunpack.c.l.b16 %v1170
        %v2656 = vunpack.c.l.b16 %v1176
        %v2657 = vunpack.c.l.b16 %v1184
        %v2658 = vpack.c.b16 %v2627, %v2626
        %v2659 = vpack.c.b16 %v2629, %v2628
        %v2660 = vpack.c.b16 %v2631, %v2630
        %v2661 = vpack.c.b16 %v2633, %v2632
        %v2662 = vpack.c.b16 %v2635, %v2634
        %v2663 = vpack.c.b16 %v2637, %v2636
        %v2664 = vpack.c.b16 %v2639, %v2638
        %v2665 = vpack.c.b16 %v2641, %v2640
        %v2666 = vpack.c.b16 %v2643, %v2642
        %v2667 = vpack.c.b16 %v2645, %v2644
        %v2668 = vpack.c.b16 %v2647, %v2646
        %v2669 = vpack.c.b16 %v2649, %v2648
        %v2670 = vpack.c.b16 %v2651, %v2650
        %v2671 = vpack.c.b16 %v2653, %v2652
        %v2672 = vpack.c.b16 %v2655, %v2654
        %v2673 = vpack.c.b16 %v2657, %v2656
        %2674 = vrot.lane.b32.xlu0 %v2658, 64
        %v2675 = vpop.permute.xlu0 %2674
        %2676 = vrot.lane.b32.xlu0 %v2659, 64
        %v2677 = vpop.permute.xlu0 %2676
        %2678 = vrot.lane.b32.xlu0 %v2660, 64
        %v2679 = vpop.permute.xlu0 %2678
        %2680 = vrot.lane.b32.xlu0 %v2661, 64
        %v2681 = vpop.permute.xlu0 %2680
        %2682 = vrot.lane.b32.xlu0 %v2662, 64
        %v2683 = vpop.permute.xlu0 %2682
        %2684 = vrot.lane.b32.xlu0 %v2663, 64
        %v2685 = vpop.permute.xlu0 %2684
        %2686 = vrot.lane.b32.xlu0 %v2664, 64
        %v2687 = vpop.permute.xlu0 %2686
        %2688 = vrot.lane.b32.xlu0 %v2665, 64
        %v2689 = vpop.permute.xlu0 %2688
        %2690 = vrot.lane.b32.xlu0 %v2666, 64
        %v2691 = vpop.permute.xlu0 %2690
        %2692 = vrot.lane.b32.xlu0 %v2667, 64
        %v2693 = vpop.permute.xlu0 %2692
        %2694 = vrot.lane.b32.xlu0 %v2668, 64
        %v2695 = vpop.permute.xlu0 %2694
        %2696 = vrot.lane.b32.xlu0 %v2669, 64
        %v2697 = vpop.permute.xlu0 %2696
        %2698 = vrot.lane.b32.xlu0 %v2670, 64
        %v2699 = vpop.permute.xlu0 %2698
        %2700 = vrot.lane.b32.xlu0 %v2671, 64
        %v2701 = vpop.permute.xlu0 %2700
        %2702 = vrot.lane.b32.xlu0 %v2672, 64
        %v2703 = vpop.permute.xlu0 %2702
        %2704 = vrot.lane.b32.xlu0 %v2673, 64
        %v2705 = vpop.permute.xlu0 %2704
        %v2706 = vunpack.c.l.b16 %v1245
        %v2707 = vunpack.c.l.b16 %v1254
        %v2708 = vunpack.c.l.b16 %v1267
        %v2709 = vunpack.c.l.b16 %v1276
        %v2710 = vunpack.c.l.b16 %v1289
        %v2711 = vunpack.c.l.b16 %v1298
        %v2712 = vunpack.c.l.b16 %v1311
        %v2713 = vunpack.c.l.b16 %v1320
        %v2714 = vunpack.c.l.b16 %v1333
        %v2715 = vunpack.c.l.b16 %v1342
        %v2716 = vunpack.c.l.b16 %v1355
        %v2717 = vunpack.c.l.b16 %v1364
        %v2718 = vunpack.c.l.b16 %v1377
        %v2719 = vunpack.c.l.b16 %v1386
        %v2720 = vunpack.c.l.b16 %v1399
        %v2721 = vunpack.c.l.b16 %v1408
        %v2722 = vunpack.c.l.b16 %v1421
        %v2723 = vunpack.c.l.b16 %v1430
        %v2724 = vunpack.c.l.b16 %v1443
        %v2725 = vunpack.c.l.b16 %v1452
        %v2726 = vunpack.c.l.b16 %v1465
        %v2727 = vunpack.c.l.b16 %v1474
        %v2728 = vunpack.c.l.b16 %v1487
        %v2729 = vunpack.c.l.b16 %v1496
        %v2730 = vunpack.c.l.b16 %v1509
        %v2731 = vunpack.c.l.b16 %v1518
        %v2732 = vunpack.c.l.b16 %v1531
        %v2733 = vunpack.c.l.b16 %v1540
        %v2734 = vunpack.c.l.b16 %v1553
        %v2735 = vunpack.c.l.b16 %v1562
        %v2736 = vunpack.c.l.b16 %v1575
        %v2737 = vunpack.c.l.b16 %v1584
        %v2738 = vpack.c.b16 %v2707, %v2706
        %v2739 = vpack.c.b16 %v2709, %v2708
        %v2740 = vpack.c.b16 %v2711, %v2710
        %v2741 = vpack.c.b16 %v2713, %v2712
        %v2742 = vpack.c.b16 %v2715, %v2714
        %v2743 = vpack.c.b16 %v2717, %v2716
        %v2744 = vpack.c.b16 %v2719, %v2718
        %v2745 = vpack.c.b16 %v2721, %v2720
        %v2746 = vpack.c.b16 %v2723, %v2722
        %v2747 = vpack.c.b16 %v2725, %v2724
        %v2748 = vpack.c.b16 %v2727, %v2726
        %v2749 = vpack.c.b16 %v2729, %v2728
        %v2750 = vpack.c.b16 %v2731, %v2730
        %v2751 = vpack.c.b16 %v2733, %v2732
        %v2752 = vpack.c.b16 %v2735, %v2734
        %v2753 = vpack.c.b16 %v2737, %v2736
        %2754 = vrot.lane.b32.xlu0 %v2738, 96
        %v2755 = vpop.permute.xlu0 %2754
        %2756 = vrot.lane.b32.xlu0 %v2739, 96
        %v2757 = vpop.permute.xlu0 %2756
        %2758 = vrot.lane.b32.xlu0 %v2740, 96
        %v2759 = vpop.permute.xlu0 %2758
        %2760 = vrot.lane.b32.xlu0 %v2741, 96
        %v2761 = vpop.permute.xlu0 %2760
        %2762 = vrot.lane.b32.xlu0 %v2742, 96
        %v2763 = vpop.permute.xlu0 %2762
        %2764 = vrot.lane.b32.xlu0 %v2743, 96
        %v2765 = vpop.permute.xlu0 %2764
        %2766 = vrot.lane.b32.xlu0 %v2744, 96
        %v2767 = vpop.permute.xlu0 %2766
        %2768 = vrot.lane.b32.xlu0 %v2745, 96
        %v2769 = vpop.permute.xlu0 %2768
        %2770 = vrot.lane.b32.xlu0 %v2746, 96
        %v2771 = vpop.permute.xlu0 %2770
        %2772 = vrot.lane.b32.xlu0 %v2747, 96
        %v2773 = vpop.permute.xlu0 %2772
        %2774 = vrot.lane.b32.xlu0 %v2748, 96
        %v2775 = vpop.permute.xlu0 %2774
        %2776 = vrot.lane.b32.xlu0 %v2749, 96
        %v2777 = vpop.permute.xlu0 %2776
        %2778 = vrot.lane.b32.xlu0 %v2750, 96
        %v2779 = vpop.permute.xlu0 %2778
        %2780 = vrot.lane.b32.xlu0 %v2751, 96
        %v2781 = vpop.permute.xlu0 %2780
        %2782 = vrot.lane.b32.xlu0 %v2752, 96
        %v2783 = vpop.permute.xlu0 %2782
        %2784 = vrot.lane.b32.xlu0 %v2753, 96
        %v2785 = vpop.permute.xlu0 %2784
        %v2818 = vunpack.c.l.b16 %v1186
        %v2819 = vunpack.c.l.b16 %v1187
        %v2820 = vunpack.c.l.b16 %v1189
        %v2821 = vunpack.c.l.b16 %v1190
        %v2822 = vunpack.c.l.b16 %v1192
        %v2823 = vunpack.c.l.b16 %v1193
        %v2824 = vunpack.c.l.b16 %v1195
        %v2825 = vunpack.c.l.b16 %v1196
        %v2826 = vunpack.c.l.b16 %v1198
        %v2827 = vunpack.c.l.b16 %v1199
        %v2828 = vunpack.c.l.b16 %v1201
        %v2829 = vunpack.c.l.b16 %v1202
        %v2830 = vunpack.c.l.b16 %v1204
        %v2831 = vunpack.c.l.b16 %v1205
        %v2832 = vunpack.c.l.b16 %v1207
        %v2833 = vunpack.c.l.b16 %v1208
        %v2834 = vunpack.c.l.b16 %v1210
        %v2835 = vunpack.c.l.b16 %v1211
        %v2836 = vunpack.c.l.b16 %v1213
        %v2837 = vunpack.c.l.b16 %v1214
        %v2838 = vunpack.c.l.b16 %v1216
        %v2839 = vunpack.c.l.b16 %v1217
        %v2840 = vunpack.c.l.b16 %v1219
        %v2841 = vunpack.c.l.b16 %v1220
        %v2842 = vunpack.c.l.b16 %v1222
        %v2843 = vunpack.c.l.b16 %v1223
        %v2844 = vunpack.c.l.b16 %v1225
        %v2845 = vunpack.c.l.b16 %v1226
        %v2846 = vunpack.c.l.b16 %v1228
        %v2847 = vunpack.c.l.b16 %v1229
        %v2848 = vunpack.c.l.b16 %v1231
        %v2849 = vunpack.c.l.b16 %v1232
        %v2850 = vpack.c.b16 %v2819, %v2818
        %v2851 = vpack.c.b16 %v2821, %v2820
        %v2852 = vpack.c.b16 %v2823, %v2822
        %v2853 = vpack.c.b16 %v2825, %v2824
        %v2854 = vpack.c.b16 %v2827, %v2826
        %v2855 = vpack.c.b16 %v2829, %v2828
        %v2856 = vpack.c.b16 %v2831, %v2830
        %v2857 = vpack.c.b16 %v2833, %v2832
        %v2858 = vpack.c.b16 %v2835, %v2834
        %v2859 = vpack.c.b16 %v2837, %v2836
        %v2860 = vpack.c.b16 %v2839, %v2838
        %v2861 = vpack.c.b16 %v2841, %v2840
        %v2862 = vpack.c.b16 %v2843, %v2842
        %v2863 = vpack.c.b16 %v2845, %v2844
        %v2864 = vpack.c.b16 %v2847, %v2846
        %v2865 = vpack.c.b16 %v2849, %v2848
        %v2866 = vunpack.c.l.b16 %v1606
        %v2867 = vunpack.c.l.b16 %v1614
        %v2868 = vunpack.c.l.b16 %v1620
        %v2869 = vunpack.c.l.b16 %v1628
        %v2870 = vunpack.c.l.b16 %v1634
        %v2871 = vunpack.c.l.b16 %v1642
        %v2872 = vunpack.c.l.b16 %v1648
        %v2873 = vunpack.c.l.b16 %v1656
        %v2874 = vunpack.c.l.b16 %v1662
        %v2875 = vunpack.c.l.b16 %v1670
        %v2876 = vunpack.c.l.b16 %v1676
        %v2877 = vunpack.c.l.b16 %v1684
        %v2878 = vunpack.c.l.b16 %v1690
        %v2879 = vunpack.c.l.b16 %v1698
        %v2880 = vunpack.c.l.b16 %v1704
        %v2881 = vunpack.c.l.b16 %v1712
        %v2882 = vunpack.c.l.b16 %v1718
        %v2883 = vunpack.c.l.b16 %v1726
        %v2884 = vunpack.c.l.b16 %v1732
        %v2885 = vunpack.c.l.b16 %v1740
        %v2886 = vunpack.c.l.b16 %v1746
        %v2887 = vunpack.c.l.b16 %v1754
        %v2888 = vunpack.c.l.b16 %v1760
        %v2889 = vunpack.c.l.b16 %v1768
        %v2890 = vunpack.c.l.b16 %v1774
        %v2891 = vunpack.c.l.b16 %v1782
        %v2892 = vunpack.c.l.b16 %v1788
        %v2893 = vunpack.c.l.b16 %v1796
        %v2894 = vunpack.c.l.b16 %v1802
        %v2895 = vunpack.c.l.b16 %v1810
        %v2896 = vunpack.c.l.b16 %v1816
        %v2897 = vunpack.c.l.b16 %v1824
        %v2898 = vpack.c.b16 %v2867, %v2866
        %v2899 = vpack.c.b16 %v2869, %v2868
        %v2900 = vpack.c.b16 %v2871, %v2870
        %v2901 = vpack.c.b16 %v2873, %v2872
        %v2902 = vpack.c.b16 %v2875, %v2874
        %v2903 = vpack.c.b16 %v2877, %v2876
        %v2904 = vpack.c.b16 %v2879, %v2878
        %v2905 = vpack.c.b16 %v2881, %v2880
        %v2906 = vpack.c.b16 %v2883, %v2882
        %v2907 = vpack.c.b16 %v2885, %v2884
        %v2908 = vpack.c.b16 %v2887, %v2886
        %v2909 = vpack.c.b16 %v2889, %v2888
        %v2910 = vpack.c.b16 %v2891, %v2890
        %v2911 = vpack.c.b16 %v2893, %v2892
        %v2912 = vpack.c.b16 %v2895, %v2894
        %v2913 = vpack.c.b16 %v2897, %v2896
        %2914 = vrot.lane.b32.xlu0 %v2898, 32
        %v2915 = vpop.permute.xlu0 %2914
        %2916 = vrot.lane.b32.xlu0 %v2899, 32
        %v2917 = vpop.permute.xlu0 %2916
        %2918 = vrot.lane.b32.xlu0 %v2900, 32
        %v2919 = vpop.permute.xlu0 %2918
        %2920 = vrot.lane.b32.xlu0 %v2901, 32
        %v2921 = vpop.permute.xlu0 %2920
        %2922 = vrot.lane.b32.xlu0 %v2902, 32
        %v2923 = vpop.permute.xlu0 %2922
        %2924 = vrot.lane.b32.xlu0 %v2903, 32
        %v2925 = vpop.permute.xlu0 %2924
        %2926 = vrot.lane.b32.xlu0 %v2904, 32
        %v2927 = vpop.permute.xlu0 %2926
        %2928 = vrot.lane.b32.xlu0 %v2905, 32
        %v2929 = vpop.permute.xlu0 %2928
        %2930 = vrot.lane.b32.xlu0 %v2906, 32
        %v2931 = vpop.permute.xlu0 %2930
        %2932 = vrot.lane.b32.xlu0 %v2907, 32
        %v2933 = vpop.permute.xlu0 %2932
        %2934 = vrot.lane.b32.xlu0 %v2908, 32
        %v2935 = vpop.permute.xlu0 %2934
        %2936 = vrot.lane.b32.xlu0 %v2909, 32
        %v2937 = vpop.permute.xlu0 %2936
        %2938 = vrot.lane.b32.xlu0 %v2910, 32
        %v2939 = vpop.permute.xlu0 %2938
        %2940 = vrot.lane.b32.xlu0 %v2911, 32
        %v2941 = vpop.permute.xlu0 %2940
        %2942 = vrot.lane.b32.xlu0 %v2912, 32
        %v2943 = vpop.permute.xlu0 %2942
        %2944 = vrot.lane.b32.xlu0 %v2913, 32
        %v2945 = vpop.permute.xlu0 %2944
        %v2946 = vunpack.c.l.b16 %v1886
        %v2947 = vunpack.c.l.b16 %v1895
        %v2948 = vunpack.c.l.b16 %v1908
        %v2949 = vunpack.c.l.b16 %v1917
        %v2950 = vunpack.c.l.b16 %v1930
        %v2951 = vunpack.c.l.b16 %v1939
        %v2952 = vunpack.c.l.b16 %v1952
        %v2953 = vunpack.c.l.b16 %v1961
        %v2954 = vunpack.c.l.b16 %v1974
        %v2955 = vunpack.c.l.b16 %v1983
        %v2956 = vunpack.c.l.b16 %v1996
        %v2957 = vunpack.c.l.b16 %v2005
        %v2958 = vunpack.c.l.b16 %v2018
        %v2959 = vunpack.c.l.b16 %v2027
        %v2960 = vunpack.c.l.b16 %v2040
        %v2961 = vunpack.c.l.b16 %v2049
        %v2962 = vunpack.c.l.b16 %v2062
        %v2963 = vunpack.c.l.b16 %v2071
        %v2964 = vunpack.c.l.b16 %v2084
        %v2965 = vunpack.c.l.b16 %v2093
        %v2966 = vunpack.c.l.b16 %v2106
        %v2967 = vunpack.c.l.b16 %v2115
        %v2968 = vunpack.c.l.b16 %v2128
        %v2969 = vunpack.c.l.b16 %v2137
        %v2970 = vunpack.c.l.b16 %v2150
        %v2971 = vunpack.c.l.b16 %v2159
        %v2972 = vunpack.c.l.b16 %v2172
        %v2973 = vunpack.c.l.b16 %v2181
        %v2974 = vunpack.c.l.b16 %v2194
        %v2975 = vunpack.c.l.b16 %v2203
        %v2976 = vunpack.c.l.b16 %v2216
        %v2977 = vunpack.c.l.b16 %v2225
        %v2978 = vpack.c.b16 %v2947, %v2946
        %v2979 = vpack.c.b16 %v2949, %v2948
        %v2980 = vpack.c.b16 %v2951, %v2950
        %v2981 = vpack.c.b16 %v2953, %v2952
        %v2982 = vpack.c.b16 %v2955, %v2954
        %v2983 = vpack.c.b16 %v2957, %v2956
        %v2984 = vpack.c.b16 %v2959, %v2958
        %v2985 = vpack.c.b16 %v2961, %v2960
        %v2986 = vpack.c.b16 %v2963, %v2962
        %v2987 = vpack.c.b16 %v2965, %v2964
        %v2988 = vpack.c.b16 %v2967, %v2966
        %v2989 = vpack.c.b16 %v2969, %v2968
        %v2990 = vpack.c.b16 %v2971, %v2970
        %v2991 = vpack.c.b16 %v2973, %v2972
        %v2992 = vpack.c.b16 %v2975, %v2974
        %v2993 = vpack.c.b16 %v2977, %v2976
        %2994 = vrot.lane.b32.xlu0 %v2978, 64
        %v2995 = vpop.permute.xlu0 %2994
        %2996 = vrot.lane.b32.xlu0 %v2979, 64
        %v2997 = vpop.permute.xlu0 %2996
        %2998 = vrot.lane.b32.xlu0 %v2980, 64
        %v2999 = vpop.permute.xlu0 %2998
        %3000 = vrot.lane.b32.xlu0 %v2981, 64
        %v3001 = vpop.permute.xlu0 %3000
        %3002 = vrot.lane.b32.xlu0 %v2982, 64
        %v3003 = vpop.permute.xlu0 %3002
        %3004 = vrot.lane.b32.xlu0 %v2983, 64
        %v3005 = vpop.permute.xlu0 %3004
        %3006 = vrot.lane.b32.xlu0 %v2984, 64
        %v3007 = vpop.permute.xlu0 %3006
        %3008 = vrot.lane.b32.xlu0 %v2985, 64
        %v3009 = vpop.permute.xlu0 %3008
        %3010 = vrot.lane.b32.xlu0 %v2986, 64
        %v3011 = vpop.permute.xlu0 %3010
        %3012 = vrot.lane.b32.xlu0 %v2987, 64
        %v3013 = vpop.permute.xlu0 %3012
        %3014 = vrot.lane.b32.xlu0 %v2988, 64
        %v3015 = vpop.permute.xlu0 %3014
        %3016 = vrot.lane.b32.xlu0 %v2989, 64
        %v3017 = vpop.permute.xlu0 %3016
        %3018 = vrot.lane.b32.xlu0 %v2990, 64
        %v3019 = vpop.permute.xlu0 %3018
        %3020 = vrot.lane.b32.xlu0 %v2991, 64
        %v3021 = vpop.permute.xlu0 %3020
        %3022 = vrot.lane.b32.xlu0 %v2992, 64
        %v3023 = vpop.permute.xlu0 %3022
        %3024 = vrot.lane.b32.xlu0 %v2993, 64
        %v3025 = vpop.permute.xlu0 %3024
        %v3058 = vunpack.c.l.b16 %v1827
        %v3059 = vunpack.c.l.b16 %v1828
        %v3060 = vunpack.c.l.b16 %v1830
        %v3061 = vunpack.c.l.b16 %v1831
        %v3062 = vunpack.c.l.b16 %v1833
        %v3063 = vunpack.c.l.b16 %v1834
        %v3064 = vunpack.c.l.b16 %v1836
        %v3065 = vunpack.c.l.b16 %v1837
        %v3066 = vunpack.c.l.b16 %v1839
        %v3067 = vunpack.c.l.b16 %v1840
        %v3068 = vunpack.c.l.b16 %v1842
        %v3069 = vunpack.c.l.b16 %v1843
        %v3070 = vunpack.c.l.b16 %v1845
        %v3071 = vunpack.c.l.b16 %v1846
        %v3072 = vunpack.c.l.b16 %v1848
        %v3073 = vunpack.c.l.b16 %v1849
        %v3074 = vunpack.c.l.b16 %v1851
        %v3075 = vunpack.c.l.b16 %v1852
        %v3076 = vunpack.c.l.b16 %v1854
        %v3077 = vunpack.c.l.b16 %v1855
        %v3078 = vunpack.c.l.b16 %v1857
        %v3079 = vunpack.c.l.b16 %v1858
        %v3080 = vunpack.c.l.b16 %v1860
        %v3081 = vunpack.c.l.b16 %v1861
        %v3082 = vunpack.c.l.b16 %v1863
        %v3083 = vunpack.c.l.b16 %v1864
        %v3084 = vunpack.c.l.b16 %v1866
        %v3085 = vunpack.c.l.b16 %v1867
        %v3086 = vunpack.c.l.b16 %v1869
        %v3087 = vunpack.c.l.b16 %v1870
        %v3088 = vunpack.c.l.b16 %v1872
        %v3089 = vunpack.c.l.b16 %v1873
        %v3090 = vpack.c.b16 %v3059, %v3058
        %v3091 = vpack.c.b16 %v3061, %v3060
        %v3092 = vpack.c.b16 %v3063, %v3062
        %v3093 = vpack.c.b16 %v3065, %v3064
        %v3094 = vpack.c.b16 %v3067, %v3066
        %v3095 = vpack.c.b16 %v3069, %v3068
        %v3096 = vpack.c.b16 %v3071, %v3070
        %v3097 = vpack.c.b16 %v3073, %v3072
        %v3098 = vpack.c.b16 %v3075, %v3074
        %v3099 = vpack.c.b16 %v3077, %v3076
        %v3100 = vpack.c.b16 %v3079, %v3078
        %v3101 = vpack.c.b16 %v3081, %v3080
        %v3102 = vpack.c.b16 %v3083, %v3082
        %v3103 = vpack.c.b16 %v3085, %v3084
        %v3104 = vpack.c.b16 %v3087, %v3086
        %v3105 = vpack.c.b16 %v3089, %v3088
        %3106 = vrot.lane.b32.xlu0 %v3090, 96
        %v3107 = vpop.permute.xlu0 %3106
        %3108 = vrot.lane.b32.xlu0 %v3091, 96
        %v3109 = vpop.permute.xlu0 %3108
        %3110 = vrot.lane.b32.xlu0 %v3092, 96
        %v3111 = vpop.permute.xlu0 %3110
        %3112 = vrot.lane.b32.xlu0 %v3093, 96
        %v3113 = vpop.permute.xlu0 %3112
        %3114 = vrot.lane.b32.xlu0 %v3094, 96
        %v3115 = vpop.permute.xlu0 %3114
        %3116 = vrot.lane.b32.xlu0 %v3095, 96
        %v3117 = vpop.permute.xlu0 %3116
        %3118 = vrot.lane.b32.xlu0 %v3096, 96
        %v3119 = vpop.permute.xlu0 %3118
        %3120 = vrot.lane.b32.xlu0 %v3097, 96
        %v3121 = vpop.permute.xlu0 %3120
        %3122 = vrot.lane.b32.xlu0 %v3098, 96
        %v3123 = vpop.permute.xlu0 %3122
        %3124 = vrot.lane.b32.xlu0 %v3099, 96
        %v3125 = vpop.permute.xlu0 %3124
        %3126 = vrot.lane.b32.xlu0 %v3100, 96
        %v3127 = vpop.permute.xlu0 %3126
        %3128 = vrot.lane.b32.xlu0 %v3101, 96
        %v3129 = vpop.permute.xlu0 %3128
        %3130 = vrot.lane.b32.xlu0 %v3102, 96
        %v3131 = vpop.permute.xlu0 %3130
        %3132 = vrot.lane.b32.xlu0 %v3103, 96
        %v3133 = vpop.permute.xlu0 %3132
        %3134 = vrot.lane.b32.xlu0 %v3104, 96
        %v3135 = vpop.permute.xlu0 %3134
        %3136 = vrot.lane.b32.xlu0 %v3105, 96
        %v3137 = vpop.permute.xlu0 %3136
        %v3138 = vunpack.c.l.b16 %v2247
        %v3139 = vunpack.c.l.b16 %v2255
        %v3140 = vunpack.c.l.b16 %v2261
        %v3141 = vunpack.c.l.b16 %v2269
        %v3142 = vunpack.c.l.b16 %v2275
        %v3143 = vunpack.c.l.b16 %v2283
        %v3144 = vunpack.c.l.b16 %v2289
        %v3145 = vunpack.c.l.b16 %v2297
        %v3146 = vunpack.c.l.b16 %v2303
        %v3147 = vunpack.c.l.b16 %v2311
        %v3148 = vunpack.c.l.b16 %v2317
        %v3149 = vunpack.c.l.b16 %v2325
        %v3150 = vunpack.c.l.b16 %v2331
        %v3151 = vunpack.c.l.b16 %v2339
        %v3152 = vunpack.c.l.b16 %v2345
        %v3153 = vunpack.c.l.b16 %v2353
        %v3154 = vunpack.c.l.b16 %v2359
        %v3155 = vunpack.c.l.b16 %v2367
        %v3156 = vunpack.c.l.b16 %v2373
        %v3157 = vunpack.c.l.b16 %v2381
        %v3158 = vunpack.c.l.b16 %v2387
        %v3159 = vunpack.c.l.b16 %v2395
        %v3160 = vunpack.c.l.b16 %v2401
        %v3161 = vunpack.c.l.b16 %v2409
        %v3162 = vunpack.c.l.b16 %v2415
        %v3163 = vunpack.c.l.b16 %v2423
        %v3164 = vunpack.c.l.b16 %v2429
        %v3165 = vunpack.c.l.b16 %v2437
        %v3166 = vunpack.c.l.b16 %v2443
        %v3167 = vunpack.c.l.b16 %v2451
        %v3168 = vunpack.c.l.b16 %v2457
        %v3169 = vunpack.c.l.b16 %v2465
        %vm3170 = vcmask 261120
        %v3173 = vsel %vm3170, %v2498, %v2595
        %v3176 = vsel %vm3170, %v2499, %v2597
        %v3179 = vsel %vm3170, %v2500, %v2599
        %v3182 = vsel %vm3170, %v2501, %v2601
        %v3185 = vsel %vm3170, %v2502, %v2603
        %v3188 = vsel %vm3170, %v2503, %v2605
        %v3191 = vsel %vm3170, %v2504, %v2607
        %v3194 = vsel %vm3170, %v2505, %v2609
        %v3197 = vsel %vm3170, %v2506, %v2611
        %v3200 = vsel %vm3170, %v2507, %v2613
        %v3203 = vsel %vm3170, %v2508, %v2615
        %v3206 = vsel %vm3170, %v2509, %v2617
        %v3209 = vsel %vm3170, %v2510, %v2619
        %v3212 = vsel %vm3170, %v2511, %v2621
        %v3215 = vsel %vm3170, %v2512, %v2623
        %v3218 = vsel %vm3170, %v2513, %v2625
        %vm3219 = vcmask 523264
        %v3221 = vsel %vm3219, %v3173, %v2675
        %v3223 = vsel %vm3219, %v3176, %v2677
        %v3225 = vsel %vm3219, %v3179, %v2679
        %v3227 = vsel %vm3219, %v3182, %v2681
        %v3229 = vsel %vm3219, %v3185, %v2683
        %v3231 = vsel %vm3219, %v3188, %v2685
        %v3233 = vsel %vm3219, %v3191, %v2687
        %v3235 = vsel %vm3219, %v3194, %v2689
        %v3237 = vsel %vm3219, %v3197, %v2691
        %v3239 = vsel %vm3219, %v3200, %v2693
        %v3241 = vsel %vm3219, %v3203, %v2695
        %v3243 = vsel %vm3219, %v3206, %v2697
        %v3245 = vsel %vm3219, %v3209, %v2699
        %v3247 = vsel %vm3219, %v3212, %v2701
        %v3249 = vsel %vm3219, %v3215, %v2703
        %v3251 = vsel %vm3219, %v3218, %v2705
        %vm3252 = vcmask 785408
        %v3254 = vsel %vm3252, %v3221, %v2755
        %v3256 = vsel %vm3252, %v3223, %v2757
        %v3258 = vsel %vm3252, %v3225, %v2759
        %v3260 = vsel %vm3252, %v3227, %v2761
        %v3262 = vsel %vm3252, %v3229, %v2763
        %v3264 = vsel %vm3252, %v3231, %v2765
        %v3266 = vsel %vm3252, %v3233, %v2767
        %v3268 = vsel %vm3252, %v3235, %v2769
        %v3270 = vsel %vm3252, %v3237, %v2771
        %v3272 = vsel %vm3252, %v3239, %v2773
        %v3274 = vsel %vm3252, %v3241, %v2775
        %v3276 = vsel %vm3252, %v3243, %v2777
        %v3278 = vsel %vm3252, %v3245, %v2779
        %v3280 = vsel %vm3252, %v3247, %v2781
        %v3282 = vsel %vm3252, %v3249, %v2783
        %v3284 = vsel %vm3252, %v3251, %v2785
        %v3287 = vsel %vm3170, %v2850, %v2915
        %v3290 = vsel %vm3170, %v2851, %v2917
        %v3293 = vsel %vm3170, %v2852, %v2919
        %v3296 = vsel %vm3170, %v2853, %v2921
        %v3299 = vsel %vm3170, %v2854, %v2923
        %v3302 = vsel %vm3170, %v2855, %v2925
        %v3305 = vsel %vm3170, %v2856, %v2927
        %v3308 = vsel %vm3170, %v2857, %v2929
        %v3311 = vsel %vm3170, %v2858, %v2931
        %v3314 = vsel %vm3170, %v2859, %v2933
        %v3317 = vsel %vm3170, %v2860, %v2935
        %v3320 = vsel %vm3170, %v2861, %v2937
        %v3323 = vsel %vm3170, %v2862, %v2939
        %v3326 = vsel %vm3170, %v2863, %v2941
        %v3329 = vsel %vm3170, %v2864, %v2943
        %v3332 = vsel %vm3170, %v2865, %v2945
        %v3334 = vsel %vm3219, %v3287, %v2995
        %v3336 = vsel %vm3219, %v3290, %v2997
        %v3338 = vsel %vm3219, %v3293, %v2999
        %v3340 = vsel %vm3219, %v3296, %v3001
        %v3342 = vsel %vm3219, %v3299, %v3003
        %v3344 = vsel %vm3219, %v3302, %v3005
        %v3346 = vsel %vm3219, %v3305, %v3007
        %v3348 = vsel %vm3219, %v3308, %v3009
        %v3350 = vsel %vm3219, %v3311, %v3011
        %v3352 = vsel %vm3219, %v3314, %v3013
        %v3354 = vsel %vm3219, %v3317, %v3015
        %v3356 = vsel %vm3219, %v3320, %v3017
        %v3358 = vsel %vm3219, %v3323, %v3019
        %v3360 = vsel %vm3219, %v3326, %v3021
        %v3362 = vsel %vm3219, %v3329, %v3023
        %v3364 = vsel %vm3219, %v3332, %v3025
        %v3366 = vsel %vm3252, %v3334, %v3107
        %v3368 = vsel %vm3252, %v3336, %v3109
        %v3370 = vsel %vm3252, %v3338, %v3111
        %v3372 = vsel %vm3252, %v3340, %v3113
        %v3374 = vsel %vm3252, %v3342, %v3115
        %v3376 = vsel %vm3252, %v3344, %v3117
        %v3378 = vsel %vm3252, %v3346, %v3119
        %v3380 = vsel %vm3252, %v3348, %v3121
        %v3382 = vsel %vm3252, %v3350, %v3123
        %v3384 = vsel %vm3252, %v3352, %v3125
        %v3386 = vsel %vm3252, %v3354, %v3127
        %v3388 = vsel %vm3252, %v3356, %v3129
        %v3390 = vsel %vm3252, %v3358, %v3131
        %v3392 = vsel %vm3252, %v3360, %v3133
        %v3394 = vsel %vm3252, %v3362, %v3135
        %v3396 = vsel %vm3252, %v3364, %v3137
        %v3429 = vunpack.c.l.b16 %v3254
        %v3430 = vunpack.c.l.b16 %v3366
        %v3431 = vunpack.c.h.b16 %v3254
        %v3432 = vunpack.c.h.b16 %v3366
        %v3433 = vunpack.c.l.b16 %v3256
        %v3434 = vunpack.c.l.b16 %v3368
        %v3435 = vunpack.c.h.b16 %v3256
        %v3436 = vunpack.c.h.b16 %v3368
        %v3437 = vunpack.c.l.b16 %v3258
        %v3438 = vunpack.c.l.b16 %v3370
        %v3439 = vunpack.c.h.b16 %v3258
        %v3440 = vunpack.c.h.b16 %v3370
        %v3441 = vunpack.c.l.b16 %v3260
        %v3442 = vunpack.c.l.b16 %v3372
        %v3443 = vunpack.c.h.b16 %v3260
        %v3444 = vunpack.c.h.b16 %v3372
        %v3445 = vunpack.c.l.b16 %v3262
        %v3446 = vunpack.c.l.b16 %v3374
        %v3447 = vunpack.c.h.b16 %v3262
        %v3448 = vunpack.c.h.b16 %v3374
        %v3449 = vunpack.c.l.b16 %v3264
        %v3450 = vunpack.c.l.b16 %v3376
        %v3451 = vunpack.c.h.b16 %v3264
        %v3452 = vunpack.c.h.b16 %v3376
        %v3453 = vunpack.c.l.b16 %v3266
        %v3454 = vunpack.c.l.b16 %v3378
        %v3455 = vunpack.c.h.b16 %v3266
        %v3456 = vunpack.c.h.b16 %v3378
        %v3457 = vunpack.c.l.b16 %v3268
        %v3458 = vunpack.c.l.b16 %v3380
        %v3459 = vunpack.c.h.b16 %v3268
        %v3460 = vunpack.c.h.b16 %v3380
        %v3461 = vunpack.c.l.b16 %v3270
        %v3462 = vunpack.c.l.b16 %v3382
        %v3463 = vunpack.c.h.b16 %v3270
        %v3464 = vunpack.c.h.b16 %v3382
        %v3465 = vunpack.c.l.b16 %v3272
        %v3466 = vunpack.c.l.b16 %v3384
        %v3467 = vunpack.c.h.b16 %v3272
        %v3468 = vunpack.c.h.b16 %v3384
        %v3469 = vunpack.c.l.b16 %v3274
        %v3470 = vunpack.c.l.b16 %v3386
        %v3471 = vunpack.c.h.b16 %v3274
        %v3472 = vunpack.c.h.b16 %v3386
        %v3473 = vunpack.c.l.b16 %v3276
        %v3474 = vunpack.c.l.b16 %v3388
        %v3475 = vunpack.c.h.b16 %v3276
        %v3476 = vunpack.c.h.b16 %v3388
        %v3477 = vunpack.c.l.b16 %v3278
        %v3478 = vunpack.c.l.b16 %v3390
        %v3479 = vunpack.c.h.b16 %v3278
        %v3480 = vunpack.c.h.b16 %v3390
        %v3481 = vunpack.c.l.b16 %v3280
        %v3482 = vunpack.c.l.b16 %v3392
        %v3483 = vunpack.c.h.b16 %v3280
        %v3484 = vunpack.c.h.b16 %v3392
        %v3485 = vunpack.c.l.b16 %v3282
        %v3486 = vunpack.c.l.b16 %v3394
        %v3487 = vunpack.c.h.b16 %v3282
        %v3488 = vunpack.c.h.b16 %v3394
        %v3489 = vunpack.c.l.b16 %v3284
        %v3490 = vunpack.c.l.b16 %v3396
        %v3491 = vunpack.c.h.b16 %v3284
        %v3492 = vunpack.c.h.b16 %v3396
        %v3493 = vpack.c.b16 %v3430, %v3429
        %v3494 = vpack.c.b16 %v3138, %v3138
        %v3495 = vpack.c.b16 %v3432, %v3431
        %v3496 = vpack.c.b16 %v3139, %v3139
        %v3497 = vpack.c.b16 %v3434, %v3433
        %v3498 = vpack.c.b16 %v3140, %v3140
        %v3499 = vpack.c.b16 %v3436, %v3435
        %v3500 = vpack.c.b16 %v3141, %v3141
        %v3501 = vpack.c.b16 %v3438, %v3437
        %v3502 = vpack.c.b16 %v3142, %v3142
        %v3503 = vpack.c.b16 %v3440, %v3439
        %v3504 = vpack.c.b16 %v3143, %v3143
        %v3505 = vpack.c.b16 %v3442, %v3441
        %v3506 = vpack.c.b16 %v3144, %v3144
        %v3507 = vpack.c.b16 %v3444, %v3443
        %v3508 = vpack.c.b16 %v3145, %v3145
        %v3509 = vpack.c.b16 %v3446, %v3445
        %v3510 = vpack.c.b16 %v3146, %v3146
        %v3511 = vpack.c.b16 %v3448, %v3447
        %v3512 = vpack.c.b16 %v3147, %v3147
        %v3513 = vpack.c.b16 %v3450, %v3449
        %v3514 = vpack.c.b16 %v3148, %v3148
        %v3515 = vpack.c.b16 %v3452, %v3451
        %v3516 = vpack.c.b16 %v3149, %v3149
        %v3517 = vpack.c.b16 %v3454, %v3453
        %v3518 = vpack.c.b16 %v3150, %v3150
        %v3519 = vpack.c.b16 %v3456, %v3455
        %v3520 = vpack.c.b16 %v3151, %v3151
        %v3521 = vpack.c.b16 %v3458, %v3457
        %v3522 = vpack.c.b16 %v3152, %v3152
        %v3523 = vpack.c.b16 %v3460, %v3459
        %v3524 = vpack.c.b16 %v3153, %v3153
        %v3525 = vpack.c.b16 %v3462, %v3461
        %v3526 = vpack.c.b16 %v3154, %v3154
        %v3527 = vpack.c.b16 %v3464, %v3463
        %v3528 = vpack.c.b16 %v3155, %v3155
        %v3529 = vpack.c.b16 %v3466, %v3465
        %v3530 = vpack.c.b16 %v3156, %v3156
        %v3531 = vpack.c.b16 %v3468, %v3467
        %v3532 = vpack.c.b16 %v3157, %v3157
        %v3533 = vpack.c.b16 %v3470, %v3469
        %v3534 = vpack.c.b16 %v3158, %v3158
        %v3535 = vpack.c.b16 %v3472, %v3471
        %v3536 = vpack.c.b16 %v3159, %v3159
        %v3537 = vpack.c.b16 %v3474, %v3473
        %v3538 = vpack.c.b16 %v3160, %v3160
        %v3539 = vpack.c.b16 %v3476, %v3475
        %v3540 = vpack.c.b16 %v3161, %v3161
        %v3541 = vpack.c.b16 %v3478, %v3477
        %v3542 = vpack.c.b16 %v3162, %v3162
        %v3543 = vpack.c.b16 %v3480, %v3479
        %v3544 = vpack.c.b16 %v3163, %v3163
        %v3545 = vpack.c.b16 %v3482, %v3481
        %v3546 = vpack.c.b16 %v3164, %v3164
        %v3547 = vpack.c.b16 %v3484, %v3483
        %v3548 = vpack.c.b16 %v3165, %v3165
        %v3549 = vpack.c.b16 %v3486, %v3485
        %v3550 = vpack.c.b16 %v3166, %v3166
        %v3551 = vpack.c.b16 %v3488, %v3487
        %v3552 = vpack.c.b16 %v3167, %v3167
        %v3553 = vpack.c.b16 %v3490, %v3489
        %v3554 = vpack.c.b16 %v3168, %v3168
        %v3555 = vpack.c.b16 %v3492, %v3491
        %v3556 = vpack.c.b16 %v3169, %v3169
        %3621 = vst [vmem:[#allocation3] sm:$0xff] %v3493
        %3622 = vst.msk [vmem:[#allocation3 + $0x8] sm:$0xf] %vm393, %v3494
        %3623 = vst [vmem:[#allocation3 + $0xc] sm:$0xff] %v3495
        %3624 = vst.msk [vmem:[#allocation3 + $0x14] sm:$0xf] %vm393, %v3496
        %3625 = vst [vmem:[#allocation3 + $0x18] sm:$0xff] %v3497
        %3626 = vst.msk [vmem:[#allocation3 + $0x20] sm:$0xf] %vm393, %v3498
        %3627 = vst [vmem:[#allocation3 + $0x24] sm:$0xff] %v3499
        %3628 = vst.msk [vmem:[#allocation3 + $0x2c] sm:$0xf] %vm393, %v3500
        %3629 = vst [vmem:[#allocation3 + $0x30] sm:$0xff] %v3501
        %3630 = vst.msk [vmem:[#allocation3 + $0x38] sm:$0xf] %vm393, %v3502
        %3631 = vst [vmem:[#allocation3 + $0x3c] sm:$0xff] %v3503
        %3632 = vst.msk [vmem:[#allocation3 + $0x44] sm:$0xf] %vm393, %v3504
        %3633 = vst [vmem:[#allocation3 + $0x48] sm:$0xff] %v3505
        %3634 = vst.msk [vmem:[#allocation3 + $0x50] sm:$0xf] %vm393, %v3506
        %3635 = vst [vmem:[#allocation3 + $0x54] sm:$0xff] %v3507
        %3636 = vst.msk [vmem:[#allocation3 + $0x5c] sm:$0xf] %vm393, %v3508
        %3637 = vst [vmem:[#allocation3 + $0x60] sm:$0xff] %v3509
        %3638 = vst.msk [vmem:[#allocation3 + $0x68] sm:$0xf] %vm393, %v3510
        %3639 = vst [vmem:[#allocation3 + $0x6c] sm:$0xff] %v3511
        %3640 = vst.msk [vmem:[#allocation3 + $0x74] sm:$0xf] %vm393, %v3512
        %3641 = vst [vmem:[#allocation3 + $0x78] sm:$0xff] %v3513
        %3642 = vst.msk [vmem:[#allocation3 + $0x80] sm:$0xf] %vm393, %v3514
        %3643 = vst [vmem:[#allocation3 + $0x84] sm:$0xff] %v3515
        %3644 = vst.msk [vmem:[#allocation3 + $0x8c] sm:$0xf] %vm393, %v3516
        %3645 = vst [vmem:[#allocation3 + $0x90] sm:$0xff] %v3517
        %3646 = vst.msk [vmem:[#allocation3 + $0x98] sm:$0xf] %vm393, %v3518
        %3647 = vst [vmem:[#allocation3 + $0x9c] sm:$0xff] %v3519
        %3648 = vst.msk [vmem:[#allocation3 + $0xa4] sm:$0xf] %vm393, %v3520
        %3649 = vst [vmem:[#allocation3 + $0xa8] sm:$0xff] %v3521
        %3650 = vst.msk [vmem:[#allocation3 + $0xb0] sm:$0xf] %vm393, %v3522
        %3651 = vst [vmem:[#allocation3 + $0xb4] sm:$0xff] %v3523
        %3652 = vst.msk [vmem:[#allocation3 + $0xbc] sm:$0xf] %vm393, %v3524
        %3653 = vst [vmem:[#allocation3 + $0xc0] sm:$0xff] %v3525
        %3654 = vst.msk [vmem:[#allocation3 + $0xc8] sm:$0xf] %vm393, %v3526
        %3655 = vst [vmem:[#allocation3 + $0xcc] sm:$0xff] %v3527
        %3656 = vst.msk [vmem:[#allocation3 + $0xd4] sm:$0xf] %vm393, %v3528
        %3657 = vst [vmem:[#allocation3 + $0xd8] sm:$0xff] %v3529
        %3658 = vst.msk [vmem:[#allocation3 + $0xe0] sm:$0xf] %vm393, %v3530
        %3659 = vst [vmem:[#allocation3 + $0xe4] sm:$0xff] %v3531
        %3660 = vst.msk [vmem:[#allocation3 + $0xec] sm:$0xf] %vm393, %v3532
        %3661 = vst [vmem:[#allocation3 + $0xf0] sm:$0xff] %v3533
        %3662 = vst.msk [vmem:[#allocation3 + $0xf8] sm:$0xf] %vm393, %v3534
        %3663 = vst [vmem:[#allocation3 + $0xfc] sm:$0xff] %v3535
        %3664 = vst.msk [vmem:[#allocation3 + $0x104] sm:$0xf] %vm393, %v3536
        %3665 = vst [vmem:[#allocation3 + $0x108] sm:$0xff] %v3537
        %3666 = vst.msk [vmem:[#allocation3 + $0x110] sm:$0xf] %vm393, %v3538
        %3667 = vst [vmem:[#allocation3 + $0x114] sm:$0xff] %v3539
        %3668 = vst.msk [vmem:[#allocation3 + $0x11c] sm:$0xf] %vm393, %v3540
        %3669 = vst [vmem:[#allocation3 + $0x120] sm:$0xff] %v3541
        %3670 = vst.msk [vmem:[#allocation3 + $0x128] sm:$0xf] %vm393, %v3542
        %3671 = vst [vmem:[#allocation3 + $0x12c] sm:$0xff] %v3543
        %3672 = vst.msk [vmem:[#allocation3 + $0x134] sm:$0xf] %vm393, %v3544
        %3673 = vst [vmem:[#allocation3 + $0x138] sm:$0xff] %v3545
        %3674 = vst.msk [vmem:[#allocation3 + $0x140] sm:$0xf] %vm393, %v3546
        %3675 = vst [vmem:[#allocation3 + $0x144] sm:$0xff] %v3547
        %3676 = vst.msk [vmem:[#allocation3 + $0x14c] sm:$0xf] %vm393, %v3548
        %3677 = vst [vmem:[#allocation3 + $0x150] sm:$0xff] %v3549
        %3678 = vst.msk [vmem:[#allocation3 + $0x158] sm:$0xf] %vm393, %v3550
        %3679 = vst [vmem:[#allocation3 + $0x15c] sm:$0xff] %v3551
        %3680 = vst.msk [vmem:[#allocation3 + $0x164] sm:$0xf] %vm393, %v3552
        %3681 = vst [vmem:[#allocation3 + $0x168] sm:$0xff] %v3553
        %3682 = vst.msk [vmem:[#allocation3 + $0x170] sm:$0xf] %vm393, %v3554
        %3683 = vst [vmem:[#allocation3 + $0x174] sm:$0xff] %v3555
        %3684 = vst.msk [vmem:[#allocation3 + $0x17c] sm:$0xf] %vm393, %v3556
        %v3685 = vld [vmem:[#allocation3] sm:$0xff]
        %v3686 = vld [vmem:[#allocation3 + $0x8] sm:$0xf]
        %v3687 = vld [vmem:[#allocation3 + $0xc] sm:$0xff]
        %v3688 = vld [vmem:[#allocation3 + $0x14] sm:$0xf]
        %v3689 = vld [vmem:[#allocation3 + $0x18] sm:$0xff]
        %v3690 = vld [vmem:[#allocation3 + $0x20] sm:$0xf]
        %v3691 = vld [vmem:[#allocation3 + $0x24] sm:$0xff]
        %v3692 = vld [vmem:[#allocation3 + $0x2c] sm:$0xf]
        %v3693 = vld [vmem:[#allocation3 + $0x30] sm:$0xff]
        %v3694 = vld [vmem:[#allocation3 + $0x38] sm:$0xf]
        %v3695 = vld [vmem:[#allocation3 + $0x3c] sm:$0xff]
        %v3696 = vld [vmem:[#allocation3 + $0x44] sm:$0xf]
        %v3697 = vld [vmem:[#allocation3 + $0x48] sm:$0xff]
        %v3698 = vld [vmem:[#allocation3 + $0x50] sm:$0xf]
        %v3699 = vld [vmem:[#allocation3 + $0x54] sm:$0xff]
        %v3700 = vld [vmem:[#allocation3 + $0x5c] sm:$0xf]
        %v3701 = vld [vmem:[#allocation3 + $0x60] sm:$0xff]
        %v3702 = vld [vmem:[#allocation3 + $0x68] sm:$0xf]
        %v3703 = vld [vmem:[#allocation3 + $0x6c] sm:$0xff]
        %v3704 = vld [vmem:[#allocation3 + $0x74] sm:$0xf]
        %v3705 = vld [vmem:[#allocation3 + $0x78] sm:$0xff]
        %v3706 = vld [vmem:[#allocation3 + $0x80] sm:$0xf]
        %v3707 = vld [vmem:[#allocation3 + $0x84] sm:$0xff]
        %v3708 = vld [vmem:[#allocation3 + $0x8c] sm:$0xf]
        %v3709 = vld [vmem:[#allocation3 + $0x90] sm:$0xff]
        %v3710 = vld [vmem:[#allocation3 + $0x98] sm:$0xf]
        %v3711 = vld [vmem:[#allocation3 + $0x9c] sm:$0xff]
        %v3712 = vld [vmem:[#allocation3 + $0xa4] sm:$0xf]
        %v3713 = vld [vmem:[#allocation3 + $0xa8] sm:$0xff]
        %v3714 = vld [vmem:[#allocation3 + $0xb0] sm:$0xf]
        %v3715 = vld [vmem:[#allocation3 + $0xb4] sm:$0xff]
        %v3716 = vld [vmem:[#allocation3 + $0xbc] sm:$0xf]
        %v3717 = vld [vmem:[#allocation3 + $0xc0] sm:$0xff]
        %v3718 = vld [vmem:[#allocation3 + $0xc8] sm:$0xf]
        %v3719 = vld [vmem:[#allocation3 + $0xcc] sm:$0xff]
        %v3720 = vld [vmem:[#allocation3 + $0xd4] sm:$0xf]
        %v3721 = vld [vmem:[#allocation3 + $0xd8] sm:$0xff]
        %v3722 = vld [vmem:[#allocation3 + $0xe0] sm:$0xf]
        %v3723 = vld [vmem:[#allocation3 + $0xe4] sm:$0xff]
        %v3724 = vld [vmem:[#allocation3 + $0xec] sm:$0xf]
        %v3725 = vld [vmem:[#allocation3 + $0xf0] sm:$0xff]
        %v3726 = vld [vmem:[#allocation3 + $0xf8] sm:$0xf]
        %v3727 = vld [vmem:[#allocation3 + $0xfc] sm:$0xff]
        %v3728 = vld [vmem:[#allocation3 + $0x104] sm:$0xf]
        %v3729 = vld [vmem:[#allocation3 + $0x108] sm:$0xff]
        %v3730 = vld [vmem:[#allocation3 + $0x110] sm:$0xf]
        %v3731 = vld [vmem:[#allocation3 + $0x114] sm:$0xff]
        %v3732 = vld [vmem:[#allocation3 + $0x11c] sm:$0xf]
        %v3733 = vld [vmem:[#allocation3 + $0x120] sm:$0xff]
        %v3734 = vld [vmem:[#allocation3 + $0x128] sm:$0xf]
        %v3735 = vld [vmem:[#allocation3 + $0x12c] sm:$0xff]
        %v3736 = vld [vmem:[#allocation3 + $0x134] sm:$0xf]
        %v3737 = vld [vmem:[#allocation3 + $0x138] sm:$0xff]
        %v3738 = vld [vmem:[#allocation3 + $0x140] sm:$0xf]
        %v3739 = vld [vmem:[#allocation3 + $0x144] sm:$0xff]
        %v3740 = vld [vmem:[#allocation3 + $0x14c] sm:$0xf]
        %v3741 = vld [vmem:[#allocation3 + $0x150] sm:$0xff]
        %v3742 = vld [vmem:[#allocation3 + $0x158] sm:$0xf]
        %v3743 = vld [vmem:[#allocation3 + $0x15c] sm:$0xff]
        %v3744 = vld [vmem:[#allocation3 + $0x164] sm:$0xf]
        %v3745 = vld [vmem:[#allocation3 + $0x168] sm:$0xff]
        %v3746 = vld [vmem:[#allocation3 + $0x170] sm:$0xf]
        %v3747 = vld [vmem:[#allocation3 + $0x174] sm:$0xff]
        %v3748 = vld [vmem:[#allocation3 + $0x17c] sm:$0xf]
        %v3749 = vld [vmem:[%s1] sm:$0xf]
        %v3750 = vld [vmem:[%s1 + $0x4] sm:$0xf]
        %v3751 = vld [vmem:[%s1 + $0x8] sm:$0xf]
        %v3752 = vld [vmem:[%s1 + $0xc] sm:$0xf]
        %v3753 = vld [vmem:[%s1 + $0x10] sm:$0xf]
        %v3754 = vld [vmem:[%s1 + $0x14] sm:$0xf]
        %v3755 = vld [vmem:[%s1 + $0x18] sm:$0xf]
        %v3756 = vld [vmem:[%s1 + $0x1c] sm:$0xf]
        %v3757 = vld [vmem:[%s1 + $0x20] sm:$0xf]
        %v3758 = vld [vmem:[%s1 + $0x24] sm:$0xf]
        %v3759 = vld [vmem:[%s1 + $0x28] sm:$0xf]
        %v3760 = vld [vmem:[%s1 + $0x2c] sm:$0xf]
        %v3761 = vld [vmem:[%s1 + $0x30] sm:$0xf]
        %v3762 = vld [vmem:[%s1 + $0x34] sm:$0xf]
        %v3763 = vld [vmem:[%s1 + $0x38] sm:$0xf]
        %v3764 = vld [vmem:[%s1 + $0x3c] sm:$0xf]
        %v3765 = vld [vmem:[%s1 + $0x40] sm:$0xf]
        %v3766 = vld [vmem:[%s1 + $0x44] sm:$0xf]
        %v3767 = vld [vmem:[%s1 + $0x48] sm:$0xf]
        %v3768 = vld [vmem:[%s1 + $0x4c] sm:$0xf]
        %v3769 = vld [vmem:[%s1 + $0x50] sm:$0xf]
        %v3770 = vld [vmem:[%s1 + $0x54] sm:$0xf]
        %v3771 = vld [vmem:[%s1 + $0x58] sm:$0xf]
        %v3772 = vld [vmem:[%s1 + $0x5c] sm:$0xf]
        %v3773 = vld [vmem:[%s1 + $0x60] sm:$0xf]
        %v3774 = vld [vmem:[%s1 + $0x64] sm:$0xf]
        %v3775 = vld [vmem:[%s1 + $0x68] sm:$0xf]
        %v3776 = vld [vmem:[%s1 + $0x6c] sm:$0xf]
        %v3777 = vld [vmem:[%s1 + $0x70] sm:$0xf]
        %v3778 = vld [vmem:[%s1 + $0x74] sm:$0xf]
        %v3779 = vld [vmem:[%s1 + $0x78] sm:$0xf]
        %v3780 = vld [vmem:[%s1 + $0x7c] sm:$0xf]
        %v3781 = vld [vmem:[%s1 + $0x80] sm:$0xf]
        %v3782 = vld [vmem:[%s1 + $0x84] sm:$0xf]
        %v3783 = vld [vmem:[%s1 + $0x88] sm:$0xf]
        %v3784 = vld [vmem:[%s1 + $0x8c] sm:$0xf]
        %v3785 = vld [vmem:[%s2] sm:$0x1]
        %v3787 = vperm.slane %v3785, 0
        %v3853 = vunpack.c.l.b16 %v3685
        %v3854 = vunpack.c.h.b16 %v3685
        %v3855 = vunpack.c.l.b16 %v3686
        %v3856 = vunpack.c.l.b16 %v3687
        %v3857 = vunpack.c.h.b16 %v3687
        %v3858 = vunpack.c.l.b16 %v3688
        %v3859 = vunpack.c.l.b16 %v3689
        %v3860 = vunpack.c.h.b16 %v3689
        %v3861 = vunpack.c.l.b16 %v3690
        %v3862 = vunpack.c.l.b16 %v3691
        %v3863 = vunpack.c.h.b16 %v3691
        %v3864 = vunpack.c.l.b16 %v3692
        %v3865 = vunpack.c.l.b16 %v3693
        %v3866 = vunpack.c.h.b16 %v3693
        %v3867 = vunpack.c.l.b16 %v3694
        %v3868 = vunpack.c.l.b16 %v3695
        %v3869 = vunpack.c.h.b16 %v3695
        %v3870 = vunpack.c.l.b16 %v3696
        %v3871 = vunpack.c.l.b16 %v3697
        %v3872 = vunpack.c.h.b16 %v3697
        %v3873 = vunpack.c.l.b16 %v3698
        %v3874 = vunpack.c.l.b16 %v3699
        %v3875 = vunpack.c.h.b16 %v3699
        %v3876 = vunpack.c.l.b16 %v3700
        %v3877 = vunpack.c.l.b16 %v3701
        %v3878 = vunpack.c.h.b16 %v3701
        %v3879 = vunpack.c.l.b16 %v3702
        %v3880 = vunpack.c.l.b16 %v3703
        %v3881 = vunpack.c.h.b16 %v3703
        %v3882 = vunpack.c.l.b16 %v3704
        %v3883 = vunpack.c.l.b16 %v3705
        %v3884 = vunpack.c.h.b16 %v3705
        %v3885 = vunpack.c.l.b16 %v3706
        %v3886 = vunpack.c.l.b16 %v3707
        %v3887 = vunpack.c.h.b16 %v3707
        %v3888 = vunpack.c.l.b16 %v3708
        %v3889 = vunpack.c.l.b16 %v3709
        %v3890 = vunpack.c.h.b16 %v3709
        %v3891 = vunpack.c.l.b16 %v3710
        %v3892 = vunpack.c.l.b16 %v3711
        %v3893 = vunpack.c.h.b16 %v3711
        %v3894 = vunpack.c.l.b16 %v3712
        %v3895 = vunpack.c.l.b16 %v3713
        %v3896 = vunpack.c.h.b16 %v3713
        %v3897 = vunpack.c.l.b16 %v3714
        %v3898 = vunpack.c.l.b16 %v3715
        %v3899 = vunpack.c.h.b16 %v3715
        %v3900 = vunpack.c.l.b16 %v3716
        %v3901 = vunpack.c.l.b16 %v3717
        %v3902 = vunpack.c.h.b16 %v3717
        %v3903 = vunpack.c.l.b16 %v3718
        %v3904 = vunpack.c.l.b16 %v3719
        %v3905 = vunpack.c.h.b16 %v3719
        %v3906 = vunpack.c.l.b16 %v3720
        %v3907 = vunpack.c.l.b16 %v3721
        %v3908 = vunpack.c.h.b16 %v3721
        %v3909 = vunpack.c.l.b16 %v3722
        %v3910 = vunpack.c.l.b16 %v3723
        %v3911 = vunpack.c.h.b16 %v3723
        %v3912 = vunpack.c.l.b16 %v3724
        %v3913 = vunpack.c.l.b16 %v3725
        %v3914 = vunpack.c.h.b16 %v3725
        %v3915 = vunpack.c.l.b16 %v3726
        %v3916 = vunpack.c.l.b16 %v3727
        %v3917 = vunpack.c.h.b16 %v3727
        %v3918 = vunpack.c.l.b16 %v3728
        %v3919 = vunpack.c.l.b16 %v3729
        %v3920 = vunpack.c.h.b16 %v3729
        %v3921 = vunpack.c.l.b16 %v3730
        %v3922 = vunpack.c.l.b16 %v3731
        %v3923 = vunpack.c.h.b16 %v3731
        %v3924 = vunpack.c.l.b16 %v3732
        %v3925 = vunpack.c.l.b16 %v3733
        %v3926 = vunpack.c.h.b16 %v3733
        %v3927 = vunpack.c.l.b16 %v3734
        %v3928 = vunpack.c.l.b16 %v3735
        %v3929 = vunpack.c.h.b16 %v3735
        %v3930 = vunpack.c.l.b16 %v3736
        %v3931 = vunpack.c.l.b16 %v3737
        %v3932 = vunpack.c.h.b16 %v3737
        %v3933 = vunpack.c.l.b16 %v3738
        %v3934 = vunpack.c.l.b16 %v3739
        %v3935 = vunpack.c.h.b16 %v3739
        %v3936 = vunpack.c.l.b16 %v3740
        %v3937 = vunpack.c.l.b16 %v3741
        %v3938 = vunpack.c.h.b16 %v3741
        %v3939 = vunpack.c.l.b16 %v3742
        %v3940 = vunpack.c.l.b16 %v3743
        %v3941 = vunpack.c.h.b16 %v3743
        %v3942 = vunpack.c.l.b16 %v3744
        %v3943 = vunpack.c.l.b16 %v3745
        %v3944 = vunpack.c.h.b16 %v3745
        %v3945 = vunpack.c.l.b16 %v3746
        %v3946 = vunpack.c.l.b16 %v3747
        %v3947 = vunpack.c.h.b16 %v3747
        %v3948 = vunpack.c.l.b16 %v3748
        %v3949 = vpack.c.b16 %v3856, %v3853
        %v3950 = vpack.c.b16 %v3857, %v3854
        %v3951 = vpack.c.b16 %v3858, %v3855
        %v3952 = vpack.c.b16 %v3862, %v3859
        %v3953 = vpack.c.b16 %v3863, %v3860
        %v3954 = vpack.c.b16 %v3864, %v3861
        %v3955 = vpack.c.b16 %v3868, %v3865
        %v3956 = vpack.c.b16 %v3869, %v3866
        %v3957 = vpack.c.b16 %v3870, %v3867
        %v3958 = vpack.c.b16 %v3874, %v3871
        %v3959 = vpack.c.b16 %v3875, %v3872
        %v3960 = vpack.c.b16 %v3876, %v3873
        %v3961 = vpack.c.b16 %v3880, %v3877
        %v3962 = vpack.c.b16 %v3881, %v3878
        %v3963 = vpack.c.b16 %v3882, %v3879
        %v3964 = vpack.c.b16 %v3886, %v3883
        %v3965 = vpack.c.b16 %v3887, %v3884
        %v3966 = vpack.c.b16 %v3888, %v3885
        %v3967 = vpack.c.b16 %v3892, %v3889
        %v3968 = vpack.c.b16 %v3893, %v3890
        %v3969 = vpack.c.b16 %v3894, %v3891
        %v3970 = vpack.c.b16 %v3898, %v3895
        %v3971 = vpack.c.b16 %v3899, %v3896
        %v3972 = vpack.c.b16 %v3900, %v3897
        %v3973 = vpack.c.b16 %v3904, %v3901
        %v3974 = vpack.c.b16 %v3905, %v3902
        %v3975 = vpack.c.b16 %v3906, %v3903
        %v3976 = vpack.c.b16 %v3910, %v3907
        %v3977 = vpack.c.b16 %v3911, %v3908
        %v3978 = vpack.c.b16 %v3912, %v3909
        %v3979 = vpack.c.b16 %v3916, %v3913
        %v3980 = vpack.c.b16 %v3917, %v3914
        %v3981 = vpack.c.b16 %v3918, %v3915
        %v3982 = vpack.c.b16 %v3922, %v3919
        %v3983 = vpack.c.b16 %v3923, %v3920
        %v3984 = vpack.c.b16 %v3924, %v3921
        %v3985 = vpack.c.b16 %v3928, %v3925
        %v3986 = vpack.c.b16 %v3929, %v3926
        %v3987 = vpack.c.b16 %v3930, %v3927
        %v3988 = vpack.c.b16 %v3934, %v3931
        %v3989 = vpack.c.b16 %v3935, %v3932
        %v3990 = vpack.c.b16 %v3936, %v3933
        %v3991 = vpack.c.b16 %v3940, %v3937
        %v3992 = vpack.c.b16 %v3941, %v3938
        %v3993 = vpack.c.b16 %v3942, %v3939
        %v3994 = vpack.c.b16 %v3946, %v3943
        %v3995 = vpack.c.b16 %v3947, %v3944
        %v3996 = vpack.c.b16 %v3948, %v3945
        %v4065 = vunpack.c.l.b16 %v3749
        %v4066 = vunpack.c.l.b16 %v3750
        %v4067 = vunpack.c.l.b16 %v3751
        %v4068 = vunpack.c.l.b16 %v3752
        %v4069 = vunpack.c.l.b16 %v3753
        %v4070 = vunpack.c.l.b16 %v3754
        %v4071 = vunpack.c.l.b16 %v3755
        %v4072 = vunpack.c.l.b16 %v3756
        %v4073 = vunpack.c.l.b16 %v3757
        %v4074 = vunpack.c.l.b16 %v3758
        %v4075 = vunpack.c.l.b16 %v3759
        %v4076 = vunpack.c.l.b16 %v3760
        %v4077 = vunpack.c.l.b16 %v3761
        %v4078 = vunpack.c.l.b16 %v3762
        %v4079 = vunpack.c.l.b16 %v3763
        %v4080 = vunpack.c.l.b16 %v3764
        %v4081 = vunpack.c.l.b16 %v3765
        %v4082 = vunpack.c.l.b16 %v3766
        %v4083 = vunpack.c.l.b16 %v3767
        %v4084 = vunpack.c.l.b16 %v3768
        %v4085 = vunpack.c.l.b16 %v3769
        %v4086 = vunpack.c.l.b16 %v3770
        %v4087 = vunpack.c.l.b16 %v3771
        %v4088 = vunpack.c.l.b16 %v3772
        %v4089 = vunpack.c.l.b16 %v3773
        %v4090 = vunpack.c.l.b16 %v3774
        %v4091 = vunpack.c.l.b16 %v3775
        %v4092 = vunpack.c.l.b16 %v3776
        %v4093 = vunpack.c.l.b16 %v3777
        %v4094 = vunpack.c.l.b16 %v3778
        %v4095 = vunpack.c.l.b16 %v3779
        %v4096 = vunpack.c.l.b16 %v3780
        %v4097 = vunpack.c.l.b16 %v3781
        %v4098 = vunpack.c.l.b16 %v3782
        %v4099 = vunpack.c.l.b16 %v3783
        %v4100 = vunpack.c.l.b16 %v3784
        %v4101 = vpack.c.b16 %v4066, %v4065
        %v4102 = vpack.c.b16 %v4068, %v4067
        %v4103 = vpack.c.b16 %v4070, %v4069
        %v4104 = vpack.c.b16 %v4072, %v4071
        %v4105 = vpack.c.b16 %v4074, %v4073
        %v4106 = vpack.c.b16 %v4076, %v4075
        %v4107 = vpack.c.b16 %v4078, %v4077
        %v4108 = vpack.c.b16 %v4080, %v4079
        %v4109 = vpack.c.b16 %v4082, %v4081
        %v4110 = vpack.c.b16 %v4084, %v4083
        %v4111 = vpack.c.b16 %v4086, %v4085
        %v4112 = vpack.c.b16 %v4088, %v4087
        %v4113 = vpack.c.b16 %v4090, %v4089
        %v4114 = vpack.c.b16 %v4092, %v4091
        %v4115 = vpack.c.b16 %v4094, %v4093
        %v4116 = vpack.c.b16 %v4096, %v4095
        %v4117 = vpack.c.b16 %v4098, %v4097
        %v4118 = vpack.c.b16 %v4100, %v4099
        %v4138 = vsel %vm3170, %v3951, 0
        %v4141 = vsel %vm3170, %v3954, 0
        %v4144 = vsel %vm3170, %v3957, 0
        %v4147 = vsel %vm3170, %v3960, 0
        %v4150 = vsel %vm3170, %v3963, 0
        %v4153 = vsel %vm3170, %v3966, 0
        %v4156 = vsel %vm3170, %v3969, 0
        %v4159 = vsel %vm3170, %v3972, 0
        %v4162 = vsel %vm3170, %v3975, 0
        %v4165 = vsel %vm3170, %v3978, 0
        %v4168 = vsel %vm3170, %v3981, 0
        %v4171 = vsel %vm3170, %v3984, 0
        %v4174 = vsel %vm3170, %v3987, 0
        %v4177 = vsel %vm3170, %v3990, 0
        %v4180 = vsel %vm3170, %v3993, 0
        %v4183 = vsel %vm3170, %v3996, 0
        %4185 = vmatpush.bf16.msra.mxu0 %v4108
        %4186 = vmatpush.bf16.msra.mxu0 %v4107
        %4187 = vmatpush.bf16.msra.mxu0 %v4106
        %4188 = vmatpush.bf16.msra.mxu0 %v4105
        %4189 = vmatpush.bf16.msra.mxu0 %v4104
        %4190 = vmatpush.bf16.msra.mxu0 %v4103
        %4191 = vmatpush.bf16.msra.mxu0 %v4102
        %4192 = vmatpush.bf16.msra.mxu0 %v4101
        %4193 = vmatmul.bf16.gmra.mxu0 %v3949
        %v4194 = vpop.f32.mrf.mxu0
        %v4195 = vadd.f32 %v3787, %v4194
        %v4196 = vpop.f32.mrf.mxu0
        %v4197 = vadd.f32 %v3787, %v4196
        %4198 = vmatmul.bf16.gmra.mxu0 %v3952
        %v4199 = vpop.f32.mrf.mxu0
        %v4200 = vadd.f32 %v3787, %v4199
        %v4201 = vpop.f32.mrf.mxu0
        %v4202 = vadd.f32 %v3787, %v4201
        %4203 = vmatmul.bf16.gmra.mxu0 %v3955
        %v4204 = vpop.f32.mrf.mxu0
        %v4205 = vadd.f32 %v3787, %v4204
        %v4206 = vpop.f32.mrf.mxu0
        %v4207 = vadd.f32 %v3787, %v4206
        %4208 = vmatmul.bf16.gmra.mxu0 %v3958
        %v4209 = vpop.f32.mrf.mxu0
        %v4210 = vadd.f32 %v3787, %v4209
        %v4211 = vpop.f32.mrf.mxu0
        %v4212 = vadd.f32 %v3787, %v4211
        %4213 = vmatmul.bf16.gmra.mxu0 %v3961
        %v4214 = vpop.f32.mrf.mxu0
        %v4215 = vadd.f32 %v3787, %v4214
        %v4216 = vpop.f32.mrf.mxu0
        %v4217 = vadd.f32 %v3787, %v4216
        %4218 = vmatmul.bf16.gmra.mxu0 %v3964
        %v4219 = vpop.f32.mrf.mxu0
        %v4220 = vadd.f32 %v3787, %v4219
        %v4221 = vpop.f32.mrf.mxu0
        %v4222 = vadd.f32 %v3787, %v4221
        %4223 = vmatmul.bf16.gmra.mxu0 %v3967
        %v4224 = vpop.f32.mrf.mxu0
        %v4225 = vadd.f32 %v3787, %v4224
        %v4226 = vpop.f32.mrf.mxu0
        %v4227 = vadd.f32 %v3787, %v4226
        %4228 = vmatmul.bf16.gmra.mxu0 %v3970
        %v4229 = vpop.f32.mrf.mxu0
        %v4230 = vadd.f32 %v3787, %v4229
        %v4231 = vpop.f32.mrf.mxu0
        %v4232 = vadd.f32 %v3787, %v4231
        %4233 = vmatmul.bf16.gmra.mxu0 %v3973
        %v4234 = vpop.f32.mrf.mxu0
        %v4235 = vadd.f32 %v3787, %v4234
        %v4236 = vpop.f32.mrf.mxu0
        %v4237 = vadd.f32 %v3787, %v4236
        %4238 = vmatmul.bf16.gmra.mxu0 %v3976
        %v4239 = vpop.f32.mrf.mxu0
        %v4240 = vadd.f32 %v3787, %v4239
        %v4241 = vpop.f32.mrf.mxu0
        %v4242 = vadd.f32 %v3787, %v4241
        %4243 = vmatmul.bf16.gmra.mxu0 %v3979
        %v4244 = vpop.f32.mrf.mxu0
        %v4245 = vadd.f32 %v3787, %v4244
        %v4246 = vpop.f32.mrf.mxu0
        %v4247 = vadd.f32 %v3787, %v4246
        %4248 = vmatmul.bf16.gmra.mxu0 %v3982
        %v4249 = vpop.f32.mrf.mxu0
        %v4250 = vadd.f32 %v3787, %v4249
        %v4251 = vpop.f32.mrf.mxu0
        %v4252 = vadd.f32 %v3787, %v4251
        %4253 = vmatmul.bf16.gmra.mxu0 %v3985
        %v4254 = vpop.f32.mrf.mxu0
        %v4255 = vadd.f32 %v3787, %v4254
        %v4256 = vpop.f32.mrf.mxu0
        %v4257 = vadd.f32 %v3787, %v4256
        %4258 = vmatmul.bf16.gmra.mxu0 %v3988
        %v4259 = vpop.f32.mrf.mxu0
        %v4260 = vadd.f32 %v3787, %v4259
        %v4261 = vpop.f32.mrf.mxu0
        %v4262 = vadd.f32 %v3787, %v4261
        %4263 = vmatmul.bf16.gmra.mxu0 %v3991
        %v4264 = vpop.f32.mrf.mxu0
        %v4265 = vadd.f32 %v3787, %v4264
        %v4266 = vpop.f32.mrf.mxu0
        %v4267 = vadd.f32 %v3787, %v4266
        %4268 = vmatmul.bf16.gmra.mxu0 %v3994
        %v4269 = vpop.f32.mrf.mxu0
        %v4270 = vadd.f32 %v3787, %v4269
        %v4271 = vpop.f32.mrf.mxu0
        %v4272 = vadd.f32 %v3787, %v4271
        %4273 = vdwg.mxu0
        %4274 = vmatpush.bf16.msra.mxu0 %v4116
        %4275 = vmatpush.bf16.msra.mxu0 %v4115
        %4276 = vmatpush.bf16.msra.mxu0 %v4114
        %4277 = vmatpush.bf16.msra.mxu0 %v4113
        %4278 = vmatpush.bf16.msra.mxu0 %v4112
        %4279 = vmatpush.bf16.msra.mxu0 %v4111
        %4280 = vmatpush.bf16.msra.mxu0 %v4110
        %4281 = vmatpush.bf16.msra.mxu0 %v4109
        %4282 = vmatmul.bf16.gmra.mxu0 %v3950
        %v4283 = vpop.f32.mrf.mxu0
        %v4284 = vadd.f32 %v4195, %v4283
        %v4285 = vpop.f32.mrf.mxu0
        %v4286 = vadd.f32 %v4197, %v4285
        %4287 = vmatmul.bf16.gmra.mxu0 %v3953
        %v4288 = vpop.f32.mrf.mxu0
        %v4289 = vadd.f32 %v4200, %v4288
        %v4290 = vpop.f32.mrf.mxu0
        %v4291 = vadd.f32 %v4202, %v4290
        %4292 = vmatmul.bf16.gmra.mxu0 %v3956
        %v4293 = vpop.f32.mrf.mxu0
        %v4294 = vadd.f32 %v4205, %v4293
        %v4295 = vpop.f32.mrf.mxu0
        %v4296 = vadd.f32 %v4207, %v4295
        %4297 = vmatmul.bf16.gmra.mxu0 %v3959
        %v4298 = vpop.f32.mrf.mxu0
        %v4299 = vadd.f32 %v4210, %v4298
        %v4300 = vpop.f32.mrf.mxu0
        %v4301 = vadd.f32 %v4212, %v4300
        %4302 = vmatmul.bf16.gmra.mxu0 %v3962
        %v4303 = vpop.f32.mrf.mxu0
        %v4304 = vadd.f32 %v4215, %v4303
        %v4305 = vpop.f32.mrf.mxu0
        %v4306 = vadd.f32 %v4217, %v4305
        %4307 = vmatmul.bf16.gmra.mxu0 %v3965
        %v4308 = vpop.f32.mrf.mxu0
        %v4309 = vadd.f32 %v4220, %v4308
        %v4310 = vpop.f32.mrf.mxu0
        %v4311 = vadd.f32 %v4222, %v4310
        %4312 = vmatmul.bf16.gmra.mxu0 %v3968
        %v4313 = vpop.f32.mrf.mxu0
        %v4314 = vadd.f32 %v4225, %v4313
        %v4315 = vpop.f32.mrf.mxu0
        %v4316 = vadd.f32 %v4227, %v4315
        %4317 = vmatmul.bf16.gmra.mxu0 %v3971
        %v4318 = vpop.f32.mrf.mxu0
        %v4319 = vadd.f32 %v4230, %v4318
        %v4320 = vpop.f32.mrf.mxu0
        %v4321 = vadd.f32 %v4232, %v4320
        %4322 = vmatmul.bf16.gmra.mxu0 %v3974
        %v4323 = vpop.f32.mrf.mxu0
        %v4324 = vadd.f32 %v4235, %v4323
        %v4325 = vpop.f32.mrf.mxu0
        %v4326 = vadd.f32 %v4237, %v4325
        %4327 = vmatmul.bf16.gmra.mxu0 %v3977
        %v4328 = vpop.f32.mrf.mxu0
        %v4329 = vadd.f32 %v4240, %v4328
        %v4330 = vpop.f32.mrf.mxu0
        %v4331 = vadd.f32 %v4242, %v4330
        %4332 = vmatmul.bf16.gmra.mxu0 %v3980
        %v4333 = vpop.f32.mrf.mxu0
        %v4334 = vadd.f32 %v4245, %v4333
        %v4335 = vpop.f32.mrf.mxu0
        %v4336 = vadd.f32 %v4247, %v4335
        %4337 = vmatmul.bf16.gmra.mxu0 %v3983
        %v4338 = vpop.f32.mrf.mxu0
        %v4339 = vadd.f32 %v4250, %v4338
        %v4340 = vpop.f32.mrf.mxu0
        %v4341 = vadd.f32 %v4252, %v4340
        %4342 = vmatmul.bf16.gmra.mxu0 %v3986
        %v4343 = vpop.f32.mrf.mxu0
        %v4344 = vadd.f32 %v4255, %v4343
        %v4345 = vpop.f32.mrf.mxu0
        %v4346 = vadd.f32 %v4257, %v4345
        %4347 = vmatmul.bf16.gmra.mxu0 %v3989
        %v4348 = vpop.f32.mrf.mxu0
        %v4349 = vadd.f32 %v4260, %v4348
        %v4350 = vpop.f32.mrf.mxu0
        %v4351 = vadd.f32 %v4262, %v4350
        %4352 = vmatmul.bf16.gmra.mxu0 %v3992
        %v4353 = vpop.f32.mrf.mxu0
        %v4354 = vadd.f32 %v4265, %v4353
        %v4355 = vpop.f32.mrf.mxu0
        %v4356 = vadd.f32 %v4267, %v4355
        %4357 = vmatmul.bf16.gmra.mxu0 %v3995
        %v4358 = vpop.f32.mrf.mxu0
        %v4359 = vadd.f32 %v4270, %v4358
        %v4360 = vpop.f32.mrf.mxu0
        %v4361 = vadd.f32 %v4272, %v4360
        %4362 = vdwg.mxu0
        %4363 = vmatpush.bf16.msra.mxu0 0
        %4364 = vmatpush.bf16.msra.mxu0 0
        %4365 = vmatpush.bf16.msra.mxu0 0
        %4366 = vmatpush.bf16.msra.mxu0 0
        %4367 = vmatpush.bf16.msra.mxu0 0
        %4368 = vmatpush.bf16.msra.mxu0 0
        %4369 = vmatpush.bf16.msra.mxu0 %v4118
        %4370 = vmatpush.bf16.msra.mxu0 %v4117
        %4371 = vmatmul.bf16.gmra.mxu0 %v4138
        %v4372 = vpop.f32.mrf.mxu0
        %v4373 = vadd.f32 %v4284, %v4372
        %v4374 = vpop.f32.mrf.mxu0
        %v4375 = vadd.f32 %v4286, %v4374
        %4376 = vmatmul.bf16.gmra.mxu0 %v4141
        %v4377 = vpop.f32.mrf.mxu0
        %v4378 = vadd.f32 %v4289, %v4377
        %v4379 = vpop.f32.mrf.mxu0
        %v4380 = vadd.f32 %v4291, %v4379
        %4381 = vmatmul.bf16.gmra.mxu0 %v4144
        %v4382 = vpop.f32.mrf.mxu0
        %v4383 = vadd.f32 %v4294, %v4382
        %v4384 = vpop.f32.mrf.mxu0
        %v4385 = vadd.f32 %v4296, %v4384
        %4386 = vmatmul.bf16.gmra.mxu0 %v4147
        %v4387 = vpop.f32.mrf.mxu0
        %v4388 = vadd.f32 %v4299, %v4387
        %v4389 = vpop.f32.mrf.mxu0
        %v4390 = vadd.f32 %v4301, %v4389
        %4391 = vmatmul.bf16.gmra.mxu0 %v4150
        %v4392 = vpop.f32.mrf.mxu0
        %v4393 = vadd.f32 %v4304, %v4392
        %v4394 = vpop.f32.mrf.mxu0
        %v4395 = vadd.f32 %v4306, %v4394
        %4396 = vmatmul.bf16.gmra.mxu0 %v4153
        %v4397 = vpop.f32.mrf.mxu0
        %v4398 = vadd.f32 %v4309, %v4397
        %v4399 = vpop.f32.mrf.mxu0
        %v4400 = vadd.f32 %v4311, %v4399
        %4401 = vmatmul.bf16.gmra.mxu0 %v4156
        %v4402 = vpop.f32.mrf.mxu0
        %v4403 = vadd.f32 %v4314, %v4402
        %v4404 = vpop.f32.mrf.mxu0
        %v4405 = vadd.f32 %v4316, %v4404
        %4406 = vmatmul.bf16.gmra.mxu0 %v4159
        %v4407 = vpop.f32.mrf.mxu0
        %v4408 = vadd.f32 %v4319, %v4407
        %v4409 = vpop.f32.mrf.mxu0
        %v4410 = vadd.f32 %v4321, %v4409
        %4411 = vmatmul.bf16.gmra.mxu0 %v4162
        %v4412 = vpop.f32.mrf.mxu0
        %v4413 = vadd.f32 %v4324, %v4412
        %v4414 = vpop.f32.mrf.mxu0
        %v4415 = vadd.f32 %v4326, %v4414
        %4416 = vmatmul.bf16.gmra.mxu0 %v4165
        %v4417 = vpop.f32.mrf.mxu0
        %v4418 = vadd.f32 %v4329, %v4417
        %v4419 = vpop.f32.mrf.mxu0
        %v4420 = vadd.f32 %v4331, %v4419
        %4421 = vmatmul.bf16.gmra.mxu0 %v4168
        %v4422 = vpop.f32.mrf.mxu0
        %v4423 = vadd.f32 %v4334, %v4422
        %v4424 = vpop.f32.mrf.mxu0
        %v4425 = vadd.f32 %v4336, %v4424
        %4426 = vmatmul.bf16.gmra.mxu0 %v4171
        %v4427 = vpop.f32.mrf.mxu0
        %v4428 = vadd.f32 %v4339, %v4427
        %v4429 = vpop.f32.mrf.mxu0
        %v4430 = vadd.f32 %v4341, %v4429
        %4431 = vmatmul.bf16.gmra.mxu0 %v4174
        %v4432 = vpop.f32.mrf.mxu0
        %v4433 = vadd.f32 %v4344, %v4432
        %v4434 = vpop.f32.mrf.mxu0
        %v4435 = vadd.f32 %v4346, %v4434
        %4436 = vmatmul.bf16.gmra.mxu0 %v4177
        %v4437 = vpop.f32.mrf.mxu0
        %v4438 = vadd.f32 %v4349, %v4437
        %v4439 = vpop.f32.mrf.mxu0
        %v4440 = vadd.f32 %v4351, %v4439
        %4441 = vmatmul.bf16.gmra.mxu0 %v4180
        %v4442 = vpop.f32.mrf.mxu0
        %v4443 = vadd.f32 %v4354, %v4442
        %v4444 = vpop.f32.mrf.mxu0
        %v4445 = vadd.f32 %v4356, %v4444
        %4446 = vmatmul.bf16.gmra.mxu0 %v4183
        %v4447 = vpop.f32.mrf.mxu0
        %v4448 = vadd.f32 %v4359, %v4447
        %v4449 = vpop.f32.mrf.mxu0
        %v4450 = vadd.f32 %v4361, %v4449
        %4451 = vdwg.mxu0
        %v4452 = vmax.f32 %v4373, 0.0
        %v4453 = vmax.f32 %v4375, 0.0
        %v4454 = vmax.f32 %v4378, 0.0
        %v4455 = vmax.f32 %v4380, 0.0
        %v4456 = vmax.f32 %v4383, 0.0
        %v4457 = vmax.f32 %v4385, 0.0
        %v4458 = vmax.f32 %v4388, 0.0
        %v4459 = vmax.f32 %v4390, 0.0
        %v4460 = vmax.f32 %v4393, 0.0
        %v4461 = vmax.f32 %v4395, 0.0
        %v4462 = vmax.f32 %v4398, 0.0
        %v4463 = vmax.f32 %v4400, 0.0
        %v4464 = vmax.f32 %v4403, 0.0
        %v4465 = vmax.f32 %v4405, 0.0
        %v4466 = vmax.f32 %v4408, 0.0
        %v4467 = vmax.f32 %v4410, 0.0
        %v4468 = vmax.f32 %v4413, 0.0
        %v4469 = vmax.f32 %v4415, 0.0
        %v4470 = vmax.f32 %v4418, 0.0
        %v4471 = vmax.f32 %v4420, 0.0
        %v4472 = vmax.f32 %v4423, 0.0
        %v4473 = vmax.f32 %v4425, 0.0
        %v4474 = vmax.f32 %v4428, 0.0
        %v4475 = vmax.f32 %v4430, 0.0
        %v4476 = vmax.f32 %v4433, 0.0
        %v4477 = vmax.f32 %v4435, 0.0
        %v4478 = vmax.f32 %v4438, 0.0
        %v4479 = vmax.f32 %v4440, 0.0
        %v4480 = vmax.f32 %v4443, 0.0
        %v4481 = vmax.f32 %v4445, 0.0
        %v4482 = vmax.f32 %v4448, 0.0
        %v4483 = vmax.f32 %v4450, 0.0
        %v4516 = vrot.slane %v4452, 2
        %v4517 = vrot.slane %v4452, 4
        %v4518 = vrot.slane %v4452, 6
        %v4519 = vrot.slane %v4453, 2
        %v4520 = vrot.slane %v4453, 4
        %v4521 = vrot.slane %v4453, 6
        %v4522 = vrot.slane %v4454, 2
        %v4523 = vrot.slane %v4454, 4
        %v4524 = vrot.slane %v4454, 6
        %v4525 = vrot.slane %v4455, 2
        %v4526 = vrot.slane %v4455, 4
        %v4527 = vrot.slane %v4455, 6
        %v4528 = vrot.slane %v4456, 2
        %v4529 = vrot.slane %v4456, 4
        %v4530 = vrot.slane %v4456, 6
        %v4531 = vrot.slane %v4457, 2
        %v4532 = vrot.slane %v4457, 4
        %v4533 = vrot.slane %v4457, 6
        %v4534 = vrot.slane %v4458, 2
        %v4535 = vrot.slane %v4458, 4
        %v4536 = vrot.slane %v4458, 6
        %v4537 = vrot.slane %v4459, 2
        %v4538 = vrot.slane %v4459, 4
        %v4539 = vrot.slane %v4459, 6
        %v4540 = vrot.slane %v4460, 2
        %v4541 = vrot.slane %v4460, 4
        %v4542 = vrot.slane %v4460, 6
        %v4543 = vrot.slane %v4461, 2
        %v4544 = vrot.slane %v4461, 4
        %v4545 = vrot.slane %v4461, 6
        %v4546 = vrot.slane %v4462, 2
        %v4547 = vrot.slane %v4462, 4
        %v4548 = vrot.slane %v4462, 6
        %v4549 = vrot.slane %v4463, 2
        %v4550 = vrot.slane %v4463, 4
        %v4551 = vrot.slane %v4463, 6
        %v4552 = vrot.slane %v4464, 2
        %v4553 = vrot.slane %v4464, 4
        %v4554 = vrot.slane %v4464, 6
        %v4555 = vrot.slane %v4465, 2
        %v4556 = vrot.slane %v4465, 4
        %v4557 = vrot.slane %v4465, 6
        %v4558 = vrot.slane %v4466, 2
        %v4559 = vrot.slane %v4466, 4
        %v4560 = vrot.slane %v4466, 6
        %v4561 = vrot.slane %v4467, 2
        %v4562 = vrot.slane %v4467, 4
        %v4563 = vrot.slane %v4467, 6
        %v4564 = vrot.slane %v4468, 2
        %v4565 = vrot.slane %v4468, 4
        %v4566 = vrot.slane %v4468, 6
        %v4567 = vrot.slane %v4469, 2
        %v4568 = vrot.slane %v4469, 4
        %v4569 = vrot.slane %v4469, 6
        %v4570 = vrot.slane %v4470, 2
        %v4571 = vrot.slane %v4470, 4
        %v4572 = vrot.slane %v4470, 6
        %v4573 = vrot.slane %v4471, 2
        %v4574 = vrot.slane %v4471, 4
        %v4575 = vrot.slane %v4471, 6
        %v4576 = vrot.slane %v4472, 2
        %v4577 = vrot.slane %v4472, 4
        %v4578 = vrot.slane %v4472, 6
        %v4579 = vrot.slane %v4473, 2
        %v4580 = vrot.slane %v4473, 4
        %v4581 = vrot.slane %v4473, 6
        %v4582 = vrot.slane %v4474, 2
        %v4583 = vrot.slane %v4474, 4
        %v4584 = vrot.slane %v4474, 6
        %v4585 = vrot.slane %v4475, 2
        %v4586 = vrot.slane %v4475, 4
        %v4587 = vrot.slane %v4475, 6
        %v4588 = vrot.slane %v4476, 2
        %v4589 = vrot.slane %v4476, 4
        %v4590 = vrot.slane %v4476, 6
        %v4591 = vrot.slane %v4477, 2
        %v4592 = vrot.slane %v4477, 4
        %v4593 = vrot.slane %v4477, 6
        %v4594 = vrot.slane %v4478, 2
        %v4595 = vrot.slane %v4478, 4
        %v4596 = vrot.slane %v4478, 6
        %v4597 = vrot.slane %v4479, 2
        %v4598 = vrot.slane %v4479, 4
        %v4599 = vrot.slane %v4479, 6
        %v4600 = vrot.slane %v4480, 2
        %v4601 = vrot.slane %v4480, 4
        %v4602 = vrot.slane %v4480, 6
        %v4603 = vrot.slane %v4481, 2
        %v4604 = vrot.slane %v4481, 4
        %v4605 = vrot.slane %v4481, 6
        %v4606 = vrot.slane %v4482, 2
        %v4607 = vrot.slane %v4482, 4
        %v4608 = vrot.slane %v4482, 6
        %v4609 = vrot.slane %v4483, 2
        %v4610 = vrot.slane %v4483, 4
        %v4611 = vrot.slane %v4483, 6
        %vm4708 = vcmask 254976
        %v4709 = vsel %vm4708, %v4452, -inf
        %v4710 = vrot.slane %v4709, 4
        %v4711 = vmax.f32 %v4709, %v4710
        %v4712 = vrot.slane %v4711, 2
        %v4713 = vmax.f32 %v4711, %v4712
        %v4714 = vrot.slane %v4713, 1
        %v4715 = vmax.f32 %v4713, %v4714
        %v4716 = vsel %vm4708, %v4516, -inf
        %v4717 = vrot.slane %v4716, 4
        %v4718 = vmax.f32 %v4716, %v4717
        %v4719 = vrot.slane %v4718, 2
        %v4720 = vmax.f32 %v4718, %v4719
        %v4721 = vrot.slane %v4720, 1
        %v4722 = vmax.f32 %v4720, %v4721
        %v4723 = vsel %vm4708, %v4517, -inf
        %v4724 = vrot.slane %v4723, 4
        %v4725 = vmax.f32 %v4723, %v4724
        %v4726 = vrot.slane %v4725, 2
        %v4727 = vmax.f32 %v4725, %v4726
        %v4728 = vrot.slane %v4727, 1
        %v4729 = vmax.f32 %v4727, %v4728
        %v4730 = vsel %vm4708, %v4518, -inf
        %v4731 = vrot.slane %v4730, 4
        %v4732 = vmax.f32 %v4730, %v4731
        %v4733 = vrot.slane %v4732, 2
        %v4734 = vmax.f32 %v4732, %v4733
        %v4735 = vrot.slane %v4734, 1
        %v4736 = vmax.f32 %v4734, %v4735
        %v4737 = vsel %vm4708, %v4453, -inf
        %v4738 = vrot.slane %v4737, 4
        %v4739 = vmax.f32 %v4737, %v4738
        %v4740 = vrot.slane %v4739, 2
        %v4741 = vmax.f32 %v4739, %v4740
        %v4742 = vrot.slane %v4741, 1
        %v4743 = vmax.f32 %v4741, %v4742
        %v4744 = vsel %vm4708, %v4519, -inf
        %v4745 = vrot.slane %v4744, 4
        %v4746 = vmax.f32 %v4744, %v4745
        %v4747 = vrot.slane %v4746, 2
        %v4748 = vmax.f32 %v4746, %v4747
        %v4749 = vrot.slane %v4748, 1
        %v4750 = vmax.f32 %v4748, %v4749
        %v4751 = vsel %vm4708, %v4520, -inf
        %v4752 = vrot.slane %v4751, 4
        %v4753 = vmax.f32 %v4751, %v4752
        %v4754 = vrot.slane %v4753, 2
        %v4755 = vmax.f32 %v4753, %v4754
        %v4756 = vrot.slane %v4755, 1
        %v4757 = vmax.f32 %v4755, %v4756
        %v4758 = vsel %vm4708, %v4521, -inf
        %v4759 = vrot.slane %v4758, 4
        %v4760 = vmax.f32 %v4758, %v4759
        %v4761 = vrot.slane %v4760, 2
        %v4762 = vmax.f32 %v4760, %v4761
        %v4763 = vrot.slane %v4762, 1
        %v4764 = vmax.f32 %v4762, %v4763
        %v4765 = vsel %vm4708, %v4454, -inf
        %v4766 = vrot.slane %v4765, 4
        %v4767 = vmax.f32 %v4765, %v4766
        %v4768 = vrot.slane %v4767, 2
        %v4769 = vmax.f32 %v4767, %v4768
        %v4770 = vrot.slane %v4769, 1
        %v4771 = vmax.f32 %v4769, %v4770
        %v4772 = vsel %vm4708, %v4522, -inf
        %v4773 = vrot.slane %v4772, 4
        %v4774 = vmax.f32 %v4772, %v4773
        %v4775 = vrot.slane %v4774, 2
        %v4776 = vmax.f32 %v4774, %v4775
        %v4777 = vrot.slane %v4776, 1
        %v4778 = vmax.f32 %v4776, %v4777
        %v4779 = vsel %vm4708, %v4523, -inf
        %v4780 = vrot.slane %v4779, 4
        %v4781 = vmax.f32 %v4779, %v4780
        %v4782 = vrot.slane %v4781, 2
        %v4783 = vmax.f32 %v4781, %v4782
        %v4784 = vrot.slane %v4783, 1
        %v4785 = vmax.f32 %v4783, %v4784
        %v4786 = vsel %vm4708, %v4524, -inf
        %v4787 = vrot.slane %v4786, 4
        %v4788 = vmax.f32 %v4786, %v4787
        %v4789 = vrot.slane %v4788, 2
        %v4790 = vmax.f32 %v4788, %v4789
        %v4791 = vrot.slane %v4790, 1
        %v4792 = vmax.f32 %v4790, %v4791
        %v4793 = vsel %vm4708, %v4455, -inf
        %v4794 = vrot.slane %v4793, 4
        %v4795 = vmax.f32 %v4793, %v4794
        %v4796 = vrot.slane %v4795, 2
        %v4797 = vmax.f32 %v4795, %v4796
        %v4798 = vrot.slane %v4797, 1
        %v4799 = vmax.f32 %v4797, %v4798
        %v4800 = vsel %vm4708, %v4525, -inf
        %v4801 = vrot.slane %v4800, 4
        %v4802 = vmax.f32 %v4800, %v4801
        %v4803 = vrot.slane %v4802, 2
        %v4804 = vmax.f32 %v4802, %v4803
        %v4805 = vrot.slane %v4804, 1
        %v4806 = vmax.f32 %v4804, %v4805
        %v4807 = vsel %vm4708, %v4526, -inf
        %v4808 = vrot.slane %v4807, 4
        %v4809 = vmax.f32 %v4807, %v4808
        %v4810 = vrot.slane %v4809, 2
        %v4811 = vmax.f32 %v4809, %v4810
        %v4812 = vrot.slane %v4811, 1
        %v4813 = vmax.f32 %v4811, %v4812
        %v4814 = vsel %vm4708, %v4527, -inf
        %v4815 = vrot.slane %v4814, 4
        %v4816 = vmax.f32 %v4814, %v4815
        %v4817 = vrot.slane %v4816, 2
        %v4818 = vmax.f32 %v4816, %v4817
        %v4819 = vrot.slane %v4818, 1
        %v4820 = vmax.f32 %v4818, %v4819
        %v4821 = vsel %vm4708, %v4456, -inf
        %v4822 = vrot.slane %v4821, 4
        %v4823 = vmax.f32 %v4821, %v4822
        %v4824 = vrot.slane %v4823, 2
        %v4825 = vmax.f32 %v4823, %v4824
        %v4826 = vrot.slane %v4825, 1
        %v4827 = vmax.f32 %v4825, %v4826
        %v4828 = vsel %vm4708, %v4528, -inf
        %v4829 = vrot.slane %v4828, 4
        %v4830 = vmax.f32 %v4828, %v4829
        %v4831 = vrot.slane %v4830, 2
        %v4832 = vmax.f32 %v4830, %v4831
        %v4833 = vrot.slane %v4832, 1
        %v4834 = vmax.f32 %v4832, %v4833
        %v4835 = vsel %vm4708, %v4529, -inf
        %v4836 = vrot.slane %v4835, 4
        %v4837 = vmax.f32 %v4835, %v4836
        %v4838 = vrot.slane %v4837, 2
        %v4839 = vmax.f32 %v4837, %v4838
        %v4840 = vrot.slane %v4839, 1
        %v4841 = vmax.f32 %v4839, %v4840
        %v4842 = vsel %vm4708, %v4530, -inf
        %v4843 = vrot.slane %v4842, 4
        %v4844 = vmax.f32 %v4842, %v4843
        %v4845 = vrot.slane %v4844, 2
        %v4846 = vmax.f32 %v4844, %v4845
        %v4847 = vrot.slane %v4846, 1
        %v4848 = vmax.f32 %v4846, %v4847
        %v4849 = vsel %vm4708, %v4457, -inf
        %v4850 = vrot.slane %v4849, 4
        %v4851 = vmax.f32 %v4849, %v4850
        %v4852 = vrot.slane %v4851, 2
        %v4853 = vmax.f32 %v4851, %v4852
        %v4854 = vrot.slane %v4853, 1
        %v4855 = vmax.f32 %v4853, %v4854
        %v4856 = vsel %vm4708, %v4531, -inf
        %v4857 = vrot.slane %v4856, 4
        %v4858 = vmax.f32 %v4856, %v4857
        %v4859 = vrot.slane %v4858, 2
        %v4860 = vmax.f32 %v4858, %v4859
        %v4861 = vrot.slane %v4860, 1
        %v4862 = vmax.f32 %v4860, %v4861
        %v4863 = vsel %vm4708, %v4532, -inf
        %v4864 = vrot.slane %v4863, 4
        %v4865 = vmax.f32 %v4863, %v4864
        %v4866 = vrot.slane %v4865, 2
        %v4867 = vmax.f32 %v4865, %v4866
        %v4868 = vrot.slane %v4867, 1
        %v4869 = vmax.f32 %v4867, %v4868
        %v4870 = vsel %vm4708, %v4533, -inf
        %v4871 = vrot.slane %v4870, 4
        %v4872 = vmax.f32 %v4870, %v4871
        %v4873 = vrot.slane %v4872, 2
        %v4874 = vmax.f32 %v4872, %v4873
        %v4875 = vrot.slane %v4874, 1
        %v4876 = vmax.f32 %v4874, %v4875
        %v4877 = vsel %vm4708, %v4458, -inf
        %v4878 = vrot.slane %v4877, 4
        %v4879 = vmax.f32 %v4877, %v4878
        %v4880 = vrot.slane %v4879, 2
        %v4881 = vmax.f32 %v4879, %v4880
        %v4882 = vrot.slane %v4881, 1
        %v4883 = vmax.f32 %v4881, %v4882
        %v4884 = vsel %vm4708, %v4534, -inf
        %v4885 = vrot.slane %v4884, 4
        %v4886 = vmax.f32 %v4884, %v4885
        %v4887 = vrot.slane %v4886, 2
        %v4888 = vmax.f32 %v4886, %v4887
        %v4889 = vrot.slane %v4888, 1
        %v4890 = vmax.f32 %v4888, %v4889
        %v4891 = vsel %vm4708, %v4535, -inf
        %v4892 = vrot.slane %v4891, 4
        %v4893 = vmax.f32 %v4891, %v4892
        %v4894 = vrot.slane %v4893, 2
        %v4895 = vmax.f32 %v4893, %v4894
        %v4896 = vrot.slane %v4895, 1
        %v4897 = vmax.f32 %v4895, %v4896
        %v4898 = vsel %vm4708, %v4536, -inf
        %v4899 = vrot.slane %v4898, 4
        %v4900 = vmax.f32 %v4898, %v4899
        %v4901 = vrot.slane %v4900, 2
        %v4902 = vmax.f32 %v4900, %v4901
        %v4903 = vrot.slane %v4902, 1
        %v4904 = vmax.f32 %v4902, %v4903
        %v4905 = vsel %vm4708, %v4459, -inf
        %v4906 = vrot.slane %v4905, 4
        %v4907 = vmax.f32 %v4905, %v4906
        %v4908 = vrot.slane %v4907, 2
        %v4909 = vmax.f32 %v4907, %v4908
        %v4910 = vrot.slane %v4909, 1
        %v4911 = vmax.f32 %v4909, %v4910
        %v4912 = vsel %vm4708, %v4537, -inf
        %v4913 = vrot.slane %v4912, 4
        %v4914 = vmax.f32 %v4912, %v4913
        %v4915 = vrot.slane %v4914, 2
        %v4916 = vmax.f32 %v4914, %v4915
        %v4917 = vrot.slane %v4916, 1
        %v4918 = vmax.f32 %v4916, %v4917
        %v4919 = vsel %vm4708, %v4538, -inf
        %v4920 = vrot.slane %v4919, 4
        %v4921 = vmax.f32 %v4919, %v4920
        %v4922 = vrot.slane %v4921, 2
        %v4923 = vmax.f32 %v4921, %v4922
        %v4924 = vrot.slane %v4923, 1
        %v4925 = vmax.f32 %v4923, %v4924
        %v4926 = vsel %vm4708, %v4539, -inf
        %v4927 = vrot.slane %v4926, 4
        %v4928 = vmax.f32 %v4926, %v4927
        %v4929 = vrot.slane %v4928, 2
        %v4930 = vmax.f32 %v4928, %v4929
        %v4931 = vrot.slane %v4930, 1
        %v4932 = vmax.f32 %v4930, %v4931
        %v4933 = vsel %vm4708, %v4460, -inf
        %v4934 = vrot.slane %v4933, 4
        %v4935 = vmax.f32 %v4933, %v4934
        %v4936 = vrot.slane %v4935, 2
        %v4937 = vmax.f32 %v4935, %v4936
        %v4938 = vrot.slane %v4937, 1
        %v4939 = vmax.f32 %v4937, %v4938
        %v4940 = vsel %vm4708, %v4540, -inf
        %v4941 = vrot.slane %v4940, 4
        %v4942 = vmax.f32 %v4940, %v4941
        %v4943 = vrot.slane %v4942, 2
        %v4944 = vmax.f32 %v4942, %v4943
        %v4945 = vrot.slane %v4944, 1
        %v4946 = vmax.f32 %v4944, %v4945
        %v4947 = vsel %vm4708, %v4541, -inf
        %v4948 = vrot.slane %v4947, 4
        %v4949 = vmax.f32 %v4947, %v4948
        %v4950 = vrot.slane %v4949, 2
        %v4951 = vmax.f32 %v4949, %v4950
        %v4952 = vrot.slane %v4951, 1
        %v4953 = vmax.f32 %v4951, %v4952
        %v4954 = vsel %vm4708, %v4542, -inf
        %v4955 = vrot.slane %v4954, 4
        %v4956 = vmax.f32 %v4954, %v4955
        %v4957 = vrot.slane %v4956, 2
        %v4958 = vmax.f32 %v4956, %v4957
        %v4959 = vrot.slane %v4958, 1
        %v4960 = vmax.f32 %v4958, %v4959
        %v4961 = vsel %vm4708, %v4461, -inf
        %v4962 = vrot.slane %v4961, 4
        %v4963 = vmax.f32 %v4961, %v4962
        %v4964 = vrot.slane %v4963, 2
        %v4965 = vmax.f32 %v4963, %v4964
        %v4966 = vrot.slane %v4965, 1
        %v4967 = vmax.f32 %v4965, %v4966
        %v4968 = vsel %vm4708, %v4543, -inf
        %v4969 = vrot.slane %v4968, 4
        %v4970 = vmax.f32 %v4968, %v4969
        %v4971 = vrot.slane %v4970, 2
        %v4972 = vmax.f32 %v4970, %v4971
        %v4973 = vrot.slane %v4972, 1
        %v4974 = vmax.f32 %v4972, %v4973
        %v4975 = vsel %vm4708, %v4544, -inf
        %v4976 = vrot.slane %v4975, 4
        %v4977 = vmax.f32 %v4975, %v4976
        %v4978 = vrot.slane %v4977, 2
        %v4979 = vmax.f32 %v4977, %v4978
        %v4980 = vrot.slane %v4979, 1
        %v4981 = vmax.f32 %v4979, %v4980
        %v4982 = vsel %vm4708, %v4545, -inf
        %v4983 = vrot.slane %v4982, 4
        %v4984 = vmax.f32 %v4982, %v4983
        %v4985 = vrot.slane %v4984, 2
        %v4986 = vmax.f32 %v4984, %v4985
        %v4987 = vrot.slane %v4986, 1
        %v4988 = vmax.f32 %v4986, %v4987
        %v4989 = vsel %vm4708, %v4462, -inf
        %v4990 = vrot.slane %v4989, 4
        %v4991 = vmax.f32 %v4989, %v4990
        %v4992 = vrot.slane %v4991, 2
        %v4993 = vmax.f32 %v4991, %v4992
        %v4994 = vrot.slane %v4993, 1
        %v4995 = vmax.f32 %v4993, %v4994
        %v4996 = vsel %vm4708, %v4546, -inf
        %v4997 = vrot.slane %v4996, 4
        %v4998 = vmax.f32 %v4996, %v4997
        %v4999 = vrot.slane %v4998, 2
        %v5000 = vmax.f32 %v4998, %v4999
        %v5001 = vrot.slane %v5000, 1
        %v5002 = vmax.f32 %v5000, %v5001
        %v5003 = vsel %vm4708, %v4547, -inf
        %v5004 = vrot.slane %v5003, 4
        %v5005 = vmax.f32 %v5003, %v5004
        %v5006 = vrot.slane %v5005, 2
        %v5007 = vmax.f32 %v5005, %v5006
        %v5008 = vrot.slane %v5007, 1
        %v5009 = vmax.f32 %v5007, %v5008
        %v5010 = vsel %vm4708, %v4548, -inf
        %v5011 = vrot.slane %v5010, 4
        %v5012 = vmax.f32 %v5010, %v5011
        %v5013 = vrot.slane %v5012, 2
        %v5014 = vmax.f32 %v5012, %v5013
        %v5015 = vrot.slane %v5014, 1
        %v5016 = vmax.f32 %v5014, %v5015
        %v5017 = vsel %vm4708, %v4463, -inf
        %v5018 = vrot.slane %v5017, 4
        %v5019 = vmax.f32 %v5017, %v5018
        %v5020 = vrot.slane %v5019, 2
        %v5021 = vmax.f32 %v5019, %v5020
        %v5022 = vrot.slane %v5021, 1
        %v5023 = vmax.f32 %v5021, %v5022
        %v5024 = vsel %vm4708, %v4549, -inf
        %v5025 = vrot.slane %v5024, 4
        %v5026 = vmax.f32 %v5024, %v5025
        %v5027 = vrot.slane %v5026, 2
        %v5028 = vmax.f32 %v5026, %v5027
        %v5029 = vrot.slane %v5028, 1
        %v5030 = vmax.f32 %v5028, %v5029
        %v5031 = vsel %vm4708, %v4550, -inf
        %v5032 = vrot.slane %v5031, 4
        %v5033 = vmax.f32 %v5031, %v5032
        %v5034 = vrot.slane %v5033, 2
        %v5035 = vmax.f32 %v5033, %v5034
        %v5036 = vrot.slane %v5035, 1
        %v5037 = vmax.f32 %v5035, %v5036
        %v5038 = vsel %vm4708, %v4551, -inf
        %v5039 = vrot.slane %v5038, 4
        %v5040 = vmax.f32 %v5038, %v5039
        %v5041 = vrot.slane %v5040, 2
        %v5042 = vmax.f32 %v5040, %v5041
        %v5043 = vrot.slane %v5042, 1
        %v5044 = vmax.f32 %v5042, %v5043
        %v5045 = vsel %vm4708, %v4464, -inf
        %v5046 = vrot.slane %v5045, 4
        %v5047 = vmax.f32 %v5045, %v5046
        %v5048 = vrot.slane %v5047, 2
        %v5049 = vmax.f32 %v5047, %v5048
        %v5050 = vrot.slane %v5049, 1
        %v5051 = vmax.f32 %v5049, %v5050
        %v5052 = vsel %vm4708, %v4552, -inf
        %v5053 = vrot.slane %v5052, 4
        %v5054 = vmax.f32 %v5052, %v5053
        %v5055 = vrot.slane %v5054, 2
        %v5056 = vmax.f32 %v5054, %v5055
        %v5057 = vrot.slane %v5056, 1
        %v5058 = vmax.f32 %v5056, %v5057
        %v5059 = vsel %vm4708, %v4553, -inf
        %v5060 = vrot.slane %v5059, 4
        %v5061 = vmax.f32 %v5059, %v5060
        %v5062 = vrot.slane %v5061, 2
        %v5063 = vmax.f32 %v5061, %v5062
        %v5064 = vrot.slane %v5063, 1
        %v5065 = vmax.f32 %v5063, %v5064
        %v5066 = vsel %vm4708, %v4554, -inf
        %v5067 = vrot.slane %v5066, 4
        %v5068 = vmax.f32 %v5066, %v5067
        %v5069 = vrot.slane %v5068, 2
        %v5070 = vmax.f32 %v5068, %v5069
        %v5071 = vrot.slane %v5070, 1
        %v5072 = vmax.f32 %v5070, %v5071
        %v5073 = vsel %vm4708, %v4465, -inf
        %v5074 = vrot.slane %v5073, 4
        %v5075 = vmax.f32 %v5073, %v5074
        %v5076 = vrot.slane %v5075, 2
        %v5077 = vmax.f32 %v5075, %v5076
        %v5078 = vrot.slane %v5077, 1
        %v5079 = vmax.f32 %v5077, %v5078
        %v5080 = vsel %vm4708, %v4555, -inf
        %v5081 = vrot.slane %v5080, 4
        %v5082 = vmax.f32 %v5080, %v5081
        %v5083 = vrot.slane %v5082, 2
        %v5084 = vmax.f32 %v5082, %v5083
        %v5085 = vrot.slane %v5084, 1
        %v5086 = vmax.f32 %v5084, %v5085
        %v5087 = vsel %vm4708, %v4556, -inf
        %v5088 = vrot.slane %v5087, 4
        %v5089 = vmax.f32 %v5087, %v5088
        %v5090 = vrot.slane %v5089, 2
        %v5091 = vmax.f32 %v5089, %v5090
        %v5092 = vrot.slane %v5091, 1
        %v5093 = vmax.f32 %v5091, %v5092
        %v5094 = vsel %vm4708, %v4557, -inf
        %v5095 = vrot.slane %v5094, 4
        %v5096 = vmax.f32 %v5094, %v5095
        %v5097 = vrot.slane %v5096, 2
        %v5098 = vmax.f32 %v5096, %v5097
        %v5099 = vrot.slane %v5098, 1
        %v5100 = vmax.f32 %v5098, %v5099
        %v5101 = vsel %vm4708, %v4466, -inf
        %v5102 = vrot.slane %v5101, 4
        %v5103 = vmax.f32 %v5101, %v5102
        %v5104 = vrot.slane %v5103, 2
        %v5105 = vmax.f32 %v5103, %v5104
        %v5106 = vrot.slane %v5105, 1
        %v5107 = vmax.f32 %v5105, %v5106
        %v5108 = vsel %vm4708, %v4558, -inf
        %v5109 = vrot.slane %v5108, 4
        %v5110 = vmax.f32 %v5108, %v5109
        %v5111 = vrot.slane %v5110, 2
        %v5112 = vmax.f32 %v5110, %v5111
        %v5113 = vrot.slane %v5112, 1
        %v5114 = vmax.f32 %v5112, %v5113
        %v5115 = vsel %vm4708, %v4559, -inf
        %v5116 = vrot.slane %v5115, 4
        %v5117 = vmax.f32 %v5115, %v5116
        %v5118 = vrot.slane %v5117, 2
        %v5119 = vmax.f32 %v5117, %v5118
        %v5120 = vrot.slane %v5119, 1
        %v5121 = vmax.f32 %v5119, %v5120
        %v5122 = vsel %vm4708, %v4560, -inf
        %v5123 = vrot.slane %v5122, 4
        %v5124 = vmax.f32 %v5122, %v5123
        %v5125 = vrot.slane %v5124, 2
        %v5126 = vmax.f32 %v5124, %v5125
        %v5127 = vrot.slane %v5126, 1
        %v5128 = vmax.f32 %v5126, %v5127
        %v5129 = vsel %vm4708, %v4467, -inf
        %v5130 = vrot.slane %v5129, 4
        %v5131 = vmax.f32 %v5129, %v5130
        %v5132 = vrot.slane %v5131, 2
        %v5133 = vmax.f32 %v5131, %v5132
        %v5134 = vrot.slane %v5133, 1
        %v5135 = vmax.f32 %v5133, %v5134
        %v5136 = vsel %vm4708, %v4561, -inf
        %v5137 = vrot.slane %v5136, 4
        %v5138 = vmax.f32 %v5136, %v5137
        %v5139 = vrot.slane %v5138, 2
        %v5140 = vmax.f32 %v5138, %v5139
        %v5141 = vrot.slane %v5140, 1
        %v5142 = vmax.f32 %v5140, %v5141
        %v5143 = vsel %vm4708, %v4562, -inf
        %v5144 = vrot.slane %v5143, 4
        %v5145 = vmax.f32 %v5143, %v5144
        %v5146 = vrot.slane %v5145, 2
        %v5147 = vmax.f32 %v5145, %v5146
        %v5148 = vrot.slane %v5147, 1
        %v5149 = vmax.f32 %v5147, %v5148
        %v5150 = vsel %vm4708, %v4563, -inf
        %v5151 = vrot.slane %v5150, 4
        %v5152 = vmax.f32 %v5150, %v5151
        %v5153 = vrot.slane %v5152, 2
        %v5154 = vmax.f32 %v5152, %v5153
        %v5155 = vrot.slane %v5154, 1
        %v5156 = vmax.f32 %v5154, %v5155
        %v5157 = vsel %vm4708, %v4468, -inf
        %v5158 = vrot.slane %v5157, 4
        %v5159 = vmax.f32 %v5157, %v5158
        %v5160 = vrot.slane %v5159, 2
        %v5161 = vmax.f32 %v5159, %v5160
        %v5162 = vrot.slane %v5161, 1
        %v5163 = vmax.f32 %v5161, %v5162
        %v5164 = vsel %vm4708, %v4564, -inf
        %v5165 = vrot.slane %v5164, 4
        %v5166 = vmax.f32 %v5164, %v5165
        %v5167 = vrot.slane %v5166, 2
        %v5168 = vmax.f32 %v5166, %v5167
        %v5169 = vrot.slane %v5168, 1
        %v5170 = vmax.f32 %v5168, %v5169
        %v5171 = vsel %vm4708, %v4565, -inf
        %v5172 = vrot.slane %v5171, 4
        %v5173 = vmax.f32 %v5171, %v5172
        %v5174 = vrot.slane %v5173, 2
        %v5175 = vmax.f32 %v5173, %v5174
        %v5176 = vrot.slane %v5175, 1
        %v5177 = vmax.f32 %v5175, %v5176
        %v5178 = vsel %vm4708, %v4566, -inf
        %v5179 = vrot.slane %v5178, 4
        %v5180 = vmax.f32 %v5178, %v5179
        %v5181 = vrot.slane %v5180, 2
        %v5182 = vmax.f32 %v5180, %v5181
        %v5183 = vrot.slane %v5182, 1
        %v5184 = vmax.f32 %v5182, %v5183
        %v5185 = vsel %vm4708, %v4469, -inf
        %v5186 = vrot.slane %v5185, 4
        %v5187 = vmax.f32 %v5185, %v5186
        %v5188 = vrot.slane %v5187, 2
        %v5189 = vmax.f32 %v5187, %v5188
        %v5190 = vrot.slane %v5189, 1
        %v5191 = vmax.f32 %v5189, %v5190
        %v5192 = vsel %vm4708, %v4567, -inf
        %v5193 = vrot.slane %v5192, 4
        %v5194 = vmax.f32 %v5192, %v5193
        %v5195 = vrot.slane %v5194, 2
        %v5196 = vmax.f32 %v5194, %v5195
        %v5197 = vrot.slane %v5196, 1
        %v5198 = vmax.f32 %v5196, %v5197
        %v5199 = vsel %vm4708, %v4568, -inf
        %v5200 = vrot.slane %v5199, 4
        %v5201 = vmax.f32 %v5199, %v5200
        %v5202 = vrot.slane %v5201, 2
        %v5203 = vmax.f32 %v5201, %v5202
        %v5204 = vrot.slane %v5203, 1
        %v5205 = vmax.f32 %v5203, %v5204
        %v5206 = vsel %vm4708, %v4569, -inf
        %v5207 = vrot.slane %v5206, 4
        %v5208 = vmax.f32 %v5206, %v5207
        %v5209 = vrot.slane %v5208, 2
        %v5210 = vmax.f32 %v5208, %v5209
        %v5211 = vrot.slane %v5210, 1
        %v5212 = vmax.f32 %v5210, %v5211
        %v5213 = vsel %vm4708, %v4470, -inf
        %v5214 = vrot.slane %v5213, 4
        %v5215 = vmax.f32 %v5213, %v5214
        %v5216 = vrot.slane %v5215, 2
        %v5217 = vmax.f32 %v5215, %v5216
        %v5218 = vrot.slane %v5217, 1
        %v5219 = vmax.f32 %v5217, %v5218
        %v5220 = vsel %vm4708, %v4570, -inf
        %v5221 = vrot.slane %v5220, 4
        %v5222 = vmax.f32 %v5220, %v5221
        %v5223 = vrot.slane %v5222, 2
        %v5224 = vmax.f32 %v5222, %v5223
        %v5225 = vrot.slane %v5224, 1
        %v5226 = vmax.f32 %v5224, %v5225
        %v5227 = vsel %vm4708, %v4571, -inf
        %v5228 = vrot.slane %v5227, 4
        %v5229 = vmax.f32 %v5227, %v5228
        %v5230 = vrot.slane %v5229, 2
        %v5231 = vmax.f32 %v5229, %v5230
        %v5232 = vrot.slane %v5231, 1
        %v5233 = vmax.f32 %v5231, %v5232
        %v5234 = vsel %vm4708, %v4572, -inf
        %v5235 = vrot.slane %v5234, 4
        %v5236 = vmax.f32 %v5234, %v5235
        %v5237 = vrot.slane %v5236, 2
        %v5238 = vmax.f32 %v5236, %v5237
        %v5239 = vrot.slane %v5238, 1
        %v5240 = vmax.f32 %v5238, %v5239
        %v5241 = vsel %vm4708, %v4471, -inf
        %v5242 = vrot.slane %v5241, 4
        %v5243 = vmax.f32 %v5241, %v5242
        %v5244 = vrot.slane %v5243, 2
        %v5245 = vmax.f32 %v5243, %v5244
        %v5246 = vrot.slane %v5245, 1
        %v5247 = vmax.f32 %v5245, %v5246
        %v5248 = vsel %vm4708, %v4573, -inf
        %v5249 = vrot.slane %v5248, 4
        %v5250 = vmax.f32 %v5248, %v5249
        %v5251 = vrot.slane %v5250, 2
        %v5252 = vmax.f32 %v5250, %v5251
        %v5253 = vrot.slane %v5252, 1
        %v5254 = vmax.f32 %v5252, %v5253
        %v5255 = vsel %vm4708, %v4574, -inf
        %v5256 = vrot.slane %v5255, 4
        %v5257 = vmax.f32 %v5255, %v5256
        %v5258 = vrot.slane %v5257, 2
        %v5259 = vmax.f32 %v5257, %v5258
        %v5260 = vrot.slane %v5259, 1
        %v5261 = vmax.f32 %v5259, %v5260
        %v5262 = vsel %vm4708, %v4575, -inf
        %v5263 = vrot.slane %v5262, 4
        %v5264 = vmax.f32 %v5262, %v5263
        %v5265 = vrot.slane %v5264, 2
        %v5266 = vmax.f32 %v5264, %v5265
        %v5267 = vrot.slane %v5266, 1
        %v5268 = vmax.f32 %v5266, %v5267
        %v5269 = vsel %vm4708, %v4472, -inf
        %v5270 = vrot.slane %v5269, 4
        %v5271 = vmax.f32 %v5269, %v5270
        %v5272 = vrot.slane %v5271, 2
        %v5273 = vmax.f32 %v5271, %v5272
        %v5274 = vrot.slane %v5273, 1
        %v5275 = vmax.f32 %v5273, %v5274
        %v5276 = vsel %vm4708, %v4576, -inf
        %v5277 = vrot.slane %v5276, 4
        %v5278 = vmax.f32 %v5276, %v5277
        %v5279 = vrot.slane %v5278, 2
        %v5280 = vmax.f32 %v5278, %v5279
        %v5281 = vrot.slane %v5280, 1
        %v5282 = vmax.f32 %v5280, %v5281
        %v5283 = vsel %vm4708, %v4577, -inf
        %v5284 = vrot.slane %v5283, 4
        %v5285 = vmax.f32 %v5283, %v5284
        %v5286 = vrot.slane %v5285, 2
        %v5287 = vmax.f32 %v5285, %v5286
        %v5288 = vrot.slane %v5287, 1
        %v5289 = vmax.f32 %v5287, %v5288
        %v5290 = vsel %vm4708, %v4578, -inf
        %v5291 = vrot.slane %v5290, 4
        %v5292 = vmax.f32 %v5290, %v5291
        %v5293 = vrot.slane %v5292, 2
        %v5294 = vmax.f32 %v5292, %v5293
        %v5295 = vrot.slane %v5294, 1
        %v5296 = vmax.f32 %v5294, %v5295
        %v5297 = vsel %vm4708, %v4473, -inf
        %v5298 = vrot.slane %v5297, 4
        %v5299 = vmax.f32 %v5297, %v5298
        %v5300 = vrot.slane %v5299, 2
        %v5301 = vmax.f32 %v5299, %v5300
        %v5302 = vrot.slane %v5301, 1
        %v5303 = vmax.f32 %v5301, %v5302
        %v5304 = vsel %vm4708, %v4579, -inf
        %v5305 = vrot.slane %v5304, 4
        %v5306 = vmax.f32 %v5304, %v5305
        %v5307 = vrot.slane %v5306, 2
        %v5308 = vmax.f32 %v5306, %v5307
        %v5309 = vrot.slane %v5308, 1
        %v5310 = vmax.f32 %v5308, %v5309
        %v5311 = vsel %vm4708, %v4580, -inf
        %v5312 = vrot.slane %v5311, 4
        %v5313 = vmax.f32 %v5311, %v5312
        %v5314 = vrot.slane %v5313, 2
        %v5315 = vmax.f32 %v5313, %v5314
        %v5316 = vrot.slane %v5315, 1
        %v5317 = vmax.f32 %v5315, %v5316
        %v5318 = vsel %vm4708, %v4581, -inf
        %v5319 = vrot.slane %v5318, 4
        %v5320 = vmax.f32 %v5318, %v5319
        %v5321 = vrot.slane %v5320, 2
        %v5322 = vmax.f32 %v5320, %v5321
        %v5323 = vrot.slane %v5322, 1
        %v5324 = vmax.f32 %v5322, %v5323
        %v5325 = vsel %vm4708, %v4474, -inf
        %v5326 = vrot.slane %v5325, 4
        %v5327 = vmax.f32 %v5325, %v5326
        %v5328 = vrot.slane %v5327, 2
        %v5329 = vmax.f32 %v5327, %v5328
        %v5330 = vrot.slane %v5329, 1
        %v5331 = vmax.f32 %v5329, %v5330
        %v5332 = vsel %vm4708, %v4582, -inf
        %v5333 = vrot.slane %v5332, 4
        %v5334 = vmax.f32 %v5332, %v5333
        %v5335 = vrot.slane %v5334, 2
        %v5336 = vmax.f32 %v5334, %v5335
        %v5337 = vrot.slane %v5336, 1
        %v5338 = vmax.f32 %v5336, %v5337
        %v5339 = vsel %vm4708, %v4583, -inf
        %v5340 = vrot.slane %v5339, 4
        %v5341 = vmax.f32 %v5339, %v5340
        %v5342 = vrot.slane %v5341, 2
        %v5343 = vmax.f32 %v5341, %v5342
        %v5344 = vrot.slane %v5343, 1
        %v5345 = vmax.f32 %v5343, %v5344
        %v5346 = vsel %vm4708, %v4584, -inf
        %v5347 = vrot.slane %v5346, 4
        %v5348 = vmax.f32 %v5346, %v5347
        %v5349 = vrot.slane %v5348, 2
        %v5350 = vmax.f32 %v5348, %v5349
        %v5351 = vrot.slane %v5350, 1
        %v5352 = vmax.f32 %v5350, %v5351
        %v5353 = vsel %vm4708, %v4475, -inf
        %v5354 = vrot.slane %v5353, 4
        %v5355 = vmax.f32 %v5353, %v5354
        %v5356 = vrot.slane %v5355, 2
        %v5357 = vmax.f32 %v5355, %v5356
        %v5358 = vrot.slane %v5357, 1
        %v5359 = vmax.f32 %v5357, %v5358
        %v5360 = vsel %vm4708, %v4585, -inf
        %v5361 = vrot.slane %v5360, 4
        %v5362 = vmax.f32 %v5360, %v5361
        %v5363 = vrot.slane %v5362, 2
        %v5364 = vmax.f32 %v5362, %v5363
        %v5365 = vrot.slane %v5364, 1
        %v5366 = vmax.f32 %v5364, %v5365
        %v5367 = vsel %vm4708, %v4586, -inf
        %v5368 = vrot.slane %v5367, 4
        %v5369 = vmax.f32 %v5367, %v5368
        %v5370 = vrot.slane %v5369, 2
        %v5371 = vmax.f32 %v5369, %v5370
        %v5372 = vrot.slane %v5371, 1
        %v5373 = vmax.f32 %v5371, %v5372
        %v5374 = vsel %vm4708, %v4587, -inf
        %v5375 = vrot.slane %v5374, 4
        %v5376 = vmax.f32 %v5374, %v5375
        %v5377 = vrot.slane %v5376, 2
        %v5378 = vmax.f32 %v5376, %v5377
        %v5379 = vrot.slane %v5378, 1
        %v5380 = vmax.f32 %v5378, %v5379
        %v5381 = vsel %vm4708, %v4476, -inf
        %v5382 = vrot.slane %v5381, 4
        %v5383 = vmax.f32 %v5381, %v5382
        %v5384 = vrot.slane %v5383, 2
        %v5385 = vmax.f32 %v5383, %v5384
        %v5386 = vrot.slane %v5385, 1
        %v5387 = vmax.f32 %v5385, %v5386
        %v5388 = vsel %vm4708, %v4588, -inf
        %v5389 = vrot.slane %v5388, 4
        %v5390 = vmax.f32 %v5388, %v5389
        %v5391 = vrot.slane %v5390, 2
        %v5392 = vmax.f32 %v5390, %v5391
        %v5393 = vrot.slane %v5392, 1
        %v5394 = vmax.f32 %v5392, %v5393
        %v5395 = vsel %vm4708, %v4589, -inf
        %v5396 = vrot.slane %v5395, 4
        %v5397 = vmax.f32 %v5395, %v5396
        %v5398 = vrot.slane %v5397, 2
        %v5399 = vmax.f32 %v5397, %v5398
        %v5400 = vrot.slane %v5399, 1
        %v5401 = vmax.f32 %v5399, %v5400
        %v5402 = vsel %vm4708, %v4590, -inf
        %v5403 = vrot.slane %v5402, 4
        %v5404 = vmax.f32 %v5402, %v5403
        %v5405 = vrot.slane %v5404, 2
        %v5406 = vmax.f32 %v5404, %v5405
        %v5407 = vrot.slane %v5406, 1
        %v5408 = vmax.f32 %v5406, %v5407
        %v5409 = vsel %vm4708, %v4477, -inf
        %v5410 = vrot.slane %v5409, 4
        %v5411 = vmax.f32 %v5409, %v5410
        %v5412 = vrot.slane %v5411, 2
        %v5413 = vmax.f32 %v5411, %v5412
        %v5414 = vrot.slane %v5413, 1
        %v5415 = vmax.f32 %v5413, %v5414
        %v5416 = vsel %vm4708, %v4591, -inf
        %v5417 = vrot.slane %v5416, 4
        %v5418 = vmax.f32 %v5416, %v5417
        %v5419 = vrot.slane %v5418, 2
        %v5420 = vmax.f32 %v5418, %v5419
        %v5421 = vrot.slane %v5420, 1
        %v5422 = vmax.f32 %v5420, %v5421
        %v5423 = vsel %vm4708, %v4592, -inf
        %v5424 = vrot.slane %v5423, 4
        %v5425 = vmax.f32 %v5423, %v5424
        %v5426 = vrot.slane %v5425, 2
        %v5427 = vmax.f32 %v5425, %v5426
        %v5428 = vrot.slane %v5427, 1
        %v5429 = vmax.f32 %v5427, %v5428
        %v5430 = vsel %vm4708, %v4593, -inf
        %v5431 = vrot.slane %v5430, 4
        %v5432 = vmax.f32 %v5430, %v5431
        %v5433 = vrot.slane %v5432, 2
        %v5434 = vmax.f32 %v5432, %v5433
        %v5435 = vrot.slane %v5434, 1
        %v5436 = vmax.f32 %v5434, %v5435
        %v5437 = vsel %vm4708, %v4478, -inf
        %v5438 = vrot.slane %v5437, 4
        %v5439 = vmax.f32 %v5437, %v5438
        %v5440 = vrot.slane %v5439, 2
        %v5441 = vmax.f32 %v5439, %v5440
        %v5442 = vrot.slane %v5441, 1
        %v5443 = vmax.f32 %v5441, %v5442
        %v5444 = vsel %vm4708, %v4594, -inf
        %v5445 = vrot.slane %v5444, 4
        %v5446 = vmax.f32 %v5444, %v5445
        %v5447 = vrot.slane %v5446, 2
        %v5448 = vmax.f32 %v5446, %v5447
        %v5449 = vrot.slane %v5448, 1
        %v5450 = vmax.f32 %v5448, %v5449
        %v5451 = vsel %vm4708, %v4595, -inf
        %v5452 = vrot.slane %v5451, 4
        %v5453 = vmax.f32 %v5451, %v5452
        %v5454 = vrot.slane %v5453, 2
        %v5455 = vmax.f32 %v5453, %v5454
        %v5456 = vrot.slane %v5455, 1
        %v5457 = vmax.f32 %v5455, %v5456
        %v5458 = vsel %vm4708, %v4596, -inf
        %v5459 = vrot.slane %v5458, 4
        %v5460 = vmax.f32 %v5458, %v5459
        %v5461 = vrot.slane %v5460, 2
        %v5462 = vmax.f32 %v5460, %v5461
        %v5463 = vrot.slane %v5462, 1
        %v5464 = vmax.f32 %v5462, %v5463
        %v5465 = vsel %vm4708, %v4479, -inf
        %v5466 = vrot.slane %v5465, 4
        %v5467 = vmax.f32 %v5465, %v5466
        %v5468 = vrot.slane %v5467, 2
        %v5469 = vmax.f32 %v5467, %v5468
        %v5470 = vrot.slane %v5469, 1
        %v5471 = vmax.f32 %v5469, %v5470
        %v5472 = vsel %vm4708, %v4597, -inf
        %v5473 = vrot.slane %v5472, 4
        %v5474 = vmax.f32 %v5472, %v5473
        %v5475 = vrot.slane %v5474, 2
        %v5476 = vmax.f32 %v5474, %v5475
        %v5477 = vrot.slane %v5476, 1
        %v5478 = vmax.f32 %v5476, %v5477
        %v5479 = vsel %vm4708, %v4598, -inf
        %v5480 = vrot.slane %v5479, 4
        %v5481 = vmax.f32 %v5479, %v5480
        %v5482 = vrot.slane %v5481, 2
        %v5483 = vmax.f32 %v5481, %v5482
        %v5484 = vrot.slane %v5483, 1
        %v5485 = vmax.f32 %v5483, %v5484
        %v5486 = vsel %vm4708, %v4599, -inf
        %v5487 = vrot.slane %v5486, 4
        %v5488 = vmax.f32 %v5486, %v5487
        %v5489 = vrot.slane %v5488, 2
        %v5490 = vmax.f32 %v5488, %v5489
        %v5491 = vrot.slane %v5490, 1
        %v5492 = vmax.f32 %v5490, %v5491
        %v5493 = vsel %vm4708, %v4480, -inf
        %v5494 = vrot.slane %v5493, 4
        %v5495 = vmax.f32 %v5493, %v5494
        %v5496 = vrot.slane %v5495, 2
        %v5497 = vmax.f32 %v5495, %v5496
        %v5498 = vrot.slane %v5497, 1
        %v5499 = vmax.f32 %v5497, %v5498
        %v5500 = vsel %vm4708, %v4600, -inf
        %v5501 = vrot.slane %v5500, 4
        %v5502 = vmax.f32 %v5500, %v5501
        %v5503 = vrot.slane %v5502, 2
        %v5504 = vmax.f32 %v5502, %v5503
        %v5505 = vrot.slane %v5504, 1
        %v5506 = vmax.f32 %v5504, %v5505
        %v5507 = vsel %vm4708, %v4601, -inf
        %v5508 = vrot.slane %v5507, 4
        %v5509 = vmax.f32 %v5507, %v5508
        %v5510 = vrot.slane %v5509, 2
        %v5511 = vmax.f32 %v5509, %v5510
        %v5512 = vrot.slane %v5511, 1
        %v5513 = vmax.f32 %v5511, %v5512
        %v5514 = vsel %vm4708, %v4602, -inf
        %v5515 = vrot.slane %v5514, 4
        %v5516 = vmax.f32 %v5514, %v5515
        %v5517 = vrot.slane %v5516, 2
        %v5518 = vmax.f32 %v5516, %v5517
        %v5519 = vrot.slane %v5518, 1
        %v5520 = vmax.f32 %v5518, %v5519
        %v5521 = vsel %vm4708, %v4481, -inf
        %v5522 = vrot.slane %v5521, 4
        %v5523 = vmax.f32 %v5521, %v5522
        %v5524 = vrot.slane %v5523, 2
        %v5525 = vmax.f32 %v5523, %v5524
        %v5526 = vrot.slane %v5525, 1
        %v5527 = vmax.f32 %v5525, %v5526
        %v5528 = vsel %vm4708, %v4603, -inf
        %v5529 = vrot.slane %v5528, 4
        %v5530 = vmax.f32 %v5528, %v5529
        %v5531 = vrot.slane %v5530, 2
        %v5532 = vmax.f32 %v5530, %v5531
        %v5533 = vrot.slane %v5532, 1
        %v5534 = vmax.f32 %v5532, %v5533
        %v5535 = vsel %vm4708, %v4604, -inf
        %v5536 = vrot.slane %v5535, 4
        %v5537 = vmax.f32 %v5535, %v5536
        %v5538 = vrot.slane %v5537, 2
        %v5539 = vmax.f32 %v5537, %v5538
        %v5540 = vrot.slane %v5539, 1
        %v5541 = vmax.f32 %v5539, %v5540
        %v5542 = vsel %vm4708, %v4605, -inf
        %v5543 = vrot.slane %v5542, 4
        %v5544 = vmax.f32 %v5542, %v5543
        %v5545 = vrot.slane %v5544, 2
        %v5546 = vmax.f32 %v5544, %v5545
        %v5547 = vrot.slane %v5546, 1
        %v5548 = vmax.f32 %v5546, %v5547
        %v5549 = vsel %vm4708, %v4482, -inf
        %v5550 = vrot.slane %v5549, 4
        %v5551 = vmax.f32 %v5549, %v5550
        %v5552 = vrot.slane %v5551, 2
        %v5553 = vmax.f32 %v5551, %v5552
        %v5554 = vrot.slane %v5553, 1
        %v5555 = vmax.f32 %v5553, %v5554
        %v5556 = vsel %vm4708, %v4606, -inf
        %v5557 = vrot.slane %v5556, 4
        %v5558 = vmax.f32 %v5556, %v5557
        %v5559 = vrot.slane %v5558, 2
        %v5560 = vmax.f32 %v5558, %v5559
        %v5561 = vrot.slane %v5560, 1
        %v5562 = vmax.f32 %v5560, %v5561
        %v5563 = vsel %vm4708, %v4607, -inf
        %v5564 = vrot.slane %v5563, 4
        %v5565 = vmax.f32 %v5563, %v5564
        %v5566 = vrot.slane %v5565, 2
        %v5567 = vmax.f32 %v5565, %v5566
        %v5568 = vrot.slane %v5567, 1
        %v5569 = vmax.f32 %v5567, %v5568
        %v5570 = vsel %vm4708, %v4608, -inf
        %v5571 = vrot.slane %v5570, 4
        %v5572 = vmax.f32 %v5570, %v5571
        %v5573 = vrot.slane %v5572, 2
        %v5574 = vmax.f32 %v5572, %v5573
        %v5575 = vrot.slane %v5574, 1
        %v5576 = vmax.f32 %v5574, %v5575
        %v5577 = vsel %vm4708, %v4483, -inf
        %v5578 = vrot.slane %v5577, 4
        %v5579 = vmax.f32 %v5577, %v5578
        %v5580 = vrot.slane %v5579, 2
        %v5581 = vmax.f32 %v5579, %v5580
        %v5582 = vrot.slane %v5581, 1
        %v5583 = vmax.f32 %v5581, %v5582
        %v5584 = vsel %vm4708, %v4609, -inf
        %v5585 = vrot.slane %v5584, 4
        %v5586 = vmax.f32 %v5584, %v5585
        %v5587 = vrot.slane %v5586, 2
        %v5588 = vmax.f32 %v5586, %v5587
        %v5589 = vrot.slane %v5588, 1
        %v5590 = vmax.f32 %v5588, %v5589
        %v5591 = vsel %vm4708, %v4610, -inf
        %v5592 = vrot.slane %v5591, 4
        %v5593 = vmax.f32 %v5591, %v5592
        %v5594 = vrot.slane %v5593, 2
        %v5595 = vmax.f32 %v5593, %v5594
        %v5596 = vrot.slane %v5595, 1
        %v5597 = vmax.f32 %v5595, %v5596
        %v5598 = vsel %vm4708, %v4611, -inf
        %v5599 = vrot.slane %v5598, 4
        %v5600 = vmax.f32 %v5598, %v5599
        %v5601 = vrot.slane %v5600, 2
        %v5602 = vmax.f32 %v5600, %v5601
        %v5603 = vrot.slane %v5602, 1
        %v5604 = vmax.f32 %v5602, %v5603
        %v5605 = vsel %vm3170, %v4715, -inf
        %v5606 = vsel %vm3170, %v4771, -inf
        %v5607 = vmax.f32 %v5605, %v5606
        %v5608 = vsel %vm3170, %v4722, -inf
        %v5609 = vsel %vm3170, %v4778, -inf
        %v5610 = vmax.f32 %v5608, %v5609
        %v5611 = vsel %vm3170, %v4729, -inf
        %v5612 = vsel %vm3170, %v4785, -inf
        %v5613 = vmax.f32 %v5611, %v5612
        %v5614 = vsel %vm3170, %v4736, -inf
        %v5615 = vsel %vm3170, %v4792, -inf
        %v5616 = vmax.f32 %v5614, %v5615
        %v5617 = vsel %vm3170, %v4743, -inf
        %v5618 = vsel %vm3170, %v4799, -inf
        %v5619 = vmax.f32 %v5617, %v5618
        %v5620 = vsel %vm3170, %v4750, -inf
        %v5621 = vsel %vm3170, %v4806, -inf
        %v5622 = vmax.f32 %v5620, %v5621
        %v5623 = vsel %vm3170, %v4757, -inf
        %v5624 = vsel %vm3170, %v4813, -inf
        %v5625 = vmax.f32 %v5623, %v5624
        %v5626 = vsel %vm3170, %v4764, -inf
        %v5627 = vsel %vm3170, %v4820, -inf
        %v5628 = vmax.f32 %v5626, %v5627
        %v5629 = vsel %vm3170, %v4827, -inf
        %v5630 = vsel %vm3170, %v4883, -inf
        %v5631 = vmax.f32 %v5629, %v5630
        %v5632 = vsel %vm3170, %v4834, -inf
        %v5633 = vsel %vm3170, %v4890, -inf
        %v5634 = vmax.f32 %v5632, %v5633
        %v5635 = vsel %vm3170, %v4841, -inf
        %v5636 = vsel %vm3170, %v4897, -inf
        %v5637 = vmax.f32 %v5635, %v5636
        %v5638 = vsel %vm3170, %v4848, -inf
        %v5639 = vsel %vm3170, %v4904, -inf
        %v5640 = vmax.f32 %v5638, %v5639
        %v5641 = vsel %vm3170, %v4855, -inf
        %v5642 = vsel %vm3170, %v4911, -inf
        %v5643 = vmax.f32 %v5641, %v5642
        %v5644 = vsel %vm3170, %v4862, -inf
        %v5645 = vsel %vm3170, %v4918, -inf
        %v5646 = vmax.f32 %v5644, %v5645
        %v5647 = vsel %vm3170, %v4869, -inf
        %v5648 = vsel %vm3170, %v4925, -inf
        %v5649 = vmax.f32 %v5647, %v5648
        %v5650 = vsel %vm3170, %v4876, -inf
        %v5651 = vsel %vm3170, %v4932, -inf
        %v5652 = vmax.f32 %v5650, %v5651
        %v5653 = vsel %vm3170, %v4939, -inf
        %v5654 = vsel %vm3170, %v4995, -inf
        %v5655 = vmax.f32 %v5653, %v5654
        %v5656 = vsel %vm3170, %v4946, -inf
        %v5657 = vsel %vm3170, %v5002, -inf
        %v5658 = vmax.f32 %v5656, %v5657
        %v5659 = vsel %vm3170, %v4953, -inf
        %v5660 = vsel %vm3170, %v5009, -inf
        %v5661 = vmax.f32 %v5659, %v5660
        %v5662 = vsel %vm3170, %v4960, -inf
        %v5663 = vsel %vm3170, %v5016, -inf
        %v5664 = vmax.f32 %v5662, %v5663
        %v5665 = vsel %vm3170, %v4967, -inf
        %v5666 = vsel %vm3170, %v5023, -inf
        %v5667 = vmax.f32 %v5665, %v5666
        %v5668 = vsel %vm3170, %v4974, -inf
        %v5669 = vsel %vm3170, %v5030, -inf
        %v5670 = vmax.f32 %v5668, %v5669
        %v5671 = vsel %vm3170, %v4981, -inf
        %v5672 = vsel %vm3170, %v5037, -inf
        %v5673 = vmax.f32 %v5671, %v5672
        %v5674 = vsel %vm3170, %v4988, -inf
        %v5675 = vsel %vm3170, %v5044, -inf
        %v5676 = vmax.f32 %v5674, %v5675
        %v5677 = vsel %vm3170, %v5051, -inf
        %v5678 = vsel %vm3170, %v5107, -inf
        %v5679 = vmax.f32 %v5677, %v5678
        %v5680 = vsel %vm3170, %v5058, -inf
        %v5681 = vsel %vm3170, %v5114, -inf
        %v5682 = vmax.f32 %v5680, %v5681
        %v5683 = vsel %vm3170, %v5065, -inf
        %v5684 = vsel %vm3170, %v5121, -inf
        %v5685 = vmax.f32 %v5683, %v5684
        %v5686 = vsel %vm3170, %v5072, -inf
        %v5687 = vsel %vm3170, %v5128, -inf
        %v5688 = vmax.f32 %v5686, %v5687
        %v5689 = vsel %vm3170, %v5079, -inf
        %v5690 = vsel %vm3170, %v5135, -inf
        %v5691 = vmax.f32 %v5689, %v5690
        %v5692 = vsel %vm3170, %v5086, -inf
        %v5693 = vsel %vm3170, %v5142, -inf
        %v5694 = vmax.f32 %v5692, %v5693
        %v5695 = vsel %vm3170, %v5093, -inf
        %v5696 = vsel %vm3170, %v5149, -inf
        %v5697 = vmax.f32 %v5695, %v5696
        %v5698 = vsel %vm3170, %v5100, -inf
        %v5699 = vsel %vm3170, %v5156, -inf
        %v5700 = vmax.f32 %v5698, %v5699
        %v5701 = vsel %vm3170, %v5163, -inf
        %v5702 = vsel %vm3170, %v5219, -inf
        %v5703 = vmax.f32 %v5701, %v5702
        %v5704 = vsel %vm3170, %v5170, -inf
        %v5705 = vsel %vm3170, %v5226, -inf
        %v5706 = vmax.f32 %v5704, %v5705
        %v5707 = vsel %vm3170, %v5177, -inf
        %v5708 = vsel %vm3170, %v5233, -inf
        %v5709 = vmax.f32 %v5707, %v5708
        %v5710 = vsel %vm3170, %v5184, -inf
        %v5711 = vsel %vm3170, %v5240, -inf
        %v5712 = vmax.f32 %v5710, %v5711
        %v5713 = vsel %vm3170, %v5191, -inf
        %v5714 = vsel %vm3170, %v5247, -inf
        %v5715 = vmax.f32 %v5713, %v5714
        %v5716 = vsel %vm3170, %v5198, -inf
        %v5717 = vsel %vm3170, %v5254, -inf
        %v5718 = vmax.f32 %v5716, %v5717
        %v5719 = vsel %vm3170, %v5205, -inf
        %v5720 = vsel %vm3170, %v5261, -inf
        %v5721 = vmax.f32 %v5719, %v5720
        %v5722 = vsel %vm3170, %v5212, -inf
        %v5723 = vsel %vm3170, %v5268, -inf
        %v5724 = vmax.f32 %v5722, %v5723
        %v5725 = vsel %vm3170, %v5275, -inf
        %v5726 = vsel %vm3170, %v5331, -inf
        %v5727 = vmax.f32 %v5725, %v5726
        %v5728 = vsel %vm3170, %v5282, -inf
        %v5729 = vsel %vm3170, %v5338, -inf
        %v5730 = vmax.f32 %v5728, %v5729
        %v5731 = vsel %vm3170, %v5289, -inf
        %v5732 = vsel %vm3170, %v5345, -inf
        %v5733 = vmax.f32 %v5731, %v5732
        %v5734 = vsel %vm3170, %v5296, -inf
        %v5735 = vsel %vm3170, %v5352, -inf
        %v5736 = vmax.f32 %v5734, %v5735
        %v5737 = vsel %vm3170, %v5303, -inf
        %v5738 = vsel %vm3170, %v5359, -inf
        %v5739 = vmax.f32 %v5737, %v5738
        %v5740 = vsel %vm3170, %v5310, -inf
        %v5741 = vsel %vm3170, %v5366, -inf
        %v5742 = vmax.f32 %v5740, %v5741
        %v5743 = vsel %vm3170, %v5317, -inf
        %v5744 = vsel %vm3170, %v5373, -inf
        %v5745 = vmax.f32 %v5743, %v5744
        %v5746 = vsel %vm3170, %v5324, -inf
        %v5747 = vsel %vm3170, %v5380, -inf
        %v5748 = vmax.f32 %v5746, %v5747
        %v5749 = vsel %vm3170, %v5387, -inf
        %v5750 = vsel %vm3170, %v5443, -inf
        %v5751 = vmax.f32 %v5749, %v5750
        %v5752 = vsel %vm3170, %v5394, -inf
        %v5753 = vsel %vm3170, %v5450, -inf
        %v5754 = vmax.f32 %v5752, %v5753
        %v5755 = vsel %vm3170, %v5401, -inf
        %v5756 = vsel %vm3170, %v5457, -inf
        %v5757 = vmax.f32 %v5755, %v5756
        %v5758 = vsel %vm3170, %v5408, -inf
        %v5759 = vsel %vm3170, %v5464, -inf
        %v5760 = vmax.f32 %v5758, %v5759
        %v5761 = vsel %vm3170, %v5415, -inf
        %v5762 = vsel %vm3170, %v5471, -inf
        %v5763 = vmax.f32 %v5761, %v5762
        %v5764 = vsel %vm3170, %v5422, -inf
        %v5765 = vsel %vm3170, %v5478, -inf
        %v5766 = vmax.f32 %v5764, %v5765
        %v5767 = vsel %vm3170, %v5429, -inf
        %v5768 = vsel %vm3170, %v5485, -inf
        %v5769 = vmax.f32 %v5767, %v5768
        %v5770 = vsel %vm3170, %v5436, -inf
        %v5771 = vsel %vm3170, %v5492, -inf
        %v5772 = vmax.f32 %v5770, %v5771
        %v5773 = vsel %vm3170, %v5499, -inf
        %v5774 = vsel %vm3170, %v5555, -inf
        %v5775 = vmax.f32 %v5773, %v5774
        %v5776 = vsel %vm3170, %v5506, -inf
        %v5777 = vsel %vm3170, %v5562, -inf
        %v5778 = vmax.f32 %v5776, %v5777
        %v5779 = vsel %vm3170, %v5513, -inf
        %v5780 = vsel %vm3170, %v5569, -inf
        %v5781 = vmax.f32 %v5779, %v5780
        %v5782 = vsel %vm3170, %v5520, -inf
        %v5783 = vsel %vm3170, %v5576, -inf
        %v5784 = vmax.f32 %v5782, %v5783
        %v5785 = vsel %vm3170, %v5527, -inf
        %v5786 = vsel %vm3170, %v5583, -inf
        %v5787 = vmax.f32 %v5785, %v5786
        %v5788 = vsel %vm3170, %v5534, -inf
        %v5789 = vsel %vm3170, %v5590, -inf
        %v5790 = vmax.f32 %v5788, %v5789
        %v5791 = vsel %vm3170, %v5541, -inf
        %v5792 = vsel %vm3170, %v5597, -inf
        %v5793 = vmax.f32 %v5791, %v5792
        %v5794 = vsel %vm3170, %v5548, -inf
        %v5795 = vsel %vm3170, %v5604, -inf
        %v5796 = vmax.f32 %v5794, %v5795
        %v5797 = vld [vmem:[#allocation4 + $0x4] sm:$0x8]
        %v5798 = vsel %vm389, 0, %v5797
        %5799 = vst [vmem:[#allocation4 + $0x4] sm:$0x8] %v5798
        %5800 = vst.msk [vmem:[#allocation4 + $0x8] sm:$0xf] %vm393, 0
        %v5801 = vld [vmem:[#allocation4 + $0xc] sm:$0x1]
        %v5802 = vsel %vm398, 0, %v5801
        %5803 = vst [vmem:[#allocation4 + $0xc] sm:$0x1] %v5802
        %s5804 = scalar_lea.vmem [#allocation4], 144
        %v5805 = vld [vmem:[%s5804 + $0x4] sm:$0x8]
        %v5806 = vsel %vm389, 0, %v5805
        %5807 = vst [vmem:[%s5804 + $0x4] sm:$0x8] %v5806
        %5808 = vst.msk [vmem:[%s5804 + $0x8] sm:$0xf] %vm393, 0
        %v5809 = vld [vmem:[%s5804 + $0xc] sm:$0x1]
        %v5810 = vsel %vm398, 0, %v5809
        %5811 = vst [vmem:[%s5804 + $0xc] sm:$0x1] %v5810
        %s5812 = scalar_lea.vmem [#allocation4], 16
        %v5813 = vld [vmem:[%s5812 + $0x4] sm:$0x8]
        %v5814 = vsel %vm389, 0, %v5813
        %5815 = vst [vmem:[%s5812 + $0x4] sm:$0x8] %v5814
        %v5816 = vld [vmem:[%s5812 + $0x14] sm:$0x8]
        %v5817 = vsel %vm389, 0, %v5816
        %5818 = vst [vmem:[%s5812 + $0x14] sm:$0x8] %v5817
        %v5819 = vld [vmem:[%s5812 + $0x24] sm:$0x8]
        %v5820 = vsel %vm389, 0, %v5819
        %5821 = vst [vmem:[%s5812 + $0x24] sm:$0x8] %v5820
        %v5822 = vld [vmem:[%s5812 + $0x34] sm:$0x8]
        %v5823 = vsel %vm389, 0, %v5822
        %5824 = vst [vmem:[%s5812 + $0x34] sm:$0x8] %v5823
        %v5825 = vld [vmem:[%s5812 + $0x44] sm:$0x8]
        %v5826 = vsel %vm389, 0, %v5825
        %5827 = vst [vmem:[%s5812 + $0x44] sm:$0x8] %v5826
        %v5828 = vld [vmem:[%s5812 + $0x54] sm:$0x8]
        %v5829 = vsel %vm389, 0, %v5828
        %5830 = vst [vmem:[%s5812 + $0x54] sm:$0x8] %v5829
        %v5831 = vld [vmem:[%s5812 + $0x64] sm:$0x8]
        %v5832 = vsel %vm389, 0, %v5831
        %5833 = vst [vmem:[%s5812 + $0x64] sm:$0x8] %v5832
        %v5834 = vld [vmem:[%s5812 + $0x74] sm:$0x8]
        %v5835 = vsel %vm389, 0, %v5834
        %5836 = vst [vmem:[%s5812 + $0x74] sm:$0x8] %v5835
        %v5837 = vld [vmem:[%s5812 + $0xc] sm:$0x1]
        %v5838 = vsel %vm398, 0, %v5837
        %5839 = vst [vmem:[%s5812 + $0xc] sm:$0x1] %v5838
        %v5840 = vld [vmem:[%s5812 + $0x1c] sm:$0x1]
        %v5841 = vsel %vm398, 0, %v5840
        %5842 = vst [vmem:[%s5812 + $0x1c] sm:$0x1] %v5841
        %v5843 = vld [vmem:[%s5812 + $0x2c] sm:$0x1]
        %v5844 = vsel %vm398, 0, %v5843
        %5845 = vst [vmem:[%s5812 + $0x2c] sm:$0x1] %v5844
        %v5846 = vld [vmem:[%s5812 + $0x3c] sm:$0x1]
        %v5847 = vsel %vm398, 0, %v5846
        %5848 = vst [vmem:[%s5812 + $0x3c] sm:$0x1] %v5847
        %v5849 = vld [vmem:[%s5812 + $0x4c] sm:$0x1]
        %v5850 = vsel %vm398, 0, %v5849
        %5851 = vst [vmem:[%s5812 + $0x4c] sm:$0x1] %v5850
        %v5852 = vld [vmem:[%s5812 + $0x5c] sm:$0x1]
        %v5853 = vsel %vm398, 0, %v5852
        %5854 = vst [vmem:[%s5812 + $0x5c] sm:$0x1] %v5853
        %v5855 = vld [vmem:[%s5812 + $0x6c] sm:$0x1]
        %v5856 = vsel %vm398, 0, %v5855
        %5857 = vst [vmem:[%s5812 + $0x6c] sm:$0x1] %v5856
        %v5858 = vld [vmem:[%s5812 + $0x7c] sm:$0x1]
        %v5859 = vsel %vm398, 0, %v5858
        %5860 = vst [vmem:[%s5812 + $0x7c] sm:$0x1] %v5859
        %v5861 = vpack.c.bf16 %v5607, %v5607
        %v5862 = vpack.c.bf16 %v5610, %v5610
        %v5863 = vpack.c.bf16 %v5613, %v5613
        %v5864 = vpack.c.bf16 %v5616, %v5616
        %v5865 = vpack.c.bf16 %v5619, %v5619
        %v5866 = vpack.c.bf16 %v5622, %v5622
        %v5867 = vpack.c.bf16 %v5625, %v5625
        %v5868 = vpack.c.bf16 %v5628, %v5628
        %v5869 = vpack.c.bf16 %v5631, %v5631
        %v5870 = vpack.c.bf16 %v5634, %v5634
        %v5871 = vpack.c.bf16 %v5637, %v5637
        %v5872 = vpack.c.bf16 %v5640, %v5640
        %v5873 = vpack.c.bf16 %v5643, %v5643
        %v5874 = vpack.c.bf16 %v5646, %v5646
        %v5875 = vpack.c.bf16 %v5649, %v5649
        %v5876 = vpack.c.bf16 %v5652, %v5652
        %v5877 = vpack.c.bf16 %v5655, %v5655
        %v5878 = vpack.c.bf16 %v5658, %v5658
        %v5879 = vpack.c.bf16 %v5661, %v5661
        %v5880 = vpack.c.bf16 %v5664, %v5664
        %v5881 = vpack.c.bf16 %v5667, %v5667
        %v5882 = vpack.c.bf16 %v5670, %v5670
        %v5883 = vpack.c.bf16 %v5673, %v5673
        %v5884 = vpack.c.bf16 %v5676, %v5676
        %v5885 = vpack.c.bf16 %v5679, %v5679
        %v5886 = vpack.c.bf16 %v5682, %v5682
        %v5887 = vpack.c.bf16 %v5685, %v5685
        %v5888 = vpack.c.bf16 %v5688, %v5688
        %v5889 = vpack.c.bf16 %v5691, %v5691
        %v5890 = vpack.c.bf16 %v5694, %v5694
        %v5891 = vpack.c.bf16 %v5697, %v5697
        %v5892 = vpack.c.bf16 %v5700, %v5700
        %v5893 = vpack.c.bf16 %v5703, %v5703
        %v5894 = vpack.c.bf16 %v5706, %v5706
        %v5895 = vpack.c.bf16 %v5709, %v5709
        %v5896 = vpack.c.bf16 %v5712, %v5712
        %v5897 = vpack.c.bf16 %v5715, %v5715
        %v5898 = vpack.c.bf16 %v5718, %v5718
        %v5899 = vpack.c.bf16 %v5721, %v5721
        %v5900 = vpack.c.bf16 %v5724, %v5724
        %v5901 = vpack.c.bf16 %v5727, %v5727
        %v5902 = vpack.c.bf16 %v5730, %v5730
        %v5903 = vpack.c.bf16 %v5733, %v5733
        %v5904 = vpack.c.bf16 %v5736, %v5736
        %v5905 = vpack.c.bf16 %v5739, %v5739
        %v5906 = vpack.c.bf16 %v5742, %v5742
        %v5907 = vpack.c.bf16 %v5745, %v5745
        %v5908 = vpack.c.bf16 %v5748, %v5748
        %v5909 = vpack.c.bf16 %v5751, %v5751
        %v5910 = vpack.c.bf16 %v5754, %v5754
        %v5911 = vpack.c.bf16 %v5757, %v5757
        %v5912 = vpack.c.bf16 %v5760, %v5760
        %v5913 = vpack.c.bf16 %v5763, %v5763
        %v5914 = vpack.c.bf16 %v5766, %v5766
        %v5915 = vpack.c.bf16 %v5769, %v5769
        %v5916 = vpack.c.bf16 %v5772, %v5772
        %v5917 = vpack.c.bf16 %v5775, %v5775
        %v5918 = vpack.c.bf16 %v5778, %v5778
        %v5919 = vpack.c.bf16 %v5781, %v5781
        %v5920 = vpack.c.bf16 %v5784, %v5784
        %v5921 = vpack.c.bf16 %v5787, %v5787
        %v5922 = vpack.c.bf16 %v5790, %v5790
        %v5923 = vpack.c.bf16 %v5793, %v5793
        %v5924 = vpack.c.bf16 %v5796, %v5796
        %v5989 = vunpack.c.l.b16 %v5861
        %v5990 = vunpack.c.l.b16 %v5862
        %v5991 = vunpack.c.l.b16 %v5863
        %v5992 = vunpack.c.l.b16 %v5864
        %v5993 = vunpack.c.l.b16 %v5865
        %v5994 = vunpack.c.l.b16 %v5866
        %v5995 = vunpack.c.l.b16 %v5867
        %v5996 = vunpack.c.l.b16 %v5868
        %v5997 = vunpack.c.l.b16 %v5869
        %v5998 = vunpack.c.l.b16 %v5870
        %v5999 = vunpack.c.l.b16 %v5871
        %v6000 = vunpack.c.l.b16 %v5872
        %v6001 = vunpack.c.l.b16 %v5873
        %v6002 = vunpack.c.l.b16 %v5874
        %v6003 = vunpack.c.l.b16 %v5875
        %v6004 = vunpack.c.l.b16 %v5876
        %v6005 = vunpack.c.l.b16 %v5877
        %v6006 = vunpack.c.l.b16 %v5878
        %v6007 = vunpack.c.l.b16 %v5879
        %v6008 = vunpack.c.l.b16 %v5880
        %v6009 = vunpack.c.l.b16 %v5881
        %v6010 = vunpack.c.l.b16 %v5882
        %v6011 = vunpack.c.l.b16 %v5883
        %v6012 = vunpack.c.l.b16 %v5884
        %v6013 = vunpack.c.l.b16 %v5885
        %v6014 = vunpack.c.l.b16 %v5886
        %v6015 = vunpack.c.l.b16 %v5887
        %v6016 = vunpack.c.l.b16 %v5888
        %v6017 = vunpack.c.l.b16 %v5889
        %v6018 = vunpack.c.l.b16 %v5890
        %v6019 = vunpack.c.l.b16 %v5891
        %v6020 = vunpack.c.l.b16 %v5892
        %v6021 = vunpack.c.l.b16 %v5893
        %v6022 = vunpack.c.l.b16 %v5894
        %v6023 = vunpack.c.l.b16 %v5895
        %v6024 = vunpack.c.l.b16 %v5896
        %v6025 = vunpack.c.l.b16 %v5897
        %v6026 = vunpack.c.l.b16 %v5898
        %v6027 = vunpack.c.l.b16 %v5899
        %v6028 = vunpack.c.l.b16 %v5900
        %v6029 = vunpack.c.l.b16 %v5901
        %v6030 = vunpack.c.l.b16 %v5902
        %v6031 = vunpack.c.l.b16 %v5903
        %v6032 = vunpack.c.l.b16 %v5904
        %v6033 = vunpack.c.l.b16 %v5905
        %v6034 = vunpack.c.l.b16 %v5906
        %v6035 = vunpack.c.l.b16 %v5907
        %v6036 = vunpack.c.l.b16 %v5908
        %v6037 = vunpack.c.l.b16 %v5909
        %v6038 = vunpack.c.l.b16 %v5910
        %v6039 = vunpack.c.l.b16 %v5911
        %v6040 = vunpack.c.l.b16 %v5912
        %v6041 = vunpack.c.l.b16 %v5913
        %v6042 = vunpack.c.l.b16 %v5914
        %v6043 = vunpack.c.l.b16 %v5915
        %v6044 = vunpack.c.l.b16 %v5916
        %v6045 = vunpack.c.l.b16 %v5917
        %v6046 = vunpack.c.l.b16 %v5918
        %v6047 = vunpack.c.l.b16 %v5919
        %v6048 = vunpack.c.l.b16 %v5920
        %v6049 = vunpack.c.l.b16 %v5921
        %v6050 = vunpack.c.l.b16 %v5922
        %v6051 = vunpack.c.l.b16 %v5923
        %v6052 = vunpack.c.l.b16 %v5924
        %vm6053 = vcmask 1041409
        %v6054 = vsel %vm6053, %v5990, %v5989
        %vm6055 = vcmask 1042434
        %v6056 = vsel %vm6055, %v5991, %v6054
        %vm6057 = vcmask 1043459
        %v6058 = vsel %vm6057, %v5992, %v6056
        %vm6059 = vcmask 1044484
        %v6060 = vsel %vm6059, %v5993, %v6058
        %vm6061 = vcmask 1045509
        %v6062 = vsel %vm6061, %v5994, %v6060
        %vm6063 = vcmask 1046534
        %v6064 = vsel %vm6063, %v5995, %v6062
        %vm6065 = vcmask 1047559
        %v6066 = vsel %vm6065, %v5996, %v6064
        %v6067 = vsel %vm6053, %v5998, %v5997
        %v6068 = vsel %vm6055, %v5999, %v6067
        %v6069 = vsel %vm6057, %v6000, %v6068
        %v6070 = vsel %vm6059, %v6001, %v6069
        %v6071 = vsel %vm6061, %v6002, %v6070
        %v6072 = vsel %vm6063, %v6003, %v6071
        %v6073 = vsel %vm6065, %v6004, %v6072
        %v6074 = vsel %vm6053, %v6006, %v6005
        %v6075 = vsel %vm6055, %v6007, %v6074
        %v6076 = vsel %vm6057, %v6008, %v6075
        %v6077 = vsel %vm6059, %v6009, %v6076
        %v6078 = vsel %vm6061, %v6010, %v6077
        %v6079 = vsel %vm6063, %v6011, %v6078
        %v6080 = vsel %vm6065, %v6012, %v6079
        %v6081 = vsel %vm6053, %v6014, %v6013
        %v6082 = vsel %vm6055, %v6015, %v6081
        %v6083 = vsel %vm6057, %v6016, %v6082
        %v6084 = vsel %vm6059, %v6017, %v6083
        %v6085 = vsel %vm6061, %v6018, %v6084
        %v6086 = vsel %vm6063, %v6019, %v6085
        %v6087 = vsel %vm6065, %v6020, %v6086
        %v6088 = vsel %vm6053, %v6022, %v6021
        %v6089 = vsel %vm6055, %v6023, %v6088
        %v6090 = vsel %vm6057, %v6024, %v6089
        %v6091 = vsel %vm6059, %v6025, %v6090
        %v6092 = vsel %vm6061, %v6026, %v6091
        %v6093 = vsel %vm6063, %v6027, %v6092
        %v6094 = vsel %vm6065, %v6028, %v6093
        %v6095 = vsel %vm6053, %v6030, %v6029
        %v6096 = vsel %vm6055, %v6031, %v6095
        %v6097 = vsel %vm6057, %v6032, %v6096
        %v6098 = vsel %vm6059, %v6033, %v6097
        %v6099 = vsel %vm6061, %v6034, %v6098
        %v6100 = vsel %vm6063, %v6035, %v6099
        %v6101 = vsel %vm6065, %v6036, %v6100
        %v6102 = vsel %vm6053, %v6038, %v6037
        %v6103 = vsel %vm6055, %v6039, %v6102
        %v6104 = vsel %vm6057, %v6040, %v6103
        %v6105 = vsel %vm6059, %v6041, %v6104
        %v6106 = vsel %vm6061, %v6042, %v6105
        %v6107 = vsel %vm6063, %v6043, %v6106
        %v6108 = vsel %vm6065, %v6044, %v6107
        %v6109 = vsel %vm6053, %v6046, %v6045
        %v6110 = vsel %vm6055, %v6047, %v6109
        %v6111 = vsel %vm6057, %v6048, %v6110
        %v6112 = vsel %vm6059, %v6049, %v6111
        %v6113 = vsel %vm6061, %v6050, %v6112
        %v6114 = vsel %vm6063, %v6051, %v6113
        %v6115 = vsel %vm6065, %v6052, %v6114
        %v6116 = vpack.c.b16 %v6066, %v6066
        %v6117 = vpack.c.b16 %v6073, %v6073
        %v6118 = vpack.c.b16 %v6080, %v6080
        %v6119 = vpack.c.b16 %v6087, %v6087
        %v6120 = vpack.c.b16 %v6094, %v6094
        %v6121 = vpack.c.b16 %v6101, %v6101
        %v6122 = vpack.c.b16 %v6108, %v6108
        %v6123 = vpack.c.b16 %v6115, %v6115
        %6132 = vst.msk [vmem:[%s5812 + $0x8] sm:$0xf] %vm393, %v6116
        %6133 = vst.msk [vmem:[%s5812 + $0x18] sm:$0xf] %vm393, %v6117
        %6134 = vst.msk [vmem:[%s5812 + $0x28] sm:$0xf] %vm393, %v6118
        %6135 = vst.msk [vmem:[%s5812 + $0x38] sm:$0xf] %vm393, %v6119
        %6136 = vst.msk [vmem:[%s5812 + $0x48] sm:$0xf] %vm393, %v6120
        %6137 = vst.msk [vmem:[%s5812 + $0x58] sm:$0xf] %vm393, %v6121
        %6138 = vst.msk [vmem:[%s5812 + $0x68] sm:$0xf] %vm393, %v6122
        %6139 = vst.msk [vmem:[%s5812 + $0x78] sm:$0xf] %vm393, %v6123
        %v6140 = vld [vmem:[#allocation4 + $0x4] sm:$0x8]
        %v6141 = vld [vmem:[#allocation4 + $0x8] sm:$0xf]
        %v6142 = vld [vmem:[#allocation4 + $0x14] sm:$0x8]
        %v6143 = vld [vmem:[#allocation4 + $0x18] sm:$0xf]
        %v6144 = vld [vmem:[#allocation4 + $0x24] sm:$0x8]
        %v6145 = vld [vmem:[#allocation4 + $0x28] sm:$0xf]
        %v6146 = vld [vmem:[#allocation4 + $0x34] sm:$0x8]
        %v6147 = vld [vmem:[#allocation4 + $0x38] sm:$0xf]
        %v6148 = vld [vmem:[#allocation4 + $0x44] sm:$0x8]
        %v6149 = vld [vmem:[#allocation4 + $0x48] sm:$0xf]
        %v6150 = vld [vmem:[#allocation4 + $0x54] sm:$0x8]
        %v6151 = vld [vmem:[#allocation4 + $0x58] sm:$0xf]
        %v6152 = vld [vmem:[#allocation4 + $0x64] sm:$0x8]
        %v6153 = vld [vmem:[#allocation4 + $0x68] sm:$0xf]
        %v6154 = vld [vmem:[#allocation4 + $0x74] sm:$0x8]
        %v6155 = vld [vmem:[#allocation4 + $0x78] sm:$0xf]
        %v6157 = vshrl.u32 %v6140, 16
        %v6159 = vrot.slane %v6157, 7
        %v6160 = vrot.slane %v6159, 4
        %v6162 = vshrl.u32 %v6141, 16
        %v6164 = vrot.slane %v6162, 7
        %v6165 = vshll.u32 %v6141, 16
        %v6167 = vor.u32 %v6164, %v6165
        %v6168 = vsel %vm589, %v6160, %v6167
        %v6170 = vshrl.u32 %v6142, 16
        %v6172 = vrot.slane %v6170, 7
        %v6173 = vrot.slane %v6172, 4
        %v6175 = vshrl.u32 %v6143, 16
        %v6177 = vrot.slane %v6175, 7
        %v6178 = vshll.u32 %v6143, 16
        %v6180 = vor.u32 %v6177, %v6178
        %v6181 = vsel %vm589, %v6173, %v6180
        %v6183 = vshrl.u32 %v6144, 16
        %v6185 = vrot.slane %v6183, 7
        %v6186 = vrot.slane %v6185, 4
        %v6188 = vshrl.u32 %v6145, 16
        %v6190 = vrot.slane %v6188, 7
        %v6191 = vshll.u32 %v6145, 16
        %v6193 = vor.u32 %v6190, %v6191
        %v6194 = vsel %vm589, %v6186, %v6193
        %v6196 = vshrl.u32 %v6146, 16
        %v6198 = vrot.slane %v6196, 7
        %v6199 = vrot.slane %v6198, 4
        %v6201 = vshrl.u32 %v6147, 16
        %v6203 = vrot.slane %v6201, 7
        %v6204 = vshll.u32 %v6147, 16
        %v6206 = vor.u32 %v6203, %v6204
        %v6207 = vsel %vm589, %v6199, %v6206
        %v6209 = vshrl.u32 %v6148, 16
        %v6211 = vrot.slane %v6209, 7
        %v6212 = vrot.slane %v6211, 4
        %v6214 = vshrl.u32 %v6149, 16
        %v6216 = vrot.slane %v6214, 7
        %v6217 = vshll.u32 %v6149, 16
        %v6219 = vor.u32 %v6216, %v6217
        %v6220 = vsel %vm589, %v6212, %v6219
        %v6222 = vshrl.u32 %v6150, 16
        %v6224 = vrot.slane %v6222, 7
        %v6225 = vrot.slane %v6224, 4
        %v6227 = vshrl.u32 %v6151, 16
        %v6229 = vrot.slane %v6227, 7
        %v6230 = vshll.u32 %v6151, 16
        %v6232 = vor.u32 %v6229, %v6230
        %v6233 = vsel %vm589, %v6225, %v6232
        %v6235 = vshrl.u32 %v6152, 16
        %v6237 = vrot.slane %v6235, 7
        %v6238 = vrot.slane %v6237, 4
        %v6240 = vshrl.u32 %v6153, 16
        %v6242 = vrot.slane %v6240, 7
        %v6243 = vshll.u32 %v6153, 16
        %v6245 = vor.u32 %v6242, %v6243
        %v6246 = vsel %vm589, %v6238, %v6245
        %v6248 = vshrl.u32 %v6154, 16
        %v6250 = vrot.slane %v6248, 7
        %v6251 = vrot.slane %v6250, 4
        %v6253 = vshrl.u32 %v6155, 16
        %v6255 = vrot.slane %v6253, 7
        %v6256 = vshll.u32 %v6155, 16
        %v6258 = vor.u32 %v6255, %v6256
        %v6259 = vsel %vm589, %v6251, %v6258
        %v6260 = vld [vmem:[#allocation4 + $0xc] sm:$0x1]
        %v6261 = vld [vmem:[#allocation4 + $0x1c] sm:$0x1]
        %v6262 = vld [vmem:[#allocation4 + $0x2c] sm:$0x1]
        %v6263 = vld [vmem:[#allocation4 + $0x3c] sm:$0x1]
        %v6264 = vld [vmem:[#allocation4 + $0x4c] sm:$0x1]
        %v6265 = vld [vmem:[#allocation4 + $0x5c] sm:$0x1]
        %v6266 = vld [vmem:[#allocation4 + $0x6c] sm:$0x1]
        %v6267 = vld [vmem:[#allocation4 + $0x7c] sm:$0x1]
        %v6268 = vrot.slane %v6162, 4
        %v6269 = vrot.slane %v6165, 5
        %v6270 = vor.u32 %v6268, %v6269
        %v6271 = vrot.slane %v6270, 4
        %v6273 = vshll.u32 %v6260, 16
        %v6275 = vrot.slane %v6273, 5
        %v6276 = vsel %vm960, %v6271, %v6275
        %v6277 = vrot.slane %v6175, 4
        %v6278 = vrot.slane %v6178, 5
        %v6279 = vor.u32 %v6277, %v6278
        %v6280 = vrot.slane %v6279, 4
        %v6282 = vshll.u32 %v6261, 16
        %v6284 = vrot.slane %v6282, 5
        %v6285 = vsel %vm960, %v6280, %v6284
        %v6286 = vrot.slane %v6188, 4
        %v6287 = vrot.slane %v6191, 5
        %v6288 = vor.u32 %v6286, %v6287
        %v6289 = vrot.slane %v6288, 4
        %v6291 = vshll.u32 %v6262, 16
        %v6293 = vrot.slane %v6291, 5
        %v6294 = vsel %vm960, %v6289, %v6293
        %v6295 = vrot.slane %v6201, 4
        %v6296 = vrot.slane %v6204, 5
        %v6297 = vor.u32 %v6295, %v6296
        %v6298 = vrot.slane %v6297, 4
        %v6300 = vshll.u32 %v6263, 16
        %v6302 = vrot.slane %v6300, 5
        %v6303 = vsel %vm960, %v6298, %v6302
        %v6304 = vrot.slane %v6214, 4
        %v6305 = vrot.slane %v6217, 5
        %v6306 = vor.u32 %v6304, %v6305
        %v6307 = vrot.slane %v6306, 4
        %v6309 = vshll.u32 %v6264, 16
        %v6311 = vrot.slane %v6309, 5
        %v6312 = vsel %vm960, %v6307, %v6311
        %v6313 = vrot.slane %v6227, 4
        %v6314 = vrot.slane %v6230, 5
        %v6315 = vor.u32 %v6313, %v6314
        %v6316 = vrot.slane %v6315, 4
        %v6318 = vshll.u32 %v6265, 16
        %v6320 = vrot.slane %v6318, 5
        %v6321 = vsel %vm960, %v6316, %v6320
        %v6322 = vrot.slane %v6240, 4
        %v6323 = vrot.slane %v6243, 5
        %v6324 = vor.u32 %v6322, %v6323
        %v6325 = vrot.slane %v6324, 4
        %v6327 = vshll.u32 %v6266, 16
        %v6329 = vrot.slane %v6327, 5
        %v6330 = vsel %vm960, %v6325, %v6329
        %v6331 = vrot.slane %v6253, 4
        %v6332 = vrot.slane %v6256, 5
        %v6333 = vor.u32 %v6331, %v6332
        %v6334 = vrot.slane %v6333, 4
        %v6336 = vshll.u32 %v6267, 16
        %v6338 = vrot.slane %v6336, 5
        %v6339 = vsel %vm960, %v6334, %v6338
        %v6340 = vld [vmem:[%s5812 + $0x4] sm:$0x8]
        %v6341 = vld [vmem:[%s5812 + $0x8] sm:$0xf]
        %v6342 = vld [vmem:[%s5812 + $0x14] sm:$0x8]
        %v6343 = vld [vmem:[%s5812 + $0x18] sm:$0xf]
        %v6344 = vld [vmem:[%s5812 + $0x24] sm:$0x8]
        %v6345 = vld [vmem:[%s5812 + $0x28] sm:$0xf]
        %v6346 = vld [vmem:[%s5812 + $0x34] sm:$0x8]
        %v6347 = vld [vmem:[%s5812 + $0x38] sm:$0xf]
        %v6348 = vld [vmem:[%s5812 + $0x44] sm:$0x8]
        %v6349 = vld [vmem:[%s5812 + $0x48] sm:$0xf]
        %v6350 = vld [vmem:[%s5812 + $0x54] sm:$0x8]
        %v6351 = vld [vmem:[%s5812 + $0x58] sm:$0xf]
        %v6352 = vld [vmem:[%s5812 + $0x64] sm:$0x8]
        %v6353 = vld [vmem:[%s5812 + $0x68] sm:$0xf]
        %v6354 = vld [vmem:[%s5812 + $0x74] sm:$0x8]
        %v6355 = vld [vmem:[%s5812 + $0x78] sm:$0xf]
        %v6357 = vshrl.u32 %v6340, 16
        %v6359 = vrot.slane %v6357, 7
        %v6360 = vrot.slane %v6359, 4
        %v6362 = vshrl.u32 %v6341, 16
        %v6364 = vrot.slane %v6362, 7
        %v6365 = vshll.u32 %v6341, 16
        %v6367 = vor.u32 %v6364, %v6365
        %v6368 = vsel %vm589, %v6360, %v6367
        %v6370 = vshrl.u32 %v6342, 16
        %v6372 = vrot.slane %v6370, 7
        %v6373 = vrot.slane %v6372, 4
        %v6375 = vshrl.u32 %v6343, 16
        %v6377 = vrot.slane %v6375, 7
        %v6378 = vshll.u32 %v6343, 16
        %v6380 = vor.u32 %v6377, %v6378
        %v6381 = vsel %vm589, %v6373, %v6380
        %v6383 = vshrl.u32 %v6344, 16
        %v6385 = vrot.slane %v6383, 7
        %v6386 = vrot.slane %v6385, 4
        %v6388 = vshrl.u32 %v6345, 16
        %v6390 = vrot.slane %v6388, 7
        %v6391 = vshll.u32 %v6345, 16
        %v6393 = vor.u32 %v6390, %v6391
        %v6394 = vsel %vm589, %v6386, %v6393
        %v6396 = vshrl.u32 %v6346, 16
        %v6398 = vrot.slane %v6396, 7
        %v6399 = vrot.slane %v6398, 4
        %v6401 = vshrl.u32 %v6347, 16
        %v6403 = vrot.slane %v6401, 7
        %v6404 = vshll.u32 %v6347, 16
        %v6406 = vor.u32 %v6403, %v6404
        %v6407 = vsel %vm589, %v6399, %v6406
        %v6409 = vshrl.u32 %v6348, 16
        %v6411 = vrot.slane %v6409, 7
        %v6412 = vrot.slane %v6411, 4
        %v6414 = vshrl.u32 %v6349, 16
        %v6416 = vrot.slane %v6414, 7
        %v6417 = vshll.u32 %v6349, 16
        %v6419 = vor.u32 %v6416, %v6417
        %v6420 = vsel %vm589, %v6412, %v6419
        %v6422 = vshrl.u32 %v6350, 16
        %v6424 = vrot.slane %v6422, 7
        %v6425 = vrot.slane %v6424, 4
        %v6427 = vshrl.u32 %v6351, 16
        %v6429 = vrot.slane %v6427, 7
        %v6430 = vshll.u32 %v6351, 16
        %v6432 = vor.u32 %v6429, %v6430
        %v6433 = vsel %vm589, %v6425, %v6432
        %v6435 = vshrl.u32 %v6352, 16
        %v6437 = vrot.slane %v6435, 7
        %v6438 = vrot.slane %v6437, 4
        %v6440 = vshrl.u32 %v6353, 16
        %v6442 = vrot.slane %v6440, 7
        %v6443 = vshll.u32 %v6353, 16
        %v6445 = vor.u32 %v6442, %v6443
        %v6446 = vsel %vm589, %v6438, %v6445
        %v6448 = vshrl.u32 %v6354, 16
        %v6450 = vrot.slane %v6448, 7
        %v6451 = vrot.slane %v6450, 4
        %v6453 = vshrl.u32 %v6355, 16
        %v6455 = vrot.slane %v6453, 7
        %v6456 = vshll.u32 %v6355, 16
        %v6458 = vor.u32 %v6455, %v6456
        %v6459 = vsel %vm589, %v6451, %v6458
        %v6460 = vld [vmem:[%s5812 + $0xc] sm:$0x1]
        %v6461 = vld [vmem:[%s5812 + $0x1c] sm:$0x1]
        %v6462 = vld [vmem:[%s5812 + $0x2c] sm:$0x1]
        %v6463 = vld [vmem:[%s5812 + $0x3c] sm:$0x1]
        %v6464 = vld [vmem:[%s5812 + $0x4c] sm:$0x1]
        %v6465 = vld [vmem:[%s5812 + $0x5c] sm:$0x1]
        %v6466 = vld [vmem:[%s5812 + $0x6c] sm:$0x1]
        %v6467 = vld [vmem:[%s5812 + $0x7c] sm:$0x1]
        %v6468 = vrot.slane %v6362, 4
        %v6469 = vrot.slane %v6365, 5
        %v6470 = vor.u32 %v6468, %v6469
        %v6471 = vrot.slane %v6470, 4
        %v6473 = vshll.u32 %v6460, 16
        %v6475 = vrot.slane %v6473, 5
        %v6476 = vsel %vm960, %v6471, %v6475
        %v6477 = vrot.slane %v6375, 4
        %v6478 = vrot.slane %v6378, 5
        %v6479 = vor.u32 %v6477, %v6478
        %v6480 = vrot.slane %v6479, 4
        %v6482 = vshll.u32 %v6461, 16
        %v6484 = vrot.slane %v6482, 5
        %v6485 = vsel %vm960, %v6480, %v6484
        %v6486 = vrot.slane %v6388, 4
        %v6487 = vrot.slane %v6391, 5
        %v6488 = vor.u32 %v6486, %v6487
        %v6489 = vrot.slane %v6488, 4
        %v6491 = vshll.u32 %v6462, 16
        %v6493 = vrot.slane %v6491, 5
        %v6494 = vsel %vm960, %v6489, %v6493
        %v6495 = vrot.slane %v6401, 4
        %v6496 = vrot.slane %v6404, 5
        %v6497 = vor.u32 %v6495, %v6496
        %v6498 = vrot.slane %v6497, 4
        %v6500 = vshll.u32 %v6463, 16
        %v6502 = vrot.slane %v6500, 5
        %v6503 = vsel %vm960, %v6498, %v6502
        %v6504 = vrot.slane %v6414, 4
        %v6505 = vrot.slane %v6417, 5
        %v6506 = vor.u32 %v6504, %v6505
        %v6507 = vrot.slane %v6506, 4
        %v6509 = vshll.u32 %v6464, 16
        %v6511 = vrot.slane %v6509, 5
        %v6512 = vsel %vm960, %v6507, %v6511
        %v6513 = vrot.slane %v6427, 4
        %v6514 = vrot.slane %v6430, 5
        %v6515 = vor.u32 %v6513, %v6514
        %v6516 = vrot.slane %v6515, 4
        %v6518 = vshll.u32 %v6465, 16
        %v6520 = vrot.slane %v6518, 5
        %v6521 = vsel %vm960, %v6516, %v6520
        %v6522 = vrot.slane %v6440, 4
        %v6523 = vrot.slane %v6443, 5
        %v6524 = vor.u32 %v6522, %v6523
        %v6525 = vrot.slane %v6524, 4
        %v6527 = vshll.u32 %v6466, 16
        %v6529 = vrot.slane %v6527, 5
        %v6530 = vsel %vm960, %v6525, %v6529
        %v6531 = vrot.slane %v6453, 4
        %v6532 = vrot.slane %v6456, 5
        %v6533 = vor.u32 %v6531, %v6532
        %v6534 = vrot.slane %v6533, 4
        %v6536 = vshll.u32 %v6467, 16
        %v6538 = vrot.slane %v6536, 5
        %v6539 = vsel %vm960, %v6534, %v6538
        %s6540 = scalar_lea.vmem [#allocation4], 32
        %v6541 = vld [vmem:[%s6540 + $0x4] sm:$0x8]
        %v6542 = vld [vmem:[%s6540 + $0x8] sm:$0xf]
        %v6543 = vld [vmem:[%s6540 + $0x14] sm:$0x8]
        %v6544 = vld [vmem:[%s6540 + $0x18] sm:$0xf]
        %v6545 = vld [vmem:[%s6540 + $0x24] sm:$0x8]
        %v6546 = vld [vmem:[%s6540 + $0x28] sm:$0xf]
        %v6547 = vld [vmem:[%s6540 + $0x34] sm:$0x8]
        %v6548 = vld [vmem:[%s6540 + $0x38] sm:$0xf]
        %v6549 = vld [vmem:[%s6540 + $0x44] sm:$0x8]
        %v6550 = vld [vmem:[%s6540 + $0x48] sm:$0xf]
        %v6551 = vld [vmem:[%s6540 + $0x54] sm:$0x8]
        %v6552 = vld [vmem:[%s6540 + $0x58] sm:$0xf]
        %v6553 = vld [vmem:[%s6540 + $0x64] sm:$0x8]
        %v6554 = vld [vmem:[%s6540 + $0x68] sm:$0xf]
        %v6555 = vld [vmem:[%s6540 + $0x74] sm:$0x8]
        %v6556 = vld [vmem:[%s6540 + $0x78] sm:$0xf]
        %v6558 = vshrl.u32 %v6541, 16
        %v6560 = vrot.slane %v6558, 7
        %v6561 = vrot.slane %v6560, 4
        %v6563 = vshrl.u32 %v6542, 16
        %v6565 = vrot.slane %v6563, 7
        %v6566 = vshll.u32 %v6542, 16
        %v6568 = vor.u32 %v6565, %v6566
        %v6569 = vsel %vm589, %v6561, %v6568
        %v6571 = vshrl.u32 %v6543, 16
        %v6573 = vrot.slane %v6571, 7
        %v6574 = vrot.slane %v6573, 4
        %v6576 = vshrl.u32 %v6544, 16
        %v6578 = vrot.slane %v6576, 7
        %v6579 = vshll.u32 %v6544, 16
        %v6581 = vor.u32 %v6578, %v6579
        %v6582 = vsel %vm589, %v6574, %v6581
        %v6584 = vshrl.u32 %v6545, 16
        %v6586 = vrot.slane %v6584, 7
        %v6587 = vrot.slane %v6586, 4
        %v6589 = vshrl.u32 %v6546, 16
        %v6591 = vrot.slane %v6589, 7
        %v6592 = vshll.u32 %v6546, 16
        %v6594 = vor.u32 %v6591, %v6592
        %v6595 = vsel %vm589, %v6587, %v6594
        %v6597 = vshrl.u32 %v6547, 16
        %v6599 = vrot.slane %v6597, 7
        %v6600 = vrot.slane %v6599, 4
        %v6602 = vshrl.u32 %v6548, 16
        %v6604 = vrot.slane %v6602, 7
        %v6605 = vshll.u32 %v6548, 16
        %v6607 = vor.u32 %v6604, %v6605
        %v6608 = vsel %vm589, %v6600, %v6607
        %v6610 = vshrl.u32 %v6549, 16
        %v6612 = vrot.slane %v6610, 7
        %v6613 = vrot.slane %v6612, 4
        %v6615 = vshrl.u32 %v6550, 16
        %v6617 = vrot.slane %v6615, 7
        %v6618 = vshll.u32 %v6550, 16
        %v6620 = vor.u32 %v6617, %v6618
        %v6621 = vsel %vm589, %v6613, %v6620
        %v6623 = vshrl.u32 %v6551, 16
        %v6625 = vrot.slane %v6623, 7
        %v6626 = vrot.slane %v6625, 4
        %v6628 = vshrl.u32 %v6552, 16
        %v6630 = vrot.slane %v6628, 7
        %v6631 = vshll.u32 %v6552, 16
        %v6633 = vor.u32 %v6630, %v6631
        %v6634 = vsel %vm589, %v6626, %v6633
        %v6636 = vshrl.u32 %v6553, 16
        %v6638 = vrot.slane %v6636, 7
        %v6639 = vrot.slane %v6638, 4
        %v6641 = vshrl.u32 %v6554, 16
        %v6643 = vrot.slane %v6641, 7
        %v6644 = vshll.u32 %v6554, 16
        %v6646 = vor.u32 %v6643, %v6644
        %v6647 = vsel %vm589, %v6639, %v6646
        %v6649 = vshrl.u32 %v6555, 16
        %v6651 = vrot.slane %v6649, 7
        %v6652 = vrot.slane %v6651, 4
        %v6654 = vshrl.u32 %v6556, 16
        %v6656 = vrot.slane %v6654, 7
        %v6657 = vshll.u32 %v6556, 16
        %v6659 = vor.u32 %v6656, %v6657
        %v6660 = vsel %vm589, %v6652, %v6659
        %v6661 = vld [vmem:[%s6540 + $0xc] sm:$0x1]
        %v6662 = vld [vmem:[%s6540 + $0x1c] sm:$0x1]
        %v6663 = vld [vmem:[%s6540 + $0x2c] sm:$0x1]
        %v6664 = vld [vmem:[%s6540 + $0x3c] sm:$0x1]
        %v6665 = vld [vmem:[%s6540 + $0x4c] sm:$0x1]
        %v6666 = vld [vmem:[%s6540 + $0x5c] sm:$0x1]
        %v6667 = vld [vmem:[%s6540 + $0x6c] sm:$0x1]
        %v6668 = vld [vmem:[%s6540 + $0x7c] sm:$0x1]
        %v6669 = vrot.slane %v6563, 4
        %v6670 = vrot.slane %v6566, 5
        %v6671 = vor.u32 %v6669, %v6670
        %v6672 = vrot.slane %v6671, 4
        %v6674 = vshll.u32 %v6661, 16
        %v6676 = vrot.slane %v6674, 5
        %v6677 = vsel %vm960, %v6672, %v6676
        %v6678 = vrot.slane %v6576, 4
        %v6679 = vrot.slane %v6579, 5
        %v6680 = vor.u32 %v6678, %v6679
        %v6681 = vrot.slane %v6680, 4
        %v6683 = vshll.u32 %v6662, 16
        %v6685 = vrot.slane %v6683, 5
        %v6686 = vsel %vm960, %v6681, %v6685
        %v6687 = vrot.slane %v6589, 4
        %v6688 = vrot.slane %v6592, 5
        %v6689 = vor.u32 %v6687, %v6688
        %v6690 = vrot.slane %v6689, 4
        %v6692 = vshll.u32 %v6663, 16
        %v6694 = vrot.slane %v6692, 5
        %v6695 = vsel %vm960, %v6690, %v6694
        %v6696 = vrot.slane %v6602, 4
        %v6697 = vrot.slane %v6605, 5
        %v6698 = vor.u32 %v6696, %v6697
        %v6699 = vrot.slane %v6698, 4
        %v6701 = vshll.u32 %v6664, 16
        %v6703 = vrot.slane %v6701, 5
        %v6704 = vsel %vm960, %v6699, %v6703
        %v6705 = vrot.slane %v6615, 4
        %v6706 = vrot.slane %v6618, 5
        %v6707 = vor.u32 %v6705, %v6706
        %v6708 = vrot.slane %v6707, 4
        %v6710 = vshll.u32 %v6665, 16
        %v6712 = vrot.slane %v6710, 5
        %v6713 = vsel %vm960, %v6708, %v6712
        %v6714 = vrot.slane %v6628, 4
        %v6715 = vrot.slane %v6631, 5
        %v6716 = vor.u32 %v6714, %v6715
        %v6717 = vrot.slane %v6716, 4
        %v6719 = vshll.u32 %v6666, 16
        %v6721 = vrot.slane %v6719, 5
        %v6722 = vsel %vm960, %v6717, %v6721
        %v6723 = vrot.slane %v6641, 4
        %v6724 = vrot.slane %v6644, 5
        %v6725 = vor.u32 %v6723, %v6724
        %v6726 = vrot.slane %v6725, 4
        %v6728 = vshll.u32 %v6667, 16
        %v6730 = vrot.slane %v6728, 5
        %v6731 = vsel %vm960, %v6726, %v6730
        %v6732 = vrot.slane %v6654, 4
        %v6733 = vrot.slane %v6657, 5
        %v6734 = vor.u32 %v6732, %v6733
        %v6735 = vrot.slane %v6734, 4
        %v6737 = vshll.u32 %v6668, 16
        %v6739 = vrot.slane %v6737, 5
        %v6740 = vsel %vm960, %v6735, %v6739
        %v6741 = vunpack.c.l.b16 %v6168
        %v6742 = vunpack.c.l.b16 %v6181
        %v6743 = vunpack.c.l.b16 %v6194
        %v6744 = vunpack.c.l.b16 %v6207
        %v6745 = vunpack.c.l.b16 %v6220
        %v6746 = vunpack.c.l.b16 %v6233
        %v6747 = vunpack.c.l.b16 %v6246
        %v6748 = vunpack.c.l.b16 %v6259
        %v6749 = vpack.c.b16 %v6742, %v6741
        %v6750 = vpack.c.b16 %v6744, %v6743
        %v6751 = vpack.c.b16 %v6746, %v6745
        %v6752 = vpack.c.b16 %v6748, %v6747
        %v6761 = vunpack.c.l.b16 %v6141
        %v6762 = vunpack.c.l.b16 %v6143
        %v6763 = vunpack.c.l.b16 %v6145
        %v6764 = vunpack.c.l.b16 %v6147
        %v6765 = vunpack.c.l.b16 %v6149
        %v6766 = vunpack.c.l.b16 %v6151
        %v6767 = vunpack.c.l.b16 %v6153
        %v6768 = vunpack.c.l.b16 %v6155
        %v6769 = vpack.c.b16 %v6762, %v6761
        %v6770 = vpack.c.b16 %v6764, %v6763
        %v6771 = vpack.c.b16 %v6766, %v6765
        %v6772 = vpack.c.b16 %v6768, %v6767
        %6773 = vrot.lane.b32.xlu0 %v6769, 32
        %v6774 = vpop.permute.xlu0 %6773
        %6775 = vrot.lane.b32.xlu0 %v6770, 32
        %v6776 = vpop.permute.xlu0 %6775
        %6777 = vrot.lane.b32.xlu0 %v6771, 32
        %v6778 = vpop.permute.xlu0 %6777
        %6779 = vrot.lane.b32.xlu0 %v6772, 32
        %v6780 = vpop.permute.xlu0 %6779
        %v6781 = vunpack.c.l.b16 %v6276
        %v6782 = vunpack.c.l.b16 %v6285
        %v6783 = vunpack.c.l.b16 %v6294
        %v6784 = vunpack.c.l.b16 %v6303
        %v6785 = vunpack.c.l.b16 %v6312
        %v6786 = vunpack.c.l.b16 %v6321
        %v6787 = vunpack.c.l.b16 %v6330
        %v6788 = vunpack.c.l.b16 %v6339
        %v6789 = vpack.c.b16 %v6782, %v6781
        %v6790 = vpack.c.b16 %v6784, %v6783
        %v6791 = vpack.c.b16 %v6786, %v6785
        %v6792 = vpack.c.b16 %v6788, %v6787
        %6793 = vrot.lane.b32.xlu0 %v6789, 64
        %v6794 = vpop.permute.xlu0 %6793
        %6795 = vrot.lane.b32.xlu0 %v6790, 64
        %v6796 = vpop.permute.xlu0 %6795
        %6797 = vrot.lane.b32.xlu0 %v6791, 64
        %v6798 = vpop.permute.xlu0 %6797
        %6799 = vrot.lane.b32.xlu0 %v6792, 64
        %v6800 = vpop.permute.xlu0 %6799
        %v6801 = vunpack.c.l.b16 %v6368
        %v6802 = vunpack.c.l.b16 %v6381
        %v6803 = vunpack.c.l.b16 %v6394
        %v6804 = vunpack.c.l.b16 %v6407
        %v6805 = vunpack.c.l.b16 %v6420
        %v6806 = vunpack.c.l.b16 %v6433
        %v6807 = vunpack.c.l.b16 %v6446
        %v6808 = vunpack.c.l.b16 %v6459
        %v6809 = vpack.c.b16 %v6802, %v6801
        %v6810 = vpack.c.b16 %v6804, %v6803
        %v6811 = vpack.c.b16 %v6806, %v6805
        %v6812 = vpack.c.b16 %v6808, %v6807
        %6813 = vrot.lane.b32.xlu0 %v6809, 96
        %v6814 = vpop.permute.xlu0 %6813
        %6815 = vrot.lane.b32.xlu0 %v6810, 96
        %v6816 = vpop.permute.xlu0 %6815
        %6817 = vrot.lane.b32.xlu0 %v6811, 96
        %v6818 = vpop.permute.xlu0 %6817
        %6819 = vrot.lane.b32.xlu0 %v6812, 96
        %v6820 = vpop.permute.xlu0 %6819
        %v6829 = vunpack.c.l.b16 %v6341
        %v6830 = vunpack.c.l.b16 %v6343
        %v6831 = vunpack.c.l.b16 %v6345
        %v6832 = vunpack.c.l.b16 %v6347
        %v6833 = vunpack.c.l.b16 %v6349
        %v6834 = vunpack.c.l.b16 %v6351
        %v6835 = vunpack.c.l.b16 %v6353
        %v6836 = vunpack.c.l.b16 %v6355
        %v6837 = vpack.c.b16 %v6830, %v6829
        %v6838 = vpack.c.b16 %v6832, %v6831
        %v6839 = vpack.c.b16 %v6834, %v6833
        %v6840 = vpack.c.b16 %v6836, %v6835
        %v6841 = vunpack.c.l.b16 %v6476
        %v6842 = vunpack.c.l.b16 %v6485
        %v6843 = vunpack.c.l.b16 %v6494
        %v6844 = vunpack.c.l.b16 %v6503
        %v6845 = vunpack.c.l.b16 %v6512
        %v6846 = vunpack.c.l.b16 %v6521
        %v6847 = vunpack.c.l.b16 %v6530
        %v6848 = vunpack.c.l.b16 %v6539
        %v6849 = vpack.c.b16 %v6842, %v6841
        %v6850 = vpack.c.b16 %v6844, %v6843
        %v6851 = vpack.c.b16 %v6846, %v6845
        %v6852 = vpack.c.b16 %v6848, %v6847
        %6853 = vrot.lane.b32.xlu0 %v6849, 32
        %v6854 = vpop.permute.xlu0 %6853
        %6855 = vrot.lane.b32.xlu0 %v6850, 32
        %v6856 = vpop.permute.xlu0 %6855
        %6857 = vrot.lane.b32.xlu0 %v6851, 32
        %v6858 = vpop.permute.xlu0 %6857
        %6859 = vrot.lane.b32.xlu0 %v6852, 32
        %v6860 = vpop.permute.xlu0 %6859
        %v6861 = vunpack.c.l.b16 %v6569
        %v6862 = vunpack.c.l.b16 %v6582
        %v6863 = vunpack.c.l.b16 %v6595
        %v6864 = vunpack.c.l.b16 %v6608
        %v6865 = vunpack.c.l.b16 %v6621
        %v6866 = vunpack.c.l.b16 %v6634
        %v6867 = vunpack.c.l.b16 %v6647
        %v6868 = vunpack.c.l.b16 %v6660
        %v6869 = vpack.c.b16 %v6862, %v6861
        %v6870 = vpack.c.b16 %v6864, %v6863
        %v6871 = vpack.c.b16 %v6866, %v6865
        %v6872 = vpack.c.b16 %v6868, %v6867
        %6873 = vrot.lane.b32.xlu0 %v6869, 64
        %v6874 = vpop.permute.xlu0 %6873
        %6875 = vrot.lane.b32.xlu0 %v6870, 64
        %v6876 = vpop.permute.xlu0 %6875
        %6877 = vrot.lane.b32.xlu0 %v6871, 64
        %v6878 = vpop.permute.xlu0 %6877
        %6879 = vrot.lane.b32.xlu0 %v6872, 64
        %v6880 = vpop.permute.xlu0 %6879
        %v6889 = vunpack.c.l.b16 %v6542
        %v6890 = vunpack.c.l.b16 %v6544
        %v6891 = vunpack.c.l.b16 %v6546
        %v6892 = vunpack.c.l.b16 %v6548
        %v6893 = vunpack.c.l.b16 %v6550
        %v6894 = vunpack.c.l.b16 %v6552
        %v6895 = vunpack.c.l.b16 %v6554
        %v6896 = vunpack.c.l.b16 %v6556
        %v6897 = vpack.c.b16 %v6890, %v6889
        %v6898 = vpack.c.b16 %v6892, %v6891
        %v6899 = vpack.c.b16 %v6894, %v6893
        %v6900 = vpack.c.b16 %v6896, %v6895
        %6901 = vrot.lane.b32.xlu0 %v6897, 96
        %v6902 = vpop.permute.xlu0 %6901
        %6903 = vrot.lane.b32.xlu0 %v6898, 96
        %v6904 = vpop.permute.xlu0 %6903
        %6905 = vrot.lane.b32.xlu0 %v6899, 96
        %v6906 = vpop.permute.xlu0 %6905
        %6907 = vrot.lane.b32.xlu0 %v6900, 96
        %v6908 = vpop.permute.xlu0 %6907
        %v6909 = vunpack.c.l.b16 %v6677
        %v6910 = vunpack.c.l.b16 %v6686
        %v6911 = vunpack.c.l.b16 %v6695
        %v6912 = vunpack.c.l.b16 %v6704
        %v6913 = vunpack.c.l.b16 %v6713
        %v6914 = vunpack.c.l.b16 %v6722
        %v6915 = vunpack.c.l.b16 %v6731
        %v6916 = vunpack.c.l.b16 %v6740
        %v6919 = vsel %vm3170, %v6749, %v6774
        %v6922 = vsel %vm3170, %v6750, %v6776
        %v6925 = vsel %vm3170, %v6751, %v6778
        %v6928 = vsel %vm3170, %v6752, %v6780
        %v6930 = vsel %vm3219, %v6919, %v6794
        %v6932 = vsel %vm3219, %v6922, %v6796
        %v6934 = vsel %vm3219, %v6925, %v6798
        %v6936 = vsel %vm3219, %v6928, %v6800
        %v6938 = vsel %vm3252, %v6930, %v6814
        %v6940 = vsel %vm3252, %v6932, %v6816
        %v6942 = vsel %vm3252, %v6934, %v6818
        %v6944 = vsel %vm3252, %v6936, %v6820
        %v6947 = vsel %vm3170, %v6837, %v6854
        %v6950 = vsel %vm3170, %v6838, %v6856
        %v6953 = vsel %vm3170, %v6839, %v6858
        %v6956 = vsel %vm3170, %v6840, %v6860
        %v6958 = vsel %vm3219, %v6947, %v6874
        %v6960 = vsel %vm3219, %v6950, %v6876
        %v6962 = vsel %vm3219, %v6953, %v6878
        %v6964 = vsel %vm3219, %v6956, %v6880
        %v6966 = vsel %vm3252, %v6958, %v6902
        %v6968 = vsel %vm3252, %v6960, %v6904
        %v6970 = vsel %vm3252, %v6962, %v6906
        %v6972 = vsel %vm3252, %v6964, %v6908
        %v6981 = vunpack.c.l.b16 %v6938
        %v6982 = vunpack.c.l.b16 %v6966
        %v6983 = vunpack.c.h.b16 %v6938
        %v6984 = vunpack.c.h.b16 %v6966
        %v6985 = vunpack.c.l.b16 %v6940
        %v6986 = vunpack.c.l.b16 %v6968
        %v6987 = vunpack.c.h.b16 %v6940
        %v6988 = vunpack.c.h.b16 %v6968
        %v6989 = vunpack.c.l.b16 %v6942
        %v6990 = vunpack.c.l.b16 %v6970
        %v6991 = vunpack.c.h.b16 %v6942
        %v6992 = vunpack.c.h.b16 %v6970
        %v6993 = vunpack.c.l.b16 %v6944
        %v6994 = vunpack.c.l.b16 %v6972
        %v6995 = vunpack.c.h.b16 %v6944
        %v6996 = vunpack.c.h.b16 %v6972
        %v6997 = vpack.c.b16 %v6982, %v6981
        %v6998 = vpack.c.b16 %v6909, %v6909
        %v6999 = vpack.c.b16 %v6984, %v6983
        %v7000 = vpack.c.b16 %v6910, %v6910
        %v7001 = vpack.c.b16 %v6986, %v6985
        %v7002 = vpack.c.b16 %v6911, %v6911
        %v7003 = vpack.c.b16 %v6988, %v6987
        %v7004 = vpack.c.b16 %v6912, %v6912
        %v7005 = vpack.c.b16 %v6990, %v6989
        %v7006 = vpack.c.b16 %v6913, %v6913
        %v7007 = vpack.c.b16 %v6992, %v6991
        %v7008 = vpack.c.b16 %v6914, %v6914
        %v7009 = vpack.c.b16 %v6994, %v6993
        %v7010 = vpack.c.b16 %v6915, %v6915
        %v7011 = vpack.c.b16 %v6996, %v6995
        %v7012 = vpack.c.b16 %v6916, %v6916
        %7029 = vst [vmem:[#allocation5] sm:$0xff] %v6997
        %7030 = vst.msk [vmem:[#allocation5 + $0x8] sm:$0xf] %vm393, %v6998
        %7031 = vst [vmem:[#allocation5 + $0xc] sm:$0xff] %v6999
        %7032 = vst.msk [vmem:[#allocation5 + $0x14] sm:$0xf] %vm393, %v7000
        %7033 = vst [vmem:[#allocation5 + $0x18] sm:$0xff] %v7001
        %7034 = vst.msk [vmem:[#allocation5 + $0x20] sm:$0xf] %vm393, %v7002
        %7035 = vst [vmem:[#allocation5 + $0x24] sm:$0xff] %v7003
        %7036 = vst.msk [vmem:[#allocation5 + $0x2c] sm:$0xf] %vm393, %v7004
        %7037 = vst [vmem:[#allocation5 + $0x30] sm:$0xff] %v7005
        %7038 = vst.msk [vmem:[#allocation5 + $0x38] sm:$0xf] %vm393, %v7006
        %7039 = vst [vmem:[#allocation5 + $0x3c] sm:$0xff] %v7007
        %7040 = vst.msk [vmem:[#allocation5 + $0x44] sm:$0xf] %vm393, %v7008
        %7041 = vst [vmem:[#allocation5 + $0x48] sm:$0xff] %v7009
        %7042 = vst.msk [vmem:[#allocation5 + $0x50] sm:$0xf] %vm393, %v7010
        %7043 = vst [vmem:[#allocation5 + $0x54] sm:$0xff] %v7011
        %7044 = vst.msk [vmem:[#allocation5 + $0x5c] sm:$0xf] %vm393, %v7012
        %v7045 = vld [vmem:[#allocation5] sm:$0xff]
        %v7046 = vld [vmem:[#allocation5 + $0x8] sm:$0xf]
        %v7047 = vld [vmem:[#allocation5 + $0xc] sm:$0xff]
        %v7048 = vld [vmem:[#allocation5 + $0x14] sm:$0xf]
        %v7049 = vld [vmem:[#allocation5 + $0x18] sm:$0xff]
        %v7050 = vld [vmem:[#allocation5 + $0x20] sm:$0xf]
        %v7051 = vld [vmem:[#allocation5 + $0x24] sm:$0xff]
        %v7052 = vld [vmem:[#allocation5 + $0x2c] sm:$0xf]
        %v7053 = vld [vmem:[#allocation5 + $0x30] sm:$0xff]
        %v7054 = vld [vmem:[#allocation5 + $0x38] sm:$0xf]
        %v7055 = vld [vmem:[#allocation5 + $0x3c] sm:$0xff]
        %v7056 = vld [vmem:[#allocation5 + $0x44] sm:$0xf]
        %v7057 = vld [vmem:[#allocation5 + $0x48] sm:$0xff]
        %v7058 = vld [vmem:[#allocation5 + $0x50] sm:$0xf]
        %v7059 = vld [vmem:[#allocation5 + $0x54] sm:$0xff]
        %v7060 = vld [vmem:[#allocation5 + $0x5c] sm:$0xf]
        %v7061 = vld [vmem:[%s3] sm:$0xf]
        %v7062 = vld [vmem:[%s3 + $0x4] sm:$0xf]
        %v7063 = vld [vmem:[%s3 + $0x8] sm:$0xf]
        %v7064 = vld [vmem:[%s3 + $0xc] sm:$0xf]
        %v7065 = vld [vmem:[%s3 + $0x10] sm:$0xf]
        %v7066 = vld [vmem:[%s3 + $0x14] sm:$0xf]
        %v7067 = vld [vmem:[%s3 + $0x18] sm:$0xf]
        %v7068 = vld [vmem:[%s3 + $0x1c] sm:$0xf]
        %v7069 = vld [vmem:[%s3 + $0x20] sm:$0xf]
        %v7070 = vld [vmem:[%s3 + $0x24] sm:$0xf]
        %v7071 = vld [vmem:[%s3 + $0x28] sm:$0xf]
        %v7072 = vld [vmem:[%s3 + $0x2c] sm:$0xf]
        %v7073 = vld [vmem:[%s3 + $0x30] sm:$0xf]
        %v7074 = vld [vmem:[%s3 + $0x34] sm:$0xf]
        %v7075 = vld [vmem:[%s3 + $0x38] sm:$0xf]
        %v7076 = vld [vmem:[%s3 + $0x3c] sm:$0xf]
        %v7077 = vld [vmem:[%s3 + $0x40] sm:$0xf]
        %v7078 = vld [vmem:[%s3 + $0x44] sm:$0xf]
        %v7079 = vld [vmem:[%s3 + $0x48] sm:$0xf]
        %v7080 = vld [vmem:[%s3 + $0x4c] sm:$0xf]
        %v7081 = vld [vmem:[%s3 + $0x50] sm:$0xf]
        %v7082 = vld [vmem:[%s3 + $0x54] sm:$0xf]
        %v7083 = vld [vmem:[%s3 + $0x58] sm:$0xf]
        %v7084 = vld [vmem:[%s3 + $0x5c] sm:$0xf]
        %v7085 = vld [vmem:[%s3 + $0x60] sm:$0xf]
        %v7086 = vld [vmem:[%s3 + $0x64] sm:$0xf]
        %v7087 = vld [vmem:[%s3 + $0x68] sm:$0xf]
        %v7088 = vld [vmem:[%s3 + $0x6c] sm:$0xf]
        %v7089 = vld [vmem:[%s3 + $0x70] sm:$0xf]
        %v7090 = vld [vmem:[%s3 + $0x74] sm:$0xf]
        %v7091 = vld [vmem:[%s3 + $0x78] sm:$0xf]
        %v7092 = vld [vmem:[%s3 + $0x7c] sm:$0xf]
        %v7093 = vld [vmem:[%s3 + $0x80] sm:$0xf]
        %v7094 = vld [vmem:[%s3 + $0x84] sm:$0xf]
        %v7095 = vld [vmem:[%s3 + $0x88] sm:$0xf]
        %v7096 = vld [vmem:[%s3 + $0x8c] sm:$0xf]
        %v7097 = vld [vmem:[%s4] sm:$0x1]
        %v7099 = vperm.slane %v7097, 0
        %v7117 = vunpack.c.l.b16 %v7045
        %v7118 = vunpack.c.h.b16 %v7045
        %v7119 = vunpack.c.l.b16 %v7046
        %v7120 = vunpack.c.l.b16 %v7047
        %v7121 = vunpack.c.h.b16 %v7047
        %v7122 = vunpack.c.l.b16 %v7048
        %v7123 = vunpack.c.l.b16 %v7049
        %v7124 = vunpack.c.h.b16 %v7049
        %v7125 = vunpack.c.l.b16 %v7050
        %v7126 = vunpack.c.l.b16 %v7051
        %v7127 = vunpack.c.h.b16 %v7051
        %v7128 = vunpack.c.l.b16 %v7052
        %v7129 = vunpack.c.l.b16 %v7053
        %v7130 = vunpack.c.h.b16 %v7053
        %v7131 = vunpack.c.l.b16 %v7054
        %v7132 = vunpack.c.l.b16 %v7055
        %v7133 = vunpack.c.h.b16 %v7055
        %v7134 = vunpack.c.l.b16 %v7056
        %v7135 = vunpack.c.l.b16 %v7057
        %v7136 = vunpack.c.h.b16 %v7057
        %v7137 = vunpack.c.l.b16 %v7058
        %v7138 = vunpack.c.l.b16 %v7059
        %v7139 = vunpack.c.h.b16 %v7059
        %v7140 = vunpack.c.l.b16 %v7060
        %v7141 = vpack.c.b16 %v7120, %v7117
        %v7142 = vpack.c.b16 %v7121, %v7118
        %v7143 = vpack.c.b16 %v7122, %v7119
        %v7144 = vpack.c.b16 %v7126, %v7123
        %v7145 = vpack.c.b16 %v7127, %v7124
        %v7146 = vpack.c.b16 %v7128, %v7125
        %v7147 = vpack.c.b16 %v7132, %v7129
        %v7148 = vpack.c.b16 %v7133, %v7130
        %v7149 = vpack.c.b16 %v7134, %v7131
        %v7150 = vpack.c.b16 %v7138, %v7135
        %v7151 = vpack.c.b16 %v7139, %v7136
        %v7152 = vpack.c.b16 %v7140, %v7137
        %v7197 = vunpack.c.l.b16 %v7061
        %v7198 = vunpack.c.l.b16 %v7062
        %v7199 = vunpack.c.l.b16 %v7063
        %v7200 = vunpack.c.l.b16 %v7064
        %v7201 = vunpack.c.l.b16 %v7065
        %v7202 = vunpack.c.l.b16 %v7066
        %v7203 = vunpack.c.l.b16 %v7067
        %v7204 = vunpack.c.l.b16 %v7068
        %v7205 = vunpack.c.l.b16 %v7069
        %v7206 = vunpack.c.l.b16 %v7070
        %v7207 = vunpack.c.l.b16 %v7071
        %v7208 = vunpack.c.l.b16 %v7072
        %v7209 = vunpack.c.l.b16 %v7073
        %v7210 = vunpack.c.l.b16 %v7074
        %v7211 = vunpack.c.l.b16 %v7075
        %v7212 = vunpack.c.l.b16 %v7076
        %v7213 = vunpack.c.l.b16 %v7077
        %v7214 = vunpack.c.l.b16 %v7078
        %v7215 = vunpack.c.l.b16 %v7079
        %v7216 = vunpack.c.l.b16 %v7080
        %v7217 = vunpack.c.l.b16 %v7081
        %v7218 = vunpack.c.l.b16 %v7082
        %v7219 = vunpack.c.l.b16 %v7083
        %v7220 = vunpack.c.l.b16 %v7084
        %v7221 = vunpack.c.l.b16 %v7085
        %v7222 = vunpack.c.l.b16 %v7086
        %v7223 = vunpack.c.l.b16 %v7087
        %v7224 = vunpack.c.l.b16 %v7088
        %v7225 = vunpack.c.l.b16 %v7089
        %v7226 = vunpack.c.l.b16 %v7090
        %v7227 = vunpack.c.l.b16 %v7091
        %v7228 = vunpack.c.l.b16 %v7092
        %v7229 = vunpack.c.l.b16 %v7093
        %v7230 = vunpack.c.l.b16 %v7094
        %v7231 = vunpack.c.l.b16 %v7095
        %v7232 = vunpack.c.l.b16 %v7096
        %v7233 = vpack.c.b16 %v7198, %v7197
        %v7234 = vpack.c.b16 %v7200, %v7199
        %v7235 = vpack.c.b16 %v7202, %v7201
        %v7236 = vpack.c.b16 %v7204, %v7203
        %v7237 = vpack.c.b16 %v7206, %v7205
        %v7238 = vpack.c.b16 %v7208, %v7207
        %v7239 = vpack.c.b16 %v7210, %v7209
        %v7240 = vpack.c.b16 %v7212, %v7211
        %v7241 = vpack.c.b16 %v7214, %v7213
        %v7242 = vpack.c.b16 %v7216, %v7215
        %v7243 = vpack.c.b16 %v7218, %v7217
        %v7244 = vpack.c.b16 %v7220, %v7219
        %v7245 = vpack.c.b16 %v7222, %v7221
        %v7246 = vpack.c.b16 %v7224, %v7223
        %v7247 = vpack.c.b16 %v7226, %v7225
        %v7248 = vpack.c.b16 %v7228, %v7227
        %v7249 = vpack.c.b16 %v7230, %v7229
        %v7250 = vpack.c.b16 %v7232, %v7231
        %v7270 = vsel %vm3170, %v7143, 0
        %v7273 = vsel %vm3170, %v7146, 0
        %v7276 = vsel %vm3170, %v7149, 0
        %v7279 = vsel %vm3170, %v7152, 0
        %7281 = vmatpush.bf16.msra.mxu0 %v7240
        %7282 = vmatpush.bf16.msra.mxu0 %v7239
        %7283 = vmatpush.bf16.msra.mxu0 %v7238
        %7284 = vmatpush.bf16.msra.mxu0 %v7237
        %7285 = vmatpush.bf16.msra.mxu0 %v7236
        %7286 = vmatpush.bf16.msra.mxu0 %v7235
        %7287 = vmatpush.bf16.msra.mxu0 %v7234
        %7288 = vmatpush.bf16.msra.mxu0 %v7233
        %7289 = vmatmul.bf16.gmra.mxu0 %v7141
        %v7290 = vpop.f32.mrf.mxu0
        %v7291 = vadd.f32 %v7099, %v7290
        %v7292 = vpop.f32.mrf.mxu0
        %v7293 = vadd.f32 %v7099, %v7292
        %7294 = vmatmul.bf16.gmra.mxu0 %v7144
        %v7295 = vpop.f32.mrf.mxu0
        %v7296 = vadd.f32 %v7099, %v7295
        %v7297 = vpop.f32.mrf.mxu0
        %v7298 = vadd.f32 %v7099, %v7297
        %7299 = vmatmul.bf16.gmra.mxu0 %v7147
        %v7300 = vpop.f32.mrf.mxu0
        %v7301 = vadd.f32 %v7099, %v7300
        %v7302 = vpop.f32.mrf.mxu0
        %v7303 = vadd.f32 %v7099, %v7302
        %7304 = vmatmul.bf16.gmra.mxu0 %v7150
        %v7305 = vpop.f32.mrf.mxu0
        %v7306 = vadd.f32 %v7099, %v7305
        %v7307 = vpop.f32.mrf.mxu0
        %v7308 = vadd.f32 %v7099, %v7307
        %7309 = vdwg.mxu0
        %7310 = vmatpush.bf16.msra.mxu0 %v7248
        %7311 = vmatpush.bf16.msra.mxu0 %v7247
        %7312 = vmatpush.bf16.msra.mxu0 %v7246
        %7313 = vmatpush.bf16.msra.mxu0 %v7245
        %7314 = vmatpush.bf16.msra.mxu0 %v7244
        %7315 = vmatpush.bf16.msra.mxu0 %v7243
        %7316 = vmatpush.bf16.msra.mxu0 %v7242
        %7317 = vmatpush.bf16.msra.mxu0 %v7241
        %7318 = vmatmul.bf16.gmra.mxu0 %v7142
        %v7319 = vpop.f32.mrf.mxu0
        %v7320 = vadd.f32 %v7291, %v7319
        %v7321 = vpop.f32.mrf.mxu0
        %v7322 = vadd.f32 %v7293, %v7321
        %7323 = vmatmul.bf16.gmra.mxu0 %v7145
        %v7324 = vpop.f32.mrf.mxu0
        %v7325 = vadd.f32 %v7296, %v7324
        %v7326 = vpop.f32.mrf.mxu0
        %v7327 = vadd.f32 %v7298, %v7326
        %7328 = vmatmul.bf16.gmra.mxu0 %v7148
        %v7329 = vpop.f32.mrf.mxu0
        %v7330 = vadd.f32 %v7301, %v7329
        %v7331 = vpop.f32.mrf.mxu0
        %v7332 = vadd.f32 %v7303, %v7331
        %7333 = vmatmul.bf16.gmra.mxu0 %v7151
        %v7334 = vpop.f32.mrf.mxu0
        %v7335 = vadd.f32 %v7306, %v7334
        %v7336 = vpop.f32.mrf.mxu0
        %v7337 = vadd.f32 %v7308, %v7336
        %7338 = vdwg.mxu0
        %7339 = vmatpush.bf16.msra.mxu0 0
        %7340 = vmatpush.bf16.msra.mxu0 0
        %7341 = vmatpush.bf16.msra.mxu0 0
        %7342 = vmatpush.bf16.msra.mxu0 0
        %7343 = vmatpush.bf16.msra.mxu0 0
        %7344 = vmatpush.bf16.msra.mxu0 0
        %7345 = vmatpush.bf16.msra.mxu0 %v7250
        %7346 = vmatpush.bf16.msra.mxu0 %v7249
        %7347 = vmatmul.bf16.gmra.mxu0 %v7270
        %v7348 = vpop.f32.mrf.mxu0
        %v7349 = vadd.f32 %v7320, %v7348
        %v7350 = vpop.f32.mrf.mxu0
        %v7351 = vadd.f32 %v7322, %v7350
        %7352 = vmatmul.bf16.gmra.mxu0 %v7273
        %v7353 = vpop.f32.mrf.mxu0
        %v7354 = vadd.f32 %v7325, %v7353
        %v7355 = vpop.f32.mrf.mxu0
        %v7356 = vadd.f32 %v7327, %v7355
        %7357 = vmatmul.bf16.gmra.mxu0 %v7276
        %v7358 = vpop.f32.mrf.mxu0
        %v7359 = vadd.f32 %v7330, %v7358
        %v7360 = vpop.f32.mrf.mxu0
        %v7361 = vadd.f32 %v7332, %v7360
        %7362 = vmatmul.bf16.gmra.mxu0 %v7279
        %v7363 = vpop.f32.mrf.mxu0
        %v7364 = vadd.f32 %v7335, %v7363
        %v7365 = vpop.f32.mrf.mxu0
        %v7366 = vadd.f32 %v7337, %v7365
        %7367 = vdwg.mxu0
        %v7368 = vmax.f32 %v7349, 0.0
        %v7369 = vmax.f32 %v7351, 0.0
        %v7370 = vmax.f32 %v7354, 0.0
        %v7371 = vmax.f32 %v7356, 0.0
        %v7372 = vmax.f32 %v7359, 0.0
        %v7373 = vmax.f32 %v7361, 0.0
        %v7374 = vmax.f32 %v7364, 0.0
        %v7375 = vmax.f32 %v7366, 0.0
        %v7384 = vrot.slane %v7368, 2
        %v7385 = vrot.slane %v7368, 4
        %v7386 = vrot.slane %v7368, 6
        %v7387 = vrot.slane %v7369, 2
        %v7388 = vrot.slane %v7369, 4
        %v7389 = vrot.slane %v7369, 6
        %v7390 = vrot.slane %v7370, 2
        %v7391 = vrot.slane %v7370, 4
        %v7392 = vrot.slane %v7370, 6
        %v7393 = vrot.slane %v7371, 2
        %v7394 = vrot.slane %v7371, 4
        %v7395 = vrot.slane %v7371, 6
        %v7396 = vrot.slane %v7372, 2
        %v7397 = vrot.slane %v7372, 4
        %v7398 = vrot.slane %v7372, 6
        %v7399 = vrot.slane %v7373, 2
        %v7400 = vrot.slane %v7373, 4
        %v7401 = vrot.slane %v7373, 6
        %v7402 = vrot.slane %v7374, 2
        %v7403 = vrot.slane %v7374, 4
        %v7404 = vrot.slane %v7374, 6
        %v7405 = vrot.slane %v7375, 2
        %v7406 = vrot.slane %v7375, 4
        %v7407 = vrot.slane %v7375, 6
        %vm7432 = vcmask 517120
        %v7433 = vsel %vm7432, %v7368, -inf
        %v7434 = vrot.slane %v7433, 4
        %v7435 = vmax.f32 %v7433, %v7434
        %v7436 = vrot.slane %v7435, 2
        %v7437 = vmax.f32 %v7435, %v7436
        %v7438 = vrot.slane %v7437, 1
        %v7439 = vmax.f32 %v7437, %v7438
        %v7440 = vsel %vm7432, %v7384, -inf
        %v7441 = vrot.slane %v7440, 4
        %v7442 = vmax.f32 %v7440, %v7441
        %v7443 = vrot.slane %v7442, 2
        %v7444 = vmax.f32 %v7442, %v7443
        %v7445 = vrot.slane %v7444, 1
        %v7446 = vmax.f32 %v7444, %v7445
        %v7447 = vsel %vm7432, %v7385, -inf
        %v7448 = vrot.slane %v7447, 4
        %v7449 = vmax.f32 %v7447, %v7448
        %v7450 = vrot.slane %v7449, 2
        %v7451 = vmax.f32 %v7449, %v7450
        %v7452 = vrot.slane %v7451, 1
        %v7453 = vmax.f32 %v7451, %v7452
        %v7454 = vsel %vm7432, %v7386, -inf
        %v7455 = vrot.slane %v7454, 4
        %v7456 = vmax.f32 %v7454, %v7455
        %v7457 = vrot.slane %v7456, 2
        %v7458 = vmax.f32 %v7456, %v7457
        %v7459 = vrot.slane %v7458, 1
        %v7460 = vmax.f32 %v7458, %v7459
        %v7461 = vsel %vm7432, %v7369, -inf
        %v7462 = vrot.slane %v7461, 4
        %v7463 = vmax.f32 %v7461, %v7462
        %v7464 = vrot.slane %v7463, 2
        %v7465 = vmax.f32 %v7463, %v7464
        %v7466 = vrot.slane %v7465, 1
        %v7467 = vmax.f32 %v7465, %v7466
        %v7468 = vsel %vm7432, %v7387, -inf
        %v7469 = vrot.slane %v7468, 4
        %v7470 = vmax.f32 %v7468, %v7469
        %v7471 = vrot.slane %v7470, 2
        %v7472 = vmax.f32 %v7470, %v7471
        %v7473 = vrot.slane %v7472, 1
        %v7474 = vmax.f32 %v7472, %v7473
        %v7475 = vsel %vm7432, %v7388, -inf
        %v7476 = vrot.slane %v7475, 4
        %v7477 = vmax.f32 %v7475, %v7476
        %v7478 = vrot.slane %v7477, 2
        %v7479 = vmax.f32 %v7477, %v7478
        %v7480 = vrot.slane %v7479, 1
        %v7481 = vmax.f32 %v7479, %v7480
        %v7482 = vsel %vm7432, %v7389, -inf
        %v7483 = vrot.slane %v7482, 4
        %v7484 = vmax.f32 %v7482, %v7483
        %v7485 = vrot.slane %v7484, 2
        %v7486 = vmax.f32 %v7484, %v7485
        %v7487 = vrot.slane %v7486, 1
        %v7488 = vmax.f32 %v7486, %v7487
        %v7489 = vsel %vm7432, %v7370, -inf
        %v7490 = vrot.slane %v7489, 4
        %v7491 = vmax.f32 %v7489, %v7490
        %v7492 = vrot.slane %v7491, 2
        %v7493 = vmax.f32 %v7491, %v7492
        %v7494 = vrot.slane %v7493, 1
        %v7495 = vmax.f32 %v7493, %v7494
        %v7496 = vsel %vm7432, %v7390, -inf
        %v7497 = vrot.slane %v7496, 4
        %v7498 = vmax.f32 %v7496, %v7497
        %v7499 = vrot.slane %v7498, 2
        %v7500 = vmax.f32 %v7498, %v7499
        %v7501 = vrot.slane %v7500, 1
        %v7502 = vmax.f32 %v7500, %v7501
        %v7503 = vsel %vm7432, %v7391, -inf
        %v7504 = vrot.slane %v7503, 4
        %v7505 = vmax.f32 %v7503, %v7504
        %v7506 = vrot.slane %v7505, 2
        %v7507 = vmax.f32 %v7505, %v7506
        %v7508 = vrot.slane %v7507, 1
        %v7509 = vmax.f32 %v7507, %v7508
        %v7510 = vsel %vm7432, %v7392, -inf
        %v7511 = vrot.slane %v7510, 4
        %v7512 = vmax.f32 %v7510, %v7511
        %v7513 = vrot.slane %v7512, 2
        %v7514 = vmax.f32 %v7512, %v7513
        %v7515 = vrot.slane %v7514, 1
        %v7516 = vmax.f32 %v7514, %v7515
        %v7517 = vsel %vm7432, %v7371, -inf
        %v7518 = vrot.slane %v7517, 4
        %v7519 = vmax.f32 %v7517, %v7518
        %v7520 = vrot.slane %v7519, 2
        %v7521 = vmax.f32 %v7519, %v7520
        %v7522 = vrot.slane %v7521, 1
        %v7523 = vmax.f32 %v7521, %v7522
        %v7524 = vsel %vm7432, %v7393, -inf
        %v7525 = vrot.slane %v7524, 4
        %v7526 = vmax.f32 %v7524, %v7525
        %v7527 = vrot.slane %v7526, 2
        %v7528 = vmax.f32 %v7526, %v7527
        %v7529 = vrot.slane %v7528, 1
        %v7530 = vmax.f32 %v7528, %v7529
        %v7531 = vsel %vm7432, %v7394, -inf
        %v7532 = vrot.slane %v7531, 4
        %v7533 = vmax.f32 %v7531, %v7532
        %v7534 = vrot.slane %v7533, 2
        %v7535 = vmax.f32 %v7533, %v7534
        %v7536 = vrot.slane %v7535, 1
        %v7537 = vmax.f32 %v7535, %v7536
        %v7538 = vsel %vm7432, %v7395, -inf
        %v7539 = vrot.slane %v7538, 4
        %v7540 = vmax.f32 %v7538, %v7539
        %v7541 = vrot.slane %v7540, 2
        %v7542 = vmax.f32 %v7540, %v7541
        %v7543 = vrot.slane %v7542, 1
        %v7544 = vmax.f32 %v7542, %v7543
        %v7545 = vsel %vm7432, %v7372, -inf
        %v7546 = vrot.slane %v7545, 4
        %v7547 = vmax.f32 %v7545, %v7546
        %v7548 = vrot.slane %v7547, 2
        %v7549 = vmax.f32 %v7547, %v7548
        %v7550 = vrot.slane %v7549, 1
        %v7551 = vmax.f32 %v7549, %v7550
        %v7552 = vsel %vm7432, %v7396, -inf
        %v7553 = vrot.slane %v7552, 4
        %v7554 = vmax.f32 %v7552, %v7553
        %v7555 = vrot.slane %v7554, 2
        %v7556 = vmax.f32 %v7554, %v7555
        %v7557 = vrot.slane %v7556, 1
        %v7558 = vmax.f32 %v7556, %v7557
        %v7559 = vsel %vm7432, %v7397, -inf
        %v7560 = vrot.slane %v7559, 4
        %v7561 = vmax.f32 %v7559, %v7560
        %v7562 = vrot.slane %v7561, 2
        %v7563 = vmax.f32 %v7561, %v7562
        %v7564 = vrot.slane %v7563, 1
        %v7565 = vmax.f32 %v7563, %v7564
        %v7566 = vsel %vm7432, %v7398, -inf
        %v7567 = vrot.slane %v7566, 4
        %v7568 = vmax.f32 %v7566, %v7567
        %v7569 = vrot.slane %v7568, 2
        %v7570 = vmax.f32 %v7568, %v7569
        %v7571 = vrot.slane %v7570, 1
        %v7572 = vmax.f32 %v7570, %v7571
        %v7573 = vsel %vm7432, %v7373, -inf
        %v7574 = vrot.slane %v7573, 4
        %v7575 = vmax.f32 %v7573, %v7574
        %v7576 = vrot.slane %v7575, 2
        %v7577 = vmax.f32 %v7575, %v7576
        %v7578 = vrot.slane %v7577, 1
        %v7579 = vmax.f32 %v7577, %v7578
        %v7580 = vsel %vm7432, %v7399, -inf
        %v7581 = vrot.slane %v7580, 4
        %v7582 = vmax.f32 %v7580, %v7581
        %v7583 = vrot.slane %v7582, 2
        %v7584 = vmax.f32 %v7582, %v7583
        %v7585 = vrot.slane %v7584, 1
        %v7586 = vmax.f32 %v7584, %v7585
        %v7587 = vsel %vm7432, %v7400, -inf
        %v7588 = vrot.slane %v7587, 4
        %v7589 = vmax.f32 %v7587, %v7588
        %v7590 = vrot.slane %v7589, 2
        %v7591 = vmax.f32 %v7589, %v7590
        %v7592 = vrot.slane %v7591, 1
        %v7593 = vmax.f32 %v7591, %v7592
        %v7594 = vsel %vm7432, %v7401, -inf
        %v7595 = vrot.slane %v7594, 4
        %v7596 = vmax.f32 %v7594, %v7595
        %v7597 = vrot.slane %v7596, 2
        %v7598 = vmax.f32 %v7596, %v7597
        %v7599 = vrot.slane %v7598, 1
        %v7600 = vmax.f32 %v7598, %v7599
        %v7601 = vsel %vm7432, %v7374, -inf
        %v7602 = vrot.slane %v7601, 4
        %v7603 = vmax.f32 %v7601, %v7602
        %v7604 = vrot.slane %v7603, 2
        %v7605 = vmax.f32 %v7603, %v7604
        %v7606 = vrot.slane %v7605, 1
        %v7607 = vmax.f32 %v7605, %v7606
        %v7608 = vsel %vm7432, %v7402, -inf
        %v7609 = vrot.slane %v7608, 4
        %v7610 = vmax.f32 %v7608, %v7609
        %v7611 = vrot.slane %v7610, 2
        %v7612 = vmax.f32 %v7610, %v7611
        %v7613 = vrot.slane %v7612, 1
        %v7614 = vmax.f32 %v7612, %v7613
        %v7615 = vsel %vm7432, %v7403, -inf
        %v7616 = vrot.slane %v7615, 4
        %v7617 = vmax.f32 %v7615, %v7616
        %v7618 = vrot.slane %v7617, 2
        %v7619 = vmax.f32 %v7617, %v7618
        %v7620 = vrot.slane %v7619, 1
        %v7621 = vmax.f32 %v7619, %v7620
        %v7622 = vsel %vm7432, %v7404, -inf
        %v7623 = vrot.slane %v7622, 4
        %v7624 = vmax.f32 %v7622, %v7623
        %v7625 = vrot.slane %v7624, 2
        %v7626 = vmax.f32 %v7624, %v7625
        %v7627 = vrot.slane %v7626, 1
        %v7628 = vmax.f32 %v7626, %v7627
        %v7629 = vsel %vm7432, %v7375, -inf
        %v7630 = vrot.slane %v7629, 4
        %v7631 = vmax.f32 %v7629, %v7630
        %v7632 = vrot.slane %v7631, 2
        %v7633 = vmax.f32 %v7631, %v7632
        %v7634 = vrot.slane %v7633, 1
        %v7635 = vmax.f32 %v7633, %v7634
        %v7636 = vsel %vm7432, %v7405, -inf
        %v7637 = vrot.slane %v7636, 4
        %v7638 = vmax.f32 %v7636, %v7637
        %v7639 = vrot.slane %v7638, 2
        %v7640 = vmax.f32 %v7638, %v7639
        %v7641 = vrot.slane %v7640, 1
        %v7642 = vmax.f32 %v7640, %v7641
        %v7643 = vsel %vm7432, %v7406, -inf
        %v7644 = vrot.slane %v7643, 4
        %v7645 = vmax.f32 %v7643, %v7644
        %v7646 = vrot.slane %v7645, 2
        %v7647 = vmax.f32 %v7645, %v7646
        %v7648 = vrot.slane %v7647, 1
        %v7649 = vmax.f32 %v7647, %v7648
        %v7650 = vsel %vm7432, %v7407, -inf
        %v7651 = vrot.slane %v7650, 4
        %v7652 = vmax.f32 %v7650, %v7651
        %v7653 = vrot.slane %v7652, 2
        %v7654 = vmax.f32 %v7652, %v7653
        %v7655 = vrot.slane %v7654, 1
        %v7656 = vmax.f32 %v7654, %v7655
        %v7657 = vsel %vm3219, %v7439, -inf
        %v7658 = vsel %vm3219, %v7467, -inf
        %v7659 = vmax.f32 %v7657, %v7658
        %v7660 = vsel %vm3219, %v7446, -inf
        %v7661 = vsel %vm3219, %v7474, -inf
        %v7662 = vmax.f32 %v7660, %v7661
        %v7663 = vsel %vm3219, %v7453, -inf
        %v7664 = vsel %vm3219, %v7481, -inf
        %v7665 = vmax.f32 %v7663, %v7664
        %v7666 = vsel %vm3219, %v7460, -inf
        %v7667 = vsel %vm3219, %v7488, -inf
        %v7668 = vmax.f32 %v7666, %v7667
        %v7669 = vsel %vm3219, %v7495, -inf
        %v7670 = vsel %vm3219, %v7523, -inf
        %v7671 = vmax.f32 %v7669, %v7670
        %v7672 = vsel %vm3219, %v7502, -inf
        %v7673 = vsel %vm3219, %v7530, -inf
        %v7674 = vmax.f32 %v7672, %v7673
        %v7675 = vsel %vm3219, %v7509, -inf
        %v7676 = vsel %vm3219, %v7537, -inf
        %v7677 = vmax.f32 %v7675, %v7676
        %v7678 = vsel %vm3219, %v7516, -inf
        %v7679 = vsel %vm3219, %v7544, -inf
        %v7680 = vmax.f32 %v7678, %v7679
        %v7681 = vsel %vm3219, %v7551, -inf
        %v7682 = vsel %vm3219, %v7579, -inf
        %v7683 = vmax.f32 %v7681, %v7682
        %v7684 = vsel %vm3219, %v7558, -inf
        %v7685 = vsel %vm3219, %v7586, -inf
        %v7686 = vmax.f32 %v7684, %v7685
        %v7687 = vsel %vm3219, %v7565, -inf
        %v7688 = vsel %vm3219, %v7593, -inf
        %v7689 = vmax.f32 %v7687, %v7688
        %v7690 = vsel %vm3219, %v7572, -inf
        %v7691 = vsel %vm3219, %v7600, -inf
        %v7692 = vmax.f32 %v7690, %v7691
        %v7693 = vsel %vm3219, %v7607, -inf
        %v7694 = vsel %vm3219, %v7635, -inf
        %v7695 = vmax.f32 %v7693, %v7694
        %v7696 = vsel %vm3219, %v7614, -inf
        %v7697 = vsel %vm3219, %v7642, -inf
        %v7698 = vmax.f32 %v7696, %v7697
        %v7699 = vsel %vm3219, %v7621, -inf
        %v7700 = vsel %vm3219, %v7649, -inf
        %v7701 = vmax.f32 %v7699, %v7700
        %v7702 = vsel %vm3219, %v7628, -inf
        %v7703 = vsel %vm3219, %v7656, -inf
        %v7704 = vmax.f32 %v7702, %v7703
        %vm7705 = vcmask 519171
        %vm7706 = vmand %vm7705, %vm388
        %v7707 = vld [vmem:[#allocation6 + $0x4] sm:$0x8]
        %v7708 = vsel %vm7706, 0, %v7707
        %7709 = vst [vmem:[#allocation6 + $0x4] sm:$0x8] %v7708
        %vm7710 = vcmask 518144
        %vm7711 = vsmask.f32 2304
        %vm7712 = vmand %vm7710, %vm7711
        %v7713 = vld [vmem:[#allocation6 + $0x8] sm:$0x7]
        %v7714 = vsel %vm7712, 0, %v7713
        %7715 = vst [vmem:[#allocation6 + $0x8] sm:$0x7] %v7714
        %s7716 = scalar_lea.vmem [#allocation6], 80
        %v7717 = vld [vmem:[%s7716 + $0x4] sm:$0x8]
        %v7718 = vsel %vm7706, 0, %v7717
        %7719 = vst [vmem:[%s7716 + $0x4] sm:$0x8] %v7718
        %v7720 = vld [vmem:[%s7716 + $0x8] sm:$0x7]
        %v7721 = vsel %vm7712, 0, %v7720
        %7722 = vst [vmem:[%s7716 + $0x8] sm:$0x7] %v7721
        %s7723 = scalar_lea.vmem [#allocation6], 16
        %v7724 = vld [vmem:[%s7723 + $0x4] sm:$0x8]
        %v7725 = vsel %vm7706, 0, %v7724
        %7726 = vst [vmem:[%s7723 + $0x4] sm:$0x8] %v7725
        %v7727 = vld [vmem:[%s7723 + $0x14] sm:$0x8]
        %v7728 = vsel %vm7706, 0, %v7727
        %7729 = vst [vmem:[%s7723 + $0x14] sm:$0x8] %v7728
        %v7730 = vld [vmem:[%s7723 + $0x24] sm:$0x8]
        %v7731 = vsel %vm7706, 0, %v7730
        %7732 = vst [vmem:[%s7723 + $0x24] sm:$0x8] %v7731
        %v7733 = vld [vmem:[%s7723 + $0x34] sm:$0x8]
        %v7734 = vsel %vm7706, 0, %v7733
        %7735 = vst [vmem:[%s7723 + $0x34] sm:$0x8] %v7734
        %vm7736 = vcmask 518146
        %vm7737 = vmand %vm7736, %vm7711
        %v7738 = vld [vmem:[%s7723 + $0x8] sm:$0x4]
        %v7739 = vsel %vm7737, 0, %v7738
        %7740 = vst [vmem:[%s7723 + $0x8] sm:$0x4] %v7739
        %v7741 = vld [vmem:[%s7723 + $0x18] sm:$0x4]
        %v7742 = vsel %vm7737, 0, %v7741
        %7743 = vst [vmem:[%s7723 + $0x18] sm:$0x4] %v7742
        %v7744 = vld [vmem:[%s7723 + $0x28] sm:$0x4]
        %v7745 = vsel %vm7737, 0, %v7744
        %7746 = vst [vmem:[%s7723 + $0x28] sm:$0x4] %v7745
        %v7747 = vld [vmem:[%s7723 + $0x38] sm:$0x4]
        %v7748 = vsel %vm7737, 0, %v7747
        %7749 = vst [vmem:[%s7723 + $0x38] sm:$0x4] %v7748
        %v7750 = vpack.c.bf16 %v7659, %v7659
        %v7751 = vpack.c.bf16 %v7662, %v7662
        %v7752 = vpack.c.bf16 %v7665, %v7665
        %v7753 = vpack.c.bf16 %v7668, %v7668
        %v7754 = vpack.c.bf16 %v7671, %v7671
        %v7755 = vpack.c.bf16 %v7674, %v7674
        %v7756 = vpack.c.bf16 %v7677, %v7677
        %v7757 = vpack.c.bf16 %v7680, %v7680
        %v7758 = vpack.c.bf16 %v7683, %v7683
        %v7759 = vpack.c.bf16 %v7686, %v7686
        %v7760 = vpack.c.bf16 %v7689, %v7689
        %v7761 = vpack.c.bf16 %v7692, %v7692
        %v7762 = vpack.c.bf16 %v7695, %v7695
        %v7763 = vpack.c.bf16 %v7698, %v7698
        %v7764 = vpack.c.bf16 %v7701, %v7701
        %v7765 = vpack.c.bf16 %v7704, %v7704
        %v7782 = vunpack.c.l.b16 %v7750
        %v7783 = vunpack.c.l.b16 %v7751
        %v7784 = vunpack.c.l.b16 %v7752
        %v7785 = vunpack.c.l.b16 %v7753
        %v7786 = vunpack.c.l.b16 %v7754
        %v7787 = vunpack.c.l.b16 %v7755
        %v7788 = vunpack.c.l.b16 %v7756
        %v7789 = vunpack.c.l.b16 %v7757
        %v7790 = vunpack.c.l.b16 %v7758
        %v7791 = vunpack.c.l.b16 %v7759
        %v7792 = vunpack.c.l.b16 %v7760
        %v7793 = vunpack.c.l.b16 %v7761
        %v7794 = vunpack.c.l.b16 %v7762
        %v7795 = vunpack.c.l.b16 %v7763
        %v7796 = vunpack.c.l.b16 %v7764
        %v7797 = vunpack.c.l.b16 %v7765
        %v7798 = vsel %vm6053, %v7783, %v7782
        %v7799 = vsel %vm6055, %v7784, %v7798
        %v7800 = vsel %vm6057, %v7785, %v7799
        %v7801 = vsel %vm6053, %v7787, %v7786
        %v7802 = vsel %vm6055, %v7788, %v7801
        %v7803 = vsel %vm6057, %v7789, %v7802
        %v7804 = vsel %vm6053, %v7791, %v7790
        %v7805 = vsel %vm6055, %v7792, %v7804
        %v7806 = vsel %vm6057, %v7793, %v7805
        %v7807 = vsel %vm6053, %v7795, %v7794
        %v7808 = vsel %vm6055, %v7796, %v7807
        %v7809 = vsel %vm6057, %v7797, %v7808
        %v7810 = vpack.c.b16 %v7800, %v7800
        %v7811 = vpack.c.b16 %v7803, %v7803
        %v7812 = vpack.c.b16 %v7806, %v7806
        %v7813 = vpack.c.b16 %v7809, %v7809
        %7818 = vst.msk [vmem:[%s7723 + $0x8] sm:$0x3] %vm7432, %v7810
        %7819 = vst.msk [vmem:[%s7723 + $0x18] sm:$0x3] %vm7432, %v7811
        %7820 = vst.msk [vmem:[%s7723 + $0x28] sm:$0x3] %vm7432, %v7812
        %7821 = vst.msk [vmem:[%s7723 + $0x38] sm:$0x3] %vm7432, %v7813
        %v7822 = vld [vmem:[#allocation6 + $0x4] sm:$0x8]
        %v7823 = vld [vmem:[#allocation6 + $0x8] sm:$0x3]
        %v7824 = vld [vmem:[#allocation6 + $0x14] sm:$0x8]
        %v7825 = vld [vmem:[#allocation6 + $0x18] sm:$0x3]
        %v7826 = vld [vmem:[#allocation6 + $0x24] sm:$0x8]
        %v7827 = vld [vmem:[#allocation6 + $0x28] sm:$0x3]
        %v7828 = vld [vmem:[#allocation6 + $0x34] sm:$0x8]
        %v7829 = vld [vmem:[#allocation6 + $0x38] sm:$0x3]
        %7831 = vst.sshfl [vmem:[#allocation1] sm:$0xff pattern:$0x75643120] %v7822
        %7833 = vst.sshfl [vmem:[#allocation1 + $0x10] sm:$0xff pattern:$0x75643120] %v7823
        %s7834 = scalar_lea.vmem [#allocation1], 1
        %v7835 = vld [vmem:[%s7834] ss:$2 sm:$0xff]
        %s7836 = scalar_lea.vmem [#allocation1], 16
        %v7837 = vld [vmem:[%s7836] ss:$2 sm:$0xff]
        %7839 = vst.sshfl [vmem:[#allocation1 + $0x20] sm:$0xff pattern:$0x75643120] %v7824
        %7841 = vst.sshfl [vmem:[#allocation1 + $0x30] sm:$0xff pattern:$0x75643120] %v7825
        %s7842 = scalar_lea.vmem [#allocation1], 33
        %v7843 = vld [vmem:[%s7842] ss:$2 sm:$0xff]
        %s7844 = scalar_lea.vmem [#allocation1], 48
        %v7845 = vld [vmem:[%s7844] ss:$2 sm:$0xff]
        %7847 = vst.sshfl [vmem:[#allocation1] sm:$0xff pattern:$0x75643120] %v7826
        %7849 = vst.sshfl [vmem:[#allocation1 + $0x10] sm:$0xff pattern:$0x75643120] %v7827
        %v7850 = vld [vmem:[%s7834] ss:$2 sm:$0xff]
        %v7851 = vld [vmem:[%s7836] ss:$2 sm:$0xff]
        %7853 = vst.sshfl [vmem:[#allocation1 + $0x20] sm:$0xff pattern:$0x75643120] %v7828
        %7855 = vst.sshfl [vmem:[#allocation1 + $0x30] sm:$0xff pattern:$0x75643120] %v7829
        %v7856 = vld [vmem:[%s7842] ss:$2 sm:$0xff]
        %v7857 = vld [vmem:[%s7844] ss:$2 sm:$0xff]
        %vm7858 = vsmask.f32 2312
        %vm7859 = vmor %vm397, %vm7858
        %vm7860 = vmor %vm7859, %vm588
        %vm7861 = vsmask.f32 6424
        %vm7862 = vmor %vm7860, %vm7861
        %v7863 = vshrl.u32 %v7835, 16
        %v7865 = vrot.slane %v7863, 7
        %v7866 = vrot.slane %v7865, 2
        %v7867 = vshrl.u32 %v7837, 16
        %v7869 = vrot.slane %v7867, 7
        %v7870 = vshll.u32 %v7837, 16
        %v7872 = vor.u32 %v7869, %v7870
        %v7873 = vsel %vm7862, %v7866, %v7872
        %v7874 = vshrl.u32 %v7843, 16
        %v7876 = vrot.slane %v7874, 7
        %v7877 = vrot.slane %v7876, 2
        %v7878 = vshrl.u32 %v7845, 16
        %v7880 = vrot.slane %v7878, 7
        %v7881 = vshll.u32 %v7845, 16
        %v7883 = vor.u32 %v7880, %v7881
        %v7884 = vsel %vm7862, %v7877, %v7883
        %v7885 = vshrl.u32 %v7850, 16
        %v7887 = vrot.slane %v7885, 7
        %v7888 = vrot.slane %v7887, 2
        %v7889 = vshrl.u32 %v7851, 16
        %v7891 = vrot.slane %v7889, 7
        %v7892 = vshll.u32 %v7851, 16
        %v7894 = vor.u32 %v7891, %v7892
        %v7895 = vsel %vm7862, %v7888, %v7894
        %v7896 = vshrl.u32 %v7856, 16
        %v7898 = vrot.slane %v7896, 7
        %v7899 = vrot.slane %v7898, 2
        %v7900 = vshrl.u32 %v7857, 16
        %v7902 = vrot.slane %v7900, 7
        %v7903 = vshll.u32 %v7857, 16
        %v7905 = vor.u32 %v7902, %v7903
        %v7906 = vsel %vm7862, %v7899, %v7905
        %v7907 = vld [vmem:[#allocation6 + $0x8] sm:$0x3]
        %v7908 = vld [vmem:[#allocation6 + $0x18] sm:$0x3]
        %v7909 = vld [vmem:[#allocation6 + $0x28] sm:$0x3]
        %v7910 = vld [vmem:[#allocation6 + $0x38] sm:$0x3]
        %v7911 = vld [vmem:[#allocation6 + $0x8] sm:$0x7]
        %v7912 = vld [vmem:[#allocation6 + $0x18] sm:$0x7]
        %v7913 = vld [vmem:[#allocation6 + $0x28] sm:$0x7]
        %v7914 = vld [vmem:[#allocation6 + $0x38] sm:$0x7]
        %v7919 = vrot.slane %v7911, 2
        %v7920 = vrot.slane %v7912, 2
        %v7921 = vrot.slane %v7913, 2
        %v7922 = vrot.slane %v7914, 2
        %vm7923 = vcmask 1041408
        %v7926 = vsel %vm7923, %v7911, %v7919
        %vm7927 = vcmask 1043458
        %v7928 = vsel %vm7927, %v7911, %v7919
        %v7930 = vrot.slane %v7928, 2
        %v7933 = vsel %vm7923, %v7912, %v7920
        %v7934 = vsel %vm7927, %v7912, %v7920
        %v7936 = vrot.slane %v7934, 2
        %v7939 = vsel %vm7923, %v7913, %v7921
        %v7940 = vsel %vm7927, %v7913, %v7921
        %v7942 = vrot.slane %v7940, 2
        %v7945 = vsel %vm7923, %v7914, %v7922
        %v7946 = vsel %vm7927, %v7914, %v7922
        %v7948 = vrot.slane %v7946, 2
        %vm7949 = vsmask.f32 1280
        %vm7950 = vsmask.f32 3336
        %vm7951 = vmor %vm7949, %vm7950
        %vm7952 = vsmask.f32 5392
        %vm7953 = vmor %vm7951, %vm7952
        %vm7954 = vsmask.f32 7448
        %vm7955 = vmor %vm7953, %vm7954
        %v7956 = vshrl.u32 %v7926, 16
        %v7958 = vrot.slane %v7956, 6
        %v7959 = vshll.u32 %v7926, 16
        %v7961 = vrot.slane %v7959, 7
        %v7962 = vor.u32 %v7958, %v7961
        %v7963 = vrot.slane %v7962, 2
        %v7965 = vshll.u32 %v7930, 16
        %v7967 = vrot.slane %v7965, 7
        %v7968 = vsel %vm7955, %v7963, %v7967
        %v7969 = vshrl.u32 %v7933, 16
        %v7971 = vrot.slane %v7969, 6
        %v7972 = vshll.u32 %v7933, 16
        %v7974 = vrot.slane %v7972, 7
        %v7975 = vor.u32 %v7971, %v7974
        %v7976 = vrot.slane %v7975, 2
        %v7978 = vshll.u32 %v7936, 16
        %v7980 = vrot.slane %v7978, 7
        %v7981 = vsel %vm7955, %v7976, %v7980
        %v7982 = vshrl.u32 %v7939, 16
        %v7984 = vrot.slane %v7982, 6
        %v7985 = vshll.u32 %v7939, 16
        %v7987 = vrot.slane %v7985, 7
        %v7988 = vor.u32 %v7984, %v7987
        %v7989 = vrot.slane %v7988, 2
        %v7991 = vshll.u32 %v7942, 16
        %v7993 = vrot.slane %v7991, 7
        %v7994 = vsel %vm7955, %v7989, %v7993
        %v7995 = vshrl.u32 %v7945, 16
        %v7997 = vrot.slane %v7995, 6
        %v7998 = vshll.u32 %v7945, 16
        %v8000 = vrot.slane %v7998, 7
        %v8001 = vor.u32 %v7997, %v8000
        %v8002 = vrot.slane %v8001, 2
        %v8004 = vshll.u32 %v7948, 16
        %v8006 = vrot.slane %v8004, 7
        %v8007 = vsel %vm7955, %v8002, %v8006
        %v8008 = vld [vmem:[%s7723 + $0x4] sm:$0x8]
        %v8009 = vld [vmem:[%s7723 + $0x8] sm:$0x3]
        %v8010 = vld [vmem:[%s7723 + $0x14] sm:$0x8]
        %v8011 = vld [vmem:[%s7723 + $0x18] sm:$0x3]
        %v8012 = vld [vmem:[%s7723 + $0x24] sm:$0x8]
        %v8013 = vld [vmem:[%s7723 + $0x28] sm:$0x3]
        %v8014 = vld [vmem:[%s7723 + $0x34] sm:$0x8]
        %v8015 = vld [vmem:[%s7723 + $0x38] sm:$0x3]
        %8017 = vst.sshfl [vmem:[#allocation1] sm:$0xff pattern:$0x75643120] %v8008
        %8019 = vst.sshfl [vmem:[#allocation1 + $0x10] sm:$0xff pattern:$0x75643120] %v8009
        %s8020 = scalar_lea.vmem [#allocation1], 1
        %v8021 = vld [vmem:[%s8020] ss:$2 sm:$0xff]
        %s8022 = scalar_lea.vmem [#allocation1], 16
        %v8023 = vld [vmem:[%s8022] ss:$2 sm:$0xff]
        %8025 = vst.sshfl [vmem:[#allocation1 + $0x20] sm:$0xff pattern:$0x75643120] %v8010
        %8027 = vst.sshfl [vmem:[#allocation1 + $0x30] sm:$0xff pattern:$0x75643120] %v8011
        %s8028 = scalar_lea.vmem [#allocation1], 33
        %v8029 = vld [vmem:[%s8028] ss:$2 sm:$0xff]
        %s8030 = scalar_lea.vmem [#allocation1], 48
        %v8031 = vld [vmem:[%s8030] ss:$2 sm:$0xff]
        %8033 = vst.sshfl [vmem:[#allocation1] sm:$0xff pattern:$0x75643120] %v8012
        %8035 = vst.sshfl [vmem:[#allocation1 + $0x10] sm:$0xff pattern:$0x75643120] %v8013
        %v8036 = vld [vmem:[%s8020] ss:$2 sm:$0xff]
        %v8037 = vld [vmem:[%s8022] ss:$2 sm:$0xff]
        %8039 = vst.sshfl [vmem:[#allocation1 + $0x20] sm:$0xff pattern:$0x75643120] %v8014
        %8041 = vst.sshfl [vmem:[#allocation1 + $0x30] sm:$0xff pattern:$0x75643120] %v8015
        %v8042 = vld [vmem:[%s8028] ss:$2 sm:$0xff]
        %v8043 = vld [vmem:[%s8030] ss:$2 sm:$0xff]
        %v8044 = vshrl.u32 %v8021, 16
        %v8046 = vrot.slane %v8044, 7
        %v8047 = vrot.slane %v8046, 2
        %v8048 = vshrl.u32 %v8023, 16
        %v8050 = vrot.slane %v8048, 7
        %v8051 = vshll.u32 %v8023, 16
        %v8053 = vor.u32 %v8050, %v8051
        %v8054 = vsel %vm7862, %v8047, %v8053
        %v8055 = vshrl.u32 %v8029, 16
        %v8057 = vrot.slane %v8055, 7
        %v8058 = vrot.slane %v8057, 2
        %v8059 = vshrl.u32 %v8031, 16
        %v8061 = vrot.slane %v8059, 7
        %v8062 = vshll.u32 %v8031, 16
        %v8064 = vor.u32 %v8061, %v8062
        %v8065 = vsel %vm7862, %v8058, %v8064
        %v8066 = vshrl.u32 %v8036, 16
        %v8068 = vrot.slane %v8066, 7
        %v8069 = vrot.slane %v8068, 2
        %v8070 = vshrl.u32 %v8037, 16
        %v8072 = vrot.slane %v8070, 7
        %v8073 = vshll.u32 %v8037, 16
        %v8075 = vor.u32 %v8072, %v8073
        %v8076 = vsel %vm7862, %v8069, %v8075
        %v8077 = vshrl.u32 %v8042, 16
        %v8079 = vrot.slane %v8077, 7
        %v8080 = vrot.slane %v8079, 2
        %v8081 = vshrl.u32 %v8043, 16
        %v8083 = vrot.slane %v8081, 7
        %v8084 = vshll.u32 %v8043, 16
        %v8086 = vor.u32 %v8083, %v8084
        %v8087 = vsel %vm7862, %v8080, %v8086
        %v8088 = vld [vmem:[%s7723 + $0x8] sm:$0x3]
        %v8089 = vld [vmem:[%s7723 + $0x18] sm:$0x3]
        %v8090 = vld [vmem:[%s7723 + $0x28] sm:$0x3]
        %v8091 = vld [vmem:[%s7723 + $0x38] sm:$0x3]
        %v8092 = vld [vmem:[%s7723 + $0x8] sm:$0x7]
        %v8093 = vld [vmem:[%s7723 + $0x18] sm:$0x7]
        %v8094 = vld [vmem:[%s7723 + $0x28] sm:$0x7]
        %v8095 = vld [vmem:[%s7723 + $0x38] sm:$0x7]
        %v8100 = vrot.slane %v8092, 2
        %v8101 = vrot.slane %v8093, 2
        %v8102 = vrot.slane %v8094, 2
        %v8103 = vrot.slane %v8095, 2
        %v8106 = vsel %vm7923, %v8092, %v8100
        %v8107 = vsel %vm7927, %v8092, %v8100
        %v8109 = vrot.slane %v8107, 2
        %v8112 = vsel %vm7923, %v8093, %v8101
        %v8113 = vsel %vm7927, %v8093, %v8101
        %v8115 = vrot.slane %v8113, 2
        %v8118 = vsel %vm7923, %v8094, %v8102
        %v8119 = vsel %vm7927, %v8094, %v8102
        %v8121 = vrot.slane %v8119, 2
        %v8124 = vsel %vm7923, %v8095, %v8103
        %v8125 = vsel %vm7927, %v8095, %v8103
        %v8127 = vrot.slane %v8125, 2
        %v8128 = vshrl.u32 %v8106, 16
        %v8130 = vrot.slane %v8128, 6
        %v8131 = vshll.u32 %v8106, 16
        %v8133 = vrot.slane %v8131, 7
        %v8134 = vor.u32 %v8130, %v8133
        %v8135 = vrot.slane %v8134, 2
        %v8137 = vshll.u32 %v8109, 16
        %v8139 = vrot.slane %v8137, 7
        %v8140 = vsel %vm7955, %v8135, %v8139
        %v8141 = vshrl.u32 %v8112, 16
        %v8143 = vrot.slane %v8141, 6
        %v8144 = vshll.u32 %v8112, 16
        %v8146 = vrot.slane %v8144, 7
        %v8147 = vor.u32 %v8143, %v8146
        %v8148 = vrot.slane %v8147, 2
        %v8150 = vshll.u32 %v8115, 16
        %v8152 = vrot.slane %v8150, 7
        %v8153 = vsel %vm7955, %v8148, %v8152
        %v8154 = vshrl.u32 %v8118, 16
        %v8156 = vrot.slane %v8154, 6
        %v8157 = vshll.u32 %v8118, 16
        %v8159 = vrot.slane %v8157, 7
        %v8160 = vor.u32 %v8156, %v8159
        %v8161 = vrot.slane %v8160, 2
        %v8163 = vshll.u32 %v8121, 16
        %v8165 = vrot.slane %v8163, 7
        %v8166 = vsel %vm7955, %v8161, %v8165
        %v8167 = vshrl.u32 %v8124, 16
        %v8169 = vrot.slane %v8167, 6
        %v8170 = vshll.u32 %v8124, 16
        %v8172 = vrot.slane %v8170, 7
        %v8173 = vor.u32 %v8169, %v8172
        %v8174 = vrot.slane %v8173, 2
        %v8176 = vshll.u32 %v8127, 16
        %v8178 = vrot.slane %v8176, 7
        %v8179 = vsel %vm7955, %v8174, %v8178
        %s8180 = scalar_lea.vmem [#allocation6], 32
        %v8181 = vld [vmem:[%s8180 + $0x4] sm:$0x8]
        %v8182 = vld [vmem:[%s8180 + $0x8] sm:$0x3]
        %v8183 = vld [vmem:[%s8180 + $0x14] sm:$0x8]
        %v8184 = vld [vmem:[%s8180 + $0x18] sm:$0x3]
        %v8185 = vld [vmem:[%s8180 + $0x24] sm:$0x8]
        %v8186 = vld [vmem:[%s8180 + $0x28] sm:$0x3]
        %v8187 = vld [vmem:[%s8180 + $0x34] sm:$0x8]
        %v8188 = vld [vmem:[%s8180 + $0x38] sm:$0x3]
        %8190 = vst.sshfl [vmem:[#allocation1] sm:$0xff pattern:$0x75643120] %v8181
        %8192 = vst.sshfl [vmem:[#allocation1 + $0x10] sm:$0xff pattern:$0x75643120] %v8182
        %s8193 = scalar_lea.vmem [#allocation1], 1
        %v8194 = vld [vmem:[%s8193] ss:$2 sm:$0xff]
        %s8195 = scalar_lea.vmem [#allocation1], 16
        %v8196 = vld [vmem:[%s8195] ss:$2 sm:$0xff]
        %8198 = vst.sshfl [vmem:[#allocation1 + $0x20] sm:$0xff pattern:$0x75643120] %v8183
        %8200 = vst.sshfl [vmem:[#allocation1 + $0x30] sm:$0xff pattern:$0x75643120] %v8184
        %s8201 = scalar_lea.vmem [#allocation1], 33
        %v8202 = vld [vmem:[%s8201] ss:$2 sm:$0xff]
        %s8203 = scalar_lea.vmem [#allocation1], 48
        %v8204 = vld [vmem:[%s8203] ss:$2 sm:$0xff]
        %8206 = vst.sshfl [vmem:[#allocation1] sm:$0xff pattern:$0x75643120] %v8185
        %8208 = vst.sshfl [vmem:[#allocation1 + $0x10] sm:$0xff pattern:$0x75643120] %v8186
        %v8209 = vld [vmem:[%s8193] ss:$2 sm:$0xff]
        %v8210 = vld [vmem:[%s8195] ss:$2 sm:$0xff]
        %8212 = vst.sshfl [vmem:[#allocation1 + $0x20] sm:$0xff pattern:$0x75643120] %v8187
        %8214 = vst.sshfl [vmem:[#allocation1 + $0x30] sm:$0xff pattern:$0x75643120] %v8188
        %v8215 = vld [vmem:[%s8201] ss:$2 sm:$0xff]
        %v8216 = vld [vmem:[%s8203] ss:$2 sm:$0xff]
        %v8217 = vshrl.u32 %v8194, 16
        %v8219 = vrot.slane %v8217, 7
        %v8220 = vrot.slane %v8219, 2
        %v8221 = vshrl.u32 %v8196, 16
        %v8223 = vrot.slane %v8221, 7
        %v8224 = vshll.u32 %v8196, 16
        %v8226 = vor.u32 %v8223, %v8224
        %v8227 = vsel %vm7862, %v8220, %v8226
        %v8228 = vshrl.u32 %v8202, 16
        %v8230 = vrot.slane %v8228, 7
        %v8231 = vrot.slane %v8230, 2
        %v8232 = vshrl.u32 %v8204, 16
        %v8234 = vrot.slane %v8232, 7
        %v8235 = vshll.u32 %v8204, 16
        %v8237 = vor.u32 %v8234, %v8235
        %v8238 = vsel %vm7862, %v8231, %v8237
        %v8239 = vshrl.u32 %v8209, 16
        %v8241 = vrot.slane %v8239, 7
        %v8242 = vrot.slane %v8241, 2
        %v8243 = vshrl.u32 %v8210, 16
        %v8245 = vrot.slane %v8243, 7
        %v8246 = vshll.u32 %v8210, 16
        %v8248 = vor.u32 %v8245, %v8246
        %v8249 = vsel %vm7862, %v8242, %v8248
        %v8250 = vshrl.u32 %v8215, 16
        %v8252 = vrot.slane %v8250, 7
        %v8253 = vrot.slane %v8252, 2
        %v8254 = vshrl.u32 %v8216, 16
        %v8256 = vrot.slane %v8254, 7
        %v8257 = vshll.u32 %v8216, 16
        %v8259 = vor.u32 %v8256, %v8257
        %v8260 = vsel %vm7862, %v8253, %v8259
        %v8261 = vld [vmem:[%s8180 + $0x8] sm:$0x3]
        %v8262 = vld [vmem:[%s8180 + $0x18] sm:$0x3]
        %v8263 = vld [vmem:[%s8180 + $0x28] sm:$0x3]
        %v8264 = vld [vmem:[%s8180 + $0x38] sm:$0x3]
        %v8265 = vld [vmem:[%s8180 + $0x8] sm:$0x7]
        %v8266 = vld [vmem:[%s8180 + $0x18] sm:$0x7]
        %v8267 = vld [vmem:[%s8180 + $0x28] sm:$0x7]
        %v8268 = vld [vmem:[%s8180 + $0x38] sm:$0x7]
        %v8273 = vrot.slane %v8265, 2
        %v8274 = vrot.slane %v8266, 2
        %v8275 = vrot.slane %v8267, 2
        %v8276 = vrot.slane %v8268, 2
        %v8279 = vsel %vm7923, %v8265, %v8273
        %v8280 = vsel %vm7927, %v8265, %v8273
        %v8282 = vrot.slane %v8280, 2
        %v8285 = vsel %vm7923, %v8266, %v8274
        %v8286 = vsel %vm7927, %v8266, %v8274
        %v8288 = vrot.slane %v8286, 2
        %v8291 = vsel %vm7923, %v8267, %v8275
        %v8292 = vsel %vm7927, %v8267, %v8275
        %v8294 = vrot.slane %v8292, 2
        %v8297 = vsel %vm7923, %v8268, %v8276
        %v8298 = vsel %vm7927, %v8268, %v8276
        %v8300 = vrot.slane %v8298, 2
        %v8301 = vshrl.u32 %v8279, 16
        %v8303 = vrot.slane %v8301, 6
        %v8304 = vshll.u32 %v8279, 16
        %v8306 = vrot.slane %v8304, 7
        %v8307 = vor.u32 %v8303, %v8306
        %v8308 = vrot.slane %v8307, 2
        %v8310 = vshll.u32 %v8282, 16
        %v8312 = vrot.slane %v8310, 7
        %v8313 = vsel %vm7955, %v8308, %v8312
        %v8314 = vshrl.u32 %v8285, 16
        %v8316 = vrot.slane %v8314, 6
        %v8317 = vshll.u32 %v8285, 16
        %v8319 = vrot.slane %v8317, 7
        %v8320 = vor.u32 %v8316, %v8319
        %v8321 = vrot.slane %v8320, 2
        %v8323 = vshll.u32 %v8288, 16
        %v8325 = vrot.slane %v8323, 7
        %v8326 = vsel %vm7955, %v8321, %v8325
        %v8327 = vshrl.u32 %v8291, 16
        %v8329 = vrot.slane %v8327, 6
        %v8330 = vshll.u32 %v8291, 16
        %v8332 = vrot.slane %v8330, 7
        %v8333 = vor.u32 %v8329, %v8332
        %v8334 = vrot.slane %v8333, 2
        %v8336 = vshll.u32 %v8294, 16
        %v8338 = vrot.slane %v8336, 7
        %v8339 = vsel %vm7955, %v8334, %v8338
        %v8340 = vshrl.u32 %v8297, 16
        %v8342 = vrot.slane %v8340, 6
        %v8343 = vshll.u32 %v8297, 16
        %v8345 = vrot.slane %v8343, 7
        %v8346 = vor.u32 %v8342, %v8345
        %v8347 = vrot.slane %v8346, 2
        %v8349 = vshll.u32 %v8300, 16
        %v8351 = vrot.slane %v8349, 7
        %v8352 = vsel %vm7955, %v8347, %v8351
        %8354 = vst [vmem:[#allocation1] ss:$4 sm:$0xff] %v7873
        %s8356 = scalar_lea.vmem [#allocation1], 1
        %8357 = vst [vmem:[%s8356] ss:$4 sm:$0xff] %v7884
        %s8359 = scalar_lea.vmem [#allocation1], 2
        %8360 = vst [vmem:[%s8359] ss:$4 sm:$0xff] %v7895
        %s8362 = scalar_lea.vmem [#allocation1], 3
        %8363 = vst [vmem:[%s8362] ss:$4 sm:$0xff] %v7906
        %v8364 = vld.sshfl [vmem:[#allocation1] sm:$0xff pattern:$0x73625140]
        %8366 = vst [vmem:[#allocation1] ss:$4 sm:$0xff] %v7907
        %s8368 = scalar_lea.vmem [#allocation1], 1
        %8369 = vst [vmem:[%s8368] ss:$4 sm:$0xff] %v7908
        %s8371 = scalar_lea.vmem [#allocation1], 2
        %8372 = vst [vmem:[%s8371] ss:$4 sm:$0xff] %v7909
        %s8374 = scalar_lea.vmem [#allocation1], 3
        %8375 = vst [vmem:[%s8374] ss:$4 sm:$0xff] %v7910
        %v8376 = vld.sshfl [vmem:[#allocation1] sm:$0xff pattern:$0x73625140]
        %8378 = vrot.lane.b32.xlu0 %v8376, 64
        %v8379 = vpop.permute.xlu0 %8378
        %8381 = vst [vmem:[#allocation1] ss:$4 sm:$0xff] %v7968
        %s8383 = scalar_lea.vmem [#allocation1], 1
        %8384 = vst [vmem:[%s8383] ss:$4 sm:$0xff] %v7981
        %s8386 = scalar_lea.vmem [#allocation1], 2
        %8387 = vst [vmem:[%s8386] ss:$4 sm:$0xff] %v7994
        %s8389 = scalar_lea.vmem [#allocation1], 3
        %8390 = vst [vmem:[%s8389] ss:$4 sm:$0xff] %v8007
        %v8391 = vld.sshfl [vmem:[#allocation1] sm:$0xff pattern:$0x73625140]
        %8393 = vst [vmem:[#allocation1] ss:$4 sm:$0xff] %v8054
        %s8395 = scalar_lea.vmem [#allocation1], 1
        %8396 = vst [vmem:[%s8395] ss:$4 sm:$0xff] %v8065
        %s8398 = scalar_lea.vmem [#allocation1], 2
        %8399 = vst [vmem:[%s8398] ss:$4 sm:$0xff] %v8076
        %s8401 = scalar_lea.vmem [#allocation1], 3
        %8402 = vst [vmem:[%s8401] ss:$4 sm:$0xff] %v8087
        %v8403 = vld.sshfl [vmem:[#allocation1] sm:$0xff pattern:$0x73625140]
        %8405 = vrot.lane.b32.xlu0 %v8403, 64
        %v8406 = vpop.permute.xlu0 %8405
        %8408 = vst [vmem:[#allocation1] ss:$4 sm:$0xff] %v8088
        %s8410 = scalar_lea.vmem [#allocation1], 1
        %8411 = vst [vmem:[%s8410] ss:$4 sm:$0xff] %v8089
        %s8413 = scalar_lea.vmem [#allocation1], 2
        %8414 = vst [vmem:[%s8413] ss:$4 sm:$0xff] %v8090
        %s8416 = scalar_lea.vmem [#allocation1], 3
        %8417 = vst [vmem:[%s8416] ss:$4 sm:$0xff] %v8091
        %v8418 = vld.sshfl [vmem:[#allocation1] sm:$0xff pattern:$0x73625140]
        %8420 = vst [vmem:[#allocation1] ss:$4 sm:$0xff] %v8140
        %s8422 = scalar_lea.vmem [#allocation1], 1
        %8423 = vst [vmem:[%s8422] ss:$4 sm:$0xff] %v8153
        %s8425 = scalar_lea.vmem [#allocation1], 2
        %8426 = vst [vmem:[%s8425] ss:$4 sm:$0xff] %v8166
        %s8428 = scalar_lea.vmem [#allocation1], 3
        %8429 = vst [vmem:[%s8428] ss:$4 sm:$0xff] %v8179
        %v8430 = vld.sshfl [vmem:[#allocation1] sm:$0xff pattern:$0x73625140]
        %8432 = vrot.lane.b32.xlu0 %v8430, 64
        %v8433 = vpop.permute.xlu0 %8432
        %8435 = vst [vmem:[#allocation1] ss:$4 sm:$0xff] %v8227
        %s8437 = scalar_lea.vmem [#allocation1], 1
        %8438 = vst [vmem:[%s8437] ss:$4 sm:$0xff] %v8238
        %s8440 = scalar_lea.vmem [#allocation1], 2
        %8441 = vst [vmem:[%s8440] ss:$4 sm:$0xff] %v8249
        %s8443 = scalar_lea.vmem [#allocation1], 3
        %8444 = vst [vmem:[%s8443] ss:$4 sm:$0xff] %v8260
        %v8445 = vld.sshfl [vmem:[#allocation1] sm:$0xff pattern:$0x73625140]
        %8447 = vst [vmem:[#allocation1] ss:$4 sm:$0xff] %v8261
        %s8449 = scalar_lea.vmem [#allocation1], 1
        %8450 = vst [vmem:[%s8449] ss:$4 sm:$0xff] %v8262
        %s8452 = scalar_lea.vmem [#allocation1], 2
        %8453 = vst [vmem:[%s8452] ss:$4 sm:$0xff] %v8263
        %s8455 = scalar_lea.vmem [#allocation1], 3
        %8456 = vst [vmem:[%s8455] ss:$4 sm:$0xff] %v8264
        %v8457 = vld.sshfl [vmem:[#allocation1] sm:$0xff pattern:$0x73625140]
        %8459 = vrot.lane.b32.xlu0 %v8457, 64
        %v8460 = vpop.permute.xlu0 %8459
        %8462 = vst [vmem:[#allocation1] ss:$4 sm:$0xff] %v8313
        %s8464 = scalar_lea.vmem [#allocation1], 1
        %8465 = vst [vmem:[%s8464] ss:$4 sm:$0xff] %v8326
        %s8467 = scalar_lea.vmem [#allocation1], 2
        %8468 = vst [vmem:[%s8467] ss:$4 sm:$0xff] %v8339
        %s8470 = scalar_lea.vmem [#allocation1], 3
        %8471 = vst [vmem:[%s8470] ss:$4 sm:$0xff] %v8352
        %v8472 = vld.sshfl [vmem:[#allocation1] sm:$0xff pattern:$0x73625140]
        %v8475 = vsel %vm3219, %v8364, %v8379
        %v8477 = vsel %vm3219, %v8391, %v8406
        %v8479 = vsel %vm3219, %v8418, %v8433
        %v8481 = vsel %vm3219, %v8445, %v8460
        %v8486 = vunpack.c.l.b16 %v8475
        %v8487 = vunpack.c.l.b16 %v8477
        %v8488 = vunpack.c.l.b16 %v8479
        %v8489 = vunpack.c.l.b16 %v8481
        %v8490 = vunpack.c.l.b16 %v8472
        %v8491 = vunpack.c.h.b16 %v8475
        %v8492 = vunpack.c.h.b16 %v8477
        %v8493 = vunpack.c.h.b16 %v8479
        %v8494 = vunpack.c.h.b16 %v8481
        %v8495 = vunpack.c.h.b16 %v8472
        %v8496 = vpack.c.b16 %v8487, %v8486
        %v8497 = vpack.c.b16 %v8489, %v8488
        %v8498 = vpack.c.b16 %v8490, %v8490
        %v8499 = vpack.c.b16 %v8492, %v8491
        %v8500 = vpack.c.b16 %v8494, %v8493
        %v8501 = vpack.c.b16 %v8495, %v8495
        %8508 = vst [vmem:[#allocation7] sm:$0xff] %v8496
        %8509 = vst [vmem:[#allocation7 + $0x8] sm:$0xff] %v8497
        %vm8510 = vcmask 519168
        %8511 = vst.msk [vmem:[#allocation7 + $0x10] sm:$0xf] %vm8510, %v8498
        %8512 = vst [vmem:[#allocation7 + $0x14] sm:$0xff] %v8499
        %8513 = vst [vmem:[#allocation7 + $0x1c] sm:$0xff] %v8500
        %8514 = vst.msk [vmem:[#allocation7 + $0x24] sm:$0xf] %vm8510, %v8501
        %v8515 = vld [vmem:[#allocation7] sm:$0xff]
        %v8516 = vld [vmem:[#allocation7 + $0x8] sm:$0xff]
        %v8517 = vld [vmem:[#allocation7 + $0x10] sm:$0xf]
        %v8518 = vld [vmem:[#allocation7 + $0x14] sm:$0xff]
        %v8519 = vld [vmem:[#allocation7 + $0x1c] sm:$0xff]
        %v8520 = vld [vmem:[#allocation7 + $0x24] sm:$0xf]
        %v8521 = vld [vmem:[%s5] sm:$0xf]
        %v8522 = vld [vmem:[%s5 + $0x4] sm:$0xf]
        %v8523 = vld [vmem:[%s5 + $0x8] sm:$0xf]
        %v8524 = vld [vmem:[%s5 + $0xc] sm:$0xf]
        %v8525 = vld [vmem:[%s5 + $0x10] sm:$0xf]
        %v8526 = vld [vmem:[%s5 + $0x14] sm:$0xf]
        %v8527 = vld [vmem:[%s5 + $0x18] sm:$0xf]
        %v8528 = vld [vmem:[%s5 + $0x1c] sm:$0xf]
        %v8529 = vld [vmem:[%s5 + $0x20] sm:$0xf]
        %v8530 = vld [vmem:[%s5 + $0x24] sm:$0xf]
        %v8531 = vld [vmem:[%s5 + $0x28] sm:$0xf]
        %v8532 = vld [vmem:[%s5 + $0x2c] sm:$0xf]
        %v8533 = vld [vmem:[%s5 + $0x30] sm:$0xf]
        %v8534 = vld [vmem:[%s5 + $0x34] sm:$0xf]
        %v8535 = vld [vmem:[%s5 + $0x38] sm:$0xf]
        %v8536 = vld [vmem:[%s5 + $0x3c] sm:$0xf]
        %v8537 = vld [vmem:[%s5 + $0x40] sm:$0xf]
        %v8538 = vld [vmem:[%s5 + $0x44] sm:$0xf]
        %v8539 = vld [vmem:[%s5 + $0x48] sm:$0xf]
        %v8540 = vld [vmem:[%s5 + $0x4c] sm:$0xf]
        %v8541 = vld [vmem:[%s5 + $0x50] sm:$0xf]
        %v8542 = vld [vmem:[%s5 + $0x54] sm:$0xf]
        %v8543 = vld [vmem:[%s5 + $0x58] sm:$0xf]
        %v8544 = vld [vmem:[%s5 + $0x5c] sm:$0xf]
        %v8545 = vld [vmem:[%s5 + $0x60] sm:$0xf]
        %v8546 = vld [vmem:[%s5 + $0x64] sm:$0xf]
        %v8547 = vld [vmem:[%s5 + $0x68] sm:$0xf]
        %v8548 = vld [vmem:[%s5 + $0x6c] sm:$0xf]
        %v8549 = vld [vmem:[%s5 + $0x70] sm:$0xf]
        %v8550 = vld [vmem:[%s5 + $0x74] sm:$0xf]
        %v8551 = vld [vmem:[%s5 + $0x78] sm:$0xf]
        %v8552 = vld [vmem:[%s5 + $0x7c] sm:$0xf]
        %v8553 = vld [vmem:[%s5 + $0x80] sm:$0xf]
        %v8554 = vld [vmem:[%s5 + $0x84] sm:$0xf]
        %v8555 = vld [vmem:[%s5 + $0x88] sm:$0xf]
        %v8556 = vld [vmem:[%s5 + $0x8c] sm:$0xf]
        %v8557 = vld [vmem:[%s5 + $0x90] sm:$0xf]
        %v8558 = vld [vmem:[%s5 + $0x94] sm:$0xf]
        %v8559 = vld [vmem:[%s5 + $0x98] sm:$0xf]
        %v8560 = vld [vmem:[%s5 + $0x9c] sm:$0xf]
        %v8561 = vld [vmem:[%s5 + $0xa0] sm:$0xf]
        %v8562 = vld [vmem:[%s5 + $0xa4] sm:$0xf]
        %v8563 = vld [vmem:[%s5 + $0xa8] sm:$0xf]
        %v8564 = vld [vmem:[%s5 + $0xac] sm:$0xf]
        %v8565 = vld [vmem:[%s5 + $0xb0] sm:$0xf]
        %v8566 = vld [vmem:[%s5 + $0xb4] sm:$0xf]
        %v8567 = vld [vmem:[%s5 + $0xb8] sm:$0xf]
        %v8568 = vld [vmem:[%s5 + $0xbc] sm:$0xf]
        %v8569 = vld [vmem:[%s5 + $0xc0] sm:$0xf]
        %v8570 = vld [vmem:[%s5 + $0xc4] sm:$0xf]
        %v8571 = vld [vmem:[%s5 + $0xc8] sm:$0xf]
        %v8572 = vld [vmem:[%s5 + $0xcc] sm:$0xf]
        %v8573 = vld [vmem:[%s5 + $0xd0] sm:$0xf]
        %v8574 = vld [vmem:[%s5 + $0xd4] sm:$0xf]
        %v8575 = vld [vmem:[%s5 + $0xd8] sm:$0xf]
        %v8576 = vld [vmem:[%s5 + $0xdc] sm:$0xf]
        %v8577 = vld [vmem:[%s5 + $0xe0] sm:$0xf]
        %v8578 = vld [vmem:[%s5 + $0xe4] sm:$0xf]
        %v8579 = vld [vmem:[%s5 + $0xe8] sm:$0xf]
        %v8580 = vld [vmem:[%s5 + $0xec] sm:$0xf]
        %v8581 = vld [vmem:[%s5 + $0xf0] sm:$0xf]
        %v8582 = vld [vmem:[%s5 + $0xf4] sm:$0xf]
        %v8583 = vld [vmem:[%s5 + $0xf8] sm:$0xf]
        %v8584 = vld [vmem:[%s5 + $0xfc] sm:$0xf]
        %v8585 = vld [vmem:[%s5 + $0x100] sm:$0xf]
        %v8586 = vld [vmem:[%s5 + $0x104] sm:$0xf]
        %v8587 = vld [vmem:[%s5 + $0x108] sm:$0xf]
        %v8588 = vld [vmem:[%s5 + $0x10c] sm:$0xf]
        %v8589 = vld [vmem:[%s5 + $0x110] sm:$0xf]
        %v8590 = vld [vmem:[%s5 + $0x114] sm:$0xf]
        %v8591 = vld [vmem:[%s5 + $0x118] sm:$0xf]
        %v8592 = vld [vmem:[%s5 + $0x11c] sm:$0xf]
        %v8593 = vld [vmem:[%s6] sm:$0x1]
        %v8595 = vperm.slane %v8593, 0
        %v8603 = vunpack.c.l.b16 %v8515
        %v8604 = vunpack.c.h.b16 %v8515
        %v8605 = vunpack.c.l.b16 %v8516
        %v8606 = vunpack.c.h.b16 %v8516
        %v8607 = vunpack.c.l.b16 %v8517
        %v8608 = vunpack.c.l.b16 %v8518
        %v8609 = vunpack.c.h.b16 %v8518
        %v8610 = vunpack.c.l.b16 %v8519
        %v8611 = vunpack.c.h.b16 %v8519
        %v8612 = vunpack.c.l.b16 %v8520
        %v8613 = vpack.c.b16 %v8608, %v8603
        %v8614 = vpack.c.b16 %v8609, %v8604
        %v8615 = vpack.c.b16 %v8610, %v8605
        %v8616 = vpack.c.b16 %v8611, %v8606
        %v8617 = vpack.c.b16 %v8612, %v8607
        %v8694 = vunpack.c.l.b16 %v8521
        %v8695 = vunpack.c.l.b16 %v8522
        %v8696 = vunpack.c.l.b16 %v8523
        %v8697 = vunpack.c.l.b16 %v8524
        %v8698 = vunpack.c.l.b16 %v8525
        %v8699 = vunpack.c.l.b16 %v8526
        %v8700 = vunpack.c.l.b16 %v8527
        %v8701 = vunpack.c.l.b16 %v8528
        %v8702 = vunpack.c.l.b16 %v8529
        %v8703 = vunpack.c.l.b16 %v8530
        %v8704 = vunpack.c.l.b16 %v8531
        %v8705 = vunpack.c.l.b16 %v8532
        %v8706 = vunpack.c.l.b16 %v8533
        %v8707 = vunpack.c.l.b16 %v8534
        %v8708 = vunpack.c.l.b16 %v8535
        %v8709 = vunpack.c.l.b16 %v8536
        %v8710 = vunpack.c.l.b16 %v8537
        %v8711 = vunpack.c.l.b16 %v8538
        %v8712 = vunpack.c.l.b16 %v8539
        %v8713 = vunpack.c.l.b16 %v8540
        %v8714 = vunpack.c.l.b16 %v8541
        %v8715 = vunpack.c.l.b16 %v8542
        %v8716 = vunpack.c.l.b16 %v8543
        %v8717 = vunpack.c.l.b16 %v8544
        %v8718 = vunpack.c.l.b16 %v8545
        %v8719 = vunpack.c.l.b16 %v8546
        %v8720 = vunpack.c.l.b16 %v8547
        %v8721 = vunpack.c.l.b16 %v8548
        %v8722 = vunpack.c.l.b16 %v8549
        %v8723 = vunpack.c.l.b16 %v8550
        %v8724 = vunpack.c.l.b16 %v8551
        %v8725 = vunpack.c.l.b16 %v8552
        %v8726 = vunpack.c.l.b16 %v8553
        %v8727 = vunpack.c.l.b16 %v8554
        %v8728 = vunpack.c.l.b16 %v8555
        %v8729 = vunpack.c.l.b16 %v8556
        %v8730 = vunpack.c.l.b16 %v8557
        %v8731 = vunpack.c.l.b16 %v8558
        %v8732 = vunpack.c.l.b16 %v8559
        %v8733 = vunpack.c.l.b16 %v8560
        %v8734 = vunpack.c.l.b16 %v8561
        %v8735 = vunpack.c.l.b16 %v8562
        %v8736 = vunpack.c.l.b16 %v8563
        %v8737 = vunpack.c.l.b16 %v8564
        %v8738 = vunpack.c.l.b16 %v8565
        %v8739 = vunpack.c.l.b16 %v8566
        %v8740 = vunpack.c.l.b16 %v8567
        %v8741 = vunpack.c.l.b16 %v8568
        %v8742 = vunpack.c.l.b16 %v8569
        %v8743 = vunpack.c.l.b16 %v8570
        %v8744 = vunpack.c.l.b16 %v8571
        %v8745 = vunpack.c.l.b16 %v8572
        %v8746 = vunpack.c.l.b16 %v8573
        %v8747 = vunpack.c.l.b16 %v8574
        %v8748 = vunpack.c.l.b16 %v8575
        %v8749 = vunpack.c.l.b16 %v8576
        %v8750 = vunpack.c.l.b16 %v8577
        %v8751 = vunpack.c.l.b16 %v8578
        %v8752 = vunpack.c.l.b16 %v8579
        %v8753 = vunpack.c.l.b16 %v8580
        %v8754 = vunpack.c.l.b16 %v8581
        %v8755 = vunpack.c.l.b16 %v8582
        %v8756 = vunpack.c.l.b16 %v8583
        %v8757 = vunpack.c.l.b16 %v8584
        %v8758 = vunpack.c.l.b16 %v8585
        %v8759 = vunpack.c.l.b16 %v8586
        %v8760 = vunpack.c.l.b16 %v8587
        %v8761 = vunpack.c.l.b16 %v8588
        %v8762 = vunpack.c.l.b16 %v8589
        %v8763 = vunpack.c.l.b16 %v8590
        %v8764 = vunpack.c.l.b16 %v8591
        %v8765 = vunpack.c.l.b16 %v8592
        %v8766 = vpack.c.b16 %v8695, %v8694
        %v8767 = vpack.c.b16 %v8697, %v8696
        %v8768 = vpack.c.b16 %v8699, %v8698
        %v8769 = vpack.c.b16 %v8701, %v8700
        %v8770 = vpack.c.b16 %v8703, %v8702
        %v8771 = vpack.c.b16 %v8705, %v8704
        %v8772 = vpack.c.b16 %v8707, %v8706
        %v8773 = vpack.c.b16 %v8709, %v8708
        %v8774 = vpack.c.b16 %v8711, %v8710
        %v8775 = vpack.c.b16 %v8713, %v8712
        %v8776 = vpack.c.b16 %v8715, %v8714
        %v8777 = vpack.c.b16 %v8717, %v8716
        %v8778 = vpack.c.b16 %v8719, %v8718
        %v8779 = vpack.c.b16 %v8721, %v8720
        %v8780 = vpack.c.b16 %v8723, %v8722
        %v8781 = vpack.c.b16 %v8725, %v8724
        %v8782 = vpack.c.b16 %v8727, %v8726
        %v8783 = vpack.c.b16 %v8729, %v8728
        %v8784 = vpack.c.b16 %v8731, %v8730
        %v8785 = vpack.c.b16 %v8733, %v8732
        %v8786 = vpack.c.b16 %v8735, %v8734
        %v8787 = vpack.c.b16 %v8737, %v8736
        %v8788 = vpack.c.b16 %v8739, %v8738
        %v8789 = vpack.c.b16 %v8741, %v8740
        %v8790 = vpack.c.b16 %v8743, %v8742
        %v8791 = vpack.c.b16 %v8745, %v8744
        %v8792 = vpack.c.b16 %v8747, %v8746
        %v8793 = vpack.c.b16 %v8749, %v8748
        %v8794 = vpack.c.b16 %v8751, %v8750
        %v8795 = vpack.c.b16 %v8753, %v8752
        %v8796 = vpack.c.b16 %v8755, %v8754
        %v8797 = vpack.c.b16 %v8757, %v8756
        %v8798 = vpack.c.b16 %v8759, %v8758
        %v8799 = vpack.c.b16 %v8761, %v8760
        %v8800 = vpack.c.b16 %v8763, %v8762
        %v8801 = vpack.c.b16 %v8765, %v8764
        %v8839 = vsel %vm3219, %v8617, 0
        %8841 = vmatpush.bf16.msra.mxu0 %v8773
        %8842 = vmatpush.bf16.msra.mxu0 %v8772
        %8843 = vmatpush.bf16.msra.mxu0 %v8771
        %8844 = vmatpush.bf16.msra.mxu0 %v8770
        %8845 = vmatpush.bf16.msra.mxu0 %v8769
        %8846 = vmatpush.bf16.msra.mxu0 %v8768
        %8847 = vmatpush.bf16.msra.mxu0 %v8767
        %8848 = vmatpush.bf16.msra.mxu0 %v8766
        %8849 = vmatmul.bf16.gmra.mxu0 %v8613
        %v8850 = vpop.f32.mrf.mxu0
        %v8851 = vadd.f32 %v8595, %v8850
        %v8852 = vpop.f32.mrf.mxu0
        %v8853 = vadd.f32 %v8595, %v8852
        %8854 = vdwg.mxu0
        %8855 = vmatpush.bf16.msra.mxu0 %v8781
        %8856 = vmatpush.bf16.msra.mxu0 %v8780
        %8857 = vmatpush.bf16.msra.mxu0 %v8779
        %8858 = vmatpush.bf16.msra.mxu0 %v8778
        %8859 = vmatpush.bf16.msra.mxu0 %v8777
        %8860 = vmatpush.bf16.msra.mxu0 %v8776
        %8861 = vmatpush.bf16.msra.mxu0 %v8775
        %8862 = vmatpush.bf16.msra.mxu0 %v8774
        %8863 = vmatmul.bf16.gmra.mxu0 %v8614
        %v8864 = vpop.f32.mrf.mxu0
        %v8865 = vadd.f32 %v8851, %v8864
        %v8866 = vpop.f32.mrf.mxu0
        %v8867 = vadd.f32 %v8853, %v8866
        %8868 = vdwg.mxu0
        %8869 = vmatpush.bf16.msra.mxu0 %v8789
        %8870 = vmatpush.bf16.msra.mxu0 %v8788
        %8871 = vmatpush.bf16.msra.mxu0 %v8787
        %8872 = vmatpush.bf16.msra.mxu0 %v8786
        %8873 = vmatpush.bf16.msra.mxu0 %v8785
        %8874 = vmatpush.bf16.msra.mxu0 %v8784
        %8875 = vmatpush.bf16.msra.mxu0 %v8783
        %8876 = vmatpush.bf16.msra.mxu0 %v8782
        %8877 = vmatmul.bf16.gmra.mxu0 %v8615
        %v8878 = vpop.f32.mrf.mxu0
        %v8879 = vadd.f32 %v8865, %v8878
        %v8880 = vpop.f32.mrf.mxu0
        %v8881 = vadd.f32 %v8867, %v8880
        %8882 = vdwg.mxu0
        %8883 = vmatpush.bf16.msra.mxu0 %v8797
        %8884 = vmatpush.bf16.msra.mxu0 %v8796
        %8885 = vmatpush.bf16.msra.mxu0 %v8795
        %8886 = vmatpush.bf16.msra.mxu0 %v8794
        %8887 = vmatpush.bf16.msra.mxu0 %v8793
        %8888 = vmatpush.bf16.msra.mxu0 %v8792
        %8889 = vmatpush.bf16.msra.mxu0 %v8791
        %8890 = vmatpush.bf16.msra.mxu0 %v8790
        %8891 = vmatmul.bf16.gmra.mxu0 %v8616
        %v8892 = vpop.f32.mrf.mxu0
        %v8893 = vadd.f32 %v8879, %v8892
        %v8894 = vpop.f32.mrf.mxu0
        %v8895 = vadd.f32 %v8881, %v8894
        %8896 = vdwg.mxu0
        %8897 = vmatpush.bf16.msra.mxu0 0
        %8898 = vmatpush.bf16.msra.mxu0 0
        %8899 = vmatpush.bf16.msra.mxu0 0
        %8900 = vmatpush.bf16.msra.mxu0 0
        %8901 = vmatpush.bf16.msra.mxu0 %v8801
        %8902 = vmatpush.bf16.msra.mxu0 %v8800
        %8903 = vmatpush.bf16.msra.mxu0 %v8799
        %8904 = vmatpush.bf16.msra.mxu0 %v8798
        %8905 = vmatmul.bf16.gmra.mxu0 %v8839
        %v8906 = vpop.f32.mrf.mxu0
        %v8907 = vadd.f32 %v8893, %v8906
        %v8908 = vpop.f32.mrf.mxu0
        %v8909 = vadd.f32 %v8895, %v8908
        %8910 = vdwg.mxu0
        %v8911 = vmax.f32 %v8907, 0.0
        %v8912 = vmax.f32 %v8909, 0.0
        %v8913 = vld [vmem:[%s7] sm:$0x1]
        %v8915 = vperm.slane %v8913, 0
        %v8917 = vmul.f32 %v8911, %v8915
        %v8918 = vmul.f32 %v8912, %v8915
        %8919 = vadd.xlane.f32.xlu0 %v8917
        %v8920 = vpop.xlane.xlu0 %8919
        %8921 = vadd.xlane.f32.xlu0 %v8918
        %v8922 = vpop.xlane.xlu0 %8921
        %v8923 = vld [vmem:[#allocation8] sm:$0x1]
        %8925 = vset.pattern.permute.xlu0 0
        %8926 = vperm.xlu0 %8925, %v8923
        %v8927 = vpop.permute.xlu0 %8926
        %v8929 = vperm.slane %v8927, 0
        %v8930 = vadd.f32 %v8920, %v8929
        %v8931 = vadd.f32 %v8922, %v8929
        %v8934 = vlaneseq
        %v8935 = vand.u32 %v8934, 127
        %v8936 = vperm.slane %v8930, %v8935
        %v8937 = vadd.s32 %v8935, 4294967288
        %v8938 = vperm.slane %v8931, %v8937
        %vm8939 = vcmask 130112
        %v8940 = vsel %vm8939, %v8938, %v8936
        %vm8942 = vcmask 122880
        %8943 = vst.msk [vmem:[%s353] sm:$0x1] %vm8942, %v8940
        %s8944 = sand.u32 %s230, 1
        %s8945 = scalar_lea.sflag [#allocation11], %s8944
        %s8946 = sand.u32 %s230, 1
        %s8947 = scalar_lea.vmem [#allocation12], %s8946
        // Predicated region
        $region61: #{tpu_custom_call.1} parent=55 // pred_check
          %p8948 = pneg %p240
        $region62: #{tpu_custom_call.1} parent=55 // pred_check_branch
          %8950 = sbr.rel (%p8948) target = $region64
        $region63: #{tpu_custom_call.1} parent=55 // pred_region
          %8952 = vsyncadd %s8945, 0
          %s8953 = scalar_lea.hbm %s9, %s28
          %s8955 = sshll.u32 %s8947, 4
          %s8956 = int_to_ptr.vmem [resolvable:$true] %s8955
          %s8957 = sshll.u32 %s8953, 4
          %s8958 = int_to_ptr.hbm [resolvable:$true] %s8957
          %8960 = dma.vmem_to_hbm [thread:$0]  %s8956, 16, %s8958, %s8945
        $region64: #{tpu_custom_call.1} parent=55 // pred_fallthru
          _
      $region56: #{tpu_custom_call.1} parent=5 // pred_fallthru
        _
      %p8961 = scmp.le.s32.totalorder 2, %s23
      // Predicated region
      $region65: #{tpu_custom_call.1} parent=5 // pred_check
        %p8962 = pneg %p8961
      $region66: #{tpu_custom_call.1} parent=5 // pred_check_branch
        %8964 = sbr.rel (%p8962) target = $region68
      $region67: #{tpu_custom_call.1} parent=5 // pred_region
        %s8965 = ssub.s32 %s23, 2
        // Predicated region
        $region69: #{tpu_custom_call.1} parent=67 // pred_check
          %p8966 = pneg %p246
        $region70: #{tpu_custom_call.1} parent=67 // pred_check_branch
          %8968 = sbr.rel (%p8966) target = $region72
        $region71: #{tpu_custom_call.1} parent=67 // pred_region
          %s8969 = sand.u32 %s231, 1
          %s8970 = scalar_lea.sflag [#allocation11], %s8969
          %s8971 = sand.u32 %s231, 1
          %s8972 = scalar_lea.vmem [#allocation12], %s8971
          %8974 = dma.done %s8970, 16
        $region72: #{tpu_custom_call.1} parent=67 // pred_fallthru
          _
      $region68: #{tpu_custom_call.1} parent=5 // pred_fallthru
        _
    $region6: #{tpu_custom_call.1} parent=1 // loop_footer
      %s27 = sadd.s32 1, %s23
    $region7: #{tpu_custom_call.1} parent=1 // loop_footer_branch
      %22 = sbr.rel target = $region3
    $region8: #{tpu_custom_call.1} parent=1 // loop_exit
      _
    %8975 = vsyncpa [#allocation10], 1
    %s8976 = scalar_lea.sflag [#allocation10], 1
    %8977 = vsyncpa %s8976, 1
    %8978 = vsyncpa [#allocation11], 1
    %s8979 = scalar_lea.sflag [#allocation11], 1
    %8980 = vsyncpa %s8979, 1

</llo_original>
